<compile_context>
chip_gen: v5e
topology: v5e:2x2
jax: 0.10.0
libtpu: 0.0.40
codegen_flags: <defaults>
</compile_context>

<pallas_src>
import math
from functools import partial

import jax
import jax.numpy as jnp
from jax.experimental import pallas as pl
from jax.experimental.pallas import tpu as pltpu

F32 = jnp.float32
BF16 = jnp.bfloat16

# ---------------- config (tiny mBART-ish) ----------------
VOCAB = 256
D_MODEL = 128
N_HEADS = 4
D_HEAD = D_MODEL // N_HEADS
D_FFN = 256
D_ADAPT = 32
N_ENC_LAYERS = 1
N_DEC_LAYERS = 1
MAX_POS = 64
LN_EPS = 1e-5
ATTN_SCALE = 1.0 / math.sqrt(D_HEAD)
NEG_BIG = 1e9  # magnitude of the masking bias

# Flattened per-layer parameter orderings (kernel refs are passed positionally).
ENC_LAYER_KEYS = (
    "ln1_g", "ln1_b", "wqkv", "bqkv", "wo", "bo",
    "ad_attn_dw", "ad_attn_db", "ad_attn_uw", "ad_attn_ub",
    "ln2_g", "ln2_b", "fc1_w", "fc1_b", "fc2_w", "fc2_b",
    "ad_ffn_dw", "ad_ffn_db", "ad_ffn_uw", "ad_ffn_ub",
)
DEC_LAYER_KEYS = (
    "ln1_g", "ln1_b", "wqkv", "bqkv", "wo", "bo",
    "ad_attn_dw", "ad_attn_db", "ad_attn_uw", "ad_attn_ub",
    "lnc_g", "lnc_b", "xwq", "xbq", "xwkv", "xbkv", "xwo", "xbo",
    "ln2_g", "ln2_b", "fc1_w", "fc1_b", "fc2_w", "fc2_b",
    "ad_ffn_dw", "ad_ffn_db", "ad_ffn_uw", "ad_ffn_ub",
)


# ---------------- in-kernel building blocks (values, not pallas_calls) ----------------
def _ln(x, g, b):
    mu = jnp.mean(x, axis=-1, keepdims=True)
    var = jnp.mean((x - mu) ** 2, axis=-1, keepdims=True)
    return (x - mu) * jax.lax.rsqrt(var + LN_EPS) * g + b


def _mm(x, w):
    # bf16 operands, f32 accumulation on the MXU.
    return jnp.dot(x.astype(BF16), w.astype(BF16), preferred_element_type=F32)


def _attention(q, k, v, bias, wo, bo):
    """All heads of one batch in one grid step + fused output projection.

    q:(Tq,D) k,v:(Tk,D) bias:(1|Tq,Tk) wo:(D,D) bo:(1,D) -> (Tq,D).
    Per-head outputs never leave VMEM; out-proj is accumulated per head
    (concat(o_h) @ Wo == sum_h o_h @ Wo[h*Dh:(h+1)*Dh, :]).
    """
    out = None
    for h in range(N_HEADS):
        sl = slice(h * D_HEAD, (h + 1) * D_HEAD)
        qh = q[:, sl].astype(BF16)
        kh = k[:, sl].astype(BF16)
        vh = v[:, sl].astype(BF16)
        s = jax.lax.dot_general(
            qh, kh, (((1,), (1,)), ((), ())), preferred_element_type=F32
        ) * ATTN_SCALE + bias
        s = s - jnp.max(s, axis=-1, keepdims=True)
        p = jnp.exp(s)
        p = p * pl.reciprocal(jnp.sum(p, axis=-1, keepdims=True), approx=True)
        oh = jnp.dot(p.astype(BF16), vh, preferred_element_type=F32)   # (Tq, Dh)
        contrib = _mm(oh, wo[sl, :])                                   # (Tq, D)
        out = contrib if out is None else out + contrib
    return out + bo


def _adapter(h, dw, db, uw, ub):
    # Houlsby bottleneck adapter; the (Tq, D_ADAPT) bottleneck stays in VMEM.
    z = jnp.maximum(_mm(h, dw) + db, 0.0)
    return h + _mm(z, uw) + ub


def _ffn(h, w1, b1, w2, b2):
    z = jax.nn.gelu(_mm(h, w1) + b1)
    return _mm(z, w2) + b2


# ---------------- fused kernels ----------------
def _encoder_kernel_body(n_layers, *refs):
    nk = len(ENC_LAYER_KEYS)
    x_ref, mask_ref, emb_g_ref, emb_b_ref = refs[:4]
    layer_refs = refs[4:4 + n_layers * nk]
    fin_g_ref, fin_b_ref, o_ref = refs[4 + n_layers * nk:]

    pad_bias = (mask_ref[0] - 1.0) * NEG_BIG            # (1, Ts): 0 valid, -1e9 pad

    x = _ln(x_ref[...], emb_g_ref[...], emb_b_ref[...])
    for li in range(n_layers):
        p = dict(zip(ENC_LAYER_KEYS, layer_refs[li * nk:(li + 1) * nk]))
        # self-attention + adapter
        r = x
        h = _ln(x, p["ln1_g"][...], p["ln1_b"][...])
        qkv = _mm(h, p["wqkv"][...]) + p["bqkv"][...]
        h = _attention(qkv[:, :D_MODEL], qkv[:, D_MODEL:2 * D_MODEL],
                       qkv[:, 2 * D_MODEL:], pad_bias, p["wo"][...], p["bo"][...])
        h = _adapter(h, p["ad_attn_dw"][...], p["ad_attn_db"][...],
                     p["ad_attn_uw"][...], p["ad_attn_ub"][...])
        x = r + h
        # FFN + adapter
        r = x
        h = _ln(x, p["ln2_g"][...], p["ln2_b"][...])
        h = _ffn(h, p["fc1_w"][...], p["fc1_b"][...], p["fc2_w"][...], p["fc2_b"][...])
        h = _adapter(h, p["ad_ffn_dw"][...], p["ad_ffn_db"][...],
                     p["ad_ffn_uw"][...], p["ad_ffn_ub"][...])
        x = r + h
    o_ref[...] = _ln(x, fin_g_ref[...], fin_b_ref[...])


def _decoder_kernel_body(n_layers, tgt_len, *refs):
    nk = len(DEC_LAYER_KEYS)
    y_ref, enc_ref, mask_ref, labels_ref, emb_g_ref, emb_b_ref = refs[:6]
    layer_refs = refs[6:6 + n_layers * nk]
    (fin_g_ref, fin_b_ref, lm_w_ref, lm_b_ref,
     logits_ref, nll_ref) = refs[6 + n_layers * nk:]

    b = pl.program_id(0)

    # biases built in-kernel (no (B*H, Tq, Tk) HBM tensors)
    pad_bias = (mask_ref[0] - 1.0) * NEG_BIG                        # (1, Ts)
    rows = jax.lax.broadcasted_iota(jnp.int32, (tgt_len, tgt_len), 0)
    cols = jax.lax.broadcasted_iota(jnp.int32, (tgt_len, tgt_len), 1)
    causal_bias = jnp.where(rows >= cols, 0.0, -NEG_BIG).astype(F32)

    enc = enc_ref[...]                                              # (Ts, D)
    y = _ln(y_ref[...], emb_g_ref[...], emb_b_ref[...])
    for li in range(n_layers):
        p = dict(zip(DEC_LAYER_KEYS, layer_refs[li * nk:(li + 1) * nk]))
        # masked self-attention + adapter
        r = y
        h = _ln(y, p["ln1_g"][...], p["ln1_b"][...])
        qkv = _mm(h, p["wqkv"][...]) + p["bqkv"][...]
        h = _attention(qkv[:, :D_MODEL], qkv[:, D_MODEL:2 * D_MODEL],
                       qkv[:, 2 * D_MODEL:], causal_bias, p["wo"][...], p["bo"][...])
        h = _adapter(h, p["ad_attn_dw"][...], p["ad_attn_db"][...],
                     p["ad_attn_uw"][...], p["ad_attn_ub"][...])
        y = r + h
        # cross-attention (no adapter, matching the reference layer)
        r = y
        h = _ln(y, p["lnc_g"][...], p["lnc_b"][...])
        q = _mm(h, p["xwq"][...]) + p["xbq"][...]
        kv = _mm(enc, p["xwkv"][...]) + p["xbkv"][...]
        h = _attention(q, kv[:, :D_MODEL], kv[:, D_MODEL:],
                       pad_bias, p["xwo"][...], p["xbo"][...])
        y = r + h
        # FFN + adapter
        r = y
        h = _ln(y, p["ln2_g"][...], p["ln2_b"][...])
        h = _ffn(h, p["fc1_w"][...], p["fc1_b"][...], p["fc2_w"][...], p["fc2_b"][...])
        h = _adapter(h, p["ad_ffn_dw"][...], p["ad_ffn_db"][...],
                     p["ad_ffn_uw"][...], p["ad_ffn_ub"][...])
        y = r + h
    y = _ln(y, fin_g_ref[...], fin_b_ref[...])

    # LM head + cross-entropy fused: logits never round-trip through HBM for the loss.
    logits = _mm(y, lm_w_ref[...]) + lm_b_ref[...]                  # (Tt, V) f32
    logits_ref[...] = logits

    mx = jnp.max(logits, axis=-1, keepdims=True)
    lse = mx + jnp.log(jnp.sum(jnp.exp(logits - mx), axis=-1, keepdims=True))
    col = jax.lax.broadcasted_iota(jnp.int32, (tgt_len, VOCAB), 1)
    row = jax.lax.broadcasted_iota(jnp.int32, (tgt_len, VOCAB), 0)
    lbl = jnp.zeros((tgt_len, VOCAB), jnp.int32)
    for t in range(tgt_len):                     # labels read as SMEM scalars
        lbl = jnp.where(row == t, labels_ref[b, t], lbl)
    tgt = jnp.sum(jnp.where(col == lbl, logits, 0.0), axis=-1, keepdims=True)
    # TODO(synk): HF ignores label id -100 in the loss; synthetic labels are all valid.
    nll_ref[...] = jnp.broadcast_to(lse - tgt, (tgt_len, 128))      # lane-dense output


# ---------------- pallas_call wrappers ----------------
def _bcast_spec(shape):
    nd = len(shape)
    return pl.BlockSpec(shape, lambda *gi, _nd=nd: (0,) * _nd)


def _flatten_weights(p, prefix, layer_list, layer_keys, tail_keys):
    ws = [p[f"{prefix}_emb_ln_g"].reshape(1, -1), p[f"{prefix}_emb_ln_b"].reshape(1, -1)]
    for lp in layer_list:
        for k in layer_keys:
            w = lp[k]
            ws.append(w.reshape(1, -1) if w.ndim == 1 else w)
    for k in tail_keys:
        w = p[k]
        ws.append(w.reshape(1, -1) if w.ndim == 1 else w)
    return ws


def run_encoder(x_rows, mask_f32, p):
    B, Ts = mask_f32.shape
    n_layers = len(p["enc_layers"])
    weights = _flatten_weights(p, "enc", p["enc_layers"], ENC_LAYER_KEYS,
                               ("enc_final_ln_g", "enc_final_ln_b"))
    in_specs = [
        pl.BlockSpec((Ts, D_MODEL), lambda b: (b, 0)),       # activations, per batch
        pl.BlockSpec((1, 1, Ts), lambda b: (b, 0, 0)),       # padding mask, per batch
    ] + [_bcast_spec(w.shape) for w in weights]

    return pl.pallas_call(
        partial(_encoder_kernel_body, n_layers),
        out_shape=jax.ShapeDtypeStruct((B * Ts, D_MODEL), F32),
        grid=(B,),
        in_specs=in_specs,
        out_specs=pl.BlockSpec((Ts, D_MODEL), lambda b: (b, 0)),
        compiler_params=pltpu.CompilerParams(dimension_semantics=("parallel",)),
    )(x_rows, mask_f32.reshape(B, 1, Ts), *weights)


def run_decoder(y_rows, enc_out, mask_f32, labels, p):
    B, Ts = mask_f32.shape
    Tt = labels.shape[1]
    n_layers = len(p["dec_layers"])
    weights = _flatten_weights(p, "dec", p["dec_layers"], DEC_LAYER_KEYS,
                               ("dec_final_ln_g", "dec_final_ln_b",
                                "lm_head_w", "lm_head_b"))
    in_specs = [
        pl.BlockSpec((Tt, D_MODEL), lambda b: (b, 0)),                # decoder rows
        pl.BlockSpec((Ts, D_MODEL), lambda b: (b, 0)),                # encoder rows
        pl.BlockSpec((1, 1, Ts), lambda b: (b, 0, 0)),                # padding mask
        pl.BlockSpec(memory_space=pltpu.MemorySpace.SMEM),            # labels in SMEM
    ] + [_bcast_spec(w.shape) for w in weights]

    out_shapes = (
        jax.ShapeDtypeStruct((B * Tt, VOCAB), F32),   # logits (lane-dense, V=256)
        jax.ShapeDtypeStruct((B * Tt, 128), F32),     # per-token NLL, lane-dense
    )
    out_specs = (
        pl.BlockSpec((Tt, VOCAB), lambda b: (b, 0)),
        pl.BlockSpec((Tt, 128), lambda b: (b, 0)),
    )
    return pl.pallas_call(
        partial(_decoder_kernel_body, n_layers, Tt),
        out_shape=out_shapes,
        grid=(B,),
        in_specs=in_specs,
        out_specs=out_specs,
        compiler_params=pltpu.CompilerParams(dimension_semantics=("parallel",)),
    )(y_rows, enc_out, mask_f32.reshape(B, 1, Ts), labels.astype(jnp.int32), *weights)


# ---------------- model glue ----------------
def _shift_tokens_right(labels):
    # TODO(synk): real mBART prepends the target-language decoder_start_token;
    # synthetic labels just rotate the last token to the front.
    return jnp.concatenate([labels[:, -1:], labels[:, :-1]], axis=1)


@jax.jit
def _forward_impl(p, input_ids, attention_mask, out_ids):
    B, Ts = input_ids.shape
    Tt = out_ids.shape[1]
    embed_scale = math.sqrt(D_MODEL)
    mask_f32 = attention_mask.astype(F32)

    # ---- encoder (embedding gathers stay in JAX glue) ----
    pos_s = jnp.take(p["pos_emb"], jnp.arange(Ts), axis=0)[None]
    x = jnp.take(p["tok_emb"], input_ids, axis=0) * embed_scale + pos_s
    x = x.reshape(B * Ts, D_MODEL).astype(F32)
    enc_out = run_encoder(x, mask_f32, p)

    # ---- decoder + LM head + loss ----
    dec_in = _shift_tokens_right(out_ids)
    pos_t = jnp.take(p["pos_emb"], jnp.arange(Tt), axis=0)[None]
    y = jnp.take(p["tok_emb"], dec_in, axis=0) * embed_scale + pos_t
    y = y.reshape(B * Tt, D_MODEL).astype(F32)

    logits, token_nll = run_decoder(y, enc_out, mask_f32, out_ids, p)
    loss = jnp.mean(token_nll[:, 0])
    return loss, logits.reshape(B, Tt, VOCAB)


class MBartAdapterSummarizerPallas:
    def __init__(self, params):
        self.p = params

    def forward(self, input_ids, attention_mask, out_ids):
        return _forward_impl(self.p, input_ids, attention_mask, out_ids)


# ---------------- deterministic parameter init ----------------
def _init_params(key):
    keys = iter(jax.random.split(key, 512))

    def w(shape, dtype=BF16, scale=0.02):
        # matmul weights stored in bf16 (halves DMA; f32 accumulation on MXU)
        return (jax.random.normal(next(keys), shape, F32) * scale).astype(dtype)

    def layer(cross=False):
        d = {
            "ln1_g": jnp.ones((D_MODEL,), F32), "ln1_b": jnp.zeros((D_MODEL,), F32),
            "wqkv": w((D_MODEL, 3 * D_MODEL)), "bqkv": jnp.zeros((3 * D_MODEL,), F32),
            "wo": w((D_MODEL, D_MODEL)), "bo": jnp.zeros((D_MODEL,), F32),
            "ad_attn_dw": w((D_MODEL, D_ADAPT)), "ad_attn_db": jnp.zeros((D_ADAPT,), F32),
            "ad_attn_uw": w((D_ADAPT, D_MODEL)), "ad_attn_ub": jnp.zeros((D_MODEL,), F32),
            "ln2_g": jnp.ones((D_MODEL,), F32), "ln2_b": jnp.zeros((D_MODEL,), F32),
            "fc1_w": w((D_MODEL, D_FFN)), "fc1_b": jnp.zeros((D_FFN,), F32),
            "fc2_w": w((D_FFN, D_MODEL)), "fc2_b": jnp.zeros((D_MODEL,), F32),
            "ad_ffn_dw": w((D_MODEL, D_ADAPT)), "ad_ffn_db": jnp.zeros((D_ADAPT,), F32),
            "ad_ffn_uw": w((D_ADAPT, D_MODEL)), "ad_ffn_ub": jnp.zeros((D_MODEL,), F32),
        }
        if cross:
            d.update({
                "lnc_g": jnp.ones((D_MODEL,), F32), "lnc_b": jnp.zeros((D_MODEL,), F32),
                "xwq": w((D_MODEL, D_MODEL)), "xbq": jnp.zeros((D_MODEL,), F32),
                "xwkv": w((D_MODEL, 2 * D_MODEL)), "xbkv": jnp.zeros((2 * D_MODEL,), F32),
                "xwo": w((D_MODEL, D_MODEL)), "xbo": jnp.zeros((D_MODEL,), F32),
            })
        return d

    return {
        "tok_emb": w((VOCAB, D_MODEL), dtype=F32),
        "pos_emb": w((MAX_POS, D_MODEL), dtype=F32),
        "enc_emb_ln_g": jnp.ones((D_MODEL,), F32), "enc_emb_ln_b": jnp.zeros((D_MODEL,), F32),
        "dec_emb_ln_g": jnp.ones((D_MODEL,), F32), "dec_emb_ln_b": jnp.zeros((D_MODEL,), F32),
        "enc_final_ln_g": jnp.ones((D_MODEL,), F32), "enc_final_ln_b": jnp.zeros((D_MODEL,), F32),
        "dec_final_ln_g": jnp.ones((D_MODEL,), F32), "dec_final_ln_b": jnp.zeros((D_MODEL,), F32),
        "enc_layers": [layer(cross=False) for _ in range(N_ENC_LAYERS)],
        "dec_layers": [layer(cross=True) for _ in range(N_DEC_LAYERS)],
        "lm_head_w": w((D_MODEL, VOCAB)),
        "lm_head_b": jnp.zeros((VOCAB,), F32),
    }


if __name__ == "__main__":
    key = jax.random.PRNGKey(0)
    k_p, k_in, k_out = jax.random.split(key, 3)

    B, S_SRC, S_TGT = 2, 8, 8
    input_ids = jax.random.randint(k_in, (B, S_SRC), 0, VOCAB, dtype=jnp.int32)
    out_ids = jax.random.randint(k_out, (B, S_TGT), 0, VOCAB, dtype=jnp.int32)
    attention_mask = jnp.ones((B, S_SRC), jnp.int32).at[1, -2:].set(0)

    model = MBartAdapterSummarizerPallas(_init_params(k_p))
    loss, logits = model.forward(input_ids, attention_mask, out_ids)
    jax.block_until_ready((loss, logits))

    assert logits.shape == (B, S_TGT, VOCAB)
    assert jnp.isfinite(loss)
    print("KERNEL_OK")
</pallas_src>

<mosaic_0001>
module attributes {stable_mosaic.version = 11 : i64} {
  func.func @_encoder_kernel_body(%arg0: i32, %arg1: memref<8x128xf32, #tpu.memory_space<vmem>>, %arg2: memref<1x1x8xf32, #tpu.memory_space<vmem>>, %arg3: memref<1x128xf32, #tpu.memory_space<vmem>>, %arg4: memref<1x128xf32, #tpu.memory_space<vmem>>, %arg5: memref<1x128xf32, #tpu.memory_space<vmem>>, %arg6: memref<1x128xf32, #tpu.memory_space<vmem>>, %arg7: memref<128x384xbf16, #tpu.memory_space<vmem>>, %arg8: memref<1x384xf32, #tpu.memory_space<vmem>>, %arg9: memref<128x128xbf16, #tpu.memory_space<vmem>>, %arg10: memref<1x128xf32, #tpu.memory_space<vmem>>, %arg11: memref<128x32xbf16, #tpu.memory_space<vmem>>, %arg12: memref<1x32xf32, #tpu.memory_space<vmem>>, %arg13: memref<32x128xbf16, #tpu.memory_space<vmem>>, %arg14: memref<1x128xf32, #tpu.memory_space<vmem>>, %arg15: memref<1x128xf32, #tpu.memory_space<vmem>>, %arg16: memref<1x128xf32, #tpu.memory_space<vmem>>, %arg17: memref<128x256xbf16, #tpu.memory_space<vmem>>, %arg18: memref<1x256xf32, #tpu.memory_space<vmem>>, %arg19: memref<256x128xbf16, #tpu.memory_space<vmem>>, %arg20: memref<1x128xf32, #tpu.memory_space<vmem>>, %arg21: memref<128x32xbf16, #tpu.memory_space<vmem>>, %arg22: memref<1x32xf32, #tpu.memory_space<vmem>>, %arg23: memref<32x128xbf16, #tpu.memory_space<vmem>>, %arg24: memref<1x128xf32, #tpu.memory_space<vmem>>, %arg25: memref<1x128xf32, #tpu.memory_space<vmem>>, %arg26: memref<1x128xf32, #tpu.memory_space<vmem>>, %arg27: memref<8x128xf32, #tpu.memory_space<vmem>>) attributes {dimension_semantics = [#tpu.dimension_semantics<parallel>], iteration_bounds = array<i64: 2>, scalar_prefetch = 0 : i64, scratch_operands = 0 : i64, tpu.core_type = #tpu.core_type<tc>, window_params = [{transform_indices = @transform_0, window_bounds = array<i64: 8, 128>}, {transform_indices = @transform_1, window_bounds = array<i64: 1, 1, 8>}, {pipeline_mode = #tpu.pipeline_mode<synchronous>, transform_indices = @transform_2, window_bounds = array<i64: 1, 128>}, {pipeline_mode = #tpu.pipeline_mode<synchronous>, transform_indices = @transform_3, window_bounds = array<i64: 1, 128>}, {pipeline_mode = #tpu.pipeline_mode<synchronous>, transform_indices = @transform_4, window_bounds = array<i64: 1, 128>}, {pipeline_mode = #tpu.pipeline_mode<synchronous>, transform_indices = @transform_5, window_bounds = array<i64: 1, 128>}, {pipeline_mode = #tpu.pipeline_mode<synchronous>, transform_indices = @transform_6, window_bounds = array<i64: 128, 384>}, {pipeline_mode = #tpu.pipeline_mode<synchronous>, transform_indices = @transform_7, window_bounds = array<i64: 1, 384>}, {pipeline_mode = #tpu.pipeline_mode<synchronous>, transform_indices = @transform_8, window_bounds = array<i64: 128, 128>}, {pipeline_mode = #tpu.pipeline_mode<synchronous>, transform_indices = @transform_9, window_bounds = array<i64: 1, 128>}, {pipeline_mode = #tpu.pipeline_mode<synchronous>, transform_indices = @transform_10, window_bounds = array<i64: 128, 32>}, {pipeline_mode = #tpu.pipeline_mode<synchronous>, transform_indices = @transform_11, window_bounds = array<i64: 1, 32>}, {pipeline_mode = #tpu.pipeline_mode<synchronous>, transform_indices = @transform_12, window_bounds = array<i64: 32, 128>}, {pipeline_mode = #tpu.pipeline_mode<synchronous>, transform_indices = @transform_13, window_bounds = array<i64: 1, 128>}, {pipeline_mode = #tpu.pipeline_mode<synchronous>, transform_indices = @transform_14, window_bounds = array<i64: 1, 128>}, {pipeline_mode = #tpu.pipeline_mode<synchronous>, transform_indices = @transform_15, window_bounds = array<i64: 1, 128>}, {pipeline_mode = #tpu.pipeline_mode<synchronous>, transform_indices = @transform_16, window_bounds = array<i64: 128, 256>}, {pipeline_mode = #tpu.pipeline_mode<synchronous>, transform_indices = @transform_17, window_bounds = array<i64: 1, 256>}, {pipeline_mode = #tpu.pipeline_mode<synchronous>, transform_indices = @transform_18, window_bounds = array<i64: 256, 128>}, {pipeline_mode = #tpu.pipeline_mode<synchronous>, transform_indices = @transform_19, window_bounds = array<i64: 1, 128>}, {pipeline_mode = #tpu.pipeline_mode<synchronous>, transform_indices = @transform_20, window_bounds = array<i64: 128, 32>}, {pipeline_mode = #tpu.pipeline_mode<synchronous>, transform_indices = @transform_21, window_bounds = array<i64: 1, 32>}, {pipeline_mode = #tpu.pipeline_mode<synchronous>, transform_indices = @transform_22, window_bounds = array<i64: 32, 128>}, {pipeline_mode = #tpu.pipeline_mode<synchronous>, transform_indices = @transform_23, window_bounds = array<i64: 1, 128>}, {pipeline_mode = #tpu.pipeline_mode<synchronous>, transform_indices = @transform_24, window_bounds = array<i64: 1, 128>}, {pipeline_mode = #tpu.pipeline_mode<synchronous>, transform_indices = @transform_25, window_bounds = array<i64: 1, 128>}, {transform_indices = @transform_26, window_bounds = array<i64: 8, 128>}]} {
    %c0 = arith.constant 0 : index
    %c0_0 = arith.constant 0 : index
    %c0_1 = arith.constant 0 : index
    %0 = vector.load %arg2[%c0, %c0_0, %c0_1] : memref<1x1x8xf32, #tpu.memory_space<vmem>>, vector<1x1x8xf32>
    %1 = vector.shape_cast %0 : vector<1x1x8xf32> to vector<1x8xf32>
    %cst = arith.constant 1.000000e+00 : f32
    %2 = vector.broadcast %cst : f32 to vector<1x8xf32>
    %3 = arith.subf %1, %2 : vector<1x8xf32>
    %cst_2 = arith.constant 1.000000e+09 : f32
    %4 = vector.broadcast %cst_2 : f32 to vector<1x8xf32>
    %5 = arith.mulf %3, %4 : vector<1x8xf32>
    %c0_3 = arith.constant 0 : index
    %c0_4 = arith.constant 0 : index
    %6 = vector.load %arg1[%c0_3, %c0_4] : memref<8x128xf32, #tpu.memory_space<vmem>>, vector<8x128xf32>
    %c0_5 = arith.constant 0 : index
    %c0_6 = arith.constant 0 : index
    %7 = vector.load %arg3[%c0_5, %c0_6] : memref<1x128xf32, #tpu.memory_space<vmem>>, vector<1x128xf32>
    %c0_7 = arith.constant 0 : index
    %c0_8 = arith.constant 0 : index
    %8 = vector.load %arg4[%c0_7, %c0_8] : memref<1x128xf32, #tpu.memory_space<vmem>>, vector<1x128xf32>
    %cst_9 = arith.constant dense<0.000000e+00> : vector<8xf32>
    %9 = vector.multi_reduction <add>, %6, %cst_9 [1] : vector<8x128xf32> to vector<8xf32>
    %10 = vector.shape_cast %9 : vector<8xf32> to vector<8x1xf32>
    %cst_10 = arith.constant 1.280000e+02 : f32
    %11 = vector.broadcast %cst_10 : f32 to vector<8x1xf32>
    %12 = arith.divf %10, %11 : vector<8x1xf32>
    %13 = vector.broadcast %12 : vector<8x1xf32> to vector<8x128xf32>
    %14 = arith.subf %6, %13 : vector<8x128xf32>
    %15 = arith.mulf %14, %14 : vector<8x128xf32>
    %cst_11 = arith.constant dense<0.000000e+00> : vector<8xf32>
    %16 = vector.multi_reduction <add>, %15, %cst_11 [1] : vector<8x128xf32> to vector<8xf32>
    %17 = vector.shape_cast %16 : vector<8xf32> to vector<8x1xf32>
    %cst_12 = arith.constant 1.280000e+02 : f32
    %18 = vector.broadcast %cst_12 : f32 to vector<8x1xf32>
    %19 = arith.divf %17, %18 : vector<8x1xf32>
    %20 = vector.broadcast %12 : vector<8x1xf32> to vector<8x128xf32>
    %21 = arith.subf %6, %20 : vector<8x128xf32>
    %cst_13 = arith.constant 9.99999974E-6 : f32
    %22 = vector.broadcast %cst_13 : f32 to vector<8x1xf32>
    %23 = arith.addf %19, %22 : vector<8x1xf32>
    %24 = math.rsqrt %23 : vector<8x1xf32>
    %25 = vector.broadcast %24 : vector<8x1xf32> to vector<8x128xf32>
    %26 = arith.mulf %21, %25 : vector<8x128xf32>
    %27 = vector.broadcast %7 : vector<1x128xf32> to vector<8x128xf32>
    %28 = arith.mulf %26, %27 : vector<8x128xf32>
    %29 = vector.broadcast %8 : vector<1x128xf32> to vector<8x128xf32>
    %30 = arith.addf %28, %29 : vector<8x128xf32>
    %c0_14 = arith.constant 0 : index
    %c0_15 = arith.constant 0 : index
    %31 = vector.load %arg5[%c0_14, %c0_15] : memref<1x128xf32, #tpu.memory_space<vmem>>, vector<1x128xf32>
    %c0_16 = arith.constant 0 : index
    %c0_17 = arith.constant 0 : index
    %32 = vector.load %arg6[%c0_16, %c0_17] : memref<1x128xf32, #tpu.memory_space<vmem>>, vector<1x128xf32>
    %cst_18 = arith.constant dense<0.000000e+00> : vector<8xf32>
    %33 = vector.multi_reduction <add>, %30, %cst_18 [1] : vector<8x128xf32> to vector<8xf32>
    %34 = vector.shape_cast %33 : vector<8xf32> to vector<8x1xf32>
    %cst_19 = arith.constant 1.280000e+02 : f32
    %35 = vector.broadcast %cst_19 : f32 to vector<8x1xf32>
    %36 = arith.divf %34, %35 : vector<8x1xf32>
    %37 = vector.broadcast %36 : vector<8x1xf32> to vector<8x128xf32>
    %38 = arith.subf %30, %37 : vector<8x128xf32>
    %39 = arith.mulf %38, %38 : vector<8x128xf32>
    %cst_20 = arith.constant dense<0.000000e+00> : vector<8xf32>
    %40 = vector.multi_reduction <add>, %39, %cst_20 [1] : vector<8x128xf32> to vector<8xf32>
    %41 = vector.shape_cast %40 : vector<8xf32> to vector<8x1xf32>
    %cst_21 = arith.constant 1.280000e+02 : f32
    %42 = vector.broadcast %cst_21 : f32 to vector<8x1xf32>
    %43 = arith.divf %41, %42 : vector<8x1xf32>
    %44 = vector.broadcast %36 : vector<8x1xf32> to vector<8x128xf32>
    %45 = arith.subf %30, %44 : vector<8x128xf32>
    %cst_22 = arith.constant 9.99999974E-6 : f32
    %46 = vector.broadcast %cst_22 : f32 to vector<8x1xf32>
    %47 = arith.addf %43, %46 : vector<8x1xf32>
    %48 = math.rsqrt %47 : vector<8x1xf32>
    %49 = vector.broadcast %48 : vector<8x1xf32> to vector<8x128xf32>
    %50 = arith.mulf %45, %49 : vector<8x128xf32>
    %51 = vector.broadcast %31 : vector<1x128xf32> to vector<8x128xf32>
    %52 = arith.mulf %50, %51 : vector<8x128xf32>
    %53 = vector.broadcast %32 : vector<1x128xf32> to vector<8x128xf32>
    %54 = arith.addf %52, %53 : vector<8x128xf32>
    %c0_23 = arith.constant 0 : index
    %c0_24 = arith.constant 0 : index
    %55 = vector.load %arg7[%c0_23, %c0_24] : memref<128x384xbf16, #tpu.memory_space<vmem>>, vector<128x384xbf16>
    %56 = arith.truncf %54 : vector<8x128xf32> to vector<8x128xbf16>
    %cst_25 = arith.constant dense<0.000000e+00> : vector<8x384xf32>
    %57 = tpu.matmul %56, %55, %cst_25 {dimension_numbers = #tpu.dot_dimension_numbers<[1], [0], [0], [1], [0, 0, 1, 1], [], []>} : vector<8x128xbf16>, vector<128x384xbf16>, vector<8x384xf32> -> vector<8x384xf32>
    %c0_26 = arith.constant 0 : index
    %c0_27 = arith.constant 0 : index
    %58 = vector.load %arg8[%c0_26, %c0_27] : memref<1x384xf32, #tpu.memory_space<vmem>>, vector<1x384xf32>
    %59 = vector.broadcast %58 : vector<1x384xf32> to vector<8x384xf32>
    %60 = arith.addf %57, %59 : vector<8x384xf32>
    %61 = vector.extract_strided_slice %60 {offsets = [0, 0], sizes = [8, 128], strides = [1, 1]} : vector<8x384xf32> to vector<8x128xf32>
    %62 = vector.extract_strided_slice %60 {offsets = [0, 128], sizes = [8, 128], strides = [1, 1]} : vector<8x384xf32> to vector<8x128xf32>
    %63 = vector.extract_strided_slice %60 {offsets = [0, 256], sizes = [8, 128], strides = [1, 1]} : vector<8x384xf32> to vector<8x128xf32>
    %c0_28 = arith.constant 0 : index
    %c0_29 = arith.constant 0 : index
    %64 = vector.load %arg9[%c0_28, %c0_29] : memref<128x128xbf16, #tpu.memory_space<vmem>>, vector<128x128xbf16>
    %c0_30 = arith.constant 0 : index
    %c0_31 = arith.constant 0 : index
    %65 = vector.load %arg10[%c0_30, %c0_31] : memref<1x128xf32, #tpu.memory_space<vmem>>, vector<1x128xf32>
    %66 = vector.extract_strided_slice %61 {offsets = [0, 0], sizes = [8, 32], strides = [1, 1]} : vector<8x128xf32> to vector<8x32xf32>
    %67 = arith.truncf %66 : vector<8x32xf32> to vector<8x32xbf16>
    %68 = vector.extract_strided_slice %62 {offsets = [0, 0], sizes = [8, 32], strides = [1, 1]} : vector<8x128xf32> to vector<8x32xf32>
    %69 = arith.truncf %68 : vector<8x32xf32> to vector<8x32xbf16>
    %70 = vector.extract_strided_slice %63 {offsets = [0, 0], sizes = [8, 32], strides = [1, 1]} : vector<8x128xf32> to vector<8x32xf32>
    %71 = arith.truncf %70 : vector<8x32xf32> to vector<8x32xbf16>
    %cst_32 = arith.constant dense<0.000000e+00> : vector<8x8xf32>
    %72 = tpu.matmul %67, %69, %cst_32 {dimension_numbers = #tpu.dot_dimension_numbers<[1], [1], [0], [0], [0, 0, 1, 0], [], []>} : vector<8x32xbf16>, vector<8x32xbf16>, vector<8x8xf32> -> vector<8x8xf32>
    %cst_33 = arith.constant 0.176776692 : f32
    %73 = vector.broadcast %cst_33 : f32 to vector<8x8xf32>
    %74 = arith.mulf %72, %73 : vector<8x8xf32>
    %75 = vector.broadcast %5 : vector<1x8xf32> to vector<8x8xf32>
    %76 = arith.addf %74, %75 : vector<8x8xf32>
    %cst_34 = arith.constant dense<0xFF800000> : vector<8xf32>
    %77 = vector.multi_reduction <maximumf>, %76, %cst_34 [1] : vector<8x8xf32> to vector<8xf32>
    %78 = vector.shape_cast %77 : vector<8xf32> to vector<8x1xf32>
    %79 = vector.broadcast %78 : vector<8x1xf32> to vector<8x8xf32>
    %80 = arith.subf %76, %79 : vector<8x8xf32>
    %81 = math.exp %80 : vector<8x8xf32>
    %cst_35 = arith.constant dense<0.000000e+00> : vector<8xf32>
    %82 = vector.multi_reduction <add>, %81, %cst_35 [1] : vector<8x8xf32> to vector<8xf32>
    %83 = vector.shape_cast %82 : vector<8xf32> to vector<8x1xf32>
    %84 = tpu.reciprocal %83 {approx = true} : vector<8x1xf32> -> vector<8x1xf32>
    %85 = vector.broadcast %84 : vector<8x1xf32> to vector<8x8xf32>
    %86 = arith.mulf %81, %85 : vector<8x8xf32>
    %87 = arith.truncf %86 : vector<8x8xf32> to vector<8x8xbf16>
    %cst_36 = arith.constant dense<0.000000e+00> : vector<8x32xf32>
    %88 = tpu.matmul %87, %71, %cst_36 {dimension_numbers = #tpu.dot_dimension_numbers<[1], [0], [0], [1], [0, 0, 1, 1], [], []>} : vector<8x8xbf16>, vector<8x32xbf16>, vector<8x32xf32> -> vector<8x32xf32>
    %89 = vector.extract_strided_slice %64 {offsets = [0, 0], sizes = [32, 128], strides = [1, 1]} : vector<128x128xbf16> to vector<32x128xbf16>
    %90 = arith.truncf %88 : vector<8x32xf32> to vector<8x32xbf16>
    %cst_37 = arith.constant dense<0.000000e+00> : vector<8x128xf32>
    %91 = tpu.matmul %90, %89, %cst_37 {dimension_numbers = #tpu.dot_dimension_numbers<[1], [0], [0], [1], [0, 0, 1, 1], [], []>} : vector<8x32xbf16>, vector<32x128xbf16>, vector<8x128xf32> -> vector<8x128xf32>
    %92 = vector.extract_strided_slice %61 {offsets = [0, 32], sizes = [8, 32], strides = [1, 1]} : vector<8x128xf32> to vector<8x32xf32>
    %93 = arith.truncf %92 : vector<8x32xf32> to vector<8x32xbf16>
    %94 = vector.extract_strided_slice %62 {offsets = [0, 32], sizes = [8, 32], strides = [1, 1]} : vector<8x128xf32> to vector<8x32xf32>
    %95 = arith.truncf %94 : vector<8x32xf32> to vector<8x32xbf16>
    %96 = vector.extract_strided_slice %63 {offsets = [0, 32], sizes = [8, 32], strides = [1, 1]} : vector<8x128xf32> to vector<8x32xf32>
    %97 = arith.truncf %96 : vector<8x32xf32> to vector<8x32xbf16>
    %cst_38 = arith.constant dense<0.000000e+00> : vector<8x8xf32>
    %98 = tpu.matmul %93, %95, %cst_38 {dimension_numbers = #tpu.dot_dimension_numbers<[1], [1], [0], [0], [0, 0, 1, 0], [], []>} : vector<8x32xbf16>, vector<8x32xbf16>, vector<8x8xf32> -> vector<8x8xf32>
    %cst_39 = arith.constant 0.176776692 : f32
    %99 = vector.broadcast %cst_39 : f32 to vector<8x8xf32>
    %100 = arith.mulf %98, %99 : vector<8x8xf32>
    %101 = vector.broadcast %5 : vector<1x8xf32> to vector<8x8xf32>
    %102 = arith.addf %100, %101 : vector<8x8xf32>
    %cst_40 = arith.constant dense<0xFF800000> : vector<8xf32>
    %103 = vector.multi_reduction <maximumf>, %102, %cst_40 [1] : vector<8x8xf32> to vector<8xf32>
    %104 = vector.shape_cast %103 : vector<8xf32> to vector<8x1xf32>
    %105 = vector.broadcast %104 : vector<8x1xf32> to vector<8x8xf32>
    %106 = arith.subf %102, %105 : vector<8x8xf32>
    %107 = math.exp %106 : vector<8x8xf32>
    %cst_41 = arith.constant dense<0.000000e+00> : vector<8xf32>
    %108 = vector.multi_reduction <add>, %107, %cst_41 [1] : vector<8x8xf32> to vector<8xf32>
    %109 = vector.shape_cast %108 : vector<8xf32> to vector<8x1xf32>
    %110 = tpu.reciprocal %109 {approx = true} : vector<8x1xf32> -> vector<8x1xf32>
    %111 = vector.broadcast %110 : vector<8x1xf32> to vector<8x8xf32>
    %112 = arith.mulf %107, %111 : vector<8x8xf32>
    %113 = arith.truncf %112 : vector<8x8xf32> to vector<8x8xbf16>
    %cst_42 = arith.constant dense<0.000000e+00> : vector<8x32xf32>
    %114 = tpu.matmul %113, %97, %cst_42 {dimension_numbers = #tpu.dot_dimension_numbers<[1], [0], [0], [1], [0, 0, 1, 1], [], []>} : vector<8x8xbf16>, vector<8x32xbf16>, vector<8x32xf32> -> vector<8x32xf32>
    %115 = vector.extract_strided_slice %64 {offsets = [32, 0], sizes = [32, 128], strides = [1, 1]} : vector<128x128xbf16> to vector<32x128xbf16>
    %116 = arith.truncf %114 : vector<8x32xf32> to vector<8x32xbf16>
    %cst_43 = arith.constant dense<0.000000e+00> : vector<8x128xf32>
    %117 = tpu.matmul %116, %115, %cst_43 {dimension_numbers = #tpu.dot_dimension_numbers<[1], [0], [0], [1], [0, 0, 1, 1], [], []>} : vector<8x32xbf16>, vector<32x128xbf16>, vector<8x128xf32> -> vector<8x128xf32>
    %118 = arith.addf %91, %117 : vector<8x128xf32>
    %119 = vector.extract_strided_slice %61 {offsets = [0, 64], sizes = [8, 32], strides = [1, 1]} : vector<8x128xf32> to vector<8x32xf32>
    %120 = arith.truncf %119 : vector<8x32xf32> to vector<8x32xbf16>
    %121 = vector.extract_strided_slice %62 {offsets = [0, 64], sizes = [8, 32], strides = [1, 1]} : vector<8x128xf32> to vector<8x32xf32>
    %122 = arith.truncf %121 : vector<8x32xf32> to vector<8x32xbf16>
    %123 = vector.extract_strided_slice %63 {offsets = [0, 64], sizes = [8, 32], strides = [1, 1]} : vector<8x128xf32> to vector<8x32xf32>
    %124 = arith.truncf %123 : vector<8x32xf32> to vector<8x32xbf16>
    %cst_44 = arith.constant dense<0.000000e+00> : vector<8x8xf32>
    %125 = tpu.matmul %120, %122, %cst_44 {dimension_numbers = #tpu.dot_dimension_numbers<[1], [1], [0], [0], [0, 0, 1, 0], [], []>} : vector<8x32xbf16>, vector<8x32xbf16>, vector<8x8xf32> -> vector<8x8xf32>
    %cst_45 = arith.constant 0.176776692 : f32
    %126 = vector.broadcast %cst_45 : f32 to vector<8x8xf32>
    %127 = arith.mulf %125, %126 : vector<8x8xf32>
    %128 = vector.broadcast %5 : vector<1x8xf32> to vector<8x8xf32>
    %129 = arith.addf %127, %128 : vector<8x8xf32>
    %cst_46 = arith.constant dense<0xFF800000> : vector<8xf32>
    %130 = vector.multi_reduction <maximumf>, %129, %cst_46 [1] : vector<8x8xf32> to vector<8xf32>
    %131 = vector.shape_cast %130 : vector<8xf32> to vector<8x1xf32>
    %132 = vector.broadcast %131 : vector<8x1xf32> to vector<8x8xf32>
    %133 = arith.subf %129, %132 : vector<8x8xf32>
    %134 = math.exp %133 : vector<8x8xf32>
    %cst_47 = arith.constant dense<0.000000e+00> : vector<8xf32>
    %135 = vector.multi_reduction <add>, %134, %cst_47 [1] : vector<8x8xf32> to vector<8xf32>
    %136 = vector.shape_cast %135 : vector<8xf32> to vector<8x1xf32>
    %137 = tpu.reciprocal %136 {approx = true} : vector<8x1xf32> -> vector<8x1xf32>
    %138 = vector.broadcast %137 : vector<8x1xf32> to vector<8x8xf32>
    %139 = arith.mulf %134, %138 : vector<8x8xf32>
    %140 = arith.truncf %139 : vector<8x8xf32> to vector<8x8xbf16>
    %cst_48 = arith.constant dense<0.000000e+00> : vector<8x32xf32>
    %141 = tpu.matmul %140, %124, %cst_48 {dimension_numbers = #tpu.dot_dimension_numbers<[1], [0], [0], [1], [0, 0, 1, 1], [], []>} : vector<8x8xbf16>, vector<8x32xbf16>, vector<8x32xf32> -> vector<8x32xf32>
    %142 = vector.extract_strided_slice %64 {offsets = [64, 0], sizes = [32, 128], strides = [1, 1]} : vector<128x128xbf16> to vector<32x128xbf16>
    %143 = arith.truncf %141 : vector<8x32xf32> to vector<8x32xbf16>
    %cst_49 = arith.constant dense<0.000000e+00> : vector<8x128xf32>
    %144 = tpu.matmul %143, %142, %cst_49 {dimension_numbers = #tpu.dot_dimension_numbers<[1], [0], [0], [1], [0, 0, 1, 1], [], []>} : vector<8x32xbf16>, vector<32x128xbf16>, vector<8x128xf32> -> vector<8x128xf32>
    %145 = arith.addf %118, %144 : vector<8x128xf32>
    %146 = vector.extract_strided_slice %61 {offsets = [0, 96], sizes = [8, 32], strides = [1, 1]} : vector<8x128xf32> to vector<8x32xf32>
    %147 = arith.truncf %146 : vector<8x32xf32> to vector<8x32xbf16>
    %148 = vector.extract_strided_slice %62 {offsets = [0, 96], sizes = [8, 32], strides = [1, 1]} : vector<8x128xf32> to vector<8x32xf32>
    %149 = arith.truncf %148 : vector<8x32xf32> to vector<8x32xbf16>
    %150 = vector.extract_strided_slice %63 {offsets = [0, 96], sizes = [8, 32], strides = [1, 1]} : vector<8x128xf32> to vector<8x32xf32>
    %151 = arith.truncf %150 : vector<8x32xf32> to vector<8x32xbf16>
    %cst_50 = arith.constant dense<0.000000e+00> : vector<8x8xf32>
    %152 = tpu.matmul %147, %149, %cst_50 {dimension_numbers = #tpu.dot_dimension_numbers<[1], [1], [0], [0], [0, 0, 1, 0], [], []>} : vector<8x32xbf16>, vector<8x32xbf16>, vector<8x8xf32> -> vector<8x8xf32>
    %cst_51 = arith.constant 0.176776692 : f32
    %153 = vector.broadcast %cst_51 : f32 to vector<8x8xf32>
    %154 = arith.mulf %152, %153 : vector<8x8xf32>
    %155 = vector.broadcast %5 : vector<1x8xf32> to vector<8x8xf32>
    %156 = arith.addf %154, %155 : vector<8x8xf32>
    %cst_52 = arith.constant dense<0xFF800000> : vector<8xf32>
    %157 = vector.multi_reduction <maximumf>, %156, %cst_52 [1] : vector<8x8xf32> to vector<8xf32>
    %158 = vector.shape_cast %157 : vector<8xf32> to vector<8x1xf32>
    %159 = vector.broadcast %158 : vector<8x1xf32> to vector<8x8xf32>
    %160 = arith.subf %156, %159 : vector<8x8xf32>
    %161 = math.exp %160 : vector<8x8xf32>
    %cst_53 = arith.constant dense<0.000000e+00> : vector<8xf32>
    %162 = vector.multi_reduction <add>, %161, %cst_53 [1] : vector<8x8xf32> to vector<8xf32>
    %163 = vector.shape_cast %162 : vector<8xf32> to vector<8x1xf32>
    %164 = tpu.reciprocal %163 {approx = true} : vector<8x1xf32> -> vector<8x1xf32>
    %165 = vector.broadcast %164 : vector<8x1xf32> to vector<8x8xf32>
    %166 = arith.mulf %161, %165 : vector<8x8xf32>
    %167 = arith.truncf %166 : vector<8x8xf32> to vector<8x8xbf16>
    %cst_54 = arith.constant dense<0.000000e+00> : vector<8x32xf32>
    %168 = tpu.matmul %167, %151, %cst_54 {dimension_numbers = #tpu.dot_dimension_numbers<[1], [0], [0], [1], [0, 0, 1, 1], [], []>} : vector<8x8xbf16>, vector<8x32xbf16>, vector<8x32xf32> -> vector<8x32xf32>
    %169 = vector.extract_strided_slice %64 {offsets = [96, 0], sizes = [32, 128], strides = [1, 1]} : vector<128x128xbf16> to vector<32x128xbf16>
    %170 = arith.truncf %168 : vector<8x32xf32> to vector<8x32xbf16>
    %cst_55 = arith.constant dense<0.000000e+00> : vector<8x128xf32>
    %171 = tpu.matmul %170, %169, %cst_55 {dimension_numbers = #tpu.dot_dimension_numbers<[1], [0], [0], [1], [0, 0, 1, 1], [], []>} : vector<8x32xbf16>, vector<32x128xbf16>, vector<8x128xf32> -> vector<8x128xf32>
    %172 = arith.addf %145, %171 : vector<8x128xf32>
    %173 = vector.broadcast %65 : vector<1x128xf32> to vector<8x128xf32>
    %174 = arith.addf %172, %173 : vector<8x128xf32>
    %c0_56 = arith.constant 0 : index
    %c0_57 = arith.constant 0 : index
    %175 = vector.load %arg11[%c0_56, %c0_57] : memref<128x32xbf16, #tpu.memory_space<vmem>>, vector<128x32xbf16>
    %c0_58 = arith.constant 0 : index
    %c0_59 = arith.constant 0 : index
    %176 = vector.load %arg12[%c0_58, %c0_59] : memref<1x32xf32, #tpu.memory_space<vmem>>, vector<1x32xf32>
    %c0_60 = arith.constant 0 : index
    %c0_61 = arith.constant 0 : index
    %177 = vector.load %arg13[%c0_60, %c0_61] : memref<32x128xbf16, #tpu.memory_space<vmem>>, vector<32x128xbf16>
    %c0_62 = arith.constant 0 : index
    %c0_63 = arith.constant 0 : index
    %178 = vector.load %arg14[%c0_62, %c0_63] : memref<1x128xf32, #tpu.memory_space<vmem>>, vector<1x128xf32>
    %179 = arith.truncf %174 : vector<8x128xf32> to vector<8x128xbf16>
    %cst_64 = arith.constant dense<0.000000e+00> : vector<8x32xf32>
    %180 = tpu.matmul %179, %175, %cst_64 {dimension_numbers = #tpu.dot_dimension_numbers<[1], [0], [0], [1], [0, 0, 1, 1], [], []>} : vector<8x128xbf16>, vector<128x32xbf16>, vector<8x32xf32> -> vector<8x32xf32>
    %181 = vector.broadcast %176 : vector<1x32xf32> to vector<8x32xf32>
    %182 = arith.addf %180, %181 : vector<8x32xf32>
    %cst_65 = arith.constant 0.000000e+00 : f32
    %183 = vector.broadcast %cst_65 : f32 to vector<8x32xf32>
    %184 = arith.maximumf %182, %183 : vector<8x32xf32>
    %185 = arith.truncf %184 : vector<8x32xf32> to vector<8x32xbf16>
    %cst_66 = arith.constant dense<0.000000e+00> : vector<8x128xf32>
    %186 = tpu.matmul %185, %177, %cst_66 {dimension_numbers = #tpu.dot_dimension_numbers<[1], [0], [0], [1], [0, 0, 1, 1], [], []>} : vector<8x32xbf16>, vector<32x128xbf16>, vector<8x128xf32> -> vector<8x128xf32>
    %187 = arith.addf %174, %186 : vector<8x128xf32>
    %188 = vector.broadcast %178 : vector<1x128xf32> to vector<8x128xf32>
    %189 = arith.addf %187, %188 : vector<8x128xf32>
    %190 = arith.addf %30, %189 : vector<8x128xf32>
    %c0_67 = arith.constant 0 : index
    %c0_68 = arith.constant 0 : index
    %191 = vector.load %arg15[%c0_67, %c0_68] : memref<1x128xf32, #tpu.memory_space<vmem>>, vector<1x128xf32>
    %c0_69 = arith.constant 0 : index
    %c0_70 = arith.constant 0 : index
    %192 = vector.load %arg16[%c0_69, %c0_70] : memref<1x128xf32, #tpu.memory_space<vmem>>, vector<1x128xf32>
    %cst_71 = arith.constant dense<0.000000e+00> : vector<8xf32>
    %193 = vector.multi_reduction <add>, %190, %cst_71 [1] : vector<8x128xf32> to vector<8xf32>
    %194 = vector.shape_cast %193 : vector<8xf32> to vector<8x1xf32>
    %cst_72 = arith.constant 1.280000e+02 : f32
    %195 = vector.broadcast %cst_72 : f32 to vector<8x1xf32>
    %196 = arith.divf %194, %195 : vector<8x1xf32>
    %197 = vector.broadcast %196 : vector<8x1xf32> to vector<8x128xf32>
    %198 = arith.subf %190, %197 : vector<8x128xf32>
    %199 = arith.mulf %198, %198 : vector<8x128xf32>
    %cst_73 = arith.constant dense<0.000000e+00> : vector<8xf32>
    %200 = vector.multi_reduction <add>, %199, %cst_73 [1] : vector<8x128xf32> to vector<8xf32>
    %201 = vector.shape_cast %200 : vector<8xf32> to vector<8x1xf32>
    %cst_74 = arith.constant 1.280000e+02 : f32
    %202 = vector.broadcast %cst_74 : f32 to vector<8x1xf32>
    %203 = arith.divf %201, %202 : vector<8x1xf32>
    %204 = vector.broadcast %196 : vector<8x1xf32> to vector<8x128xf32>
    %205 = arith.subf %190, %204 : vector<8x128xf32>
    %cst_75 = arith.constant 9.99999974E-6 : f32
    %206 = vector.broadcast %cst_75 : f32 to vector<8x1xf32>
    %207 = arith.addf %203, %206 : vector<8x1xf32>
    %208 = math.rsqrt %207 : vector<8x1xf32>
    %209 = vector.broadcast %208 : vector<8x1xf32> to vector<8x128xf32>
    %210 = arith.mulf %205, %209 : vector<8x128xf32>
    %211 = vector.broadcast %191 : vector<1x128xf32> to vector<8x128xf32>
    %212 = arith.mulf %210, %211 : vector<8x128xf32>
    %213 = vector.broadcast %192 : vector<1x128xf32> to vector<8x128xf32>
    %214 = arith.addf %212, %213 : vector<8x128xf32>
    %c0_76 = arith.constant 0 : index
    %c0_77 = arith.constant 0 : index
    %215 = vector.load %arg17[%c0_76, %c0_77] : memref<128x256xbf16, #tpu.memory_space<vmem>>, vector<128x256xbf16>
    %c0_78 = arith.constant 0 : index
    %c0_79 = arith.constant 0 : index
    %216 = vector.load %arg18[%c0_78, %c0_79] : memref<1x256xf32, #tpu.memory_space<vmem>>, vector<1x256xf32>
    %c0_80 = arith.constant 0 : index
    %c0_81 = arith.constant 0 : index
    %217 = vector.load %arg19[%c0_80, %c0_81] : memref<256x128xbf16, #tpu.memory_space<vmem>>, vector<256x128xbf16>
    %c0_82 = arith.constant 0 : index
    %c0_83 = arith.constant 0 : index
    %218 = vector.load %arg20[%c0_82, %c0_83] : memref<1x128xf32, #tpu.memory_space<vmem>>, vector<1x128xf32>
    %219 = arith.truncf %214 : vector<8x128xf32> to vector<8x128xbf16>
    %cst_84 = arith.constant dense<0.000000e+00> : vector<8x256xf32>
    %220 = tpu.matmul %219, %215, %cst_84 {dimension_numbers = #tpu.dot_dimension_numbers<[1], [0], [0], [1], [0, 0, 1, 1], [], []>} : vector<8x128xbf16>, vector<128x256xbf16>, vector<8x256xf32> -> vector<8x256xf32>
    %221 = vector.broadcast %216 : vector<1x256xf32> to vector<8x256xf32>
    %222 = arith.addf %220, %221 : vector<8x256xf32>
    %223 = arith.mulf %222, %222 : vector<8x256xf32>
    %224 = arith.mulf %222, %223 : vector<8x256xf32>
    %cst_85 = arith.constant 4.471500e-02 : f32
    %225 = vector.broadcast %cst_85 : f32 to vector<8x256xf32>
    %226 = arith.mulf %225, %224 : vector<8x256xf32>
    %227 = arith.addf %222, %226 : vector<8x256xf32>
    %cst_86 = arith.constant 0.797884583 : f32
    %228 = vector.broadcast %cst_86 : f32 to vector<8x256xf32>
    %229 = arith.mulf %228, %227 : vector<8x256xf32>
    %230 = math.tanh %229 : vector<8x256xf32>
    %cst_87 = arith.constant 1.000000e+00 : f32
    %231 = vector.broadcast %cst_87 : f32 to vector<8x256xf32>
    %232 = arith.addf %231, %230 : vector<8x256xf32>
    %cst_88 = arith.constant 5.000000e-01 : f32
    %233 = vector.broadcast %cst_88 : f32 to vector<8x256xf32>
    %234 = arith.mulf %233, %232 : vector<8x256xf32>
    %235 = arith.mulf %222, %234 : vector<8x256xf32>
    %236 = arith.truncf %235 : vector<8x256xf32> to vector<8x256xbf16>
    %cst_89 = arith.constant dense<0.000000e+00> : vector<8x128xf32>
    %237 = tpu.matmul %236, %217, %cst_89 {dimension_numbers = #tpu.dot_dimension_numbers<[1], [0], [0], [1], [0, 0, 1, 1], [], []>} : vector<8x256xbf16>, vector<256x128xbf16>, vector<8x128xf32> -> vector<8x128xf32>
    %238 = vector.broadcast %218 : vector<1x128xf32> to vector<8x128xf32>
    %239 = arith.addf %237, %238 : vector<8x128xf32>
    %c0_90 = arith.constant 0 : index
    %c0_91 = arith.constant 0 : index
    %240 = vector.load %arg21[%c0_90, %c0_91] : memref<128x32xbf16, #tpu.memory_space<vmem>>, vector<128x32xbf16>
    %c0_92 = arith.constant 0 : index
    %c0_93 = arith.constant 0 : index
    %241 = vector.load %arg22[%c0_92, %c0_93] : memref<1x32xf32, #tpu.memory_space<vmem>>, vector<1x32xf32>
    %c0_94 = arith.constant 0 : index
    %c0_95 = arith.constant 0 : index
    %242 = vector.load %arg23[%c0_94, %c0_95] : memref<32x128xbf16, #tpu.memory_space<vmem>>, vector<32x128xbf16>
    %c0_96 = arith.constant 0 : index
    %c0_97 = arith.constant 0 : index
    %243 = vector.load %arg24[%c0_96, %c0_97] : memref<1x128xf32, #tpu.memory_space<vmem>>, vector<1x128xf32>
    %244 = arith.truncf %239 : vector<8x128xf32> to vector<8x128xbf16>
    %cst_98 = arith.constant dense<0.000000e+00> : vector<8x32xf32>
    %245 = tpu.matmul %244, %240, %cst_98 {dimension_numbers = #tpu.dot_dimension_numbers<[1], [0], [0], [1], [0, 0, 1, 1], [], []>} : vector<8x128xbf16>, vector<128x32xbf16>, vector<8x32xf32> -> vector<8x32xf32>
    %246 = vector.broadcast %241 : vector<1x32xf32> to vector<8x32xf32>
    %247 = arith.addf %245, %246 : vector<8x32xf32>
    %cst_99 = arith.constant 0.000000e+00 : f32
    %248 = vector.broadcast %cst_99 : f32 to vector<8x32xf32>
    %249 = arith.maximumf %247, %248 : vector<8x32xf32>
    %250 = arith.truncf %249 : vector<8x32xf32> to vector<8x32xbf16>
    %cst_100 = arith.constant dense<0.000000e+00> : vector<8x128xf32>
    %251 = tpu.matmul %250, %242, %cst_100 {dimension_numbers = #tpu.dot_dimension_numbers<[1], [0], [0], [1], [0, 0, 1, 1], [], []>} : vector<8x32xbf16>, vector<32x128xbf16>, vector<8x128xf32> -> vector<8x128xf32>
    %252 = arith.addf %239, %251 : vector<8x128xf32>
    %253 = vector.broadcast %243 : vector<1x128xf32> to vector<8x128xf32>
    %254 = arith.addf %252, %253 : vector<8x128xf32>
    %255 = arith.addf %190, %254 : vector<8x128xf32>
    %c0_101 = arith.constant 0 : index
    %c0_102 = arith.constant 0 : index
    %256 = vector.load %arg25[%c0_101, %c0_102] : memref<1x128xf32, #tpu.memory_space<vmem>>, vector<1x128xf32>
    %c0_103 = arith.constant 0 : index
    %c0_104 = arith.constant 0 : index
    %257 = vector.load %arg26[%c0_103, %c0_104] : memref<1x128xf32, #tpu.memory_space<vmem>>, vector<1x128xf32>
    %cst_105 = arith.constant dense<0.000000e+00> : vector<8xf32>
    %258 = vector.multi_reduction <add>, %255, %cst_105 [1] : vector<8x128xf32> to vector<8xf32>
    %259 = vector.shape_cast %258 : vector<8xf32> to vector<8x1xf32>
    %cst_106 = arith.constant 1.280000e+02 : f32
    %260 = vector.broadcast %cst_106 : f32 to vector<8x1xf32>
    %261 = arith.divf %259, %260 : vector<8x1xf32>
    %262 = vector.broadcast %261 : vector<8x1xf32> to vector<8x128xf32>
    %263 = arith.subf %255, %262 : vector<8x128xf32>
    %264 = arith.mulf %263, %263 : vector<8x128xf32>
    %cst_107 = arith.constant dense<0.000000e+00> : vector<8xf32>
    %265 = vector.multi_reduction <add>, %264, %cst_107 [1] : vector<8x128xf32> to vector<8xf32>
    %266 = vector.shape_cast %265 : vector<8xf32> to vector<8x1xf32>
    %cst_108 = arith.constant 1.280000e+02 : f32
    %267 = vector.broadcast %cst_108 : f32 to vector<8x1xf32>
    %268 = arith.divf %266, %267 : vector<8x1xf32>
    %269 = vector.broadcast %261 : vector<8x1xf32> to vector<8x128xf32>
    %270 = arith.subf %255, %269 : vector<8x128xf32>
    %cst_109 = arith.constant 9.99999974E-6 : f32
    %271 = vector.broadcast %cst_109 : f32 to vector<8x1xf32>
    %272 = arith.addf %268, %271 : vector<8x1xf32>
    %273 = math.rsqrt %272 : vector<8x1xf32>
    %274 = vector.broadcast %273 : vector<8x1xf32> to vector<8x128xf32>
    %275 = arith.mulf %270, %274 : vector<8x128xf32>
    %276 = vector.broadcast %256 : vector<1x128xf32> to vector<8x128xf32>
    %277 = arith.mulf %275, %276 : vector<8x128xf32>
    %278 = vector.broadcast %257 : vector<1x128xf32> to vector<8x128xf32>
    %279 = arith.addf %277, %278 : vector<8x128xf32>
    %c0_110 = arith.constant 0 : index
    %c0_111 = arith.constant 0 : index
    %280 = vector.load %arg27[%c0_110, %c0_111] : memref<8x128xf32, #tpu.memory_space<vmem>>, vector<8x128xf32>
    tpu.vector_store %arg27[%c0_110, %c0_111], %279 {strides = array<i32>} : memref<8x128xf32, #tpu.memory_space<vmem>>, vector<8x128xf32>,
    return
  }
  func.func @transform_0(%arg0: i32) -> (i32, i32) {
    %c0_i32 = arith.constant 0 : i32
    %c0_i32_0 = arith.constant 0 : i32
    return %arg0, %c0_i32 : i32, i32
  }
  func.func @transform_1(%arg0: i32) -> (i32, i32, i32) {
    %c0_i32 = arith.constant 0 : i32
    %c0_i32_0 = arith.constant 0 : i32
    %c0_i32_1 = arith.constant 0 : i32
    return %arg0, %c0_i32, %c0_i32_0 : i32, i32, i32
  }
  func.func @transform_2(%arg0: i32) -> (i32, i32) {
    %c0_i32 = arith.constant 0 : i32
    %c0_i32_0 = arith.constant 0 : i32
    %c0_i32_1 = arith.constant 0 : i32
    return %c0_i32, %c0_i32_0 : i32, i32
  }
  func.func @transform_3(%arg0: i32) -> (i32, i32) {
    %c0_i32 = arith.constant 0 : i32
    %c0_i32_0 = arith.constant 0 : i32
    %c0_i32_1 = arith.constant 0 : i32
    return %c0_i32, %c0_i32_0 : i32, i32
  }
  func.func @transform_4(%arg0: i32) -> (i32, i32) {
    %c0_i32 = arith.constant 0 : i32
    %c0_i32_0 = arith.constant 0 : i32
    %c0_i32_1 = arith.constant 0 : i32
    return %c0_i32, %c0_i32_0 : i32, i32
  }
  func.func @transform_5(%arg0: i32) -> (i32, i32) {
    %c0_i32 = arith.constant 0 : i32
    %c0_i32_0 = arith.constant 0 : i32
    %c0_i32_1 = arith.constant 0 : i32
    return %c0_i32, %c0_i32_0 : i32, i32
  }
  func.func @transform_6(%arg0: i32) -> (i32, i32) {
    %c0_i32 = arith.constant 0 : i32
    %c0_i32_0 = arith.constant 0 : i32
    %c0_i32_1 = arith.constant 0 : i32
    return %c0_i32, %c0_i32_0 : i32, i32
  }
  func.func @transform_7(%arg0: i32) -> (i32, i32) {
    %c0_i32 = arith.constant 0 : i32
    %c0_i32_0 = arith.constant 0 : i32
    %c0_i32_1 = arith.constant 0 : i32
    return %c0_i32, %c0_i32_0 : i32, i32
  }
  func.func @transform_8(%arg0: i32) -> (i32, i32) {
    %c0_i32 = arith.constant 0 : i32
    %c0_i32_0 = arith.constant 0 : i32
    %c0_i32_1 = arith.constant 0 : i32
    return %c0_i32, %c0_i32_0 : i32, i32
  }
  func.func @transform_9(%arg0: i32) -> (i32, i32) {
    %c0_i32 = arith.constant 0 : i32
    %c0_i32_0 = arith.constant 0 : i32
    %c0_i32_1 = arith.constant 0 : i32
    return %c0_i32, %c0_i32_0 : i32, i32
  }
  func.func @transform_10(%arg0: i32) -> (i32, i32) {
    %c0_i32 = arith.constant 0 : i32
    %c0_i32_0 = arith.constant 0 : i32
    %c0_i32_1 = arith.constant 0 : i32
    return %c0_i32, %c0_i32_0 : i32, i32
  }
  func.func @transform_11(%arg0: i32) -> (i32, i32) {
    %c0_i32 = arith.constant 0 : i32
    %c0_i32_0 = arith.constant 0 : i32
    %c0_i32_1 = arith.constant 0 : i32
    return %c0_i32, %c0_i32_0 : i32, i32
  }
  func.func @transform_12(%arg0: i32) -> (i32, i32) {
    %c0_i32 = arith.constant 0 : i32
    %c0_i32_0 = arith.constant 0 : i32
    %c0_i32_1 = arith.constant 0 : i32
    return %c0_i32, %c0_i32_0 : i32, i32
  }
  func.func @transform_13(%arg0: i32) -> (i32, i32) {
    %c0_i32 = arith.constant 0 : i32
    %c0_i32_0 = arith.constant 0 : i32
    %c0_i32_1 = arith.constant 0 : i32
    return %c0_i32, %c0_i32_0 : i32, i32
  }
  func.func @transform_14(%arg0: i32) -> (i32, i32) {
    %c0_i32 = arith.constant 0 : i32
    %c0_i32_0 = arith.constant 0 : i32
    %c0_i32_1 = arith.constant 0 : i32
    return %c0_i32, %c0_i32_0 : i32, i32
  }
  func.func @transform_15(%arg0: i32) -> (i32, i32) {
    %c0_i32 = arith.constant 0 : i32
    %c0_i32_0 = arith.constant 0 : i32
    %c0_i32_1 = arith.constant 0 : i32
    return %c0_i32, %c0_i32_0 : i32, i32
  }
  func.func @transform_16(%arg0: i32) -> (i32, i32) {
    %c0_i32 = arith.constant 0 : i32
    %c0_i32_0 = arith.constant 0 : i32
    %c0_i32_1 = arith.constant 0 : i32
    return %c0_i32, %c0_i32_0 : i32, i32
  }
  func.func @transform_17(%arg0: i32) -> (i32, i32) {
    %c0_i32 = arith.constant 0 : i32
    %c0_i32_0 = arith.constant 0 : i32
    %c0_i32_1 = arith.constant 0 : i32
    return %c0_i32, %c0_i32_0 : i32, i32
  }
  func.func @transform_18(%arg0: i32) -> (i32, i32) {
    %c0_i32 = arith.constant 0 : i32
    %c0_i32_0 = arith.constant 0 : i32
    %c0_i32_1 = arith.constant 0 : i32
    return %c0_i32, %c0_i32_0 : i32, i32
  }
  func.func @transform_19(%arg0: i32) -> (i32, i32) {
    %c0_i32 = arith.constant 0 : i32
    %c0_i32_0 = arith.constant 0 : i32
    %c0_i32_1 = arith.constant 0 : i32
    return %c0_i32, %c0_i32_0 : i32, i32
  }
  func.func @transform_20(%arg0: i32) -> (i32, i32) {
    %c0_i32 = arith.constant 0 : i32
    %c0_i32_0 = arith.constant 0 : i32
    %c0_i32_1 = arith.constant 0 : i32
    return %c0_i32, %c0_i32_0 : i32, i32
  }
  func.func @transform_21(%arg0: i32) -> (i32, i32) {
    %c0_i32 = arith.constant 0 : i32
    %c0_i32_0 = arith.constant 0 : i32
    %c0_i32_1 = arith.constant 0 : i32
    return %c0_i32, %c0_i32_0 : i32, i32
  }
  func.func @transform_22(%arg0: i32) -> (i32, i32) {
    %c0_i32 = arith.constant 0 : i32
    %c0_i32_0 = arith.constant 0 : i32
    %c0_i32_1 = arith.constant 0 : i32
    return %c0_i32, %c0_i32_0 : i32, i32
  }
  func.func @transform_23(%arg0: i32) -> (i32, i32) {
    %c0_i32 = arith.constant 0 : i32
    %c0_i32_0 = arith.constant 0 : i32
    %c0_i32_1 = arith.constant 0 : i32
    return %c0_i32, %c0_i32_0 : i32, i32
  }
  func.func @transform_24(%arg0: i32) -> (i32, i32) {
    %c0_i32 = arith.constant 0 : i32
    %c0_i32_0 = arith.constant 0 : i32
    %c0_i32_1 = arith.constant 0 : i32
    return %c0_i32, %c0_i32_0 : i32, i32
  }
  func.func @transform_25(%arg0: i32) -> (i32, i32) {
    %c0_i32 = arith.constant 0 : i32
    %c0_i32_0 = arith.constant 0 : i32
    %c0_i32_1 = arith.constant 0 : i32
    return %c0_i32, %c0_i32_0 : i32, i32
  }
  func.func @transform_26(%arg0: i32) -> (i32, i32) {
    %c0_i32 = arith.constant 0 : i32
    %c0_i32_0 = arith.constant 0 : i32
    return %arg0, %c0_i32 : i32, i32
  }
}

module attributes {stable_mosaic.version = 11 : i64} {
  func.func @_decoder_kernel_body(%arg0: i32, %arg1: memref<8x128xf32, #tpu.memory_space<vmem>>, %arg2: memref<8x128xf32, #tpu.memory_space<vmem>>, %arg3: memref<1x1x8xf32, #tpu.memory_space<vmem>>, %arg4: memref<2x8xi32, #tpu.memory_space<smem>>, %arg5: memref<1x128xf32, #tpu.memory_space<vmem>>, %arg6: memref<1x128xf32, #tpu.memory_space<vmem>>, %arg7: memref<1x128xf32, #tpu.memory_space<vmem>>, %arg8: memref<1x128xf32, #tpu.memory_space<vmem>>, %arg9: memref<128x384xbf16, #tpu.memory_space<vmem>>, %arg10: memref<1x384xf32, #tpu.memory_space<vmem>>, %arg11: memref<128x128xbf16, #tpu.memory_space<vmem>>, %arg12: memref<1x128xf32, #tpu.memory_space<vmem>>, %arg13: memref<128x32xbf16, #tpu.memory_space<vmem>>, %arg14: memref<1x32xf32, #tpu.memory_space<vmem>>, %arg15: memref<32x128xbf16, #tpu.memory_space<vmem>>, %arg16: memref<1x128xf32, #tpu.memory_space<vmem>>, %arg17: memref<1x128xf32, #tpu.memory_space<vmem>>, %arg18: memref<1x128xf32, #tpu.memory_space<vmem>>, %arg19: memref<128x128xbf16, #tpu.memory_space<vmem>>, %arg20: memref<1x128xf32, #tpu.memory_space<vmem>>, %arg21: memref<128x256xbf16, #tpu.memory_space<vmem>>, %arg22: memref<1x256xf32, #tpu.memory_space<vmem>>, %arg23: memref<128x128xbf16, #tpu.memory_space<vmem>>, %arg24: memref<1x128xf32, #tpu.memory_space<vmem>>, %arg25: memref<1x128xf32, #tpu.memory_space<vmem>>, %arg26: memref<1x128xf32, #tpu.memory_space<vmem>>, %arg27: memref<128x256xbf16, #tpu.memory_space<vmem>>, %arg28: memref<1x256xf32, #tpu.memory_space<vmem>>, %arg29: memref<256x128xbf16, #tpu.memory_space<vmem>>, %arg30: memref<1x128xf32, #tpu.memory_space<vmem>>, %arg31: memref<128x32xbf16, #tpu.memory_space<vmem>>, %arg32: memref<1x32xf32, #tpu.memory_space<vmem>>, %arg33: memref<32x128xbf16, #tpu.memory_space<vmem>>, %arg34: memref<1x128xf32, #tpu.memory_space<vmem>>, %arg35: memref<1x128xf32, #tpu.memory_space<vmem>>, %arg36: memref<1x128xf32, #tpu.memory_space<vmem>>, %arg37: memref<128x256xbf16, #tpu.memory_space<vmem>>, %arg38: memref<1x256xf32, #tpu.memory_space<vmem>>, %arg39: memref<8x256xf32, #tpu.memory_space<vmem>>, %arg40: memref<8x128xf32, #tpu.memory_space<vmem>>) attributes {dimension_semantics = [#tpu.dimension_semantics<parallel>], iteration_bounds = array<i64: 2>, scalar_prefetch = 0 : i64, scratch_operands = 0 : i64, tpu.core_type = #tpu.core_type<tc>, window_params = [{transform_indices = @transform_0, window_bounds = array<i64: 8, 128>}, {transform_indices = @transform_1, window_bounds = array<i64: 8, 128>}, {transform_indices = @transform_2, window_bounds = array<i64: 1, 1, 8>}, {transform_indices = @transform_3, window_bounds = array<i64: 2, 8>}, {pipeline_mode = #tpu.pipeline_mode<synchronous>, transform_indices = @transform_4, window_bounds = array<i64: 1, 128>}, {pipeline_mode = #tpu.pipeline_mode<synchronous>, transform_indices = @transform_5, window_bounds = array<i64: 1, 128>}, {pipeline_mode = #tpu.pipeline_mode<synchronous>, transform_indices = @transform_6, window_bounds = array<i64: 1, 128>}, {pipeline_mode = #tpu.pipeline_mode<synchronous>, transform_indices = @transform_7, window_bounds = array<i64: 1, 128>}, {pipeline_mode = #tpu.pipeline_mode<synchronous>, transform_indices = @transform_8, window_bounds = array<i64: 128, 384>}, {pipeline_mode = #tpu.pipeline_mode<synchronous>, transform_indices = @transform_9, window_bounds = array<i64: 1, 384>}, {pipeline_mode = #tpu.pipeline_mode<synchronous>, transform_indices = @transform_10, window_bounds = array<i64: 128, 128>}, {pipeline_mode = #tpu.pipeline_mode<synchronous>, transform_indices = @transform_11, window_bounds = array<i64: 1, 128>}, {pipeline_mode = #tpu.pipeline_mode<synchronous>, transform_indices = @transform_12, window_bounds = array<i64: 128, 32>}, {pipeline_mode = #tpu.pipeline_mode<synchronous>, transform_indices = @transform_13, window_bounds = array<i64: 1, 32>}, {pipeline_mode = #tpu.pipeline_mode<synchronous>, transform_indices = @transform_14, window_bounds = array<i64: 32, 128>}, {pipeline_mode = #tpu.pipeline_mode<synchronous>, transform_indices = @transform_15, window_bounds = array<i64: 1, 128>}, {pipeline_mode = #tpu.pipeline_mode<synchronous>, transform_indices = @transform_16, window_bounds = array<i64: 1, 128>}, {pipeline_mode = #tpu.pipeline_mode<synchronous>, transform_indices = @transform_17, window_bounds = array<i64: 1, 128>}, {pipeline_mode = #tpu.pipeline_mode<synchronous>, transform_indices = @transform_18, window_bounds = array<i64: 128, 128>}, {pipeline_mode = #tpu.pipeline_mode<synchronous>, transform_indices = @transform_19, window_bounds = array<i64: 1, 128>}, {pipeline_mode = #tpu.pipeline_mode<synchronous>, transform_indices = @transform_20, window_bounds = array<i64: 128, 256>}, {pipeline_mode = #tpu.pipeline_mode<synchronous>, transform_indices = @transform_21, window_bounds = array<i64: 1, 256>}, {pipeline_mode = #tpu.pipeline_mode<synchronous>, transform_indices = @transform_22, window_bounds = array<i64: 128, 128>}, {pipeline_mode = #tpu.pipeline_mode<synchronous>, transform_indices = @transform_23, window_bounds = array<i64: 1, 128>}, {pipeline_mode = #tpu.pipeline_mode<synchronous>, transform_indices = @transform_24, window_bounds = array<i64: 1, 128>}, {pipeline_mode = #tpu.pipeline_mode<synchronous>, transform_indices = @transform_25, window_bounds = array<i64: 1, 128>}, {pipeline_mode = #tpu.pipeline_mode<synchronous>, transform_indices = @transform_26, window_bounds = array<i64: 128, 256>}, {pipeline_mode = #tpu.pipeline_mode<synchronous>, transform_indices = @transform_27, window_bounds = array<i64: 1, 256>}, {pipeline_mode = #tpu.pipeline_mode<synchronous>, transform_indices = @transform_28, window_bounds = array<i64: 256, 128>}, {pipeline_mode = #tpu.pipeline_mode<synchronous>, transform_indices = @transform_29, window_bounds = array<i64: 1, 128>}, {pipeline_mode = #tpu.pipeline_mode<synchronous>, transform_indices = @transform_30, window_bounds = array<i64: 128, 32>}, {pipeline_mode = #tpu.pipeline_mode<synchronous>, transform_indices = @transform_31, window_bounds = array<i64: 1, 32>}, {pipeline_mode = #tpu.pipeline_mode<synchronous>, transform_indices = @transform_32, window_bounds = array<i64: 32, 128>}, {pipeline_mode = #tpu.pipeline_mode<synchronous>, transform_indices = @transform_33, window_bounds = array<i64: 1, 128>}, {pipeline_mode = #tpu.pipeline_mode<synchronous>, transform_indices = @transform_34, window_bounds = array<i64: 1, 128>}, {pipeline_mode = #tpu.pipeline_mode<synchronous>, transform_indices = @transform_35, window_bounds = array<i64: 1, 128>}, {pipeline_mode = #tpu.pipeline_mode<synchronous>, transform_indices = @transform_36, window_bounds = array<i64: 128, 256>}, {pipeline_mode = #tpu.pipeline_mode<synchronous>, transform_indices = @transform_37, window_bounds = array<i64: 1, 256>}, {transform_indices = @transform_38, window_bounds = array<i64: 8, 256>}, {transform_indices = @transform_39, window_bounds = array<i64: 8, 128>}]} {
    %c0 = arith.constant 0 : index
    %c0_0 = arith.constant 0 : index
    %c0_1 = arith.constant 0 : index
    %0 = vector.load %arg3[%c0, %c0_0, %c0_1] : memref<1x1x8xf32, #tpu.memory_space<vmem>>, vector<1x1x8xf32>
    %1 = vector.shape_cast %0 : vector<1x1x8xf32> to vector<1x8xf32>
    %cst = arith.constant 1.000000e+00 : f32
    %2 = vector.broadcast %cst : f32 to vector<1x8xf32>
    %3 = arith.subf %1, %2 : vector<1x8xf32>
    %cst_2 = arith.constant 1.000000e+09 : f32
    %4 = vector.broadcast %cst_2 : f32 to vector<1x8xf32>
    %5 = arith.mulf %3, %4 : vector<1x8xf32>
    %6 = tpu.iota {dimensions = array<i32: 0>} : vector<8x8xi32>
    %7 = tpu.iota {dimensions = array<i32: 1>} : vector<8x8xi32>
    %8 = arith.cmpi sge, %6, %7 : vector<8x8xi32>
    %cst_3 = arith.constant 0.000000e+00 : f32
    %cst_4 = arith.constant -1.000000e+09 : f32
    %9 = vector.broadcast %cst_3 : f32 to vector<8x8xf32>
    %10 = vector.broadcast %cst_4 : f32 to vector<8x8xf32>
    %11 = arith.select %8, %9, %10 : vector<8x8xi1>, vector<8x8xf32>
    %c0_5 = arith.constant 0 : index
    %c0_6 = arith.constant 0 : index
    %12 = vector.load %arg2[%c0_5, %c0_6] : memref<8x128xf32, #tpu.memory_space<vmem>>, vector<8x128xf32>
    %c0_7 = arith.constant 0 : index
    %c0_8 = arith.constant 0 : index
    %13 = vector.load %arg1[%c0_7, %c0_8] : memref<8x128xf32, #tpu.memory_space<vmem>>, vector<8x128xf32>
    %c0_9 = arith.constant 0 : index
    %c0_10 = arith.constant 0 : index
    %14 = vector.load %arg5[%c0_9, %c0_10] : memref<1x128xf32, #tpu.memory_space<vmem>>, vector<1x128xf32>
    %c0_11 = arith.constant 0 : index
    %c0_12 = arith.constant 0 : index
    %15 = vector.load %arg6[%c0_11, %c0_12] : memref<1x128xf32, #tpu.memory_space<vmem>>, vector<1x128xf32>
    %cst_13 = arith.constant dense<0.000000e+00> : vector<8xf32>
    %16 = vector.multi_reduction <add>, %13, %cst_13 [1] : vector<8x128xf32> to vector<8xf32>
    %17 = vector.shape_cast %16 : vector<8xf32> to vector<8x1xf32>
    %cst_14 = arith.constant 1.280000e+02 : f32
    %18 = vector.broadcast %cst_14 : f32 to vector<8x1xf32>
    %19 = arith.divf %17, %18 : vector<8x1xf32>
    %20 = vector.broadcast %19 : vector<8x1xf32> to vector<8x128xf32>
    %21 = arith.subf %13, %20 : vector<8x128xf32>
    %22 = arith.mulf %21, %21 : vector<8x128xf32>
    %cst_15 = arith.constant dense<0.000000e+00> : vector<8xf32>
    %23 = vector.multi_reduction <add>, %22, %cst_15 [1] : vector<8x128xf32> to vector<8xf32>
    %24 = vector.shape_cast %23 : vector<8xf32> to vector<8x1xf32>
    %cst_16 = arith.constant 1.280000e+02 : f32
    %25 = vector.broadcast %cst_16 : f32 to vector<8x1xf32>
    %26 = arith.divf %24, %25 : vector<8x1xf32>
    %27 = vector.broadcast %19 : vector<8x1xf32> to vector<8x128xf32>
    %28 = arith.subf %13, %27 : vector<8x128xf32>
    %cst_17 = arith.constant 9.99999974E-6 : f32
    %29 = vector.broadcast %cst_17 : f32 to vector<8x1xf32>
    %30 = arith.addf %26, %29 : vector<8x1xf32>
    %31 = math.rsqrt %30 : vector<8x1xf32>
    %32 = vector.broadcast %31 : vector<8x1xf32> to vector<8x128xf32>
    %33 = arith.mulf %28, %32 : vector<8x128xf32>
    %34 = vector.broadcast %14 : vector<1x128xf32> to vector<8x128xf32>
    %35 = arith.mulf %33, %34 : vector<8x128xf32>
    %36 = vector.broadcast %15 : vector<1x128xf32> to vector<8x128xf32>
    %37 = arith.addf %35, %36 : vector<8x128xf32>
    %c0_18 = arith.constant 0 : index
    %c0_19 = arith.constant 0 : index
    %38 = vector.load %arg7[%c0_18, %c0_19] : memref<1x128xf32, #tpu.memory_space<vmem>>, vector<1x128xf32>
    %c0_20 = arith.constant 0 : index
    %c0_21 = arith.constant 0 : index
    %39 = vector.load %arg8[%c0_20, %c0_21] : memref<1x128xf32, #tpu.memory_space<vmem>>, vector<1x128xf32>
    %cst_22 = arith.constant dense<0.000000e+00> : vector<8xf32>
    %40 = vector.multi_reduction <add>, %37, %cst_22 [1] : vector<8x128xf32> to vector<8xf32>
    %41 = vector.shape_cast %40 : vector<8xf32> to vector<8x1xf32>
    %cst_23 = arith.constant 1.280000e+02 : f32
    %42 = vector.broadcast %cst_23 : f32 to vector<8x1xf32>
    %43 = arith.divf %41, %42 : vector<8x1xf32>
    %44 = vector.broadcast %43 : vector<8x1xf32> to vector<8x128xf32>
    %45 = arith.subf %37, %44 : vector<8x128xf32>
    %46 = arith.mulf %45, %45 : vector<8x128xf32>
    %cst_24 = arith.constant dense<0.000000e+00> : vector<8xf32>
    %47 = vector.multi_reduction <add>, %46, %cst_24 [1] : vector<8x128xf32> to vector<8xf32>
    %48 = vector.shape_cast %47 : vector<8xf32> to vector<8x1xf32>
    %cst_25 = arith.constant 1.280000e+02 : f32
    %49 = vector.broadcast %cst_25 : f32 to vector<8x1xf32>
    %50 = arith.divf %48, %49 : vector<8x1xf32>
    %51 = vector.broadcast %43 : vector<8x1xf32> to vector<8x128xf32>
    %52 = arith.subf %37, %51 : vector<8x128xf32>
    %cst_26 = arith.constant 9.99999974E-6 : f32
    %53 = vector.broadcast %cst_26 : f32 to vector<8x1xf32>
    %54 = arith.addf %50, %53 : vector<8x1xf32>
    %55 = math.rsqrt %54 : vector<8x1xf32>
    %56 = vector.broadcast %55 : vector<8x1xf32> to vector<8x128xf32>
    %57 = arith.mulf %52, %56 : vector<8x128xf32>
    %58 = vector.broadcast %38 : vector<1x128xf32> to vector<8x128xf32>
    %59 = arith.mulf %57, %58 : vector<8x128xf32>
    %60 = vector.broadcast %39 : vector<1x128xf32> to vector<8x128xf32>
    %61 = arith.addf %59, %60 : vector<8x128xf32>
    %c0_27 = arith.constant 0 : index
    %c0_28 = arith.constant 0 : index
    %62 = vector.load %arg9[%c0_27, %c0_28] : memref<128x384xbf16, #tpu.memory_space<vmem>>, vector<128x384xbf16>
    %63 = arith.truncf %61 : vector<8x128xf32> to vector<8x128xbf16>
    %cst_29 = arith.constant dense<0.000000e+00> : vector<8x384xf32>
    %64 = tpu.matmul %63, %62, %cst_29 {dimension_numbers = #tpu.dot_dimension_numbers<[1], [0], [0], [1], [0, 0, 1, 1], [], []>} : vector<8x128xbf16>, vector<128x384xbf16>, vector<8x384xf32> -> vector<8x384xf32>
    %c0_30 = arith.constant 0 : index
    %c0_31 = arith.constant 0 : index
    %65 = vector.load %arg10[%c0_30, %c0_31] : memref<1x384xf32, #tpu.memory_space<vmem>>, vector<1x384xf32>
    %66 = vector.broadcast %65 : vector<1x384xf32> to vector<8x384xf32>
    %67 = arith.addf %64, %66 : vector<8x384xf32>
    %68 = vector.extract_strided_slice %67 {offsets = [0, 0], sizes = [8, 128], strides = [1, 1]} : vector<8x384xf32> to vector<8x128xf32>
    %69 = vector.extract_strided_slice %67 {offsets = [0, 128], sizes = [8, 128], strides = [1, 1]} : vector<8x384xf32> to vector<8x128xf32>
    %70 = vector.extract_strided_slice %67 {offsets = [0, 256], sizes = [8, 128], strides = [1, 1]} : vector<8x384xf32> to vector<8x128xf32>
    %c0_32 = arith.constant 0 : index
    %c0_33 = arith.constant 0 : index
    %71 = vector.load %arg11[%c0_32, %c0_33] : memref<128x128xbf16, #tpu.memory_space<vmem>>, vector<128x128xbf16>
    %c0_34 = arith.constant 0 : index
    %c0_35 = arith.constant 0 : index
    %72 = vector.load %arg12[%c0_34, %c0_35] : memref<1x128xf32, #tpu.memory_space<vmem>>, vector<1x128xf32>
    %73 = vector.extract_strided_slice %68 {offsets = [0, 0], sizes = [8, 32], strides = [1, 1]} : vector<8x128xf32> to vector<8x32xf32>
    %74 = arith.truncf %73 : vector<8x32xf32> to vector<8x32xbf16>
    %75 = vector.extract_strided_slice %69 {offsets = [0, 0], sizes = [8, 32], strides = [1, 1]} : vector<8x128xf32> to vector<8x32xf32>
    %76 = arith.truncf %75 : vector<8x32xf32> to vector<8x32xbf16>
    %77 = vector.extract_strided_slice %70 {offsets = [0, 0], sizes = [8, 32], strides = [1, 1]} : vector<8x128xf32> to vector<8x32xf32>
    %78 = arith.truncf %77 : vector<8x32xf32> to vector<8x32xbf16>
    %cst_36 = arith.constant dense<0.000000e+00> : vector<8x8xf32>
    %79 = tpu.matmul %74, %76, %cst_36 {dimension_numbers = #tpu.dot_dimension_numbers<[1], [1], [0], [0], [0, 0, 1, 0], [], []>} : vector<8x32xbf16>, vector<8x32xbf16>, vector<8x8xf32> -> vector<8x8xf32>
    %cst_37 = arith.constant 0.176776692 : f32
    %80 = vector.broadcast %cst_37 : f32 to vector<8x8xf32>
    %81 = arith.mulf %79, %80 : vector<8x8xf32>
    %82 = arith.addf %81, %11 : vector<8x8xf32>
    %cst_38 = arith.constant dense<0xFF800000> : vector<8xf32>
    %83 = vector.multi_reduction <maximumf>, %82, %cst_38 [1] : vector<8x8xf32> to vector<8xf32>
    %84 = vector.shape_cast %83 : vector<8xf32> to vector<8x1xf32>
    %85 = vector.broadcast %84 : vector<8x1xf32> to vector<8x8xf32>
    %86 = arith.subf %82, %85 : vector<8x8xf32>
    %87 = math.exp %86 : vector<8x8xf32>
    %cst_39 = arith.constant dense<0.000000e+00> : vector<8xf32>
    %88 = vector.multi_reduction <add>, %87, %cst_39 [1] : vector<8x8xf32> to vector<8xf32>
    %89 = vector.shape_cast %88 : vector<8xf32> to vector<8x1xf32>
    %90 = tpu.reciprocal %89 {approx = true} : vector<8x1xf32> -> vector<8x1xf32>
    %91 = vector.broadcast %90 : vector<8x1xf32> to vector<8x8xf32>
    %92 = arith.mulf %87, %91 : vector<8x8xf32>
    %93 = arith.truncf %92 : vector<8x8xf32> to vector<8x8xbf16>
    %cst_40 = arith.constant dense<0.000000e+00> : vector<8x32xf32>
    %94 = tpu.matmul %93, %78, %cst_40 {dimension_numbers = #tpu.dot_dimension_numbers<[1], [0], [0], [1], [0, 0, 1, 1], [], []>} : vector<8x8xbf16>, vector<8x32xbf16>, vector<8x32xf32> -> vector<8x32xf32>
    %95 = vector.extract_strided_slice %71 {offsets = [0, 0], sizes = [32, 128], strides = [1, 1]} : vector<128x128xbf16> to vector<32x128xbf16>
    %96 = arith.truncf %94 : vector<8x32xf32> to vector<8x32xbf16>
    %cst_41 = arith.constant dense<0.000000e+00> : vector<8x128xf32>
    %97 = tpu.matmul %96, %95, %cst_41 {dimension_numbers = #tpu.dot_dimension_numbers<[1], [0], [0], [1], [0, 0, 1, 1], [], []>} : vector<8x32xbf16>, vector<32x128xbf16>, vector<8x128xf32> -> vector<8x128xf32>
    %98 = vector.extract_strided_slice %68 {offsets = [0, 32], sizes = [8, 32], strides = [1, 1]} : vector<8x128xf32> to vector<8x32xf32>
    %99 = arith.truncf %98 : vector<8x32xf32> to vector<8x32xbf16>
    %100 = vector.extract_strided_slice %69 {offsets = [0, 32], sizes = [8, 32], strides = [1, 1]} : vector<8x128xf32> to vector<8x32xf32>
    %101 = arith.truncf %100 : vector<8x32xf32> to vector<8x32xbf16>
    %102 = vector.extract_strided_slice %70 {offsets = [0, 32], sizes = [8, 32], strides = [1, 1]} : vector<8x128xf32> to vector<8x32xf32>
    %103 = arith.truncf %102 : vector<8x32xf32> to vector<8x32xbf16>
    %cst_42 = arith.constant dense<0.000000e+00> : vector<8x8xf32>
    %104 = tpu.matmul %99, %101, %cst_42 {dimension_numbers = #tpu.dot_dimension_numbers<[1], [1], [0], [0], [0, 0, 1, 0], [], []>} : vector<8x32xbf16>, vector<8x32xbf16>, vector<8x8xf32> -> vector<8x8xf32>
    %cst_43 = arith.constant 0.176776692 : f32
    %105 = vector.broadcast %cst_43 : f32 to vector<8x8xf32>
    %106 = arith.mulf %104, %105 : vector<8x8xf32>
    %107 = arith.addf %106, %11 : vector<8x8xf32>
    %cst_44 = arith.constant dense<0xFF800000> : vector<8xf32>
    %108 = vector.multi_reduction <maximumf>, %107, %cst_44 [1] : vector<8x8xf32> to vector<8xf32>
    %109 = vector.shape_cast %108 : vector<8xf32> to vector<8x1xf32>
    %110 = vector.broadcast %109 : vector<8x1xf32> to vector<8x8xf32>
    %111 = arith.subf %107, %110 : vector<8x8xf32>
    %112 = math.exp %111 : vector<8x8xf32>
    %cst_45 = arith.constant dense<0.000000e+00> : vector<8xf32>
    %113 = vector.multi_reduction <add>, %112, %cst_45 [1] : vector<8x8xf32> to vector<8xf32>
    %114 = vector.shape_cast %113 : vector<8xf32> to vector<8x1xf32>
    %115 = tpu.reciprocal %114 {approx = true} : vector<8x1xf32> -> vector<8x1xf32>
    %116 = vector.broadcast %115 : vector<8x1xf32> to vector<8x8xf32>
    %117 = arith.mulf %112, %116 : vector<8x8xf32>
    %118 = arith.truncf %117 : vector<8x8xf32> to vector<8x8xbf16>
    %cst_46 = arith.constant dense<0.000000e+00> : vector<8x32xf32>
    %119 = tpu.matmul %118, %103, %cst_46 {dimension_numbers = #tpu.dot_dimension_numbers<[1], [0], [0], [1], [0, 0, 1, 1], [], []>} : vector<8x8xbf16>, vector<8x32xbf16>, vector<8x32xf32> -> vector<8x32xf32>
    %120 = vector.extract_strided_slice %71 {offsets = [32, 0], sizes = [32, 128], strides = [1, 1]} : vector<128x128xbf16> to vector<32x128xbf16>
    %121 = arith.truncf %119 : vector<8x32xf32> to vector<8x32xbf16>
    %cst_47 = arith.constant dense<0.000000e+00> : vector<8x128xf32>
    %122 = tpu.matmul %121, %120, %cst_47 {dimension_numbers = #tpu.dot_dimension_numbers<[1], [0], [0], [1], [0, 0, 1, 1], [], []>} : vector<8x32xbf16>, vector<32x128xbf16>, vector<8x128xf32> -> vector<8x128xf32>
    %123 = arith.addf %97, %122 : vector<8x128xf32>
    %124 = vector.extract_strided_slice %68 {offsets = [0, 64], sizes = [8, 32], strides = [1, 1]} : vector<8x128xf32> to vector<8x32xf32>
    %125 = arith.truncf %124 : vector<8x32xf32> to vector<8x32xbf16>
    %126 = vector.extract_strided_slice %69 {offsets = [0, 64], sizes = [8, 32], strides = [1, 1]} : vector<8x128xf32> to vector<8x32xf32>
    %127 = arith.truncf %126 : vector<8x32xf32> to vector<8x32xbf16>
    %128 = vector.extract_strided_slice %70 {offsets = [0, 64], sizes = [8, 32], strides = [1, 1]} : vector<8x128xf32> to vector<8x32xf32>
    %129 = arith.truncf %128 : vector<8x32xf32> to vector<8x32xbf16>
    %cst_48 = arith.constant dense<0.000000e+00> : vector<8x8xf32>
    %130 = tpu.matmul %125, %127, %cst_48 {dimension_numbers = #tpu.dot_dimension_numbers<[1], [1], [0], [0], [0, 0, 1, 0], [], []>} : vector<8x32xbf16>, vector<8x32xbf16>, vector<8x8xf32> -> vector<8x8xf32>
    %cst_49 = arith.constant 0.176776692 : f32
    %131 = vector.broadcast %cst_49 : f32 to vector<8x8xf32>
    %132 = arith.mulf %130, %131 : vector<8x8xf32>
    %133 = arith.addf %132, %11 : vector<8x8xf32>
    %cst_50 = arith.constant dense<0xFF800000> : vector<8xf32>
    %134 = vector.multi_reduction <maximumf>, %133, %cst_50 [1] : vector<8x8xf32> to vector<8xf32>
    %135 = vector.shape_cast %134 : vector<8xf32> to vector<8x1xf32>
    %136 = vector.broadcast %135 : vector<8x1xf32> to vector<8x8xf32>
    %137 = arith.subf %133, %136 : vector<8x8xf32>
    %138 = math.exp %137 : vector<8x8xf32>
    %cst_51 = arith.constant dense<0.000000e+00> : vector<8xf32>
    %139 = vector.multi_reduction <add>, %138, %cst_51 [1] : vector<8x8xf32> to vector<8xf32>
    %140 = vector.shape_cast %139 : vector<8xf32> to vector<8x1xf32>
    %141 = tpu.reciprocal %140 {approx = true} : vector<8x1xf32> -> vector<8x1xf32>
    %142 = vector.broadcast %141 : vector<8x1xf32> to vector<8x8xf32>
    %143 = arith.mulf %138, %142 : vector<8x8xf32>
    %144 = arith.truncf %143 : vector<8x8xf32> to vector<8x8xbf16>
    %cst_52 = arith.constant dense<0.000000e+00> : vector<8x32xf32>
    %145 = tpu.matmul %144, %129, %cst_52 {dimension_numbers = #tpu.dot_dimension_numbers<[1], [0], [0], [1], [0, 0, 1, 1], [], []>} : vector<8x8xbf16>, vector<8x32xbf16>, vector<8x32xf32> -> vector<8x32xf32>
    %146 = vector.extract_strided_slice %71 {offsets = [64, 0], sizes = [32, 128], strides = [1, 1]} : vector<128x128xbf16> to vector<32x128xbf16>
    %147 = arith.truncf %145 : vector<8x32xf32> to vector<8x32xbf16>
    %cst_53 = arith.constant dense<0.000000e+00> : vector<8x128xf32>
    %148 = tpu.matmul %147, %146, %cst_53 {dimension_numbers = #tpu.dot_dimension_numbers<[1], [0], [0], [1], [0, 0, 1, 1], [], []>} : vector<8x32xbf16>, vector<32x128xbf16>, vector<8x128xf32> -> vector<8x128xf32>
    %149 = arith.addf %123, %148 : vector<8x128xf32>
    %150 = vector.extract_strided_slice %68 {offsets = [0, 96], sizes = [8, 32], strides = [1, 1]} : vector<8x128xf32> to vector<8x32xf32>
    %151 = arith.truncf %150 : vector<8x32xf32> to vector<8x32xbf16>
    %152 = vector.extract_strided_slice %69 {offsets = [0, 96], sizes = [8, 32], strides = [1, 1]} : vector<8x128xf32> to vector<8x32xf32>
    %153 = arith.truncf %152 : vector<8x32xf32> to vector<8x32xbf16>
    %154 = vector.extract_strided_slice %70 {offsets = [0, 96], sizes = [8, 32], strides = [1, 1]} : vector<8x128xf32> to vector<8x32xf32>
    %155 = arith.truncf %154 : vector<8x32xf32> to vector<8x32xbf16>
    %cst_54 = arith.constant dense<0.000000e+00> : vector<8x8xf32>
    %156 = tpu.matmul %151, %153, %cst_54 {dimension_numbers = #tpu.dot_dimension_numbers<[1], [1], [0], [0], [0, 0, 1, 0], [], []>} : vector<8x32xbf16>, vector<8x32xbf16>, vector<8x8xf32> -> vector<8x8xf32>
    %cst_55 = arith.constant 0.176776692 : f32
    %157 = vector.broadcast %cst_55 : f32 to vector<8x8xf32>
    %158 = arith.mulf %156, %157 : vector<8x8xf32>
    %159 = arith.addf %158, %11 : vector<8x8xf32>
    %cst_56 = arith.constant dense<0xFF800000> : vector<8xf32>
    %160 = vector.multi_reduction <maximumf>, %159, %cst_56 [1] : vector<8x8xf32> to vector<8xf32>
    %161 = vector.shape_cast %160 : vector<8xf32> to vector<8x1xf32>
    %162 = vector.broadcast %161 : vector<8x1xf32> to vector<8x8xf32>
    %163 = arith.subf %159, %162 : vector<8x8xf32>
    %164 = math.exp %163 : vector<8x8xf32>
    %cst_57 = arith.constant dense<0.000000e+00> : vector<8xf32>
    %165 = vector.multi_reduction <add>, %164, %cst_57 [1] : vector<8x8xf32> to vector<8xf32>
    %166 = vector.shape_cast %165 : vector<8xf32> to vector<8x1xf32>
    %167 = tpu.reciprocal %166 {approx = true} : vector<8x1xf32> -> vector<8x1xf32>
    %168 = vector.broadcast %167 : vector<8x1xf32> to vector<8x8xf32>
    %169 = arith.mulf %164, %168 : vector<8x8xf32>
    %170 = arith.truncf %169 : vector<8x8xf32> to vector<8x8xbf16>
    %cst_58 = arith.constant dense<0.000000e+00> : vector<8x32xf32>
    %171 = tpu.matmul %170, %155, %cst_58 {dimension_numbers = #tpu.dot_dimension_numbers<[1], [0], [0], [1], [0, 0, 1, 1], [], []>} : vector<8x8xbf16>, vector<8x32xbf16>, vector<8x32xf32> -> vector<8x32xf32>
    %172 = vector.extract_strided_slice %71 {offsets = [96, 0], sizes = [32, 128], strides = [1, 1]} : vector<128x128xbf16> to vector<32x128xbf16>
    %173 = arith.truncf %171 : vector<8x32xf32> to vector<8x32xbf16>
    %cst_59 = arith.constant dense<0.000000e+00> : vector<8x128xf32>
    %174 = tpu.matmul %173, %172, %cst_59 {dimension_numbers = #tpu.dot_dimension_numbers<[1], [0], [0], [1], [0, 0, 1, 1], [], []>} : vector<8x32xbf16>, vector<32x128xbf16>, vector<8x128xf32> -> vector<8x128xf32>
    %175 = arith.addf %149, %174 : vector<8x128xf32>
    %176 = vector.broadcast %72 : vector<1x128xf32> to vector<8x128xf32>
    %177 = arith.addf %175, %176 : vector<8x128xf32>
    %c0_60 = arith.constant 0 : index
    %c0_61 = arith.constant 0 : index
    %178 = vector.load %arg13[%c0_60, %c0_61] : memref<128x32xbf16, #tpu.memory_space<vmem>>, vector<128x32xbf16>
    %c0_62 = arith.constant 0 : index
    %c0_63 = arith.constant 0 : index
    %179 = vector.load %arg14[%c0_62, %c0_63] : memref<1x32xf32, #tpu.memory_space<vmem>>, vector<1x32xf32>
    %c0_64 = arith.constant 0 : index
    %c0_65 = arith.constant 0 : index
    %180 = vector.load %arg15[%c0_64, %c0_65] : memref<32x128xbf16, #tpu.memory_space<vmem>>, vector<32x128xbf16>
    %c0_66 = arith.constant 0 : index
    %c0_67 = arith.constant 0 : index
    %181 = vector.load %arg16[%c0_66, %c0_67] : memref<1x128xf32, #tpu.memory_space<vmem>>, vector<1x128xf32>
    %182 = arith.truncf %177 : vector<8x128xf32> to vector<8x128xbf16>
    %cst_68 = arith.constant dense<0.000000e+00> : vector<8x32xf32>
    %183 = tpu.matmul %182, %178, %cst_68 {dimension_numbers = #tpu.dot_dimension_numbers<[1], [0], [0], [1], [0, 0, 1, 1], [], []>} : vector<8x128xbf16>, vector<128x32xbf16>, vector<8x32xf32> -> vector<8x32xf32>
    %184 = vector.broadcast %179 : vector<1x32xf32> to vector<8x32xf32>
    %185 = arith.addf %183, %184 : vector<8x32xf32>
    %cst_69 = arith.constant 0.000000e+00 : f32
    %186 = vector.broadcast %cst_69 : f32 to vector<8x32xf32>
    %187 = arith.maximumf %185, %186 : vector<8x32xf32>
    %188 = arith.truncf %187 : vector<8x32xf32> to vector<8x32xbf16>
    %cst_70 = arith.constant dense<0.000000e+00> : vector<8x128xf32>
    %189 = tpu.matmul %188, %180, %cst_70 {dimension_numbers = #tpu.dot_dimension_numbers<[1], [0], [0], [1], [0, 0, 1, 1], [], []>} : vector<8x32xbf16>, vector<32x128xbf16>, vector<8x128xf32> -> vector<8x128xf32>
    %190 = arith.addf %177, %189 : vector<8x128xf32>
    %191 = vector.broadcast %181 : vector<1x128xf32> to vector<8x128xf32>
    %192 = arith.addf %190, %191 : vector<8x128xf32>
    %193 = arith.addf %37, %192 : vector<8x128xf32>
    %c0_71 = arith.constant 0 : index
    %c0_72 = arith.constant 0 : index
    %194 = vector.load %arg17[%c0_71, %c0_72] : memref<1x128xf32, #tpu.memory_space<vmem>>, vector<1x128xf32>
    %c0_73 = arith.constant 0 : index
    %c0_74 = arith.constant 0 : index
    %195 = vector.load %arg18[%c0_73, %c0_74] : memref<1x128xf32, #tpu.memory_space<vmem>>, vector<1x128xf32>
    %cst_75 = arith.constant dense<0.000000e+00> : vector<8xf32>
    %196 = vector.multi_reduction <add>, %193, %cst_75 [1] : vector<8x128xf32> to vector<8xf32>
    %197 = vector.shape_cast %196 : vector<8xf32> to vector<8x1xf32>
    %cst_76 = arith.constant 1.280000e+02 : f32
    %198 = vector.broadcast %cst_76 : f32 to vector<8x1xf32>
    %199 = arith.divf %197, %198 : vector<8x1xf32>
    %200 = vector.broadcast %199 : vector<8x1xf32> to vector<8x128xf32>
    %201 = arith.subf %193, %200 : vector<8x128xf32>
    %202 = arith.mulf %201, %201 : vector<8x128xf32>
    %cst_77 = arith.constant dense<0.000000e+00> : vector<8xf32>
    %203 = vector.multi_reduction <add>, %202, %cst_77 [1] : vector<8x128xf32> to vector<8xf32>
    %204 = vector.shape_cast %203 : vector<8xf32> to vector<8x1xf32>
    %cst_78 = arith.constant 1.280000e+02 : f32
    %205 = vector.broadcast %cst_78 : f32 to vector<8x1xf32>
    %206 = arith.divf %204, %205 : vector<8x1xf32>
    %207 = vector.broadcast %199 : vector<8x1xf32> to vector<8x128xf32>
    %208 = arith.subf %193, %207 : vector<8x128xf32>
    %cst_79 = arith.constant 9.99999974E-6 : f32
    %209 = vector.broadcast %cst_79 : f32 to vector<8x1xf32>
    %210 = arith.addf %206, %209 : vector<8x1xf32>
    %211 = math.rsqrt %210 : vector<8x1xf32>
    %212 = vector.broadcast %211 : vector<8x1xf32> to vector<8x128xf32>
    %213 = arith.mulf %208, %212 : vector<8x128xf32>
    %214 = vector.broadcast %194 : vector<1x128xf32> to vector<8x128xf32>
    %215 = arith.mulf %213, %214 : vector<8x128xf32>
    %216 = vector.broadcast %195 : vector<1x128xf32> to vector<8x128xf32>
    %217 = arith.addf %215, %216 : vector<8x128xf32>
    %c0_80 = arith.constant 0 : index
    %c0_81 = arith.constant 0 : index
    %218 = vector.load %arg19[%c0_80, %c0_81] : memref<128x128xbf16, #tpu.memory_space<vmem>>, vector<128x128xbf16>
    %219 = arith.truncf %217 : vector<8x128xf32> to vector<8x128xbf16>
    %cst_82 = arith.constant dense<0.000000e+00> : vector<8x128xf32>
    %220 = tpu.matmul %219, %218, %cst_82 {dimension_numbers = #tpu.dot_dimension_numbers<[1], [0], [0], [1], [0, 0, 1, 1], [], []>} : vector<8x128xbf16>, vector<128x128xbf16>, vector<8x128xf32> -> vector<8x128xf32>
    %c0_83 = arith.constant 0 : index
    %c0_84 = arith.constant 0 : index
    %221 = vector.load %arg20[%c0_83, %c0_84] : memref<1x128xf32, #tpu.memory_space<vmem>>, vector<1x128xf32>
    %222 = vector.broadcast %221 : vector<1x128xf32> to vector<8x128xf32>
    %223 = arith.addf %220, %222 : vector<8x128xf32>
    %c0_85 = arith.constant 0 : index
    %c0_86 = arith.constant 0 : index
    %224 = vector.load %arg21[%c0_85, %c0_86] : memref<128x256xbf16, #tpu.memory_space<vmem>>, vector<128x256xbf16>
    %225 = arith.truncf %12 : vector<8x128xf32> to vector<8x128xbf16>
    %cst_87 = arith.constant dense<0.000000e+00> : vector<8x256xf32>
    %226 = tpu.matmul %225, %224, %cst_87 {dimension_numbers = #tpu.dot_dimension_numbers<[1], [0], [0], [1], [0, 0, 1, 1], [], []>} : vector<8x128xbf16>, vector<128x256xbf16>, vector<8x256xf32> -> vector<8x256xf32>
    %c0_88 = arith.constant 0 : index
    %c0_89 = arith.constant 0 : index
    %227 = vector.load %arg22[%c0_88, %c0_89] : memref<1x256xf32, #tpu.memory_space<vmem>>, vector<1x256xf32>
    %228 = vector.broadcast %227 : vector<1x256xf32> to vector<8x256xf32>
    %229 = arith.addf %226, %228 : vector<8x256xf32>
    %230 = vector.extract_strided_slice %229 {offsets = [0, 0], sizes = [8, 128], strides = [1, 1]} : vector<8x256xf32> to vector<8x128xf32>
    %231 = vector.extract_strided_slice %229 {offsets = [0, 128], sizes = [8, 128], strides = [1, 1]} : vector<8x256xf32> to vector<8x128xf32>
    %c0_90 = arith.constant 0 : index
    %c0_91 = arith.constant 0 : index
    %232 = vector.load %arg23[%c0_90, %c0_91] : memref<128x128xbf16, #tpu.memory_space<vmem>>, vector<128x128xbf16>
    %c0_92 = arith.constant 0 : index
    %c0_93 = arith.constant 0 : index
    %233 = vector.load %arg24[%c0_92, %c0_93] : memref<1x128xf32, #tpu.memory_space<vmem>>, vector<1x128xf32>
    %234 = vector.extract_strided_slice %223 {offsets = [0, 0], sizes = [8, 32], strides = [1, 1]} : vector<8x128xf32> to vector<8x32xf32>
    %235 = arith.truncf %234 : vector<8x32xf32> to vector<8x32xbf16>
    %236 = vector.extract_strided_slice %230 {offsets = [0, 0], sizes = [8, 32], strides = [1, 1]} : vector<8x128xf32> to vector<8x32xf32>
    %237 = arith.truncf %236 : vector<8x32xf32> to vector<8x32xbf16>
    %238 = vector.extract_strided_slice %231 {offsets = [0, 0], sizes = [8, 32], strides = [1, 1]} : vector<8x128xf32> to vector<8x32xf32>
    %239 = arith.truncf %238 : vector<8x32xf32> to vector<8x32xbf16>
    %cst_94 = arith.constant dense<0.000000e+00> : vector<8x8xf32>
    %240 = tpu.matmul %235, %237, %cst_94 {dimension_numbers = #tpu.dot_dimension_numbers<[1], [1], [0], [0], [0, 0, 1, 0], [], []>} : vector<8x32xbf16>, vector<8x32xbf16>, vector<8x8xf32> -> vector<8x8xf32>
    %cst_95 = arith.constant 0.176776692 : f32
    %241 = vector.broadcast %cst_95 : f32 to vector<8x8xf32>
    %242 = arith.mulf %240, %241 : vector<8x8xf32>
    %243 = vector.broadcast %5 : vector<1x8xf32> to vector<8x8xf32>
    %244 = arith.addf %242, %243 : vector<8x8xf32>
    %cst_96 = arith.constant dense<0xFF800000> : vector<8xf32>
    %245 = vector.multi_reduction <maximumf>, %244, %cst_96 [1] : vector<8x8xf32> to vector<8xf32>
    %246 = vector.shape_cast %245 : vector<8xf32> to vector<8x1xf32>
    %247 = vector.broadcast %246 : vector<8x1xf32> to vector<8x8xf32>
    %248 = arith.subf %244, %247 : vector<8x8xf32>
    %249 = math.exp %248 : vector<8x8xf32>
    %cst_97 = arith.constant dense<0.000000e+00> : vector<8xf32>
    %250 = vector.multi_reduction <add>, %249, %cst_97 [1] : vector<8x8xf32> to vector<8xf32>
    %251 = vector.shape_cast %250 : vector<8xf32> to vector<8x1xf32>
    %252 = tpu.reciprocal %251 {approx = true} : vector<8x1xf32> -> vector<8x1xf32>
    %253 = vector.broadcast %252 : vector<8x1xf32> to vector<8x8xf32>
    %254 = arith.mulf %249, %253 : vector<8x8xf32>
    %255 = arith.truncf %254 : vector<8x8xf32> to vector<8x8xbf16>
    %cst_98 = arith.constant dense<0.000000e+00> : vector<8x32xf32>
    %256 = tpu.matmul %255, %239, %cst_98 {dimension_numbers = #tpu.dot_dimension_numbers<[1], [0], [0], [1], [0, 0, 1, 1], [], []>} : vector<8x8xbf16>, vector<8x32xbf16>, vector<8x32xf32> -> vector<8x32xf32>
    %257 = vector.extract_strided_slice %232 {offsets = [0, 0], sizes = [32, 128], strides = [1, 1]} : vector<128x128xbf16> to vector<32x128xbf16>
    %258 = arith.truncf %256 : vector<8x32xf32> to vector<8x32xbf16>
    %cst_99 = arith.constant dense<0.000000e+00> : vector<8x128xf32>
    %259 = tpu.matmul %258, %257, %cst_99 {dimension_numbers = #tpu.dot_dimension_numbers<[1], [0], [0], [1], [0, 0, 1, 1], [], []>} : vector<8x32xbf16>, vector<32x128xbf16>, vector<8x128xf32> -> vector<8x128xf32>
    %260 = vector.extract_strided_slice %223 {offsets = [0, 32], sizes = [8, 32], strides = [1, 1]} : vector<8x128xf32> to vector<8x32xf32>
    %261 = arith.truncf %260 : vector<8x32xf32> to vector<8x32xbf16>
    %262 = vector.extract_strided_slice %230 {offsets = [0, 32], sizes = [8, 32], strides = [1, 1]} : vector<8x128xf32> to vector<8x32xf32>
    %263 = arith.truncf %262 : vector<8x32xf32> to vector<8x32xbf16>
    %264 = vector.extract_strided_slice %231 {offsets = [0, 32], sizes = [8, 32], strides = [1, 1]} : vector<8x128xf32> to vector<8x32xf32>
    %265 = arith.truncf %264 : vector<8x32xf32> to vector<8x32xbf16>
    %cst_100 = arith.constant dense<0.000000e+00> : vector<8x8xf32>
    %266 = tpu.matmul %261, %263, %cst_100 {dimension_numbers = #tpu.dot_dimension_numbers<[1], [1], [0], [0], [0, 0, 1, 0], [], []>} : vector<8x32xbf16>, vector<8x32xbf16>, vector<8x8xf32> -> vector<8x8xf32>
    %cst_101 = arith.constant 0.176776692 : f32
    %267 = vector.broadcast %cst_101 : f32 to vector<8x8xf32>
    %268 = arith.mulf %266, %267 : vector<8x8xf32>
    %269 = vector.broadcast %5 : vector<1x8xf32> to vector<8x8xf32>
    %270 = arith.addf %268, %269 : vector<8x8xf32>
    %cst_102 = arith.constant dense<0xFF800000> : vector<8xf32>
    %271 = vector.multi_reduction <maximumf>, %270, %cst_102 [1] : vector<8x8xf32> to vector<8xf32>
    %272 = vector.shape_cast %271 : vector<8xf32> to vector<8x1xf32>
    %273 = vector.broadcast %272 : vector<8x1xf32> to vector<8x8xf32>
    %274 = arith.subf %270, %273 : vector<8x8xf32>
    %275 = math.exp %274 : vector<8x8xf32>
    %cst_103 = arith.constant dense<0.000000e+00> : vector<8xf32>
    %276 = vector.multi_reduction <add>, %275, %cst_103 [1] : vector<8x8xf32> to vector<8xf32>
    %277 = vector.shape_cast %276 : vector<8xf32> to vector<8x1xf32>
    %278 = tpu.reciprocal %277 {approx = true} : vector<8x1xf32> -> vector<8x1xf32>
    %279 = vector.broadcast %278 : vector<8x1xf32> to vector<8x8xf32>
    %280 = arith.mulf %275, %279 : vector<8x8xf32>
    %281 = arith.truncf %280 : vector<8x8xf32> to vector<8x8xbf16>
    %cst_104 = arith.constant dense<0.000000e+00> : vector<8x32xf32>
    %282 = tpu.matmul %281, %265, %cst_104 {dimension_numbers = #tpu.dot_dimension_numbers<[1], [0], [0], [1], [0, 0, 1, 1], [], []>} : vector<8x8xbf16>, vector<8x32xbf16>, vector<8x32xf32> -> vector<8x32xf32>
    %283 = vector.extract_strided_slice %232 {offsets = [32, 0], sizes = [32, 128], strides = [1, 1]} : vector<128x128xbf16> to vector<32x128xbf16>
    %284 = arith.truncf %282 : vector<8x32xf32> to vector<8x32xbf16>
    %cst_105 = arith.constant dense<0.000000e+00> : vector<8x128xf32>
    %285 = tpu.matmul %284, %283, %cst_105 {dimension_numbers = #tpu.dot_dimension_numbers<[1], [0], [0], [1], [0, 0, 1, 1], [], []>} : vector<8x32xbf16>, vector<32x128xbf16>, vector<8x128xf32> -> vector<8x128xf32>
    %286 = arith.addf %259, %285 : vector<8x128xf32>
    %287 = vector.extract_strided_slice %223 {offsets = [0, 64], sizes = [8, 32], strides = [1, 1]} : vector<8x128xf32> to vector<8x32xf32>
    %288 = arith.truncf %287 : vector<8x32xf32> to vector<8x32xbf16>
    %289 = vector.extract_strided_slice %230 {offsets = [0, 64], sizes = [8, 32], strides = [1, 1]} : vector<8x128xf32> to vector<8x32xf32>
    %290 = arith.truncf %289 : vector<8x32xf32> to vector<8x32xbf16>
    %291 = vector.extract_strided_slice %231 {offsets = [0, 64], sizes = [8, 32], strides = [1, 1]} : vector<8x128xf32> to vector<8x32xf32>
    %292 = arith.truncf %291 : vector<8x32xf32> to vector<8x32xbf16>
    %cst_106 = arith.constant dense<0.000000e+00> : vector<8x8xf32>
    %293 = tpu.matmul %288, %290, %cst_106 {dimension_numbers = #tpu.dot_dimension_numbers<[1], [1], [0], [0], [0, 0, 1, 0], [], []>} : vector<8x32xbf16>, vector<8x32xbf16>, vector<8x8xf32> -> vector<8x8xf32>
    %cst_107 = arith.constant 0.176776692 : f32
    %294 = vector.broadcast %cst_107 : f32 to vector<8x8xf32>
    %295 = arith.mulf %293, %294 : vector<8x8xf32>
    %296 = vector.broadcast %5 : vector<1x8xf32> to vector<8x8xf32>
    %297 = arith.addf %295, %296 : vector<8x8xf32>
    %cst_108 = arith.constant dense<0xFF800000> : vector<8xf32>
    %298 = vector.multi_reduction <maximumf>, %297, %cst_108 [1] : vector<8x8xf32> to vector<8xf32>
    %299 = vector.shape_cast %298 : vector<8xf32> to vector<8x1xf32>
    %300 = vector.broadcast %299 : vector<8x1xf32> to vector<8x8xf32>
    %301 = arith.subf %297, %300 : vector<8x8xf32>
    %302 = math.exp %301 : vector<8x8xf32>
    %cst_109 = arith.constant dense<0.000000e+00> : vector<8xf32>
    %303 = vector.multi_reduction <add>, %302, %cst_109 [1] : vector<8x8xf32> to vector<8xf32>
    %304 = vector.shape_cast %303 : vector<8xf32> to vector<8x1xf32>
    %305 = tpu.reciprocal %304 {approx = true} : vector<8x1xf32> -> vector<8x1xf32>
    %306 = vector.broadcast %305 : vector<8x1xf32> to vector<8x8xf32>
    %307 = arith.mulf %302, %306 : vector<8x8xf32>
    %308 = arith.truncf %307 : vector<8x8xf32> to vector<8x8xbf16>
    %cst_110 = arith.constant dense<0.000000e+00> : vector<8x32xf32>
    %309 = tpu.matmul %308, %292, %cst_110 {dimension_numbers = #tpu.dot_dimension_numbers<[1], [0], [0], [1], [0, 0, 1, 1], [], []>} : vector<8x8xbf16>, vector<8x32xbf16>, vector<8x32xf32> -> vector<8x32xf32>
    %310 = vector.extract_strided_slice %232 {offsets = [64, 0], sizes = [32, 128], strides = [1, 1]} : vector<128x128xbf16> to vector<32x128xbf16>
    %311 = arith.truncf %309 : vector<8x32xf32> to vector<8x32xbf16>
    %cst_111 = arith.constant dense<0.000000e+00> : vector<8x128xf32>
    %312 = tpu.matmul %311, %310, %cst_111 {dimension_numbers = #tpu.dot_dimension_numbers<[1], [0], [0], [1], [0, 0, 1, 1], [], []>} : vector<8x32xbf16>, vector<32x128xbf16>, vector<8x128xf32> -> vector<8x128xf32>
    %313 = arith.addf %286, %312 : vector<8x128xf32>
    %314 = vector.extract_strided_slice %223 {offsets = [0, 96], sizes = [8, 32], strides = [1, 1]} : vector<8x128xf32> to vector<8x32xf32>
    %315 = arith.truncf %314 : vector<8x32xf32> to vector<8x32xbf16>
    %316 = vector.extract_strided_slice %230 {offsets = [0, 96], sizes = [8, 32], strides = [1, 1]} : vector<8x128xf32> to vector<8x32xf32>
    %317 = arith.truncf %316 : vector<8x32xf32> to vector<8x32xbf16>
    %318 = vector.extract_strided_slice %231 {offsets = [0, 96], sizes = [8, 32], strides = [1, 1]} : vector<8x128xf32> to vector<8x32xf32>
    %319 = arith.truncf %318 : vector<8x32xf32> to vector<8x32xbf16>
    %cst_112 = arith.constant dense<0.000000e+00> : vector<8x8xf32>
    %320 = tpu.matmul %315, %317, %cst_112 {dimension_numbers = #tpu.dot_dimension_numbers<[1], [1], [0], [0], [0, 0, 1, 0], [], []>} : vector<8x32xbf16>, vector<8x32xbf16>, vector<8x8xf32> -> vector<8x8xf32>
    %cst_113 = arith.constant 0.176776692 : f32
    %321 = vector.broadcast %cst_113 : f32 to vector<8x8xf32>
    %322 = arith.mulf %320, %321 : vector<8x8xf32>
    %323 = vector.broadcast %5 : vector<1x8xf32> to vector<8x8xf32>
    %324 = arith.addf %322, %323 : vector<8x8xf32>
    %cst_114 = arith.constant dense<0xFF800000> : vector<8xf32>
    %325 = vector.multi_reduction <maximumf>, %324, %cst_114 [1] : vector<8x8xf32> to vector<8xf32>
    %326 = vector.shape_cast %325 : vector<8xf32> to vector<8x1xf32>
    %327 = vector.broadcast %326 : vector<8x1xf32> to vector<8x8xf32>
    %328 = arith.subf %324, %327 : vector<8x8xf32>
    %329 = math.exp %328 : vector<8x8xf32>
    %cst_115 = arith.constant dense<0.000000e+00> : vector<8xf32>
    %330 = vector.multi_reduction <add>, %329, %cst_115 [1] : vector<8x8xf32> to vector<8xf32>
    %331 = vector.shape_cast %330 : vector<8xf32> to vector<8x1xf32>
    %332 = tpu.reciprocal %331 {approx = true} : vector<8x1xf32> -> vector<8x1xf32>
    %333 = vector.broadcast %332 : vector<8x1xf32> to vector<8x8xf32>
    %334 = arith.mulf %329, %333 : vector<8x8xf32>
    %335 = arith.truncf %334 : vector<8x8xf32> to vector<8x8xbf16>
    %cst_116 = arith.constant dense<0.000000e+00> : vector<8x32xf32>
    %336 = tpu.matmul %335, %319, %cst_116 {dimension_numbers = #tpu.dot_dimension_numbers<[1], [0], [0], [1], [0, 0, 1, 1], [], []>} : vector<8x8xbf16>, vector<8x32xbf16>, vector<8x32xf32> -> vector<8x32xf32>
    %337 = vector.extract_strided_slice %232 {offsets = [96, 0], sizes = [32, 128], strides = [1, 1]} : vector<128x128xbf16> to vector<32x128xbf16>
    %338 = arith.truncf %336 : vector<8x32xf32> to vector<8x32xbf16>
    %cst_117 = arith.constant dense<0.000000e+00> : vector<8x128xf32>
    %339 = tpu.matmul %338, %337, %cst_117 {dimension_numbers = #tpu.dot_dimension_numbers<[1], [0], [0], [1], [0, 0, 1, 1], [], []>} : vector<8x32xbf16>, vector<32x128xbf16>, vector<8x128xf32> -> vector<8x128xf32>
    %340 = arith.addf %313, %339 : vector<8x128xf32>
    %341 = vector.broadcast %233 : vector<1x128xf32> to vector<8x128xf32>
    %342 = arith.addf %340, %341 : vector<8x128xf32>
    %343 = arith.addf %193, %342 : vector<8x128xf32>
    %c0_118 = arith.constant 0 : index
    %c0_119 = arith.constant 0 : index
    %344 = vector.load %arg25[%c0_118, %c0_119] : memref<1x128xf32, #tpu.memory_space<vmem>>, vector<1x128xf32>
    %c0_120 = arith.constant 0 : index
    %c0_121 = arith.constant 0 : index
    %345 = vector.load %arg26[%c0_120, %c0_121] : memref<1x128xf32, #tpu.memory_space<vmem>>, vector<1x128xf32>
    %cst_122 = arith.constant dense<0.000000e+00> : vector<8xf32>
    %346 = vector.multi_reduction <add>, %343, %cst_122 [1] : vector<8x128xf32> to vector<8xf32>
    %347 = vector.shape_cast %346 : vector<8xf32> to vector<8x1xf32>
    %cst_123 = arith.constant 1.280000e+02 : f32
    %348 = vector.broadcast %cst_123 : f32 to vector<8x1xf32>
    %349 = arith.divf %347, %348 : vector<8x1xf32>
    %350 = vector.broadcast %349 : vector<8x1xf32> to vector<8x128xf32>
    %351 = arith.subf %343, %350 : vector<8x128xf32>
    %352 = arith.mulf %351, %351 : vector<8x128xf32>
    %cst_124 = arith.constant dense<0.000000e+00> : vector<8xf32>
    %353 = vector.multi_reduction <add>, %352, %cst_124 [1] : vector<8x128xf32> to vector<8xf32>
    %354 = vector.shape_cast %353 : vector<8xf32> to vector<8x1xf32>
    %cst_125 = arith.constant 1.280000e+02 : f32
    %355 = vector.broadcast %cst_125 : f32 to vector<8x1xf32>
    %356 = arith.divf %354, %355 : vector<8x1xf32>
    %357 = vector.broadcast %349 : vector<8x1xf32> to vector<8x128xf32>
    %358 = arith.subf %343, %357 : vector<8x128xf32>
    %cst_126 = arith.constant 9.99999974E-6 : f32
    %359 = vector.broadcast %cst_126 : f32 to vector<8x1xf32>
    %360 = arith.addf %356, %359 : vector<8x1xf32>
    %361 = math.rsqrt %360 : vector<8x1xf32>
    %362 = vector.broadcast %361 : vector<8x1xf32> to vector<8x128xf32>
    %363 = arith.mulf %358, %362 : vector<8x128xf32>
    %364 = vector.broadcast %344 : vector<1x128xf32> to vector<8x128xf32>
    %365 = arith.mulf %363, %364 : vector<8x128xf32>
    %366 = vector.broadcast %345 : vector<1x128xf32> to vector<8x128xf32>
    %367 = arith.addf %365, %366 : vector<8x128xf32>
    %c0_127 = arith.constant 0 : index
    %c0_128 = arith.constant 0 : index
    %368 = vector.load %arg27[%c0_127, %c0_128] : memref<128x256xbf16, #tpu.memory_space<vmem>>, vector<128x256xbf16>
    %c0_129 = arith.constant 0 : index
    %c0_130 = arith.constant 0 : index
    %369 = vector.load %arg28[%c0_129, %c0_130] : memref<1x256xf32, #tpu.memory_space<vmem>>, vector<1x256xf32>
    %c0_131 = arith.constant 0 : index
    %c0_132 = arith.constant 0 : index
    %370 = vector.load %arg29[%c0_131, %c0_132] : memref<256x128xbf16, #tpu.memory_space<vmem>>, vector<256x128xbf16>
    %c0_133 = arith.constant 0 : index
    %c0_134 = arith.constant 0 : index
    %371 = vector.load %arg30[%c0_133, %c0_134] : memref<1x128xf32, #tpu.memory_space<vmem>>, vector<1x128xf32>
    %372 = arith.truncf %367 : vector<8x128xf32> to vector<8x128xbf16>
    %cst_135 = arith.constant dense<0.000000e+00> : vector<8x256xf32>
    %373 = tpu.matmul %372, %368, %cst_135 {dimension_numbers = #tpu.dot_dimension_numbers<[1], [0], [0], [1], [0, 0, 1, 1], [], []>} : vector<8x128xbf16>, vector<128x256xbf16>, vector<8x256xf32> -> vector<8x256xf32>
    %374 = vector.broadcast %369 : vector<1x256xf32> to vector<8x256xf32>
    %375 = arith.addf %373, %374 : vector<8x256xf32>
    %376 = arith.mulf %375, %375 : vector<8x256xf32>
    %377 = arith.mulf %375, %376 : vector<8x256xf32>
    %cst_136 = arith.constant 4.471500e-02 : f32
    %378 = vector.broadcast %cst_136 : f32 to vector<8x256xf32>
    %379 = arith.mulf %378, %377 : vector<8x256xf32>
    %380 = arith.addf %375, %379 : vector<8x256xf32>
    %cst_137 = arith.constant 0.797884583 : f32
    %381 = vector.broadcast %cst_137 : f32 to vector<8x256xf32>
    %382 = arith.mulf %381, %380 : vector<8x256xf32>
    %383 = math.tanh %382 : vector<8x256xf32>
    %cst_138 = arith.constant 1.000000e+00 : f32
    %384 = vector.broadcast %cst_138 : f32 to vector<8x256xf32>
    %385 = arith.addf %384, %383 : vector<8x256xf32>
    %cst_139 = arith.constant 5.000000e-01 : f32
    %386 = vector.broadcast %cst_139 : f32 to vector<8x256xf32>
    %387 = arith.mulf %386, %385 : vector<8x256xf32>
    %388 = arith.mulf %375, %387 : vector<8x256xf32>
    %389 = arith.truncf %388 : vector<8x256xf32> to vector<8x256xbf16>
    %cst_140 = arith.constant dense<0.000000e+00> : vector<8x128xf32>
    %390 = tpu.matmul %389, %370, %cst_140 {dimension_numbers = #tpu.dot_dimension_numbers<[1], [0], [0], [1], [0, 0, 1, 1], [], []>} : vector<8x256xbf16>, vector<256x128xbf16>, vector<8x128xf32> -> vector<8x128xf32>
    %391 = vector.broadcast %371 : vector<1x128xf32> to vector<8x128xf32>
    %392 = arith.addf %390, %391 : vector<8x128xf32>
    %c0_141 = arith.constant 0 : index
    %c0_142 = arith.constant 0 : index
    %393 = vector.load %arg31[%c0_141, %c0_142] : memref<128x32xbf16, #tpu.memory_space<vmem>>, vector<128x32xbf16>
    %c0_143 = arith.constant 0 : index
    %c0_144 = arith.constant 0 : index
    %394 = vector.load %arg32[%c0_143, %c0_144] : memref<1x32xf32, #tpu.memory_space<vmem>>, vector<1x32xf32>
    %c0_145 = arith.constant 0 : index
    %c0_146 = arith.constant 0 : index
    %395 = vector.load %arg33[%c0_145, %c0_146] : memref<32x128xbf16, #tpu.memory_space<vmem>>, vector<32x128xbf16>
    %c0_147 = arith.constant 0 : index
    %c0_148 = arith.constant 0 : index
    %396 = vector.load %arg34[%c0_147, %c0_148] : memref<1x128xf32, #tpu.memory_space<vmem>>, vector<1x128xf32>
    %397 = arith.truncf %392 : vector<8x128xf32> to vector<8x128xbf16>
    %cst_149 = arith.constant dense<0.000000e+00> : vector<8x32xf32>
    %398 = tpu.matmul %397, %393, %cst_149 {dimension_numbers = #tpu.dot_dimension_numbers<[1], [0], [0], [1], [0, 0, 1, 1], [], []>} : vector<8x128xbf16>, vector<128x32xbf16>, vector<8x32xf32> -> vector<8x32xf32>
    %399 = vector.broadcast %394 : vector<1x32xf32> to vector<8x32xf32>
    %400 = arith.addf %398, %399 : vector<8x32xf32>
    %cst_150 = arith.constant 0.000000e+00 : f32
    %401 = vector.broadcast %cst_150 : f32 to vector<8x32xf32>
    %402 = arith.maximumf %400, %401 : vector<8x32xf32>
    %403 = arith.truncf %402 : vector<8x32xf32> to vector<8x32xbf16>
    %cst_151 = arith.constant dense<0.000000e+00> : vector<8x128xf32>
    %404 = tpu.matmul %403, %395, %cst_151 {dimension_numbers = #tpu.dot_dimension_numbers<[1], [0], [0], [1], [0, 0, 1, 1], [], []>} : vector<8x32xbf16>, vector<32x128xbf16>, vector<8x128xf32> -> vector<8x128xf32>
    %405 = arith.addf %392, %404 : vector<8x128xf32>
    %406 = vector.broadcast %396 : vector<1x128xf32> to vector<8x128xf32>
    %407 = arith.addf %405, %406 : vector<8x128xf32>
    %408 = arith.addf %343, %407 : vector<8x128xf32>
    %c0_152 = arith.constant 0 : index
    %c0_153 = arith.constant 0 : index
    %409 = vector.load %arg35[%c0_152, %c0_153] : memref<1x128xf32, #tpu.memory_space<vmem>>, vector<1x128xf32>
    %c0_154 = arith.constant 0 : index
    %c0_155 = arith.constant 0 : index
    %410 = vector.load %arg36[%c0_154, %c0_155] : memref<1x128xf32, #tpu.memory_space<vmem>>, vector<1x128xf32>
    %cst_156 = arith.constant dense<0.000000e+00> : vector<8xf32>
    %411 = vector.multi_reduction <add>, %408, %cst_156 [1] : vector<8x128xf32> to vector<8xf32>
    %412 = vector.shape_cast %411 : vector<8xf32> to vector<8x1xf32>
    %cst_157 = arith.constant 1.280000e+02 : f32
    %413 = vector.broadcast %cst_157 : f32 to vector<8x1xf32>
    %414 = arith.divf %412, %413 : vector<8x1xf32>
    %415 = vector.broadcast %414 : vector<8x1xf32> to vector<8x128xf32>
    %416 = arith.subf %408, %415 : vector<8x128xf32>
    %417 = arith.mulf %416, %416 : vector<8x128xf32>
    %cst_158 = arith.constant dense<0.000000e+00> : vector<8xf32>
    %418 = vector.multi_reduction <add>, %417, %cst_158 [1] : vector<8x128xf32> to vector<8xf32>
    %419 = vector.shape_cast %418 : vector<8xf32> to vector<8x1xf32>
    %cst_159 = arith.constant 1.280000e+02 : f32
    %420 = vector.broadcast %cst_159 : f32 to vector<8x1xf32>
    %421 = arith.divf %419, %420 : vector<8x1xf32>
    %422 = vector.broadcast %414 : vector<8x1xf32> to vector<8x128xf32>
    %423 = arith.subf %408, %422 : vector<8x128xf32>
    %cst_160 = arith.constant 9.99999974E-6 : f32
    %424 = vector.broadcast %cst_160 : f32 to vector<8x1xf32>
    %425 = arith.addf %421, %424 : vector<8x1xf32>
    %426 = math.rsqrt %425 : vector<8x1xf32>
    %427 = vector.broadcast %426 : vector<8x1xf32> to vector<8x128xf32>
    %428 = arith.mulf %423, %427 : vector<8x128xf32>
    %429 = vector.broadcast %409 : vector<1x128xf32> to vector<8x128xf32>
    %430 = arith.mulf %428, %429 : vector<8x128xf32>
    %431 = vector.broadcast %410 : vector<1x128xf32> to vector<8x128xf32>
    %432 = arith.addf %430, %431 : vector<8x128xf32>
    %c0_161 = arith.constant 0 : index
    %c0_162 = arith.constant 0 : index
    %433 = vector.load %arg37[%c0_161, %c0_162] : memref<128x256xbf16, #tpu.memory_space<vmem>>, vector<128x256xbf16>
    %434 = arith.truncf %432 : vector<8x128xf32> to vector<8x128xbf16>
    %cst_163 = arith.constant dense<0.000000e+00> : vector<8x256xf32>
    %435 = tpu.matmul %434, %433, %cst_163 {dimension_numbers = #tpu.dot_dimension_numbers<[1], [0], [0], [1], [0, 0, 1, 1], [], []>} : vector<8x128xbf16>, vector<128x256xbf16>, vector<8x256xf32> -> vector<8x256xf32>
    %c0_164 = arith.constant 0 : index
    %c0_165 = arith.constant 0 : index
    %436 = vector.load %arg38[%c0_164, %c0_165] : memref<1x256xf32, #tpu.memory_space<vmem>>, vector<1x256xf32>
    %437 = vector.broadcast %436 : vector<1x256xf32> to vector<8x256xf32>
    %438 = arith.addf %435, %437 : vector<8x256xf32>
    %c0_166 = arith.constant 0 : index
    %c0_167 = arith.constant 0 : index
    %439 = vector.load %arg39[%c0_166, %c0_167] : memref<8x256xf32, #tpu.memory_space<vmem>>, vector<8x256xf32>
    tpu.vector_store %arg39[%c0_166, %c0_167], %438 {strides = array<i32>} : memref<8x256xf32, #tpu.memory_space<vmem>>, vector<8x256xf32>,
    %cst_168 = arith.constant dense<0xFF800000> : vector<8xf32>
    %440 = vector.multi_reduction <maximumf>, %438, %cst_168 [1] : vector<8x256xf32> to vector<8xf32>
    %441 = vector.shape_cast %440 : vector<8xf32> to vector<8x1xf32>
    %442 = vector.broadcast %441 : vector<8x1xf32> to vector<8x256xf32>
    %443 = arith.subf %438, %442 : vector<8x256xf32>
    %444 = math.exp %443 : vector<8x256xf32>
    %cst_169 = arith.constant dense<0.000000e+00> : vector<8xf32>
    %445 = vector.multi_reduction <add>, %444, %cst_169 [1] : vector<8x256xf32> to vector<8xf32>
    %446 = vector.shape_cast %445 : vector<8xf32> to vector<8x1xf32>
    %447 = math.log %446 : vector<8x1xf32>
    %448 = arith.addf %441, %447 : vector<8x1xf32>
    %449 = tpu.iota {dimensions = array<i32: 1>} : vector<8x256xi32>
    %450 = tpu.iota {dimensions = array<i32: 0>} : vector<8x256xi32>
    %c0_i32 = arith.constant 0 : i32
    %451 = vector.broadcast %c0_i32 : i32 to vector<8x256xi32>
    %c0_i32_170 = arith.constant 0 : i32
    %452 = vector.broadcast %c0_i32_170 : i32 to vector<8x256xi32>
    %453 = arith.cmpi eq, %450, %452 : vector<8x256xi32>
    %454 = arith.index_cast %arg0 : i32 to index
    %c0_171 = arith.constant 0 : index
    %455 = memref.load %arg4[%454, %c0_171] : memref<2x8xi32, #tpu.memory_space<smem>>
    %456 = vector.broadcast %455 : i32 to vector<8x256xi32>
    %457 = arith.select %453, %456, %451 : vector<8x256xi1>, vector<8x256xi32>
    %c1_i32 = arith.constant 1 : i32
    %458 = vector.broadcast %c1_i32 : i32 to vector<8x256xi32>
    %459 = arith.cmpi eq, %450, %458 : vector<8x256xi32>
    %460 = arith.index_cast %arg0 : i32 to index
    %c1 = arith.constant 1 : index
    %461 = memref.load %arg4[%460, %c1] : memref<2x8xi32, #tpu.memory_space<smem>>
    %462 = vector.broadcast %461 : i32 to vector<8x256xi32>
    %463 = arith.select %459, %462, %457 : vector<8x256xi1>, vector<8x256xi32>
    %c2_i32 = arith.constant 2 : i32
    %464 = vector.broadcast %c2_i32 : i32 to vector<8x256xi32>
    %465 = arith.cmpi eq, %450, %464 : vector<8x256xi32>
    %466 = arith.index_cast %arg0 : i32 to index
    %c2 = arith.constant 2 : index
    %467 = memref.load %arg4[%466, %c2] : memref<2x8xi32, #tpu.memory_space<smem>>
    %468 = vector.broadcast %467 : i32 to vector<8x256xi32>
    %469 = arith.select %465, %468, %463 : vector<8x256xi1>, vector<8x256xi32>
    %c3_i32 = arith.constant 3 : i32
    %470 = vector.broadcast %c3_i32 : i32 to vector<8x256xi32>
    %471 = arith.cmpi eq, %450, %470 : vector<8x256xi32>
    %472 = arith.index_cast %arg0 : i32 to index
    %c3 = arith.constant 3 : index
    %473 = memref.load %arg4[%472, %c3] : memref<2x8xi32, #tpu.memory_space<smem>>
    %474 = vector.broadcast %473 : i32 to vector<8x256xi32>
    %475 = arith.select %471, %474, %469 : vector<8x256xi1>, vector<8x256xi32>
    %c4_i32 = arith.constant 4 : i32
    %476 = vector.broadcast %c4_i32 : i32 to vector<8x256xi32>
    %477 = arith.cmpi eq, %450, %476 : vector<8x256xi32>
    %478 = arith.index_cast %arg0 : i32 to index
    %c4 = arith.constant 4 : index
    %479 = memref.load %arg4[%478, %c4] : memref<2x8xi32, #tpu.memory_space<smem>>
    %480 = vector.broadcast %479 : i32 to vector<8x256xi32>
    %481 = arith.select %477, %480, %475 : vector<8x256xi1>, vector<8x256xi32>
    %c5_i32 = arith.constant 5 : i32
    %482 = vector.broadcast %c5_i32 : i32 to vector<8x256xi32>
    %483 = arith.cmpi eq, %450, %482 : vector<8x256xi32>
    %484 = arith.index_cast %arg0 : i32 to index
    %c5 = arith.constant 5 : index
    %485 = memref.load %arg4[%484, %c5] : memref<2x8xi32, #tpu.memory_space<smem>>
    %486 = vector.broadcast %485 : i32 to vector<8x256xi32>
    %487 = arith.select %483, %486, %481 : vector<8x256xi1>, vector<8x256xi32>
    %c6_i32 = arith.constant 6 : i32
    %488 = vector.broadcast %c6_i32 : i32 to vector<8x256xi32>
    %489 = arith.cmpi eq, %450, %488 : vector<8x256xi32>
    %490 = arith.index_cast %arg0 : i32 to index
    %c6 = arith.constant 6 : index
    %491 = memref.load %arg4[%490, %c6] : memref<2x8xi32, #tpu.memory_space<smem>>
    %492 = vector.broadcast %491 : i32 to vector<8x256xi32>
    %493 = arith.select %489, %492, %487 : vector<8x256xi1>, vector<8x256xi32>
    %c7_i32 = arith.constant 7 : i32
    %494 = vector.broadcast %c7_i32 : i32 to vector<8x256xi32>
    %495 = arith.cmpi eq, %450, %494 : vector<8x256xi32>
    %496 = arith.index_cast %arg0 : i32 to index
    %c7 = arith.constant 7 : index
    %497 = memref.load %arg4[%496, %c7] : memref<2x8xi32, #tpu.memory_space<smem>>
    %498 = vector.broadcast %497 : i32 to vector<8x256xi32>
    %499 = arith.select %495, %498, %493 : vector<8x256xi1>, vector<8x256xi32>
    %500 = arith.cmpi eq, %449, %499 : vector<8x256xi32>
    %cst_172 = arith.constant 0.000000e+00 : f32
    %501 = vector.broadcast %cst_172 : f32 to vector<8x256xf32>
    %502 = arith.select %500, %438, %501 : vector<8x256xi1>, vector<8x256xf32>
    %cst_173 = arith.constant dense<0.000000e+00> : vector<8xf32>
    %503 = vector.multi_reduction <add>, %502, %cst_173 [1] : vector<8x256xf32> to vector<8xf32>
    %504 = vector.shape_cast %503 : vector<8xf32> to vector<8x1xf32>
    %505 = arith.subf %448, %504 : vector<8x1xf32>
    %506 = vector.shape_cast %505 : vector<8x1xf32> to vector<8x1xf32>
    %507 = vector.broadcast %506 : vector<8x1xf32> to vector<8x128xf32>
    %c0_174 = arith.constant 0 : index
    %c0_175 = arith.constant 0 : index
    %508 = vector.load %arg40[%c0_174, %c0_175] : memref<8x128xf32, #tpu.memory_space<vmem>>, vector<8x128xf32>
    tpu.vector_store %arg40[%c0_174, %c0_175], %507 {strides = array<i32>} : memref<8x128xf32, #tpu.memory_space<vmem>>, vector<8x128xf32>,
    return
  }
  func.func @transform_0(%arg0: i32) -> (i32, i32) {
    %c0_i32 = arith.constant 0 : i32
    %c0_i32_0 = arith.constant 0 : i32
    return %arg0, %c0_i32 : i32, i32
  }
  func.func @transform_1(%arg0: i32) -> (i32, i32) {
    %c0_i32 = arith.constant 0 : i32
    %c0_i32_0 = arith.constant 0 : i32
    return %arg0, %c0_i32 : i32, i32
  }
  func.func @transform_2(%arg0: i32) -> (i32, i32, i32) {
    %c0_i32 = arith.constant 0 : i32
    %c0_i32_0 = arith.constant 0 : i32
    %c0_i32_1 = arith.constant 0 : i32
    return %arg0, %c0_i32, %c0_i32_0 : i32, i32, i32
  }
  func.func @transform_3(%arg0: i32) -> (i32, i32) {
    %c0_i32 = arith.constant 0 : i32
    %c0_i32_0 = arith.constant 0 : i32
    %c0_i32_1 = arith.constant 0 : i32
    return %c0_i32, %c0_i32_0 : i32, i32
  }
  func.func @transform_4(%arg0: i32) -> (i32, i32) {
    %c0_i32 = arith.constant 0 : i32
    %c0_i32_0 = arith.constant 0 : i32
    %c0_i32_1 = arith.constant 0 : i32
    return %c0_i32, %c0_i32_0 : i32, i32
  }
  func.func @transform_5(%arg0: i32) -> (i32, i32) {
    %c0_i32 = arith.constant 0 : i32
    %c0_i32_0 = arith.constant 0 : i32
    %c0_i32_1 = arith.constant 0 : i32
    return %c0_i32, %c0_i32_0 : i32, i32
  }
  func.func @transform_6(%arg0: i32) -> (i32, i32) {
    %c0_i32 = arith.constant 0 : i32
    %c0_i32_0 = arith.constant 0 : i32
    %c0_i32_1 = arith.constant 0 : i32
    return %c0_i32, %c0_i32_0 : i32, i32
  }
  func.func @transform_7(%arg0: i32) -> (i32, i32) {
    %c0_i32 = arith.constant 0 : i32
    %c0_i32_0 = arith.constant 0 : i32
    %c0_i32_1 = arith.constant 0 : i32
    return %c0_i32, %c0_i32_0 : i32, i32
  }
  func.func @transform_8(%arg0: i32) -> (i32, i32) {
    %c0_i32 = arith.constant 0 : i32
    %c0_i32_0 = arith.constant 0 : i32
    %c0_i32_1 = arith.constant 0 : i32
    return %c0_i32, %c0_i32_0 : i32, i32
  }
  func.func @transform_9(%arg0: i32) -> (i32, i32) {
    %c0_i32 = arith.constant 0 : i32
    %c0_i32_0 = arith.constant 0 : i32
    %c0_i32_1 = arith.constant 0 : i32
    return %c0_i32, %c0_i32_0 : i32, i32
  }
  func.func @transform_10(%arg0: i32) -> (i32, i32) {
    %c0_i32 = arith.constant 0 : i32
    %c0_i32_0 = arith.constant 0 : i32
    %c0_i32_1 = arith.constant 0 : i32
    return %c0_i32, %c0_i32_0 : i32, i32
  }
  func.func @transform_11(%arg0: i32) -> (i32, i32) {
    %c0_i32 = arith.constant 0 : i32
    %c0_i32_0 = arith.constant 0 : i32
    %c0_i32_1 = arith.constant 0 : i32
    return %c0_i32, %c0_i32_0 : i32, i32
  }
  func.func @transform_12(%arg0: i32) -> (i32, i32) {
    %c0_i32 = arith.constant 0 : i32
    %c0_i32_0 = arith.constant 0 : i32
    %c0_i32_1 = arith.constant 0 : i32
    return %c0_i32, %c0_i32_0 : i32, i32
  }
  func.func @transform_13(%arg0: i32) -> (i32, i32) {
    %c0_i32 = arith.constant 0 : i32
    %c0_i32_0 = arith.constant 0 : i32
    %c0_i32_1 = arith.constant 0 : i32
    return %c0_i32, %c0_i32_0 : i32, i32
  }
  func.func @transform_14(%arg0: i32) -> (i32, i32) {
    %c0_i32 = arith.constant 0 : i32
    %c0_i32_0 = arith.constant 0 : i32
    %c0_i32_1 = arith.constant 0 : i32
    return %c0_i32, %c0_i32_0 : i32, i32
  }
  func.func @transform_15(%arg0: i32) -> (i32, i32) {
    %c0_i32 = arith.constant 0 : i32
    %c0_i32_0 = arith.constant 0 : i32
    %c0_i32_1 = arith.constant 0 : i32
    return %c0_i32, %c0_i32_0 : i32, i32
  }
  func.func @transform_16(%arg0: i32) -> (i32, i32) {
    %c0_i32 = arith.constant 0 : i32
    %c0_i32_0 = arith.constant 0 : i32
    %c0_i32_1 = arith.constant 0 : i32
    return %c0_i32, %c0_i32_0 : i32, i32
  }
  func.func @transform_17(%arg0: i32) -> (i32, i32) {
    %c0_i32 = arith.constant 0 : i32
    %c0_i32_0 = arith.constant 0 : i32
    %c0_i32_1 = arith.constant 0 : i32
    return %c0_i32, %c0_i32_0 : i32, i32
  }
  func.func @transform_18(%arg0: i32) -> (i32, i32) {
    %c0_i32 = arith.constant 0 : i32
    %c0_i32_0 = arith.constant 0 : i32
    %c0_i32_1 = arith.constant 0 : i32
    return %c0_i32, %c0_i32_0 : i32, i32
  }
  func.func @transform_19(%arg0: i32) -> (i32, i32) {
    %c0_i32 = arith.constant 0 : i32
    %c0_i32_0 = arith.constant 0 : i32
    %c0_i32_1 = arith.constant 0 : i32
    return %c0_i32, %c0_i32_0 : i32, i32
  }
  func.func @transform_20(%arg0: i32) -> (i32, i32) {
    %c0_i32 = arith.constant 0 : i32
    %c0_i32_0 = arith.constant 0 : i32
    %c0_i32_1 = arith.constant 0 : i32
    return %c0_i32, %c0_i32_0 : i32, i32
  }
  func.func @transform_21(%arg0: i32) -> (i32, i32) {
    %c0_i32 = arith.constant 0 : i32
    %c0_i32_0 = arith.constant 0 : i32
    %c0_i32_1 = arith.constant 0 : i32
    return %c0_i32, %c0_i32_0 : i32, i32
  }
  func.func @transform_22(%arg0: i32) -> (i32, i32) {
    %c0_i32 = arith.constant 0 : i32
    %c0_i32_0 = arith.constant 0 : i32
    %c0_i32_1 = arith.constant 0 : i32
    return %c0_i32, %c0_i32_0 : i32, i32
  }
  func.func @transform_23(%arg0: i32) -> (i32, i32) {
    %c0_i32 = arith.constant 0 : i32
    %c0_i32_0 = arith.constant 0 : i32
    %c0_i32_1 = arith.constant 0 : i32
    return %c0_i32, %c0_i32_0 : i32, i32
  }
  func.func @transform_24(%arg0: i32) -> (i32, i32) {
    %c0_i32 = arith.constant 0 : i32
    %c0_i32_0 = arith.constant 0 : i32
    %c0_i32_1 = arith.constant 0 : i32
    return %c0_i32, %c0_i32_0 : i32, i32
  }
  func.func @transform_25(%arg0: i32) -> (i32, i32) {
    %c0_i32 = arith.constant 0 : i32
    %c0_i32_0 = arith.constant 0 : i32
    %c0_i32_1 = arith.constant 0 : i32
    return %c0_i32, %c0_i32_0 : i32, i32
  }
  func.func @transform_26(%arg0: i32) -> (i32, i32) {
    %c0_i32 = arith.constant 0 : i32
    %c0_i32_0 = arith.constant 0 : i32
    %c0_i32_1 = arith.constant 0 : i32
    return %c0_i32, %c0_i32_0 : i32, i32
  }
  func.func @transform_27(%arg0: i32) -> (i32, i32) {
    %c0_i32 = arith.constant 0 : i32
    %c0_i32_0 = arith.constant 0 : i32
    %c0_i32_1 = arith.constant 0 : i32
    return %c0_i32, %c0_i32_0 : i32, i32
  }
  func.func @transform_28(%arg0: i32) -> (i32, i32) {
    %c0_i32 = arith.constant 0 : i32
    %c0_i32_0 = arith.constant 0 : i32
    %c0_i32_1 = arith.constant 0 : i32
    return %c0_i32, %c0_i32_0 : i32, i32
  }
  func.func @transform_29(%arg0: i32) -> (i32, i32) {
    %c0_i32 = arith.constant 0 : i32
    %c0_i32_0 = arith.constant 0 : i32
    %c0_i32_1 = arith.constant 0 : i32
    return %c0_i32, %c0_i32_0 : i32, i32
  }
  func.func @transform_30(%arg0: i32) -> (i32, i32) {
    %c0_i32 = arith.constant 0 : i32
    %c0_i32_0 = arith.constant 0 : i32
    %c0_i32_1 = arith.constant 0 : i32
    return %c0_i32, %c0_i32_0 : i32, i32
  }
  func.func @transform_31(%arg0: i32) -> (i32, i32) {
    %c0_i32 = arith.constant 0 : i32
    %c0_i32_0 = arith.constant 0 : i32
    %c0_i32_1 = arith.constant 0 : i32
    return %c0_i32, %c0_i32_0 : i32, i32
  }
  func.func @transform_32(%arg0: i32) -> (i32, i32) {
    %c0_i32 = arith.constant 0 : i32
    %c0_i32_0 = arith.constant 0 : i32
    %c0_i32_1 = arith.constant 0 : i32
    return %c0_i32, %c0_i32_0 : i32, i32
  }
  func.func @transform_33(%arg0: i32) -> (i32, i32) {
    %c0_i32 = arith.constant 0 : i32
    %c0_i32_0 = arith.constant 0 : i32
    %c0_i32_1 = arith.constant 0 : i32
    return %c0_i32, %c0_i32_0 : i32, i32
  }
  func.func @transform_34(%arg0: i32) -> (i32, i32) {
    %c0_i32 = arith.constant 0 : i32
    %c0_i32_0 = arith.constant 0 : i32
    %c0_i32_1 = arith.constant 0 : i32
    return %c0_i32, %c0_i32_0 : i32, i32
  }
  func.func @transform_35(%arg0: i32) -> (i32, i32) {
    %c0_i32 = arith.constant 0 : i32
    %c0_i32_0 = arith.constant 0 : i32
    %c0_i32_1 = arith.constant 0 : i32
    return %c0_i32, %c0_i32_0 : i32, i32
  }
  func.func @transform_36(%arg0: i32) -> (i32, i32) {
    %c0_i32 = arith.constant 0 : i32
    %c0_i32_0 = arith.constant 0 : i32
    %c0_i32_1 = arith.constant 0 : i32
    return %c0_i32, %c0_i32_0 : i32, i32
  }
  func.func @transform_37(%arg0: i32) -> (i32, i32) {
    %c0_i32 = arith.constant 0 : i32
    %c0_i32_0 = arith.constant 0 : i32
    %c0_i32_1 = arith.constant 0 : i32
    return %c0_i32, %c0_i32_0 : i32, i32
  }
  func.func @transform_38(%arg0: i32) -> (i32, i32) {
    %c0_i32 = arith.constant 0 : i32
    %c0_i32_0 = arith.constant 0 : i32
    return %arg0, %c0_i32 : i32, i32
  }
  func.func @transform_39(%arg0: i32) -> (i32, i32) {
    %c0_i32 = arith.constant 0 : i32
    %c0_i32_0 = arith.constant 0 : i32
    return %arg0, %c0_i32 : i32, i32
  }
}

</mosaic_0001>

<llo_original>
// kernel: _forward_impl.2
$region0: #{_forward_impl.2}
  #allocation0 [shape = 'u32[]', space=smem, size = 0x4, offset = 0x4, fixed_abs, tag = 'smem constant byte address 0x4 - core index']
  #allocation1 [shape = 'u32[72,128]{1,0:T(1,128)}', space=vmem, size = 0x9000, scoped, tag = 'internal scratch']
  %s0 = inlined_call_operand.vmem [shape: f32[16,128], index: 0, kind: input, shape index: {}]
  %s1 = inlined_call_operand.vmem [shape: f32[2,1,8], index: 1, kind: input, shape index: {}]
  %s2 = inlined_call_operand.vmem [shape: f32[1,128], index: 2, kind: input, shape index: {}]
  %s3 = inlined_call_operand.vmem [shape: f32[1,128], index: 3, kind: input, shape index: {}]
  %s4 = inlined_call_operand.vmem [shape: f32[1,128], index: 4, kind: input, shape index: {}]
  %s5 = inlined_call_operand.vmem [shape: f32[1,128], index: 5, kind: input, shape index: {}]
  %s6 = inlined_call_operand.vmem [shape: bf16[128,384], index: 6, kind: input, shape index: {}]
  %s7 = inlined_call_operand.vmem [shape: f32[1,384], index: 7, kind: input, shape index: {}]
  %s8 = inlined_call_operand.hbm [shape: bf16[128,128], index: 8, kind: input, shape index: {}]
  %s9 = inlined_call_operand.vmem [shape: f32[1,128], index: 9, kind: input, shape index: {}]
  %s10 = inlined_call_operand.vmem [shape: bf16[128,32], index: 10, kind: input, shape index: {}]
  %s11 = inlined_call_operand.vmem [shape: f32[1,32], index: 11, kind: input, shape index: {}]
  %s12 = inlined_call_operand.vmem [shape: bf16[32,128], index: 12, kind: input, shape index: {}]
  %s13 = inlined_call_operand.vmem [shape: f32[1,128], index: 13, kind: input, shape index: {}]
  %s14 = inlined_call_operand.vmem [shape: f32[1,128], index: 14, kind: input, shape index: {}]
  %s15 = inlined_call_operand.vmem [shape: f32[1,128], index: 15, kind: input, shape index: {}]
  %s16 = inlined_call_operand.vmem [shape: bf16[128,256], index: 16, kind: input, shape index: {}]
  %s17 = inlined_call_operand.vmem [shape: f32[1,256], index: 17, kind: input, shape index: {}]
  %s18 = inlined_call_operand.hbm [shape: bf16[256,128], index: 18, kind: input, shape index: {}]
  %s19 = inlined_call_operand.vmem [shape: f32[1,128], index: 19, kind: input, shape index: {}]
  %s20 = inlined_call_operand.vmem [shape: bf16[128,32], index: 20, kind: input, shape index: {}]
  %s21 = inlined_call_operand.vmem [shape: f32[1,32], index: 21, kind: input, shape index: {}]
  %s22 = inlined_call_operand.vmem [shape: bf16[32,128], index: 22, kind: input, shape index: {}]
  %s23 = inlined_call_operand.vmem [shape: f32[1,128], index: 23, kind: input, shape index: {}]
  %s24 = inlined_call_operand.vmem [shape: f32[1,128], index: 24, kind: input, shape index: {}]
  %s25 = inlined_call_operand.vmem [shape: f32[1,128], index: 25, kind: input, shape index: {}]
  %s26 = inlined_call_operand.vmem [shape: f32[16,128], index: 26, kind: output, shape index: {}]
  %s27 = sld [smem:[#allocation0]]
  $region145: #{_forward_impl.2} parent=0
    _
  %s29 = ssub.s32 1, %s27
  %s30 = scalar_select 0, %s29, %s27
  $region1: #{_forward_impl.2} parent=0
    #allocation2 [shape = 'u8[32768]{0}', space=vmem, size = 0x8000, scoped, tag = 'input window, operand 8, single buffered']
    #allocation3 [shape = 's32[2]{0}', space=sflag, size = 0x8, scoped, tag = 'scoped memory for _forward_impl.2']
    #allocation4 [shape = 'u8[65536]{0}', space=vmem, size = 0x10000, scoped, tag = 'input window, operand 18, single buffered']
    #allocation5 [shape = 's32[1]{0}', space=sflag, size = 0x4, scoped, tag = 'scoped memory for _forward_impl.2']
    %31 = vsyncpa [#allocation3], 0
    %32 = vsyncpa [#allocation5], 0
    loop: start=0, step=1, limit=4
    $region2: #{_forward_impl.2} parent=1 // loop_pre_header
      _
    $region3: #{_forward_impl.2} parent=1 // loop_header
      %s34 = sphi 0, %s38
      %p35 = scmp.ge.s32.totalorder %s34, 4
      %s44 = sphi 0, %s46
      %s47 = sphi 0, %s44
      %s48 = sphi 0, %s47
      %s64 = sphi 0, %s48
      %s70 = sphi 0, %s72
      %s73 = sphi 0, %s70
      %s74 = sphi 0, %s73
      %s90 = sphi 0, %s74
      %s94 = sphi 0, %s94
      %s96 = sphi 0, %s94
      %s97 = sphi 0, %s96
      %s111 = sphi 0, %s97
      %s115 = sphi 0, %s115
      %s117 = sphi 0, %s115
      %s118 = sphi 0, %s117
      %s132 = sphi 0, %s118
      %s136 = sphi 0, %s136
      %s138 = sphi 0, %s136
      %s139 = sphi 0, %s138
      %s153 = sphi 0, %s139
      %s157 = sphi 0, %s157
      %s159 = sphi 0, %s157
      %s160 = sphi 0, %s159
      %s174 = sphi 0, %s160
      %s178 = sphi 0, %s178
      %s180 = sphi 0, %s178
      %s181 = sphi 0, %s180
      %s195 = sphi 0, %s181
      %s199 = sphi 0, %s199
      %s201 = sphi 0, %s199
      %s202 = sphi 0, %s201
      %s216 = sphi 0, %s202
      %s220 = sphi 0, %s220
      %s222 = sphi 0, %s220
      %s223 = sphi 0, %s222
      %s237 = sphi 0, %s223
      %s241 = sphi 0, %s241
      %s243 = sphi 0, %s241
      %s244 = sphi 0, %s243
      %s258 = sphi 0, %s244
      %s262 = sphi 0, %s262
      %s264 = sphi 0, %s262
      %s265 = sphi 0, %s264
      %s279 = sphi 0, %s265
      %s283 = sphi 0, %s283
      %s285 = sphi 0, %s283
      %s286 = sphi 0, %s285
      %s300 = sphi 0, %s286
      %s304 = sphi 0, %s304
      %s306 = sphi 0, %s304
      %s307 = sphi 0, %s306
      %s321 = sphi 0, %s307
      %s325 = sphi 0, %s325
      %s327 = sphi 0, %s325
      %s328 = sphi 0, %s327
      %s342 = sphi 0, %s328
      %s346 = sphi 0, %s346
      %s348 = sphi 0, %s346
      %s349 = sphi 0, %s348
      %s363 = sphi 0, %s349
      %s367 = sphi 0, %s367
      %s369 = sphi 0, %s367
      %s370 = sphi 0, %s369
      %s384 = sphi 0, %s370
      %s388 = sphi 0, %s388
      %s390 = sphi 0, %s388
      %s391 = sphi 0, %s390
      %s405 = sphi 0, %s391
      %s409 = sphi 0, %s409
      %s411 = sphi 0, %s409
      %s412 = sphi 0, %s411
      %s426 = sphi 0, %s412
      %s430 = sphi 0, %s430
      %s432 = sphi 0, %s430
      %s433 = sphi 0, %s432
      %s447 = sphi 0, %s433
      %s451 = sphi 0, %s451
      %s453 = sphi 0, %s451
      %s454 = sphi 0, %s453
      %s468 = sphi 0, %s454
      %s472 = sphi 0, %s472
      %s474 = sphi 0, %s472
      %s475 = sphi 0, %s474
      %s489 = sphi 0, %s475
      %s493 = sphi 0, %s493
      %s495 = sphi 0, %s493
      %s496 = sphi 0, %s495
      %s510 = sphi 0, %s496
      %s514 = sphi 0, %s514
      %s516 = sphi 0, %s514
      %s517 = sphi 0, %s516
      %s531 = sphi 0, %s517
      %s535 = sphi 0, %s535
      %s537 = sphi 0, %s535
      %s538 = sphi 0, %s537
      %s552 = sphi 0, %s538
      %s556 = sphi 0, %s556
      %s558 = sphi 0, %s556
      %s559 = sphi 0, %s558
      %s573 = sphi 0, %s559
      %s577 = sphi 0, %s577
      %s579 = sphi 0, %s577
      %s580 = sphi 0, %s579
      %s594 = sphi 0, %s580
      %s600 = sphi 0, %s602
      %s603 = sphi 0, %s600
      %s604 = sphi 0, %s603
      %s620 = sphi 0, %s604
    $region4: #{_forward_impl.2} parent=1 // loop_header_branch
      %37 = sbr.rel (%p35) target = $region8
    $region5: #{_forward_impl.2} parent=1 // loop_body
      %s39 = ssub.s32 %s34, 1
      %s40 = ssub.s32 %s34, 2
      %s41 = sadd.s32 %s34, 1
      %s42 = ssub.s32 %s34, %s41
      %p43 = scmp.eq.s32.totalorder %s42, 0
      %s45 = sadd.s32 %s44, 1
      %s46 = scalar_select %p43, %s44, %s45
      %p49 = pneg %p43
      %p50 = scmp.eq.s32.totalorder %s34, 1
      %p51 = por %p49, %p50
      %p52 = scmp.ne.s32.totalorder %s44, %s47
      %p53 = scmp.eq.s32.totalorder %s34, 0
      %p54 = por %p52, %p53
      %p55 = scmp.ne.s32.totalorder %s44, %s47
      %p56 = scmp.eq.s32.totalorder %s39, 1
      %p57 = por %p55, %p56
      %p58 = scmp.ne.s32.totalorder %s47, %s48
      %p59 = scmp.eq.s32.totalorder %s39, 0
      %p60 = por %p58, %p59
      %p61 = scmp.ne.s32.totalorder %s47, %s48
      %p62 = scmp.eq.s32.totalorder %s40, 1
      %p63 = por %p61, %p62
      %p65 = scmp.ne.s32.totalorder %s48, %s64
      %p66 = scmp.eq.s32.totalorder %s40, 0
      %p67 = por %p65, %p66
      %s68 = ssub.s32 %s34, %s41
      %p69 = scmp.eq.s32.totalorder %s68, 0
      %s71 = sadd.s32 %s70, 1
      %s72 = scalar_select %p69, %s70, %s71
      %p75 = pneg %p69
      %p76 = scmp.eq.s32.totalorder %s34, 1
      %p77 = por %p75, %p76
      %p78 = scmp.ne.s32.totalorder %s70, %s73
      %p79 = scmp.eq.s32.totalorder %s34, 0
      %p80 = por %p78, %p79
      %p81 = scmp.ne.s32.totalorder %s70, %s73
      %p82 = scmp.eq.s32.totalorder %s39, 1
      %p83 = por %p81, %p82
      %p84 = scmp.ne.s32.totalorder %s73, %s74
      %p85 = scmp.eq.s32.totalorder %s39, 0
      %p86 = por %p84, %p85
      %p87 = scmp.ne.s32.totalorder %s73, %s74
      %p88 = scmp.eq.s32.totalorder %s40, 1
      %p89 = por %p87, %p88
      %p91 = scmp.ne.s32.totalorder %s74, %s90
      %p92 = scmp.eq.s32.totalorder %s40, 0
      %p93 = por %p91, %p92
      %s95 = sadd.s32 %s94, 1
      %p98 = scmp.eq.s32.totalorder %s34, 1
      %p99 = scmp.ne.s32.totalorder %s94, %s96
      %p100 = scmp.eq.s32.totalorder %s34, 0
      %p101 = por %p99, %p100
      %p102 = scmp.ne.s32.totalorder %s94, %s96
      %p103 = scmp.eq.s32.totalorder %s39, 1
      %p104 = por %p102, %p103
      %p105 = scmp.ne.s32.totalorder %s96, %s97
      %p106 = scmp.eq.s32.totalorder %s39, 0
      %p107 = por %p105, %p106
      %p108 = scmp.ne.s32.totalorder %s96, %s97
      %p109 = scmp.eq.s32.totalorder %s40, 1
      %p110 = por %p108, %p109
      %p112 = scmp.ne.s32.totalorder %s97, %s111
      %p113 = scmp.eq.s32.totalorder %s40, 0
      %p114 = por %p112, %p113
      %s116 = sadd.s32 %s115, 1
      %p119 = scmp.eq.s32.totalorder %s34, 1
      %p120 = scmp.ne.s32.totalorder %s115, %s117
      %p121 = scmp.eq.s32.totalorder %s34, 0
      %p122 = por %p120, %p121
      %p123 = scmp.ne.s32.totalorder %s115, %s117
      %p124 = scmp.eq.s32.totalorder %s39, 1
      %p125 = por %p123, %p124
      %p126 = scmp.ne.s32.totalorder %s117, %s118
      %p127 = scmp.eq.s32.totalorder %s39, 0
      %p128 = por %p126, %p127
      %p129 = scmp.ne.s32.totalorder %s117, %s118
      %p130 = scmp.eq.s32.totalorder %s40, 1
      %p131 = por %p129, %p130
      %p133 = scmp.ne.s32.totalorder %s118, %s132
      %p134 = scmp.eq.s32.totalorder %s40, 0
      %p135 = por %p133, %p134
      %s137 = sadd.s32 %s136, 1
      %p140 = scmp.eq.s32.totalorder %s34, 1
      %p141 = scmp.ne.s32.totalorder %s136, %s138
      %p142 = scmp.eq.s32.totalorder %s34, 0
      %p143 = por %p141, %p142
      %p144 = scmp.ne.s32.totalorder %s136, %s138
      %p145 = scmp.eq.s32.totalorder %s39, 1
      %p146 = por %p144, %p145
      %p147 = scmp.ne.s32.totalorder %s138, %s139
      %p148 = scmp.eq.s32.totalorder %s39, 0
      %p149 = por %p147, %p148
      %p150 = scmp.ne.s32.totalorder %s138, %s139
      %p151 = scmp.eq.s32.totalorder %s40, 1
      %p152 = por %p150, %p151
      %p154 = scmp.ne.s32.totalorder %s139, %s153
      %p155 = scmp.eq.s32.totalorder %s40, 0
      %p156 = por %p154, %p155
      %s158 = sadd.s32 %s157, 1
      %p161 = scmp.eq.s32.totalorder %s34, 1
      %p162 = scmp.ne.s32.totalorder %s157, %s159
      %p163 = scmp.eq.s32.totalorder %s34, 0
      %p164 = por %p162, %p163
      %p165 = scmp.ne.s32.totalorder %s157, %s159
      %p166 = scmp.eq.s32.totalorder %s39, 1
      %p167 = por %p165, %p166
      %p168 = scmp.ne.s32.totalorder %s159, %s160
      %p169 = scmp.eq.s32.totalorder %s39, 0
      %p170 = por %p168, %p169
      %p171 = scmp.ne.s32.totalorder %s159, %s160
      %p172 = scmp.eq.s32.totalorder %s40, 1
      %p173 = por %p171, %p172
      %p175 = scmp.ne.s32.totalorder %s160, %s174
      %p176 = scmp.eq.s32.totalorder %s40, 0
      %p177 = por %p175, %p176
      %s179 = sadd.s32 %s178, 1
      %p182 = scmp.eq.s32.totalorder %s34, 1
      %p183 = scmp.ne.s32.totalorder %s178, %s180
      %p184 = scmp.eq.s32.totalorder %s34, 0
      %p185 = por %p183, %p184
      %p186 = scmp.ne.s32.totalorder %s178, %s180
      %p187 = scmp.eq.s32.totalorder %s39, 1
      %p188 = por %p186, %p187
      %p189 = scmp.ne.s32.totalorder %s180, %s181
      %p190 = scmp.eq.s32.totalorder %s39, 0
      %p191 = por %p189, %p190
      %p192 = scmp.ne.s32.totalorder %s180, %s181
      %p193 = scmp.eq.s32.totalorder %s40, 1
      %p194 = por %p192, %p193
      %p196 = scmp.ne.s32.totalorder %s181, %s195
      %p197 = scmp.eq.s32.totalorder %s40, 0
      %p198 = por %p196, %p197
      %s200 = sadd.s32 %s199, 1
      %p203 = scmp.eq.s32.totalorder %s34, 1
      %p204 = scmp.ne.s32.totalorder %s199, %s201
      %p205 = scmp.eq.s32.totalorder %s34, 0
      %p206 = por %p204, %p205
      %p207 = scmp.ne.s32.totalorder %s199, %s201
      %p208 = scmp.eq.s32.totalorder %s39, 1
      %p209 = por %p207, %p208
      %p210 = scmp.ne.s32.totalorder %s201, %s202
      %p211 = scmp.eq.s32.totalorder %s39, 0
      %p212 = por %p210, %p211
      %p213 = scmp.ne.s32.totalorder %s201, %s202
      %p214 = scmp.eq.s32.totalorder %s40, 1
      %p215 = por %p213, %p214
      %p217 = scmp.ne.s32.totalorder %s202, %s216
      %p218 = scmp.eq.s32.totalorder %s40, 0
      %p219 = por %p217, %p218
      %s221 = sadd.s32 %s220, 1
      %p224 = scmp.eq.s32.totalorder %s34, 1
      %p225 = scmp.ne.s32.totalorder %s220, %s222
      %p226 = scmp.eq.s32.totalorder %s34, 0
      %p227 = por %p225, %p226
      %p228 = scmp.ne.s32.totalorder %s220, %s222
      %p229 = scmp.eq.s32.totalorder %s39, 1
      %p230 = por %p228, %p229
      %p231 = scmp.ne.s32.totalorder %s222, %s223
      %p232 = scmp.eq.s32.totalorder %s39, 0
      %p233 = por %p231, %p232
      %p234 = scmp.ne.s32.totalorder %s222, %s223
      %p235 = scmp.eq.s32.totalorder %s40, 1
      %p236 = por %p234, %p235
      %p238 = scmp.ne.s32.totalorder %s223, %s237
      %p239 = scmp.eq.s32.totalorder %s40, 0
      %p240 = por %p238, %p239
      %s242 = sadd.s32 %s241, 1
      %p245 = scmp.eq.s32.totalorder %s34, 1
      %p246 = scmp.ne.s32.totalorder %s241, %s243
      %p247 = scmp.eq.s32.totalorder %s34, 0
      %p248 = por %p246, %p247
      %p249 = scmp.ne.s32.totalorder %s241, %s243
      %p250 = scmp.eq.s32.totalorder %s39, 1
      %p251 = por %p249, %p250
      %p252 = scmp.ne.s32.totalorder %s243, %s244
      %p253 = scmp.eq.s32.totalorder %s39, 0
      %p254 = por %p252, %p253
      %p255 = scmp.ne.s32.totalorder %s243, %s244
      %p256 = scmp.eq.s32.totalorder %s40, 1
      %p257 = por %p255, %p256
      %p259 = scmp.ne.s32.totalorder %s244, %s258
      %p260 = scmp.eq.s32.totalorder %s40, 0
      %p261 = por %p259, %p260
      %s263 = sadd.s32 %s262, 1
      %p266 = scmp.eq.s32.totalorder %s34, 1
      %p267 = scmp.ne.s32.totalorder %s262, %s264
      %p268 = scmp.eq.s32.totalorder %s34, 0
      %p269 = por %p267, %p268
      %p270 = scmp.ne.s32.totalorder %s262, %s264
      %p271 = scmp.eq.s32.totalorder %s39, 1
      %p272 = por %p270, %p271
      %p273 = scmp.ne.s32.totalorder %s264, %s265
      %p274 = scmp.eq.s32.totalorder %s39, 0
      %p275 = por %p273, %p274
      %p276 = scmp.ne.s32.totalorder %s264, %s265
      %p277 = scmp.eq.s32.totalorder %s40, 1
      %p278 = por %p276, %p277
      %p280 = scmp.ne.s32.totalorder %s265, %s279
      %p281 = scmp.eq.s32.totalorder %s40, 0
      %p282 = por %p280, %p281
      %s284 = sadd.s32 %s283, 1
      %p287 = scmp.eq.s32.totalorder %s34, 1
      %p288 = scmp.ne.s32.totalorder %s283, %s285
      %p289 = scmp.eq.s32.totalorder %s34, 0
      %p290 = por %p288, %p289
      %p291 = scmp.ne.s32.totalorder %s283, %s285
      %p292 = scmp.eq.s32.totalorder %s39, 1
      %p293 = por %p291, %p292
      %p294 = scmp.ne.s32.totalorder %s285, %s286
      %p295 = scmp.eq.s32.totalorder %s39, 0
      %p296 = por %p294, %p295
      %p297 = scmp.ne.s32.totalorder %s285, %s286
      %p298 = scmp.eq.s32.totalorder %s40, 1
      %p299 = por %p297, %p298
      %p301 = scmp.ne.s32.totalorder %s286, %s300
      %p302 = scmp.eq.s32.totalorder %s40, 0
      %p303 = por %p301, %p302
      %s305 = sadd.s32 %s304, 1
      %p308 = scmp.eq.s32.totalorder %s34, 1
      %p309 = scmp.ne.s32.totalorder %s304, %s306
      %p310 = scmp.eq.s32.totalorder %s34, 0
      %p311 = por %p309, %p310
      %p312 = scmp.ne.s32.totalorder %s304, %s306
      %p313 = scmp.eq.s32.totalorder %s39, 1
      %p314 = por %p312, %p313
      %p315 = scmp.ne.s32.totalorder %s306, %s307
      %p316 = scmp.eq.s32.totalorder %s39, 0
      %p317 = por %p315, %p316
      %p318 = scmp.ne.s32.totalorder %s306, %s307
      %p319 = scmp.eq.s32.totalorder %s40, 1
      %p320 = por %p318, %p319
      %p322 = scmp.ne.s32.totalorder %s307, %s321
      %p323 = scmp.eq.s32.totalorder %s40, 0
      %p324 = por %p322, %p323
      %s326 = sadd.s32 %s325, 1
      %p329 = scmp.eq.s32.totalorder %s34, 1
      %p330 = scmp.ne.s32.totalorder %s325, %s327
      %p331 = scmp.eq.s32.totalorder %s34, 0
      %p332 = por %p330, %p331
      %p333 = scmp.ne.s32.totalorder %s325, %s327
      %p334 = scmp.eq.s32.totalorder %s39, 1
      %p335 = por %p333, %p334
      %p336 = scmp.ne.s32.totalorder %s327, %s328
      %p337 = scmp.eq.s32.totalorder %s39, 0
      %p338 = por %p336, %p337
      %p339 = scmp.ne.s32.totalorder %s327, %s328
      %p340 = scmp.eq.s32.totalorder %s40, 1
      %p341 = por %p339, %p340
      %p343 = scmp.ne.s32.totalorder %s328, %s342
      %p344 = scmp.eq.s32.totalorder %s40, 0
      %p345 = por %p343, %p344
      %s347 = sadd.s32 %s346, 1
      %p350 = scmp.eq.s32.totalorder %s34, 1
      %p351 = scmp.ne.s32.totalorder %s346, %s348
      %p352 = scmp.eq.s32.totalorder %s34, 0
      %p353 = por %p351, %p352
      %p354 = scmp.ne.s32.totalorder %s346, %s348
      %p355 = scmp.eq.s32.totalorder %s39, 1
      %p356 = por %p354, %p355
      %p357 = scmp.ne.s32.totalorder %s348, %s349
      %p358 = scmp.eq.s32.totalorder %s39, 0
      %p359 = por %p357, %p358
      %p360 = scmp.ne.s32.totalorder %s348, %s349
      %p361 = scmp.eq.s32.totalorder %s40, 1
      %p362 = por %p360, %p361
      %p364 = scmp.ne.s32.totalorder %s349, %s363
      %p365 = scmp.eq.s32.totalorder %s40, 0
      %p366 = por %p364, %p365
      %s368 = sadd.s32 %s367, 1
      %p371 = scmp.eq.s32.totalorder %s34, 1
      %p372 = scmp.ne.s32.totalorder %s367, %s369
      %p373 = scmp.eq.s32.totalorder %s34, 0
      %p374 = por %p372, %p373
      %p375 = scmp.ne.s32.totalorder %s367, %s369
      %p376 = scmp.eq.s32.totalorder %s39, 1
      %p377 = por %p375, %p376
      %p378 = scmp.ne.s32.totalorder %s369, %s370
      %p379 = scmp.eq.s32.totalorder %s39, 0
      %p380 = por %p378, %p379
      %p381 = scmp.ne.s32.totalorder %s369, %s370
      %p382 = scmp.eq.s32.totalorder %s40, 1
      %p383 = por %p381, %p382
      %p385 = scmp.ne.s32.totalorder %s370, %s384
      %p386 = scmp.eq.s32.totalorder %s40, 0
      %p387 = por %p385, %p386
      %s389 = sadd.s32 %s388, 1
      %p392 = scmp.eq.s32.totalorder %s34, 1
      %p393 = scmp.ne.s32.totalorder %s388, %s390
      %p394 = scmp.eq.s32.totalorder %s34, 0
      %p395 = por %p393, %p394
      %p396 = scmp.ne.s32.totalorder %s388, %s390
      %p397 = scmp.eq.s32.totalorder %s39, 1
      %p398 = por %p396, %p397
      %p399 = scmp.ne.s32.totalorder %s390, %s391
      %p400 = scmp.eq.s32.totalorder %s39, 0
      %p401 = por %p399, %p400
      %p402 = scmp.ne.s32.totalorder %s390, %s391
      %p403 = scmp.eq.s32.totalorder %s40, 1
      %p404 = por %p402, %p403
      %p406 = scmp.ne.s32.totalorder %s391, %s405
      %p407 = scmp.eq.s32.totalorder %s40, 0
      %p408 = por %p406, %p407
      %s410 = sadd.s32 %s409, 1
      %p413 = scmp.eq.s32.totalorder %s34, 1
      %p414 = scmp.ne.s32.totalorder %s409, %s411
      %p415 = scmp.eq.s32.totalorder %s34, 0
      %p416 = por %p414, %p415
      %p417 = scmp.ne.s32.totalorder %s409, %s411
      %p418 = scmp.eq.s32.totalorder %s39, 1
      %p419 = por %p417, %p418
      %p420 = scmp.ne.s32.totalorder %s411, %s412
      %p421 = scmp.eq.s32.totalorder %s39, 0
      %p422 = por %p420, %p421
      %p423 = scmp.ne.s32.totalorder %s411, %s412
      %p424 = scmp.eq.s32.totalorder %s40, 1
      %p425 = por %p423, %p424
      %p427 = scmp.ne.s32.totalorder %s412, %s426
      %p428 = scmp.eq.s32.totalorder %s40, 0
      %p429 = por %p427, %p428
      %s431 = sadd.s32 %s430, 1
      %p434 = scmp.eq.s32.totalorder %s34, 1
      %p435 = scmp.ne.s32.totalorder %s430, %s432
      %p436 = scmp.eq.s32.totalorder %s34, 0
      %p437 = por %p435, %p436
      %p438 = scmp.ne.s32.totalorder %s430, %s432
      %p439 = scmp.eq.s32.totalorder %s39, 1
      %p440 = por %p438, %p439
      %p441 = scmp.ne.s32.totalorder %s432, %s433
      %p442 = scmp.eq.s32.totalorder %s39, 0
      %p443 = por %p441, %p442
      %p444 = scmp.ne.s32.totalorder %s432, %s433
      %p445 = scmp.eq.s32.totalorder %s40, 1
      %p446 = por %p444, %p445
      %p448 = scmp.ne.s32.totalorder %s433, %s447
      %p449 = scmp.eq.s32.totalorder %s40, 0
      %p450 = por %p448, %p449
      %s452 = sadd.s32 %s451, 1
      %p455 = scmp.eq.s32.totalorder %s34, 1
      %p456 = scmp.ne.s32.totalorder %s451, %s453
      %p457 = scmp.eq.s32.totalorder %s34, 0
      %p458 = por %p456, %p457
      %p459 = scmp.ne.s32.totalorder %s451, %s453
      %p460 = scmp.eq.s32.totalorder %s39, 1
      %p461 = por %p459, %p460
      %p462 = scmp.ne.s32.totalorder %s453, %s454
      %p463 = scmp.eq.s32.totalorder %s39, 0
      %p464 = por %p462, %p463
      %p465 = scmp.ne.s32.totalorder %s453, %s454
      %p466 = scmp.eq.s32.totalorder %s40, 1
      %p467 = por %p465, %p466
      %p469 = scmp.ne.s32.totalorder %s454, %s468
      %p470 = scmp.eq.s32.totalorder %s40, 0
      %p471 = por %p469, %p470
      %s473 = sadd.s32 %s472, 1
      %p476 = scmp.eq.s32.totalorder %s34, 1
      %p477 = scmp.ne.s32.totalorder %s472, %s474
      %p478 = scmp.eq.s32.totalorder %s34, 0
      %p479 = por %p477, %p478
      %p480 = scmp.ne.s32.totalorder %s472, %s474
      %p481 = scmp.eq.s32.totalorder %s39, 1
      %p482 = por %p480, %p481
      %p483 = scmp.ne.s32.totalorder %s474, %s475
      %p484 = scmp.eq.s32.totalorder %s39, 0
      %p485 = por %p483, %p484
      %p486 = scmp.ne.s32.totalorder %s474, %s475
      %p487 = scmp.eq.s32.totalorder %s40, 1
      %p488 = por %p486, %p487
      %p490 = scmp.ne.s32.totalorder %s475, %s489
      %p491 = scmp.eq.s32.totalorder %s40, 0
      %p492 = por %p490, %p491
      %s494 = sadd.s32 %s493, 1
      %p497 = scmp.eq.s32.totalorder %s34, 1
      %p498 = scmp.ne.s32.totalorder %s493, %s495
      %p499 = scmp.eq.s32.totalorder %s34, 0
      %p500 = por %p498, %p499
      %p501 = scmp.ne.s32.totalorder %s493, %s495
      %p502 = scmp.eq.s32.totalorder %s39, 1
      %p503 = por %p501, %p502
      %p504 = scmp.ne.s32.totalorder %s495, %s496
      %p505 = scmp.eq.s32.totalorder %s39, 0
      %p506 = por %p504, %p505
      %p507 = scmp.ne.s32.totalorder %s495, %s496
      %p508 = scmp.eq.s32.totalorder %s40, 1
      %p509 = por %p507, %p508
      %p511 = scmp.ne.s32.totalorder %s496, %s510
      %p512 = scmp.eq.s32.totalorder %s40, 0
      %p513 = por %p511, %p512
      %s515 = sadd.s32 %s514, 1
      %p518 = scmp.eq.s32.totalorder %s34, 1
      %p519 = scmp.ne.s32.totalorder %s514, %s516
      %p520 = scmp.eq.s32.totalorder %s34, 0
      %p521 = por %p519, %p520
      %p522 = scmp.ne.s32.totalorder %s514, %s516
      %p523 = scmp.eq.s32.totalorder %s39, 1
      %p524 = por %p522, %p523
      %p525 = scmp.ne.s32.totalorder %s516, %s517
      %p526 = scmp.eq.s32.totalorder %s39, 0
      %p527 = por %p525, %p526
      %p528 = scmp.ne.s32.totalorder %s516, %s517
      %p529 = scmp.eq.s32.totalorder %s40, 1
      %p530 = por %p528, %p529
      %p532 = scmp.ne.s32.totalorder %s517, %s531
      %p533 = scmp.eq.s32.totalorder %s40, 0
      %p534 = por %p532, %p533
      %s536 = sadd.s32 %s535, 1
      %p539 = scmp.eq.s32.totalorder %s34, 1
      %p540 = scmp.ne.s32.totalorder %s535, %s537
      %p541 = scmp.eq.s32.totalorder %s34, 0
      %p542 = por %p540, %p541
      %p543 = scmp.ne.s32.totalorder %s535, %s537
      %p544 = scmp.eq.s32.totalorder %s39, 1
      %p545 = por %p543, %p544
      %p546 = scmp.ne.s32.totalorder %s537, %s538
      %p547 = scmp.eq.s32.totalorder %s39, 0
      %p548 = por %p546, %p547
      %p549 = scmp.ne.s32.totalorder %s537, %s538
      %p550 = scmp.eq.s32.totalorder %s40, 1
      %p551 = por %p549, %p550
      %p553 = scmp.ne.s32.totalorder %s538, %s552
      %p554 = scmp.eq.s32.totalorder %s40, 0
      %p555 = por %p553, %p554
      %s557 = sadd.s32 %s556, 1
      %p560 = scmp.eq.s32.totalorder %s34, 1
      %p561 = scmp.ne.s32.totalorder %s556, %s558
      %p562 = scmp.eq.s32.totalorder %s34, 0
      %p563 = por %p561, %p562
      %p564 = scmp.ne.s32.totalorder %s556, %s558
      %p565 = scmp.eq.s32.totalorder %s39, 1
      %p566 = por %p564, %p565
      %p567 = scmp.ne.s32.totalorder %s558, %s559
      %p568 = scmp.eq.s32.totalorder %s39, 0
      %p569 = por %p567, %p568
      %p570 = scmp.ne.s32.totalorder %s558, %s559
      %p571 = scmp.eq.s32.totalorder %s40, 1
      %p572 = por %p570, %p571
      %p574 = scmp.ne.s32.totalorder %s559, %s573
      %p575 = scmp.eq.s32.totalorder %s40, 0
      %p576 = por %p574, %p575
      %s578 = sadd.s32 %s577, 1
      %p581 = scmp.eq.s32.totalorder %s34, 1
      %p582 = scmp.ne.s32.totalorder %s577, %s579
      %p583 = scmp.eq.s32.totalorder %s34, 0
      %p584 = por %p582, %p583
      %p585 = scmp.ne.s32.totalorder %s577, %s579
      %p586 = scmp.eq.s32.totalorder %s39, 1
      %p587 = por %p585, %p586
      %p588 = scmp.ne.s32.totalorder %s579, %s580
      %p589 = scmp.eq.s32.totalorder %s39, 0
      %p590 = por %p588, %p589
      %p591 = scmp.ne.s32.totalorder %s579, %s580
      %p592 = scmp.eq.s32.totalorder %s40, 1
      %p593 = por %p591, %p592
      %p595 = scmp.ne.s32.totalorder %s580, %s594
      %p596 = scmp.eq.s32.totalorder %s40, 0
      %p597 = por %p595, %p596
      %s598 = ssub.s32 %s34, %s41
      %p599 = scmp.eq.s32.totalorder %s598, 0
      %s601 = sadd.s32 %s600, 1
      %s602 = scalar_select %p599, %s600, %s601
      %p605 = pneg %p599
      %p606 = scmp.eq.s32.totalorder %s34, 1
      %p607 = por %p605, %p606
      %p608 = scmp.ne.s32.totalorder %s600, %s603
      %p609 = scmp.eq.s32.totalorder %s34, 0
      %p610 = por %p608, %p609
      %p611 = scmp.ne.s32.totalorder %s600, %s603
      %p612 = scmp.eq.s32.totalorder %s39, 1
      %p613 = por %p611, %p612
      %p614 = scmp.ne.s32.totalorder %s603, %s604
      %p615 = scmp.eq.s32.totalorder %s39, 0
      %p616 = por %p614, %p615
      %p617 = scmp.ne.s32.totalorder %s603, %s604
      %p618 = scmp.eq.s32.totalorder %s40, 1
      %p619 = por %p617, %p618
      %p621 = scmp.ne.s32.totalorder %s604, %s620
      %p622 = scmp.eq.s32.totalorder %s40, 0
      %p623 = por %p621, %p622
      %p624 = scmp.le.s32.totalorder 1, %s34
      %p625 = scmp.lt.s32.totalorder %s34, 3
      %p626 = pnand %p624, %p625
      %p627 = pneg %p626
      // Predicated region
      $region9: #{_forward_impl.2} parent=5 // pred_check
        _
      $region10: #{_forward_impl.2} parent=5 // pred_check_branch
        %629 = sbr.rel (%p626) target = $region12
      $region11: #{_forward_impl.2} parent=5 // pred_region
        %s630 = ssub.s32 %s34, 1
        // Predicated region
        $region13: #{_forward_impl.2} parent=11 // pred_check
          %p631 = pneg %p107
        $region14: #{_forward_impl.2} parent=11 // pred_check_branch
          %633 = sbr.rel (%p631) target = $region16
        $region15: #{_forward_impl.2} parent=11 // pred_region
          _
        $region16: #{_forward_impl.2} parent=11 // pred_fallthru
          _
        // Predicated region
        $region17: #{_forward_impl.2} parent=11 // pred_check
          %p634 = pneg %p128
        $region18: #{_forward_impl.2} parent=11 // pred_check_branch
          %636 = sbr.rel (%p634) target = $region20
        $region19: #{_forward_impl.2} parent=11 // pred_region
          _
        $region20: #{_forward_impl.2} parent=11 // pred_fallthru
          _
        // Predicated region
        $region21: #{_forward_impl.2} parent=11 // pred_check
          %p637 = pneg %p149
        $region22: #{_forward_impl.2} parent=11 // pred_check_branch
          %639 = sbr.rel (%p637) target = $region24
        $region23: #{_forward_impl.2} parent=11 // pred_region
          _
        $region24: #{_forward_impl.2} parent=11 // pred_fallthru
          _
        // Predicated region
        $region25: #{_forward_impl.2} parent=11 // pred_check
          %p640 = pneg %p170
        $region26: #{_forward_impl.2} parent=11 // pred_check_branch
          %642 = sbr.rel (%p640) target = $region28
        $region27: #{_forward_impl.2} parent=11 // pred_region
          _
        $region28: #{_forward_impl.2} parent=11 // pred_fallthru
          _
        // Predicated region
        $region29: #{_forward_impl.2} parent=11 // pred_check
          %p643 = pneg %p191
        $region30: #{_forward_impl.2} parent=11 // pred_check_branch
          %645 = sbr.rel (%p643) target = $region32
        $region31: #{_forward_impl.2} parent=11 // pred_region
          _
        $region32: #{_forward_impl.2} parent=11 // pred_fallthru
          _
        // Predicated region
        $region33: #{_forward_impl.2} parent=11 // pred_check
          %p646 = pneg %p212
        $region34: #{_forward_impl.2} parent=11 // pred_check_branch
          %648 = sbr.rel (%p646) target = $region36
        $region35: #{_forward_impl.2} parent=11 // pred_region
          _
        $region36: #{_forward_impl.2} parent=11 // pred_fallthru
          _
        // Predicated region
        $region37: #{_forward_impl.2} parent=11 // pred_check
          %p649 = pneg %p233
        $region38: #{_forward_impl.2} parent=11 // pred_check_branch
          %651 = sbr.rel (%p649) target = $region40
        $region39: #{_forward_impl.2} parent=11 // pred_region
          %653 = vsyncadd [#allocation3], 0
          %s654 = sshll.u32 %s8, 4
          %s655 = int_to_ptr.hbm [resolvable:$true] %s654
          %s656 = sshll.u32 [#allocation2], 4
          %s657 = int_to_ptr.vmem [resolvable:$true] %s656
          %662 = dma.hbm_to_vmem [thread:$0]  %s655, 1024, %s657, [#allocation3], 64, 64, 4
        $region40: #{_forward_impl.2} parent=11 // pred_fallthru
          _
        // Predicated region
        $region41: #{_forward_impl.2} parent=11 // pred_check
          %p663 = pneg %p254
        $region42: #{_forward_impl.2} parent=11 // pred_check_branch
          %665 = sbr.rel (%p663) target = $region44
        $region43: #{_forward_impl.2} parent=11 // pred_region
          _
        $region44: #{_forward_impl.2} parent=11 // pred_fallthru
          _
        // Predicated region
        $region45: #{_forward_impl.2} parent=11 // pred_check
          %p666 = pneg %p275
        $region46: #{_forward_impl.2} parent=11 // pred_check_branch
          %668 = sbr.rel (%p666) target = $region48
        $region47: #{_forward_impl.2} parent=11 // pred_region
          _
        $region48: #{_forward_impl.2} parent=11 // pred_fallthru
          _
        // Predicated region
        $region49: #{_forward_impl.2} parent=11 // pred_check
          %p669 = pneg %p296
        $region50: #{_forward_impl.2} parent=11 // pred_check_branch
          %671 = sbr.rel (%p669) target = $region52
        $region51: #{_forward_impl.2} parent=11 // pred_region
          _
        $region52: #{_forward_impl.2} parent=11 // pred_fallthru
          _
        // Predicated region
        $region53: #{_forward_impl.2} parent=11 // pred_check
          %p672 = pneg %p317
        $region54: #{_forward_impl.2} parent=11 // pred_check_branch
          %674 = sbr.rel (%p672) target = $region56
        $region55: #{_forward_impl.2} parent=11 // pred_region
          _
        $region56: #{_forward_impl.2} parent=11 // pred_fallthru
          _
        // Predicated region
        $region57: #{_forward_impl.2} parent=11 // pred_check
          %p675 = pneg %p338
        $region58: #{_forward_impl.2} parent=11 // pred_check_branch
          %677 = sbr.rel (%p675) target = $region60
        $region59: #{_forward_impl.2} parent=11 // pred_region
          _
        $region60: #{_forward_impl.2} parent=11 // pred_fallthru
          _
        // Predicated region
        $region61: #{_forward_impl.2} parent=11 // pred_check
          %p678 = pneg %p359
        $region62: #{_forward_impl.2} parent=11 // pred_check_branch
          %680 = sbr.rel (%p678) target = $region64
        $region63: #{_forward_impl.2} parent=11 // pred_region
          _
        $region64: #{_forward_impl.2} parent=11 // pred_fallthru
          _
        // Predicated region
        $region65: #{_forward_impl.2} parent=11 // pred_check
          %p681 = pneg %p380
        $region66: #{_forward_impl.2} parent=11 // pred_check_branch
          %683 = sbr.rel (%p681) target = $region68
        $region67: #{_forward_impl.2} parent=11 // pred_region
          _
        $region68: #{_forward_impl.2} parent=11 // pred_fallthru
          _
        // Predicated region
        $region69: #{_forward_impl.2} parent=11 // pred_check
          %p684 = pneg %p401
        $region70: #{_forward_impl.2} parent=11 // pred_check_branch
          %686 = sbr.rel (%p684) target = $region72
        $region71: #{_forward_impl.2} parent=11 // pred_region
          _
        $region72: #{_forward_impl.2} parent=11 // pred_fallthru
          _
        // Predicated region
        $region73: #{_forward_impl.2} parent=11 // pred_check
          %p687 = pneg %p422
        $region74: #{_forward_impl.2} parent=11 // pred_check_branch
          %689 = sbr.rel (%p687) target = $region76
        $region75: #{_forward_impl.2} parent=11 // pred_region
          _
        $region76: #{_forward_impl.2} parent=11 // pred_fallthru
          _
        // Predicated region
        $region77: #{_forward_impl.2} parent=11 // pred_check
          %p690 = pneg %p443
        $region78: #{_forward_impl.2} parent=11 // pred_check_branch
          %692 = sbr.rel (%p690) target = $region80
        $region79: #{_forward_impl.2} parent=11 // pred_region
          %694 = vsyncadd [#allocation5], 0
          %s695 = sshll.u32 %s18, 4
          %s696 = int_to_ptr.hbm [resolvable:$true] %s695
          %s697 = sshll.u32 [#allocation4], 4
          %s698 = int_to_ptr.vmem [resolvable:$true] %s697
          %703 = dma.hbm_to_vmem [thread:$0]  %s696, 2048, %s698, [#allocation5], 64, 64, 4
        $region80: #{_forward_impl.2} parent=11 // pred_fallthru
          _
        // Predicated region
        $region81: #{_forward_impl.2} parent=11 // pred_check
          %p704 = pneg %p464
        $region82: #{_forward_impl.2} parent=11 // pred_check_branch
          %706 = sbr.rel (%p704) target = $region84
        $region83: #{_forward_impl.2} parent=11 // pred_region
          _
        $region84: #{_forward_impl.2} parent=11 // pred_fallthru
          _
        // Predicated region
        $region85: #{_forward_impl.2} parent=11 // pred_check
          %p707 = pneg %p485
        $region86: #{_forward_impl.2} parent=11 // pred_check_branch
          %709 = sbr.rel (%p707) target = $region88
        $region87: #{_forward_impl.2} parent=11 // pred_region
          _
        $region88: #{_forward_impl.2} parent=11 // pred_fallthru
          _
        // Predicated region
        $region89: #{_forward_impl.2} parent=11 // pred_check
          %p710 = pneg %p506
        $region90: #{_forward_impl.2} parent=11 // pred_check_branch
          %712 = sbr.rel (%p710) target = $region92
        $region91: #{_forward_impl.2} parent=11 // pred_region
          _
        $region92: #{_forward_impl.2} parent=11 // pred_fallthru
          _
        // Predicated region
        $region93: #{_forward_impl.2} parent=11 // pred_check
          %p713 = pneg %p527
        $region94: #{_forward_impl.2} parent=11 // pred_check_branch
          %715 = sbr.rel (%p713) target = $region96
        $region95: #{_forward_impl.2} parent=11 // pred_region
          _
        $region96: #{_forward_impl.2} parent=11 // pred_fallthru
          _
        // Predicated region
        $region97: #{_forward_impl.2} parent=11 // pred_check
          %p716 = pneg %p548
        $region98: #{_forward_impl.2} parent=11 // pred_check_branch
          %718 = sbr.rel (%p716) target = $region100
        $region99: #{_forward_impl.2} parent=11 // pred_region
          _
        $region100: #{_forward_impl.2} parent=11 // pred_fallthru
          _
        // Predicated region
        $region101: #{_forward_impl.2} parent=11 // pred_check
          %p719 = pneg %p569
        $region102: #{_forward_impl.2} parent=11 // pred_check_branch
          %721 = sbr.rel (%p719) target = $region104
        $region103: #{_forward_impl.2} parent=11 // pred_region
          _
        $region104: #{_forward_impl.2} parent=11 // pred_fallthru
          _
        // Predicated region
        $region105: #{_forward_impl.2} parent=11 // pred_check
          %p722 = pneg %p590
        $region106: #{_forward_impl.2} parent=11 // pred_check_branch
          %724 = sbr.rel (%p722) target = $region108
        $region107: #{_forward_impl.2} parent=11 // pred_region
          _
        $region108: #{_forward_impl.2} parent=11 // pred_fallthru
          _
      $region12: #{_forward_impl.2} parent=5 // pred_fallthru
        _
      %p725 = scmp.lt.s32.totalorder %s34, 2
      // Predicated region
      $region109: #{_forward_impl.2} parent=5 // pred_check
        %p726 = pneg %p725
      $region110: #{_forward_impl.2} parent=5 // pred_check_branch
        %728 = sbr.rel (%p726) target = $region112
      $region111: #{_forward_impl.2} parent=5 // pred_region
        // Predicated region
        $region113: #{_forward_impl.2} parent=111 // pred_check
          %p729 = pneg %p54
        $region114: #{_forward_impl.2} parent=111 // pred_check_branch
          %731 = sbr.rel (%p729) target = $region116
        $region115: #{_forward_impl.2} parent=111 // pred_region
          %p732 = scmp.lt.s32.totalorder %s34, 1
          %s733 = scalar_select %p732, %s34, 1
          %s734 = smul.addr %s733, 8
          %s735 = scalar_lea.vmem %s0, %s734
        $region116: #{_forward_impl.2} parent=111 // pred_fallthru
          _
        // Predicated region
        $region117: #{_forward_impl.2} parent=111 // pred_check
          %p736 = pneg %p80
        $region118: #{_forward_impl.2} parent=111 // pred_check_branch
          %738 = sbr.rel (%p736) target = $region120
        $region119: #{_forward_impl.2} parent=111 // pred_region
          %p739 = scmp.lt.s32.totalorder %s34, 1
          %s740 = scalar_select %p739, %s34, 1
          %s741 = scalar_lea.vmem %s1, %s740
        $region120: #{_forward_impl.2} parent=111 // pred_fallthru
          _
      $region112: #{_forward_impl.2} parent=5 // pred_fallthru
        _
      %p742 = scmp.le.s32.totalorder 1, %s34
      %p743 = scmp.lt.s32.totalorder %s34, 3
      %p744 = pnand %p742, %p743
      %p745 = pneg %p744
      // Predicated region
      $region121: #{_forward_impl.2} parent=5 // pred_check
        _
      $region122: #{_forward_impl.2} parent=5 // pred_check_branch
        %747 = sbr.rel (%p744) target = $region124
      $region123: #{_forward_impl.2} parent=5 // pred_region
        %s748 = ssub.s32 %s34, 1
        // Predicated region
        $region125: #{_forward_impl.2} parent=123 // pred_check
          %p749 = pneg %p233
        $region126: #{_forward_impl.2} parent=123 // pred_check_branch
          %751 = sbr.rel (%p749) target = $region128
        $region127: #{_forward_impl.2} parent=123 // pred_region
          %753 = dma.done [#allocation3], 1024
        $region128: #{_forward_impl.2} parent=123 // pred_fallthru
          _
        // Predicated region
        $region129: #{_forward_impl.2} parent=123 // pred_check
          %p754 = pneg %p443
        $region130: #{_forward_impl.2} parent=123 // pred_check_branch
          %756 = sbr.rel (%p754) target = $region132
        $region131: #{_forward_impl.2} parent=123 // pred_region
          %758 = dma.done [#allocation5], 2048
        $region132: #{_forward_impl.2} parent=123 // pred_fallthru
          _
        %p759 = scmp.lt.s32.totalorder %s39, 1
        %s760 = scalar_select %p759, %s39, 1
        %s761 = smul.addr %s760, 8
        %s762 = scalar_lea.vmem %s0, %s761
        %p763 = pneg %p60
        %p764 = pneg %p57
        %p765 = scmp.lt.s32.totalorder %s39, 1
        %s766 = scalar_select %p765, %s39, 1
        %s767 = scalar_lea.vmem %s1, %s766
        %p768 = pneg %p86
        %p769 = pneg %p83
        %p770 = pneg %p107
        %p771 = pneg %p104
        %p772 = pneg %p128
        %p773 = pneg %p125
        %p774 = pneg %p149
        %p775 = pneg %p146
        %p776 = pneg %p170
        %p777 = pneg %p167
        %p778 = pneg %p191
        %p779 = pneg %p188
        %p780 = pneg %p212
        %p781 = pneg %p209
        %p782 = pneg %p233
        %p783 = pneg %p230
        %p784 = pneg %p254
        %p785 = pneg %p251
        %p786 = pneg %p275
        %p787 = pneg %p272
        %p788 = pneg %p296
        %p789 = pneg %p293
        %p790 = pneg %p317
        %p791 = pneg %p314
        %p792 = pneg %p338
        %p793 = pneg %p335
        %p794 = pneg %p359
        %p795 = pneg %p356
        %p796 = pneg %p380
        %p797 = pneg %p377
        %p798 = pneg %p401
        %p799 = pneg %p398
        %p800 = pneg %p422
        %p801 = pneg %p419
        %p802 = pneg %p443
        %p803 = pneg %p440
        %p804 = pneg %p464
        %p805 = pneg %p461
        %p806 = pneg %p485
        %p807 = pneg %p482
        %p808 = pneg %p506
        %p809 = pneg %p503
        %p810 = pneg %p527
        %p811 = pneg %p524
        %p812 = pneg %p548
        %p813 = pneg %p545
        %p814 = pneg %p569
        %p815 = pneg %p566
        %p816 = pneg %p590
        %p817 = pneg %p587
        %p818 = pneg %p616
        %p819 = pneg %p613
        %p820 = scmp.lt.s32.totalorder %s39, 1
        %s821 = scalar_select %p820, %s39, 1
        %s822 = smul.addr %s821, 8
        %s823 = scalar_lea.vmem %s26, %s822
        %p824 = scmp.lt.s32.totalorder %s39, 1
        %s825 = scalar_select %p824, %s39, 1
        %s826 = smul.addr %s825, 8
        %s827 = scalar_lea.vmem %s0, %s826
        %p828 = scmp.lt.s32.totalorder %s39, 1
        %s829 = scalar_select %p828, %s39, 1
        %s830 = scalar_lea.vmem %s1, %s829
        %p831 = scmp.lt.s32.totalorder %s39, 1
        %s832 = scalar_select %p831, %s39, 1
        %s833 = smul.addr %s832, 8
        %s834 = scalar_lea.vmem %s26, %s833
        %v836 = vld [vmem:[%s830] sm:$0x1]
        %v837 = vsub.f32 %v836, 1.0
        %v838 = vmul.f32 %v837, 1e+09
        %v839 = vld [vmem:[%s827] sm:$0xff]
        %v840 = vld [vmem:[%s2] sm:$0x1]
        %v841 = vld [vmem:[%s3] sm:$0x1]
        %842 = vadd.xlane.f32.xlu0 %v839
        %v843 = vpop.xlane.xlu0 %842
        %v844 = vrcp.pop 128.0
        %v845 = vmul.f32 128.0, %v844
        %v846 = vsub.f32 1.0, %v845
        %v847 = vmul.f32 %v844, %v846
        %v848 = vadd.f32 %v844, %v847
        %vm849 = vweird.f32 %v844
        %v850 = vsel %vm849, %v844, %v848
        %v851 = vmul.f32 %v843, %v850
        %v852 = vsub.f32 %v839, %v851
        %v853 = vmul.f32 %v852, %v852
        %854 = vadd.xlane.f32.xlu0 %v853
        %v855 = vpop.xlane.xlu0 %854
        %v856 = vmul.f32 %v855, %v850
        %v857 = vadd.f32 %v856, 1e-05
        %v858 = vrsqrt.pop %v857
        %v859 = vmul.f32 %v858, %v857
        %v860 = vmul.f32 %v859, %v858
        %v861 = vmul.f32 0.5, %v860
        %v862 = vsub.f32 1.5, %v861
        %v863 = vmul.f32 %v858, %v862
        %vm864 = vweird.f32 %v857
        %vm865 = vweird.f32 %v858
        %vm866 = vmor %vm864, %vm865
        %v867 = vsel %vm866, %v858, %v863
        %v868 = vmul.f32 %v852, %v867
        %v870 = vperm.slane %v840, 0
        %v872 = vmul.f32 %v868, %v870
        %v874 = vperm.slane %v841, 0
        %v876 = vadd.f32 %v872, %v874
        %v877 = vld [vmem:[%s4] sm:$0x1]
        %v878 = vld [vmem:[%s5] sm:$0x1]
        %879 = vadd.xlane.f32.xlu0 %v876
        %v880 = vpop.xlane.xlu0 %879
        %v881 = vmul.f32 %v880, %v850
        %v882 = vsub.f32 %v876, %v881
        %v883 = vmul.f32 %v882, %v882
        %884 = vadd.xlane.f32.xlu0 %v883
        %v885 = vpop.xlane.xlu0 %884
        %v886 = vmul.f32 %v885, %v850
        %v887 = vadd.f32 %v886, 1e-05
        %v888 = vrsqrt.pop %v887
        %v889 = vmul.f32 %v888, %v887
        %v890 = vmul.f32 %v889, %v888
        %v891 = vmul.f32 0.5, %v890
        %v892 = vsub.f32 1.5, %v891
        %v893 = vmul.f32 %v888, %v892
        %vm894 = vweird.f32 %v887
        %vm895 = vweird.f32 %v888
        %vm896 = vmor %vm894, %vm895
        %v897 = vsel %vm896, %v888, %v893
        %v898 = vmul.f32 %v882, %v897
        %v900 = vperm.slane %v877, 0
        %v902 = vmul.f32 %v898, %v900
        %v904 = vperm.slane %v878, 0
        %v906 = vadd.f32 %v902, %v904
        %v907 = vld [vmem:[%s6] sm:$0xff]
        %v908 = vld [vmem:[%s6 + $0x8] sm:$0xf]
        %v909 = vld [vmem:[%s6 + $0xc] sm:$0xff]
        %v910 = vld [vmem:[%s6 + $0x14] sm:$0xf]
        %v911 = vld [vmem:[%s6 + $0x18] sm:$0xff]
        %v912 = vld [vmem:[%s6 + $0x20] sm:$0xf]
        %v913 = vld [vmem:[%s6 + $0x24] sm:$0xff]
        %v914 = vld [vmem:[%s6 + $0x2c] sm:$0xf]
        %v915 = vld [vmem:[%s6 + $0x30] sm:$0xff]
        %v916 = vld [vmem:[%s6 + $0x38] sm:$0xf]
        %v917 = vld [vmem:[%s6 + $0x3c] sm:$0xff]
        %v918 = vld [vmem:[%s6 + $0x44] sm:$0xf]
        %v919 = vld [vmem:[%s6 + $0x48] sm:$0xff]
        %v920 = vld [vmem:[%s6 + $0x50] sm:$0xf]
        %v921 = vld [vmem:[%s6 + $0x54] sm:$0xff]
        %v922 = vld [vmem:[%s6 + $0x5c] sm:$0xf]
        %v923 = vld [vmem:[%s6 + $0x60] sm:$0xff]
        %v924 = vld [vmem:[%s6 + $0x68] sm:$0xf]
        %v925 = vld [vmem:[%s6 + $0x6c] sm:$0xff]
        %v926 = vld [vmem:[%s6 + $0x74] sm:$0xf]
        %v927 = vld [vmem:[%s6 + $0x78] sm:$0xff]
        %v928 = vld [vmem:[%s6 + $0x80] sm:$0xf]
        %v929 = vld [vmem:[%s6 + $0x84] sm:$0xff]
        %v930 = vld [vmem:[%s6 + $0x8c] sm:$0xf]
        %v931 = vld [vmem:[%s6 + $0x90] sm:$0xff]
        %v932 = vld [vmem:[%s6 + $0x98] sm:$0xf]
        %v933 = vld [vmem:[%s6 + $0x9c] sm:$0xff]
        %v934 = vld [vmem:[%s6 + $0xa4] sm:$0xf]
        %v935 = vld [vmem:[%s6 + $0xa8] sm:$0xff]
        %v936 = vld [vmem:[%s6 + $0xb0] sm:$0xf]
        %v937 = vld [vmem:[%s6 + $0xb4] sm:$0xff]
        %v938 = vld [vmem:[%s6 + $0xbc] sm:$0xf]
        %v939 = vpack.c.bf16 %v906, %v906
        %v940 = vld [vmem:[%s7] sm:$0x7]
        %v942 = vperm.slane %v940, 0
        %v943 = vperm.slane %v940, 1
        %v944 = vperm.slane %v940, 2
        %v980 = vunpack.c.l.b16 %v907
        %v981 = vunpack.c.h.b16 %v907
        %v982 = vunpack.c.l.b16 %v908
        %v983 = vunpack.c.l.b16 %v909
        %v984 = vunpack.c.h.b16 %v909
        %v985 = vunpack.c.l.b16 %v910
        %v986 = vunpack.c.l.b16 %v911
        %v987 = vunpack.c.h.b16 %v911
        %v988 = vunpack.c.l.b16 %v912
        %v989 = vunpack.c.l.b16 %v913
        %v990 = vunpack.c.h.b16 %v913
        %v991 = vunpack.c.l.b16 %v914
        %v992 = vunpack.c.l.b16 %v915
        %v993 = vunpack.c.h.b16 %v915
        %v994 = vunpack.c.l.b16 %v916
        %v995 = vunpack.c.l.b16 %v917
        %v996 = vunpack.c.h.b16 %v917
        %v997 = vunpack.c.l.b16 %v918
        %v998 = vunpack.c.l.b16 %v919
        %v999 = vunpack.c.h.b16 %v919
        %v1000 = vunpack.c.l.b16 %v920
        %v1001 = vunpack.c.l.b16 %v921
        %v1002 = vunpack.c.h.b16 %v921
        %v1003 = vunpack.c.l.b16 %v922
        %v1004 = vunpack.c.l.b16 %v923
        %v1005 = vunpack.c.h.b16 %v923
        %v1006 = vunpack.c.l.b16 %v924
        %v1007 = vunpack.c.l.b16 %v925
        %v1008 = vunpack.c.h.b16 %v925
        %v1009 = vunpack.c.l.b16 %v926
        %v1010 = vunpack.c.l.b16 %v927
        %v1011 = vunpack.c.h.b16 %v927
        %v1012 = vunpack.c.l.b16 %v928
        %v1013 = vunpack.c.l.b16 %v929
        %v1014 = vunpack.c.h.b16 %v929
        %v1015 = vunpack.c.l.b16 %v930
        %v1016 = vunpack.c.l.b16 %v931
        %v1017 = vunpack.c.h.b16 %v931
        %v1018 = vunpack.c.l.b16 %v932
        %v1019 = vunpack.c.l.b16 %v933
        %v1020 = vunpack.c.h.b16 %v933
        %v1021 = vunpack.c.l.b16 %v934
        %v1022 = vunpack.c.l.b16 %v935
        %v1023 = vunpack.c.h.b16 %v935
        %v1024 = vunpack.c.l.b16 %v936
        %v1025 = vunpack.c.l.b16 %v937
        %v1026 = vunpack.c.h.b16 %v937
        %v1027 = vunpack.c.l.b16 %v938
        %v1028 = vpack.c.b16 %v983, %v980
        %v1029 = vpack.c.b16 %v984, %v981
        %v1030 = vpack.c.b16 %v985, %v982
        %v1031 = vpack.c.b16 %v989, %v986
        %v1032 = vpack.c.b16 %v990, %v987
        %v1033 = vpack.c.b16 %v991, %v988
        %v1034 = vpack.c.b16 %v995, %v992
        %v1035 = vpack.c.b16 %v996, %v993
        %v1036 = vpack.c.b16 %v997, %v994
        %v1037 = vpack.c.b16 %v1001, %v998
        %v1038 = vpack.c.b16 %v1002, %v999
        %v1039 = vpack.c.b16 %v1003, %v1000
        %v1040 = vpack.c.b16 %v1007, %v1004
        %v1041 = vpack.c.b16 %v1008, %v1005
        %v1042 = vpack.c.b16 %v1009, %v1006
        %v1043 = vpack.c.b16 %v1013, %v1010
        %v1044 = vpack.c.b16 %v1014, %v1011
        %v1045 = vpack.c.b16 %v1015, %v1012
        %v1046 = vpack.c.b16 %v1019, %v1016
        %v1047 = vpack.c.b16 %v1020, %v1017
        %v1048 = vpack.c.b16 %v1021, %v1018
        %v1049 = vpack.c.b16 %v1025, %v1022
        %v1050 = vpack.c.b16 %v1026, %v1023
        %v1051 = vpack.c.b16 %v1027, %v1024
        %1076 = vmatpush.bf16.msra.mxu0 %v1049
        %1077 = vmatpush.bf16.msra.mxu0 %v1046
        %1078 = vmatpush.bf16.msra.mxu0 %v1043
        %1079 = vmatpush.bf16.msra.mxu0 %v1040
        %1080 = vmatpush.bf16.msra.mxu0 %v1037
        %1081 = vmatpush.bf16.msra.mxu0 %v1034
        %1082 = vmatpush.bf16.msra.mxu0 %v1031
        %1083 = vmatpush.bf16.msra.mxu0 %v1028
        %1084 = vmatmul.bf16.gmra.mxu0 %v939
        %v1085 = vpop.f32.mrf.mxu0
        %v1086 = vadd.f32 %v942, %v1085
        %v1087 = vpop.f32.mrf.mxu0
        %1088 = vdwg.mxu0
        %1089 = vmatpush.bf16.msra.mxu0 %v1050
        %1090 = vmatpush.bf16.msra.mxu0 %v1047
        %1091 = vmatpush.bf16.msra.mxu0 %v1044
        %1092 = vmatpush.bf16.msra.mxu0 %v1041
        %1093 = vmatpush.bf16.msra.mxu0 %v1038
        %1094 = vmatpush.bf16.msra.mxu0 %v1035
        %1095 = vmatpush.bf16.msra.mxu0 %v1032
        %1096 = vmatpush.bf16.msra.mxu0 %v1029
        %1097 = vmatmul.bf16.gmra.mxu0 %v939
        %v1098 = vpop.f32.mrf.mxu0
        %v1099 = vadd.f32 %v943, %v1098
        %v1100 = vpop.f32.mrf.mxu0
        %1101 = vdwg.mxu0
        %1102 = vmatpush.bf16.msra.mxu0 %v1051
        %1103 = vmatpush.bf16.msra.mxu0 %v1048
        %1104 = vmatpush.bf16.msra.mxu0 %v1045
        %1105 = vmatpush.bf16.msra.mxu0 %v1042
        %1106 = vmatpush.bf16.msra.mxu0 %v1039
        %1107 = vmatpush.bf16.msra.mxu0 %v1036
        %1108 = vmatpush.bf16.msra.mxu0 %v1033
        %1109 = vmatpush.bf16.msra.mxu0 %v1030
        %1110 = vmatmul.bf16.gmra.mxu0 %v939
        %v1111 = vpop.f32.mrf.mxu0
        %v1112 = vadd.f32 %v944, %v1111
        %v1113 = vpop.f32.mrf.mxu0
        %1114 = vdwg.mxu0
        %v1115 = vld [vmem:[#allocation2] sm:$0xf]
        %v1116 = vld [vmem:[#allocation2 + $0x4] sm:$0xf]
        %v1117 = vld [vmem:[#allocation2 + $0x8] sm:$0xf]
        %v1118 = vld [vmem:[#allocation2 + $0xc] sm:$0xf]
        %v1119 = vld [vmem:[#allocation2 + $0x10] sm:$0xf]
        %v1120 = vld [vmem:[#allocation2 + $0x14] sm:$0xf]
        %v1121 = vld [vmem:[#allocation2 + $0x18] sm:$0xf]
        %v1122 = vld [vmem:[#allocation2 + $0x1c] sm:$0xf]
        %v1123 = vld [vmem:[#allocation2 + $0x20] sm:$0xf]
        %v1124 = vld [vmem:[#allocation2 + $0x24] sm:$0xf]
        %v1125 = vld [vmem:[#allocation2 + $0x28] sm:$0xf]
        %v1126 = vld [vmem:[#allocation2 + $0x2c] sm:$0xf]
        %v1127 = vld [vmem:[#allocation2 + $0x30] sm:$0xf]
        %v1128 = vld [vmem:[#allocation2 + $0x34] sm:$0xf]
        %v1129 = vld [vmem:[#allocation2 + $0x38] sm:$0xf]
        %v1130 = vld [vmem:[#allocation2 + $0x3c] sm:$0xf]
        %v1131 = vld [vmem:[%s9] sm:$0x1]
        %v1132 = vpack.c.bf16 %v1086, %v1086
        %v1133 = vpack.c.bf16 %v1099, %v1099
        %v1134 = vpack.c.bf16 %v1112, %v1112
        %vm1135 = vcmask 261120
        %v1137 = vsel %vm1135, %v1132, 0
        %v1140 = vsel %vm1135, %v1133, 0
        %1142 = vmatpush.bf16.xpose.msra.mxu0 0
        %1143 = vmatpush.bf16.xpose.msra.mxu0 0
        %1144 = vmatpush.bf16.xpose.msra.mxu0 0
        %1145 = vmatpush.bf16.xpose.msra.mxu0 0
        %1146 = vmatpush.bf16.xpose.msra.mxu0 0
        %1147 = vmatpush.bf16.xpose.msra.mxu0 0
        %1148 = vmatpush.bf16.xpose.msra.mxu0 0
        %1149 = vmatpush.bf16.xpose.msra.mxu0 %v1140
        %1150 = vmatmul.bf16.gmra.mxu0 %v1137
        %v1151 = vpop.f32.mrf.mxu0
        %v1152 = vadd.f32 0.0, %v1151
        %v1153 = vpop.f32.mrf.mxu0
        %1154 = vdwg.mxu0
        %v1155 = vmul.f32 %v1152, 0.17677669
        %v1157 = vperm.slane %v838, 0
        %v1159 = vadd.f32 %v1155, %v1157
        %vm1160 = vcmask 64512
        %v1161 = vsel %vm1160, %v1159, -inf
        %1162 = vmax.xlane.f32.xlu0 %v1161
        %v1163 = vpop.xlane.xlu0 %1162
        %v1164 = vsub.f32 %v1159, %v1163
        %v1165 = vmul.f32 %v1164, 1.442695
        %v1166 = vpow.pop %v1165
        %v1167 = vsel %vm1160, %v1166, 0.0
        %1168 = vadd.xlane.f32.xlu0 %v1167
        %v1169 = vpop.xlane.xlu0 %1168
        %v1170 = vrcp.pop %v1169
        %v1171 = vmul.f32 %v1166, %v1170
        %v1172 = vpack.c.bf16 %v1171, %v1171
        %v1174 = vsel %vm1160, %v1172, 0
        %vm1176 = vcmask 1043456
        %v1178 = vsel %vm1176, %v1134, 0
        %1180 = vmatpush.bf16.msra.mxu0 0
        %1181 = vmatpush.bf16.msra.mxu0 0
        %1182 = vmatpush.bf16.msra.mxu0 0
        %1183 = vmatpush.bf16.msra.mxu0 0
        %1184 = vmatpush.bf16.msra.mxu0 0
        %1185 = vmatpush.bf16.msra.mxu0 0
        %1186 = vmatpush.bf16.msra.mxu0 0
        %1187 = vmatpush.bf16.msra.mxu0 %v1178
        %1188 = vmatmul.bf16.gmra.mxu0 %v1174
        %v1189 = vpop.f32.mrf.mxu0
        %v1190 = vadd.f32 0.0, %v1189
        %v1191 = vpop.f32.mrf.mxu0
        %1192 = vdwg.mxu0
        %v1193 = vpack.c.bf16 %v1190, %v1190
        %1195 = vrot.lane.b32.xlu0 %v1132, 96
        %v1196 = vpop.permute.xlu0 %1195
        %1198 = vrot.lane.b32.xlu0 %v1133, 96
        %v1199 = vpop.permute.xlu0 %1198
        %v1201 = vsel %vm1135, %v1196, 0
        %v1204 = vsel %vm1135, %v1199, 0
        %1206 = vmatpush.bf16.xpose.msra.mxu0 0
        %1207 = vmatpush.bf16.xpose.msra.mxu0 0
        %1208 = vmatpush.bf16.xpose.msra.mxu0 0
        %1209 = vmatpush.bf16.xpose.msra.mxu0 0
        %1210 = vmatpush.bf16.xpose.msra.mxu0 0
        %1211 = vmatpush.bf16.xpose.msra.mxu0 0
        %1212 = vmatpush.bf16.xpose.msra.mxu0 0
        %1213 = vmatpush.bf16.xpose.msra.mxu0 %v1204
        %1214 = vmatmul.bf16.gmra.mxu0 %v1201
        %v1215 = vpop.f32.mrf.mxu0
        %v1216 = vadd.f32 0.0, %v1215
        %v1217 = vpop.f32.mrf.mxu0
        %1218 = vdwg.mxu0
        %v1219 = vmul.f32 %v1216, 0.17677669
        %v1220 = vadd.f32 %v1219, %v1157
        %v1221 = vsel %vm1160, %v1220, -inf
        %1222 = vmax.xlane.f32.xlu0 %v1221
        %v1223 = vpop.xlane.xlu0 %1222
        %v1224 = vsub.f32 %v1220, %v1223
        %v1225 = vmul.f32 %v1224, 1.442695
        %v1226 = vpow.pop %v1225
        %v1227 = vsel %vm1160, %v1226, 0.0
        %1228 = vadd.xlane.f32.xlu0 %v1227
        %v1229 = vpop.xlane.xlu0 %1228
        %v1230 = vrcp.pop %v1229
        %v1231 = vmul.f32 %v1226, %v1230
        %v1232 = vpack.c.bf16 %v1231, %v1231
        %1234 = vrot.lane.b32.xlu0 %v1134, 96
        %v1235 = vpop.permute.xlu0 %1234
        %v1237 = vsel %vm1160, %v1232, 0
        %v1240 = vsel %vm1176, %v1235, 0
        %1242 = vmatpush.bf16.msra.mxu0 0
        %1243 = vmatpush.bf16.msra.mxu0 0
        %1244 = vmatpush.bf16.msra.mxu0 0
        %1245 = vmatpush.bf16.msra.mxu0 0
        %1246 = vmatpush.bf16.msra.mxu0 0
        %1247 = vmatpush.bf16.msra.mxu0 0
        %1248 = vmatpush.bf16.msra.mxu0 0
        %1249 = vmatpush.bf16.msra.mxu0 %v1240
        %1250 = vmatmul.bf16.gmra.mxu0 %v1237
        %v1251 = vpop.f32.mrf.mxu0
        %v1252 = vadd.f32 0.0, %v1251
        %v1253 = vpop.f32.mrf.mxu0
        %1254 = vdwg.mxu0
        %v1255 = vpack.c.bf16 %v1252, %v1252
        %v1260 = vunpack.c.l.b16 %v1119
        %v1261 = vunpack.c.l.b16 %v1120
        %v1262 = vunpack.c.l.b16 %v1121
        %v1263 = vunpack.c.l.b16 %v1122
        %v1264 = vpack.c.b16 %v1261, %v1260
        %v1265 = vpack.c.b16 %v1263, %v1262
        %v1269 = vsel %vm1135, %v1255, 0
        %1271 = vmatpush.bf16.msra.mxu0 0
        %1272 = vmatpush.bf16.msra.mxu0 0
        %1273 = vmatpush.bf16.msra.mxu0 0
        %1274 = vmatpush.bf16.msra.mxu0 0
        %1275 = vmatpush.bf16.msra.mxu0 0
        %1276 = vmatpush.bf16.msra.mxu0 0
        %1277 = vmatpush.bf16.msra.mxu0 %v1265
        %1278 = vmatpush.bf16.msra.mxu0 %v1264
        %1279 = vmatmul.bf16.gmra.mxu0 %v1269
        %v1280 = vpop.f32.mrf.mxu0
        %v1281 = vadd.f32 0.0, %v1280
        %v1282 = vpop.f32.mrf.mxu0
        %1283 = vdwg.mxu0
        %v1288 = vunpack.c.l.b16 %v1115
        %v1289 = vunpack.c.l.b16 %v1116
        %v1290 = vunpack.c.l.b16 %v1117
        %v1291 = vunpack.c.l.b16 %v1118
        %v1292 = vpack.c.b16 %v1289, %v1288
        %v1293 = vpack.c.b16 %v1291, %v1290
        %v1297 = vsel %vm1135, %v1193, 0
        %1299 = vmatpush.bf16.msra.mxu0 0
        %1300 = vmatpush.bf16.msra.mxu0 0
        %1301 = vmatpush.bf16.msra.mxu0 0
        %1302 = vmatpush.bf16.msra.mxu0 0
        %1303 = vmatpush.bf16.msra.mxu0 0
        %1304 = vmatpush.bf16.msra.mxu0 0
        %1305 = vmatpush.bf16.msra.mxu0 %v1293
        %1306 = vmatpush.bf16.msra.mxu0 %v1292
        %1307 = vmatmul.bf16.gmra.mxu0 %v1297
        %v1308 = vpop.f32.mrf.mxu0
        %v1309 = vadd.f32 %v1281, %v1308
        %v1310 = vpop.f32.mrf.mxu0
        %1311 = vdwg.mxu0
        %1312 = vrot.lane.b32.xlu0 %v1132, 64
        %v1313 = vpop.permute.xlu0 %1312
        %1314 = vrot.lane.b32.xlu0 %v1133, 64
        %v1315 = vpop.permute.xlu0 %1314
        %v1317 = vsel %vm1135, %v1313, 0
        %v1320 = vsel %vm1135, %v1315, 0
        %1322 = vmatpush.bf16.xpose.msra.mxu0 0
        %1323 = vmatpush.bf16.xpose.msra.mxu0 0
        %1324 = vmatpush.bf16.xpose.msra.mxu0 0
        %1325 = vmatpush.bf16.xpose.msra.mxu0 0
        %1326 = vmatpush.bf16.xpose.msra.mxu0 0
        %1327 = vmatpush.bf16.xpose.msra.mxu0 0
        %1328 = vmatpush.bf16.xpose.msra.mxu0 0
        %1329 = vmatpush.bf16.xpose.msra.mxu0 %v1320
        %1330 = vmatmul.bf16.gmra.mxu0 %v1317
        %v1331 = vpop.f32.mrf.mxu0
        %v1332 = vadd.f32 0.0, %v1331
        %v1333 = vpop.f32.mrf.mxu0
        %1334 = vdwg.mxu0
        %v1335 = vmul.f32 %v1332, 0.17677669
        %v1336 = vadd.f32 %v1335, %v1157
        %v1337 = vsel %vm1160, %v1336, -inf
        %1338 = vmax.xlane.f32.xlu0 %v1337
        %v1339 = vpop.xlane.xlu0 %1338
        %v1340 = vsub.f32 %v1336, %v1339
        %v1341 = vmul.f32 %v1340, 1.442695
        %v1342 = vpow.pop %v1341
        %v1343 = vsel %vm1160, %v1342, 0.0
        %1344 = vadd.xlane.f32.xlu0 %v1343
        %v1345 = vpop.xlane.xlu0 %1344
        %v1346 = vrcp.pop %v1345
        %v1347 = vmul.f32 %v1342, %v1346
        %v1348 = vpack.c.bf16 %v1347, %v1347
        %1349 = vrot.lane.b32.xlu0 %v1134, 64
        %v1350 = vpop.permute.xlu0 %1349
        %v1352 = vsel %vm1160, %v1348, 0
        %v1355 = vsel %vm1176, %v1350, 0
        %1357 = vmatpush.bf16.msra.mxu0 0
        %1358 = vmatpush.bf16.msra.mxu0 0
        %1359 = vmatpush.bf16.msra.mxu0 0
        %1360 = vmatpush.bf16.msra.mxu0 0
        %1361 = vmatpush.bf16.msra.mxu0 0
        %1362 = vmatpush.bf16.msra.mxu0 0
        %1363 = vmatpush.bf16.msra.mxu0 0
        %1364 = vmatpush.bf16.msra.mxu0 %v1355
        %1365 = vmatmul.bf16.gmra.mxu0 %v1352
        %v1366 = vpop.f32.mrf.mxu0
        %v1367 = vadd.f32 0.0, %v1366
        %v1368 = vpop.f32.mrf.mxu0
        %1369 = vdwg.mxu0
        %v1370 = vpack.c.bf16 %v1367, %v1367
        %v1375 = vunpack.c.l.b16 %v1123
        %v1376 = vunpack.c.l.b16 %v1124
        %v1377 = vunpack.c.l.b16 %v1125
        %v1378 = vunpack.c.l.b16 %v1126
        %v1379 = vpack.c.b16 %v1376, %v1375
        %v1380 = vpack.c.b16 %v1378, %v1377
        %v1384 = vsel %vm1135, %v1370, 0
        %1386 = vmatpush.bf16.msra.mxu0 0
        %1387 = vmatpush.bf16.msra.mxu0 0
        %1388 = vmatpush.bf16.msra.mxu0 0
        %1389 = vmatpush.bf16.msra.mxu0 0
        %1390 = vmatpush.bf16.msra.mxu0 0
        %1391 = vmatpush.bf16.msra.mxu0 0
        %1392 = vmatpush.bf16.msra.mxu0 %v1380
        %1393 = vmatpush.bf16.msra.mxu0 %v1379
        %1394 = vmatmul.bf16.gmra.mxu0 %v1384
        %v1395 = vpop.f32.mrf.mxu0
        %v1396 = vadd.f32 0.0, %v1395
        %v1397 = vpop.f32.mrf.mxu0
        %1398 = vdwg.mxu0
        %v1399 = vadd.f32 %v1309, %v1396
        %1400 = vrot.lane.b32.xlu0 %v1132, 32
        %v1401 = vpop.permute.xlu0 %1400
        %1402 = vrot.lane.b32.xlu0 %v1133, 32
        %v1403 = vpop.permute.xlu0 %1402
        %v1405 = vsel %vm1135, %v1401, 0
        %v1408 = vsel %vm1135, %v1403, 0
        %1410 = vmatpush.bf16.xpose.msra.mxu0 0
        %1411 = vmatpush.bf16.xpose.msra.mxu0 0
        %1412 = vmatpush.bf16.xpose.msra.mxu0 0
        %1413 = vmatpush.bf16.xpose.msra.mxu0 0
        %1414 = vmatpush.bf16.xpose.msra.mxu0 0
        %1415 = vmatpush.bf16.xpose.msra.mxu0 0
        %1416 = vmatpush.bf16.xpose.msra.mxu0 0
        %1417 = vmatpush.bf16.xpose.msra.mxu0 %v1408
        %1418 = vmatmul.bf16.gmra.mxu0 %v1405
        %v1419 = vpop.f32.mrf.mxu0
        %v1420 = vadd.f32 0.0, %v1419
        %v1421 = vpop.f32.mrf.mxu0
        %1422 = vdwg.mxu0
        %v1423 = vmul.f32 %v1420, 0.17677669
        %v1424 = vadd.f32 %v1423, %v1157
        %v1425 = vsel %vm1160, %v1424, -inf
        %1426 = vmax.xlane.f32.xlu0 %v1425
        %v1427 = vpop.xlane.xlu0 %1426
        %v1428 = vsub.f32 %v1424, %v1427
        %v1429 = vmul.f32 %v1428, 1.442695
        %v1430 = vpow.pop %v1429
        %v1431 = vsel %vm1160, %v1430, 0.0
        %1432 = vadd.xlane.f32.xlu0 %v1431
        %v1433 = vpop.xlane.xlu0 %1432
        %v1434 = vrcp.pop %v1433
        %v1435 = vmul.f32 %v1430, %v1434
        %v1436 = vpack.c.bf16 %v1435, %v1435
        %1437 = vrot.lane.b32.xlu0 %v1134, 32
        %v1438 = vpop.permute.xlu0 %1437
        %v1440 = vsel %vm1160, %v1436, 0
        %v1443 = vsel %vm1176, %v1438, 0
        %1445 = vmatpush.bf16.msra.mxu0 0
        %1446 = vmatpush.bf16.msra.mxu0 0
        %1447 = vmatpush.bf16.msra.mxu0 0
        %1448 = vmatpush.bf16.msra.mxu0 0
        %1449 = vmatpush.bf16.msra.mxu0 0
        %1450 = vmatpush.bf16.msra.mxu0 0
        %1451 = vmatpush.bf16.msra.mxu0 0
        %1452 = vmatpush.bf16.msra.mxu0 %v1443
        %1453 = vmatmul.bf16.gmra.mxu0 %v1440
        %v1454 = vpop.f32.mrf.mxu0
        %v1455 = vadd.f32 0.0, %v1454
        %v1456 = vpop.f32.mrf.mxu0
        %1457 = vdwg.mxu0
        %v1458 = vpack.c.bf16 %v1455, %v1455
        %v1463 = vunpack.c.l.b16 %v1127
        %v1464 = vunpack.c.l.b16 %v1128
        %v1465 = vunpack.c.l.b16 %v1129
        %v1466 = vunpack.c.l.b16 %v1130
        %v1467 = vpack.c.b16 %v1464, %v1463
        %v1468 = vpack.c.b16 %v1466, %v1465
        %v1472 = vsel %vm1135, %v1458, 0
        %1474 = vmatpush.bf16.msra.mxu0 0
        %1475 = vmatpush.bf16.msra.mxu0 0
        %1476 = vmatpush.bf16.msra.mxu0 0
        %1477 = vmatpush.bf16.msra.mxu0 0
        %1478 = vmatpush.bf16.msra.mxu0 0
        %1479 = vmatpush.bf16.msra.mxu0 0
        %1480 = vmatpush.bf16.msra.mxu0 %v1468
        %1481 = vmatpush.bf16.msra.mxu0 %v1467
        %1482 = vmatmul.bf16.gmra.mxu0 %v1472
        %v1483 = vpop.f32.mrf.mxu0
        %v1484 = vadd.f32 0.0, %v1483
        %v1485 = vpop.f32.mrf.mxu0
        %1486 = vdwg.mxu0
        %v1487 = vadd.f32 %v1399, %v1484
        %v1489 = vperm.slane %v1131, 0
        %v1491 = vadd.f32 %v1487, %v1489
        %v1492 = vld [vmem:[%s10] sm:$0xf]
        %v1493 = vld [vmem:[%s10 + $0x4] sm:$0xf]
        %v1494 = vld [vmem:[%s10 + $0x8] sm:$0xf]
        %v1495 = vld [vmem:[%s10 + $0xc] sm:$0xf]
        %v1496 = vld [vmem:[%s10 + $0x10] sm:$0xf]
        %v1497 = vld [vmem:[%s10 + $0x14] sm:$0xf]
        %v1498 = vld [vmem:[%s10 + $0x18] sm:$0xf]
        %v1499 = vld [vmem:[%s10 + $0x1c] sm:$0xf]
        %v1500 = vld [vmem:[%s10 + $0x20] sm:$0xf]
        %v1501 = vld [vmem:[%s10 + $0x24] sm:$0xf]
        %v1502 = vld [vmem:[%s10 + $0x28] sm:$0xf]
        %v1503 = vld [vmem:[%s10 + $0x2c] sm:$0xf]
        %v1504 = vld [vmem:[%s10 + $0x30] sm:$0xf]
        %v1505 = vld [vmem:[%s10 + $0x34] sm:$0xf]
        %v1506 = vld [vmem:[%s10 + $0x38] sm:$0xf]
        %v1507 = vld [vmem:[%s10 + $0x3c] sm:$0xf]
        %v1508 = vld [vmem:[%s11] sm:$0x1]
        %v1509 = vld [vmem:[%s12] sm:$0xf]
        %v1510 = vld [vmem:[%s12 + $0x4] sm:$0xf]
        %v1511 = vld [vmem:[%s12 + $0x8] sm:$0xf]
        %v1512 = vld [vmem:[%s12 + $0xc] sm:$0xf]
        %v1513 = vld [vmem:[%s13] sm:$0x1]
        %v1514 = vpack.c.bf16 %v1491, %v1491
        %v1516 = vperm.slane %v1508, 0
        %v1534 = vunpack.c.l.b16 %v1492
        %v1535 = vunpack.c.l.b16 %v1493
        %v1536 = vunpack.c.l.b16 %v1494
        %v1537 = vunpack.c.l.b16 %v1495
        %v1538 = vunpack.c.l.b16 %v1496
        %v1539 = vunpack.c.l.b16 %v1497
        %v1540 = vunpack.c.l.b16 %v1498
        %v1541 = vunpack.c.l.b16 %v1499
        %v1542 = vunpack.c.l.b16 %v1500
        %v1543 = vunpack.c.l.b16 %v1501
        %v1544 = vunpack.c.l.b16 %v1502
        %v1545 = vunpack.c.l.b16 %v1503
        %v1546 = vunpack.c.l.b16 %v1504
        %v1547 = vunpack.c.l.b16 %v1505
        %v1548 = vunpack.c.l.b16 %v1506
        %v1549 = vunpack.c.l.b16 %v1507
        %v1550 = vpack.c.b16 %v1535, %v1534
        %v1551 = vpack.c.b16 %v1537, %v1536
        %v1552 = vpack.c.b16 %v1539, %v1538
        %v1553 = vpack.c.b16 %v1541, %v1540
        %v1554 = vpack.c.b16 %v1543, %v1542
        %v1555 = vpack.c.b16 %v1545, %v1544
        %v1556 = vpack.c.b16 %v1547, %v1546
        %v1557 = vpack.c.b16 %v1549, %v1548
        %1566 = vmatpush.bf16.msra.mxu0 %v1557
        %1567 = vmatpush.bf16.msra.mxu0 %v1556
        %1568 = vmatpush.bf16.msra.mxu0 %v1555
        %1569 = vmatpush.bf16.msra.mxu0 %v1554
        %1570 = vmatpush.bf16.msra.mxu0 %v1553
        %1571 = vmatpush.bf16.msra.mxu0 %v1552
        %1572 = vmatpush.bf16.msra.mxu0 %v1551
        %1573 = vmatpush.bf16.msra.mxu0 %v1550
        %1574 = vmatmul.bf16.gmra.mxu0 %v1514
        %v1575 = vpop.f32.mrf.mxu0
        %v1576 = vadd.f32 %v1516, %v1575
        %v1577 = vpop.f32.mrf.mxu0
        %1578 = vdwg.mxu0
        %v1579 = vmax.f32 %v1576, 0.0
        %v1580 = vpack.c.bf16 %v1579, %v1579
        %v1585 = vunpack.c.l.b16 %v1509
        %v1586 = vunpack.c.l.b16 %v1510
        %v1587 = vunpack.c.l.b16 %v1511
        %v1588 = vunpack.c.l.b16 %v1512
        %v1589 = vpack.c.b16 %v1586, %v1585
        %v1590 = vpack.c.b16 %v1588, %v1587
        %v1594 = vsel %vm1135, %v1580, 0
        %1596 = vmatpush.bf16.msra.mxu0 0
        %1597 = vmatpush.bf16.msra.mxu0 0
        %1598 = vmatpush.bf16.msra.mxu0 0
        %1599 = vmatpush.bf16.msra.mxu0 0
        %1600 = vmatpush.bf16.msra.mxu0 0
        %1601 = vmatpush.bf16.msra.mxu0 0
        %1602 = vmatpush.bf16.msra.mxu0 %v1590
        %1603 = vmatpush.bf16.msra.mxu0 %v1589
        %1604 = vmatmul.bf16.gmra.mxu0 %v1594
        %v1605 = vpop.f32.mrf.mxu0
        %v1606 = vadd.f32 0.0, %v1605
        %v1607 = vpop.f32.mrf.mxu0
        %1608 = vdwg.mxu0
        %v1609 = vadd.f32 %v1491, %v1606
        %v1611 = vperm.slane %v1513, 0
        %v1613 = vadd.f32 %v1609, %v1611
        %v1614 = vadd.f32 %v876, %v1613
        %v1615 = vld [vmem:[%s14] sm:$0x1]
        %v1616 = vld [vmem:[%s15] sm:$0x1]
        %1617 = vadd.xlane.f32.xlu0 %v1614
        %v1618 = vpop.xlane.xlu0 %1617
        %v1619 = vmul.f32 %v1618, %v850
        %v1620 = vsub.f32 %v1614, %v1619
        %v1621 = vmul.f32 %v1620, %v1620
        %1622 = vadd.xlane.f32.xlu0 %v1621
        %v1623 = vpop.xlane.xlu0 %1622
        %v1624 = vmul.f32 %v1623, %v850
        %v1625 = vadd.f32 %v1624, 1e-05
        %v1626 = vrsqrt.pop %v1625
        %v1627 = vmul.f32 %v1626, %v1625
        %v1628 = vmul.f32 %v1627, %v1626
        %v1629 = vmul.f32 0.5, %v1628
        %v1630 = vsub.f32 1.5, %v1629
        %v1631 = vmul.f32 %v1626, %v1630
        %vm1632 = vweird.f32 %v1625
        %vm1633 = vweird.f32 %v1626
        %vm1634 = vmor %vm1632, %vm1633
        %v1635 = vsel %vm1634, %v1626, %v1631
        %v1636 = vmul.f32 %v1620, %v1635
        %v1638 = vperm.slane %v1615, 0
        %v1640 = vmul.f32 %v1636, %v1638
        %v1642 = vperm.slane %v1616, 0
        %v1644 = vadd.f32 %v1640, %v1642
        %v1645 = vld [vmem:[%s16] sm:$0xff]
        %v1646 = vld [vmem:[%s16 + $0x8] sm:$0xff]
        %v1647 = vld [vmem:[%s16 + $0x10] sm:$0xff]
        %v1648 = vld [vmem:[%s16 + $0x18] sm:$0xff]
        %v1649 = vld [vmem:[%s16 + $0x20] sm:$0xff]
        %v1650 = vld [vmem:[%s16 + $0x28] sm:$0xff]
        %v1651 = vld [vmem:[%s16 + $0x30] sm:$0xff]
        %v1652 = vld [vmem:[%s16 + $0x38] sm:$0xff]
        %v1653 = vld [vmem:[%s16 + $0x40] sm:$0xff]
        %v1654 = vld [vmem:[%s16 + $0x48] sm:$0xff]
        %v1655 = vld [vmem:[%s16 + $0x50] sm:$0xff]
        %v1656 = vld [vmem:[%s16 + $0x58] sm:$0xff]
        %v1657 = vld [vmem:[%s16 + $0x60] sm:$0xff]
        %v1658 = vld [vmem:[%s16 + $0x68] sm:$0xff]
        %v1659 = vld [vmem:[%s16 + $0x70] sm:$0xff]
        %v1660 = vld [vmem:[%s16 + $0x78] sm:$0xff]
        %v1661 = vld [vmem:[%s17] sm:$0x3]
        %v1662 = vld [vmem:[#allocation4] sm:$0xf]
        %v1663 = vld [vmem:[#allocation4 + $0x4] sm:$0xf]
        %v1664 = vld [vmem:[#allocation4 + $0x8] sm:$0xf]
        %v1665 = vld [vmem:[#allocation4 + $0xc] sm:$0xf]
        %v1666 = vld [vmem:[#allocation4 + $0x10] sm:$0xf]
        %v1667 = vld [vmem:[#allocation4 + $0x14] sm:$0xf]
        %v1668 = vld [vmem:[#allocation4 + $0x18] sm:$0xf]
        %v1669 = vld [vmem:[#allocation4 + $0x1c] sm:$0xf]
        %v1670 = vld [vmem:[#allocation4 + $0x20] sm:$0xf]
        %v1671 = vld [vmem:[#allocation4 + $0x24] sm:$0xf]
        %v1672 = vld [vmem:[#allocation4 + $0x28] sm:$0xf]
        %v1673 = vld [vmem:[#allocation4 + $0x2c] sm:$0xf]
        %v1674 = vld [vmem:[#allocation4 + $0x30] sm:$0xf]
        %v1675 = vld [vmem:[#allocation4 + $0x34] sm:$0xf]
        %v1676 = vld [vmem:[#allocation4 + $0x38] sm:$0xf]
        %v1677 = vld [vmem:[#allocation4 + $0x3c] sm:$0xf]
        %v1678 = vld [vmem:[#allocation4 + $0x40] sm:$0xf]
        %v1679 = vld [vmem:[#allocation4 + $0x44] sm:$0xf]
        %v1680 = vld [vmem:[#allocation4 + $0x48] sm:$0xf]
        %v1681 = vld [vmem:[#allocation4 + $0x4c] sm:$0xf]
        %v1682 = vld [vmem:[#allocation4 + $0x50] sm:$0xf]
        %v1683 = vld [vmem:[#allocation4 + $0x54] sm:$0xf]
        %v1684 = vld [vmem:[#allocation4 + $0x58] sm:$0xf]
        %v1685 = vld [vmem:[#allocation4 + $0x5c] sm:$0xf]
        %v1686 = vld [vmem:[#allocation4 + $0x60] sm:$0xf]
        %v1687 = vld [vmem:[#allocation4 + $0x64] sm:$0xf]
        %v1688 = vld [vmem:[#allocation4 + $0x68] sm:$0xf]
        %v1689 = vld [vmem:[#allocation4 + $0x6c] sm:$0xf]
        %v1690 = vld [vmem:[#allocation4 + $0x70] sm:$0xf]
        %v1691 = vld [vmem:[#allocation4 + $0x74] sm:$0xf]
        %v1692 = vld [vmem:[#allocation4 + $0x78] sm:$0xf]
        %v1693 = vld [vmem:[#allocation4 + $0x7c] sm:$0xf]
        %v1694 = vld [vmem:[%s19] sm:$0x1]
        %v1695 = vpack.c.bf16 %v1644, %v1644
        %v1697 = vperm.slane %v1661, 0
        %v1698 = vperm.slane %v1661, 1
        %v1717 = vunpack.c.l.b16 %v1645
        %v1718 = vunpack.c.h.b16 %v1645
        %v1719 = vunpack.c.l.b16 %v1646
        %v1720 = vunpack.c.h.b16 %v1646
        %v1721 = vunpack.c.l.b16 %v1647
        %v1722 = vunpack.c.h.b16 %v1647
        %v1723 = vunpack.c.l.b16 %v1648
        %v1724 = vunpack.c.h.b16 %v1648
        %v1725 = vunpack.c.l.b16 %v1649
        %v1726 = vunpack.c.h.b16 %v1649
        %v1727 = vunpack.c.l.b16 %v1650
        %v1728 = vunpack.c.h.b16 %v1650
        %v1729 = vunpack.c.l.b16 %v1651
        %v1730 = vunpack.c.h.b16 %v1651
        %v1731 = vunpack.c.l.b16 %v1652
        %v1732 = vunpack.c.h.b16 %v1652
        %v1733 = vunpack.c.l.b16 %v1653
        %v1734 = vunpack.c.h.b16 %v1653
        %v1735 = vunpack.c.l.b16 %v1654
        %v1736 = vunpack.c.h.b16 %v1654
        %v1737 = vunpack.c.l.b16 %v1655
        %v1738 = vunpack.c.h.b16 %v1655
        %v1739 = vunpack.c.l.b16 %v1656
        %v1740 = vunpack.c.h.b16 %v1656
        %v1741 = vunpack.c.l.b16 %v1657
        %v1742 = vunpack.c.h.b16 %v1657
        %v1743 = vunpack.c.l.b16 %v1658
        %v1744 = vunpack.c.h.b16 %v1658
        %v1745 = vunpack.c.l.b16 %v1659
        %v1746 = vunpack.c.h.b16 %v1659
        %v1747 = vunpack.c.l.b16 %v1660
        %v1748 = vunpack.c.h.b16 %v1660
        %v1749 = vpack.c.b16 %v1719, %v1717
        %v1750 = vpack.c.b16 %v1720, %v1718
        %v1751 = vpack.c.b16 %v1723, %v1721
        %v1752 = vpack.c.b16 %v1724, %v1722
        %v1753 = vpack.c.b16 %v1727, %v1725
        %v1754 = vpack.c.b16 %v1728, %v1726
        %v1755 = vpack.c.b16 %v1731, %v1729
        %v1756 = vpack.c.b16 %v1732, %v1730
        %v1757 = vpack.c.b16 %v1735, %v1733
        %v1758 = vpack.c.b16 %v1736, %v1734
        %v1759 = vpack.c.b16 %v1739, %v1737
        %v1760 = vpack.c.b16 %v1740, %v1738
        %v1761 = vpack.c.b16 %v1743, %v1741
        %v1762 = vpack.c.b16 %v1744, %v1742
        %v1763 = vpack.c.b16 %v1747, %v1745
        %v1764 = vpack.c.b16 %v1748, %v1746
        %1781 = vmatpush.bf16.msra.mxu0 %v1763
        %1782 = vmatpush.bf16.msra.mxu0 %v1761
        %1783 = vmatpush.bf16.msra.mxu0 %v1759
        %1784 = vmatpush.bf16.msra.mxu0 %v1757
        %1785 = vmatpush.bf16.msra.mxu0 %v1755
        %1786 = vmatpush.bf16.msra.mxu0 %v1753
        %1787 = vmatpush.bf16.msra.mxu0 %v1751
        %1788 = vmatpush.bf16.msra.mxu0 %v1749
        %1789 = vmatmul.bf16.gmra.mxu0 %v1695
        %v1790 = vpop.f32.mrf.mxu0
        %v1791 = vadd.f32 %v1697, %v1790
        %v1792 = vpop.f32.mrf.mxu0
        %1793 = vdwg.mxu0
        %1794 = vmatpush.bf16.msra.mxu0 %v1764
        %1795 = vmatpush.bf16.msra.mxu0 %v1762
        %1796 = vmatpush.bf16.msra.mxu0 %v1760
        %1797 = vmatpush.bf16.msra.mxu0 %v1758
        %1798 = vmatpush.bf16.msra.mxu0 %v1756
        %1799 = vmatpush.bf16.msra.mxu0 %v1754
        %1800 = vmatpush.bf16.msra.mxu0 %v1752
        %1801 = vmatpush.bf16.msra.mxu0 %v1750
        %1802 = vmatmul.bf16.gmra.mxu0 %v1695
        %v1803 = vpop.f32.mrf.mxu0
        %v1804 = vadd.f32 %v1698, %v1803
        %v1805 = vpop.f32.mrf.mxu0
        %1806 = vdwg.mxu0
        %v1807 = vmul.f32 %v1791, %v1791
        %v1808 = vmul.f32 %v1804, %v1804
        %v1809 = vmul.f32 %v1791, %v1807
        %v1810 = vmul.f32 %v1804, %v1808
        %v1811 = vmul.f32 %v1809, 0.044715
        %v1812 = vmul.f32 %v1810, 0.044715
        %v1813 = vadd.f32 %v1791, %v1811
        %v1814 = vadd.f32 %v1804, %v1812
        %v1815 = vmul.f32 %v1813, 0.7978846
        %v1816 = vmul.f32 %v1814, 0.7978846
        %v1817 = vtanh.pop %v1815
        %v1818 = vtanh.pop %v1816
        %v1819 = vadd.f32 %v1817, 1.0
        %v1820 = vadd.f32 %v1818, 1.0
        %v1821 = vmul.f32 %v1819, 0.5
        %v1822 = vmul.f32 %v1820, 0.5
        %v1823 = vmul.f32 %v1791, %v1821
        %v1824 = vmul.f32 %v1804, %v1822
        %v1825 = vpack.c.bf16 %v1823, %v1823
        %v1826 = vpack.c.bf16 %v1824, %v1824
        %v1828 = vperm.slane %v1694, 0
        %v1862 = vunpack.c.l.b16 %v1662
        %v1863 = vunpack.c.l.b16 %v1663
        %v1864 = vunpack.c.l.b16 %v1664
        %v1865 = vunpack.c.l.b16 %v1665
        %v1866 = vunpack.c.l.b16 %v1666
        %v1867 = vunpack.c.l.b16 %v1667
        %v1868 = vunpack.c.l.b16 %v1668
        %v1869 = vunpack.c.l.b16 %v1669
        %v1870 = vunpack.c.l.b16 %v1670
        %v1871 = vunpack.c.l.b16 %v1671
        %v1872 = vunpack.c.l.b16 %v1672
        %v1873 = vunpack.c.l.b16 %v1673
        %v1874 = vunpack.c.l.b16 %v1674
        %v1875 = vunpack.c.l.b16 %v1675
        %v1876 = vunpack.c.l.b16 %v1676
        %v1877 = vunpack.c.l.b16 %v1677
        %v1878 = vunpack.c.l.b16 %v1678
        %v1879 = vunpack.c.l.b16 %v1679
        %v1880 = vunpack.c.l.b16 %v1680
        %v1881 = vunpack.c.l.b16 %v1681
        %v1882 = vunpack.c.l.b16 %v1682
        %v1883 = vunpack.c.l.b16 %v1683
        %v1884 = vunpack.c.l.b16 %v1684
        %v1885 = vunpack.c.l.b16 %v1685
        %v1886 = vunpack.c.l.b16 %v1686
        %v1887 = vunpack.c.l.b16 %v1687
        %v1888 = vunpack.c.l.b16 %v1688
        %v1889 = vunpack.c.l.b16 %v1689
        %v1890 = vunpack.c.l.b16 %v1690
        %v1891 = vunpack.c.l.b16 %v1691
        %v1892 = vunpack.c.l.b16 %v1692
        %v1893 = vunpack.c.l.b16 %v1693
        %v1894 = vpack.c.b16 %v1863, %v1862
        %v1895 = vpack.c.b16 %v1865, %v1864
        %v1896 = vpack.c.b16 %v1867, %v1866
        %v1897 = vpack.c.b16 %v1869, %v1868
        %v1898 = vpack.c.b16 %v1871, %v1870
        %v1899 = vpack.c.b16 %v1873, %v1872
        %v1900 = vpack.c.b16 %v1875, %v1874
        %v1901 = vpack.c.b16 %v1877, %v1876
        %v1902 = vpack.c.b16 %v1879, %v1878
        %v1903 = vpack.c.b16 %v1881, %v1880
        %v1904 = vpack.c.b16 %v1883, %v1882
        %v1905 = vpack.c.b16 %v1885, %v1884
        %v1906 = vpack.c.b16 %v1887, %v1886
        %v1907 = vpack.c.b16 %v1889, %v1888
        %v1908 = vpack.c.b16 %v1891, %v1890
        %v1909 = vpack.c.b16 %v1893, %v1892
        %1926 = vmatpush.bf16.msra.mxu0 %v1901
        %1927 = vmatpush.bf16.msra.mxu0 %v1900
        %1928 = vmatpush.bf16.msra.mxu0 %v1899
        %1929 = vmatpush.bf16.msra.mxu0 %v1898
        %1930 = vmatpush.bf16.msra.mxu0 %v1897
        %1931 = vmatpush.bf16.msra.mxu0 %v1896
        %1932 = vmatpush.bf16.msra.mxu0 %v1895
        %1933 = vmatpush.bf16.msra.mxu0 %v1894
        %1934 = vmatmul.bf16.gmra.mxu0 %v1825
        %v1935 = vpop.f32.mrf.mxu0
        %v1936 = vadd.f32 %v1828, %v1935
        %v1937 = vpop.f32.mrf.mxu0
        %1938 = vdwg.mxu0
        %1939 = vmatpush.bf16.msra.mxu0 %v1909
        %1940 = vmatpush.bf16.msra.mxu0 %v1908
        %1941 = vmatpush.bf16.msra.mxu0 %v1907
        %1942 = vmatpush.bf16.msra.mxu0 %v1906
        %1943 = vmatpush.bf16.msra.mxu0 %v1905
        %1944 = vmatpush.bf16.msra.mxu0 %v1904
        %1945 = vmatpush.bf16.msra.mxu0 %v1903
        %1946 = vmatpush.bf16.msra.mxu0 %v1902
        %1947 = vmatmul.bf16.gmra.mxu0 %v1826
        %v1948 = vpop.f32.mrf.mxu0
        %v1949 = vadd.f32 %v1936, %v1948
        %v1950 = vpop.f32.mrf.mxu0
        %1951 = vdwg.mxu0
        %v1952 = vld [vmem:[%s20] sm:$0xf]
        %v1953 = vld [vmem:[%s20 + $0x4] sm:$0xf]
        %v1954 = vld [vmem:[%s20 + $0x8] sm:$0xf]
        %v1955 = vld [vmem:[%s20 + $0xc] sm:$0xf]
        %v1956 = vld [vmem:[%s20 + $0x10] sm:$0xf]
        %v1957 = vld [vmem:[%s20 + $0x14] sm:$0xf]
        %v1958 = vld [vmem:[%s20 + $0x18] sm:$0xf]
        %v1959 = vld [vmem:[%s20 + $0x1c] sm:$0xf]
        %v1960 = vld [vmem:[%s20 + $0x20] sm:$0xf]
        %v1961 = vld [vmem:[%s20 + $0x24] sm:$0xf]
        %v1962 = vld [vmem:[%s20 + $0x28] sm:$0xf]
        %v1963 = vld [vmem:[%s20 + $0x2c] sm:$0xf]
        %v1964 = vld [vmem:[%s20 + $0x30] sm:$0xf]
        %v1965 = vld [vmem:[%s20 + $0x34] sm:$0xf]
        %v1966 = vld [vmem:[%s20 + $0x38] sm:$0xf]
        %v1967 = vld [vmem:[%s20 + $0x3c] sm:$0xf]
        %v1968 = vld [vmem:[%s21] sm:$0x1]
        %v1969 = vld [vmem:[%s22] sm:$0xf]
        %v1970 = vld [vmem:[%s22 + $0x4] sm:$0xf]
        %v1971 = vld [vmem:[%s22 + $0x8] sm:$0xf]
        %v1972 = vld [vmem:[%s22 + $0xc] sm:$0xf]
        %v1973 = vld [vmem:[%s23] sm:$0x1]
        %v1974 = vpack.c.bf16 %v1949, %v1949
        %v1976 = vperm.slane %v1968, 0
        %v1994 = vunpack.c.l.b16 %v1952
        %v1995 = vunpack.c.l.b16 %v1953
        %v1996 = vunpack.c.l.b16 %v1954
        %v1997 = vunpack.c.l.b16 %v1955
        %v1998 = vunpack.c.l.b16 %v1956
        %v1999 = vunpack.c.l.b16 %v1957
        %v2000 = vunpack.c.l.b16 %v1958
        %v2001 = vunpack.c.l.b16 %v1959
        %v2002 = vunpack.c.l.b16 %v1960
        %v2003 = vunpack.c.l.b16 %v1961
        %v2004 = vunpack.c.l.b16 %v1962
        %v2005 = vunpack.c.l.b16 %v1963
        %v2006 = vunpack.c.l.b16 %v1964
        %v2007 = vunpack.c.l.b16 %v1965
        %v2008 = vunpack.c.l.b16 %v1966
        %v2009 = vunpack.c.l.b16 %v1967
        %v2010 = vpack.c.b16 %v1995, %v1994
        %v2011 = vpack.c.b16 %v1997, %v1996
        %v2012 = vpack.c.b16 %v1999, %v1998
        %v2013 = vpack.c.b16 %v2001, %v2000
        %v2014 = vpack.c.b16 %v2003, %v2002
        %v2015 = vpack.c.b16 %v2005, %v2004
        %v2016 = vpack.c.b16 %v2007, %v2006
        %v2017 = vpack.c.b16 %v2009, %v2008
        %2026 = vmatpush.bf16.msra.mxu0 %v2017
        %2027 = vmatpush.bf16.msra.mxu0 %v2016
        %2028 = vmatpush.bf16.msra.mxu0 %v2015
        %2029 = vmatpush.bf16.msra.mxu0 %v2014
        %2030 = vmatpush.bf16.msra.mxu0 %v2013
        %2031 = vmatpush.bf16.msra.mxu0 %v2012
        %2032 = vmatpush.bf16.msra.mxu0 %v2011
        %2033 = vmatpush.bf16.msra.mxu0 %v2010
        %2034 = vmatmul.bf16.gmra.mxu0 %v1974
        %v2035 = vpop.f32.mrf.mxu0
        %v2036 = vadd.f32 %v1976, %v2035
        %v2037 = vpop.f32.mrf.mxu0
        %2038 = vdwg.mxu0
        %v2039 = vmax.f32 %v2036, 0.0
        %v2040 = vpack.c.bf16 %v2039, %v2039
        %v2045 = vunpack.c.l.b16 %v1969
        %v2046 = vunpack.c.l.b16 %v1970
        %v2047 = vunpack.c.l.b16 %v1971
        %v2048 = vunpack.c.l.b16 %v1972
        %v2049 = vpack.c.b16 %v2046, %v2045
        %v2050 = vpack.c.b16 %v2048, %v2047
        %v2054 = vsel %vm1135, %v2040, 0
        %2056 = vmatpush.bf16.msra.mxu0 0
        %2057 = vmatpush.bf16.msra.mxu0 0
        %2058 = vmatpush.bf16.msra.mxu0 0
        %2059 = vmatpush.bf16.msra.mxu0 0
        %2060 = vmatpush.bf16.msra.mxu0 0
        %2061 = vmatpush.bf16.msra.mxu0 0
        %2062 = vmatpush.bf16.msra.mxu0 %v2050
        %2063 = vmatpush.bf16.msra.mxu0 %v2049
        %2064 = vmatmul.bf16.gmra.mxu0 %v2054
        %v2065 = vpop.f32.mrf.mxu0
        %v2066 = vadd.f32 0.0, %v2065
        %v2067 = vpop.f32.mrf.mxu0
        %2068 = vdwg.mxu0
        %v2069 = vadd.f32 %v1949, %v2066
        %v2071 = vperm.slane %v1973, 0
        %v2073 = vadd.f32 %v2069, %v2071
        %v2074 = vadd.f32 %v1614, %v2073
        %v2075 = vld [vmem:[%s24] sm:$0x1]
        %v2076 = vld [vmem:[%s25] sm:$0x1]
        %2077 = vadd.xlane.f32.xlu0 %v2074
        %v2078 = vpop.xlane.xlu0 %2077
        %v2079 = vmul.f32 %v2078, %v850
        %v2080 = vsub.f32 %v2074, %v2079
        %v2081 = vmul.f32 %v2080, %v2080
        %2082 = vadd.xlane.f32.xlu0 %v2081
        %v2083 = vpop.xlane.xlu0 %2082
        %v2084 = vmul.f32 %v2083, %v850
        %v2085 = vadd.f32 %v2084, 1e-05
        %v2086 = vrsqrt.pop %v2085
        %v2087 = vmul.f32 %v2086, %v2085
        %v2088 = vmul.f32 %v2087, %v2086
        %v2089 = vmul.f32 0.5, %v2088
        %v2090 = vsub.f32 1.5, %v2089
        %v2091 = vmul.f32 %v2086, %v2090
        %vm2092 = vweird.f32 %v2085
        %vm2093 = vweird.f32 %v2086
        %vm2094 = vmor %vm2092, %vm2093
        %v2095 = vsel %vm2094, %v2086, %v2091
        %v2096 = vmul.f32 %v2080, %v2095
        %v2098 = vperm.slane %v2075, 0
        %v2100 = vmul.f32 %v2096, %v2098
        %v2102 = vperm.slane %v2076, 0
        %v2104 = vadd.f32 %v2100, %v2102
        %2105 = vst [vmem:[%s834] sm:$0xff] %v2104
        %p2106 = scmp.lt.s32.totalorder %s39, 1
        %s2107 = scalar_select %p2106, %s39, 1
        %s2108 = smul.addr %s2107, 8
        %s2109 = scalar_lea.vmem %s26, %s2108
        // Predicated region
        $region133: #{_forward_impl.2} parent=123 // pred_check
          %p2110 = pneg %p613
        $region134: #{_forward_impl.2} parent=123 // pred_check_branch
          %2112 = sbr.rel (%p2110) target = $region136
        $region135: #{_forward_impl.2} parent=123 // pred_region
          _
        $region136: #{_forward_impl.2} parent=123 // pred_fallthru
          _
      $region124: #{_forward_impl.2} parent=5 // pred_fallthru
        _
      %p2113 = scmp.le.s32.totalorder 2, %s34
      // Predicated region
      $region137: #{_forward_impl.2} parent=5 // pred_check
        %p2114 = pneg %p2113
      $region138: #{_forward_impl.2} parent=5 // pred_check_branch
        %2116 = sbr.rel (%p2114) target = $region140
      $region139: #{_forward_impl.2} parent=5 // pred_region
        %s2117 = ssub.s32 %s34, 2
        // Predicated region
        $region141: #{_forward_impl.2} parent=139 // pred_check
          %p2118 = pneg %p619
        $region142: #{_forward_impl.2} parent=139 // pred_check_branch
          %2120 = sbr.rel (%p2118) target = $region144
        $region143: #{_forward_impl.2} parent=139 // pred_region
          %p2121 = scmp.lt.s32.totalorder %s40, 1
          %s2122 = scalar_select %p2121, %s40, 1
          %s2123 = smul.addr %s2122, 8
          %s2124 = scalar_lea.vmem %s26, %s2123
        $region144: #{_forward_impl.2} parent=139 // pred_fallthru
          _
      $region140: #{_forward_impl.2} parent=5 // pred_fallthru
        _
    $region6: #{_forward_impl.2} parent=1 // loop_footer
      %s38 = sadd.s32 1, %s34
    $region7: #{_forward_impl.2} parent=1 // loop_footer_branch
      %33 = sbr.rel target = $region3
    $region8: #{_forward_impl.2} parent=1 // loop_exit
      _
    %2125 = vsyncpa [#allocation3], 1
    %s2126 = scalar_lea.sflag [#allocation3], 1
    %2127 = vsyncpa %s2126, 1
    %2128 = vsyncpa [#allocation5], 1

// kernel: _forward_impl.3
$region0: #{_forward_impl.3}
  #allocation0 [shape = 'u32[]', space=smem, size = 0x4, offset = 0x4, fixed_abs, tag = 'smem constant byte address 0x4 - core index']
  #allocation1 [shape = 'u32[72,128]{1,0:T(1,128)}', space=vmem, size = 0x9000, scoped, tag = 'internal scratch']
  %s0 = inlined_call_operand.smem [shape: u32[40], index: -1, kind: input, shape index: {}]
  %s1 = sld [smem:[%s0]]
  %s2 = scalar_lea.smem %s0, 1
  %s3 = sld [smem:[%s2]]
  %s4 = scalar_lea.smem %s0, 2
  %s5 = sld [smem:[%s4]]
  %s6 = scalar_lea.smem %s0, 3
  %s7 = sld [smem:[%s6]]
  %s8 = scalar_lea.smem %s0, 4
  %s9 = sld [smem:[%s8]]
  %s10 = scalar_lea.smem %s0, 5
  %s11 = sld [smem:[%s10]]
  %s12 = scalar_lea.smem %s0, 6
  %s13 = sld [smem:[%s12]]
  %s14 = scalar_lea.smem %s0, 7
  %s15 = sld [smem:[%s14]]
  %s16 = scalar_lea.smem %s0, 8
  %s17 = sld [smem:[%s16]]
  %s18 = scalar_lea.smem %s0, 9
  %s19 = sld [smem:[%s18]]
  %s20 = scalar_lea.smem %s0, 10
  %s21 = sld [smem:[%s20]]
  %s22 = scalar_lea.smem %s0, 11
  %s23 = sld [smem:[%s22]]
  %s24 = scalar_lea.smem %s0, 12
  %s25 = sld [smem:[%s24]]
  %s26 = scalar_lea.smem %s0, 13
  %s27 = sld [smem:[%s26]]
  %s28 = scalar_lea.smem %s0, 14
  %s29 = sld [smem:[%s28]]
  %s30 = scalar_lea.smem %s0, 15
  %s31 = sld [smem:[%s30]]
  %s32 = scalar_lea.smem %s0, 16
  %s33 = sld [smem:[%s32]]
  %s34 = scalar_lea.smem %s0, 17
  %s35 = sld [smem:[%s34]]
  %s36 = scalar_lea.smem %s0, 18
  %s37 = sld [smem:[%s36]]
  %s38 = scalar_lea.smem %s0, 19
  %s39 = sld [smem:[%s38]]
  %s40 = scalar_lea.smem %s0, 20
  %s41 = sld [smem:[%s40]]
  %s42 = scalar_lea.smem %s0, 21
  %s43 = sld [smem:[%s42]]
  %s44 = scalar_lea.smem %s0, 22
  %s45 = sld [smem:[%s44]]
  %s46 = scalar_lea.smem %s0, 23
  %s47 = sld [smem:[%s46]]
  %s48 = scalar_lea.smem %s0, 24
  %s49 = sld [smem:[%s48]]
  %s50 = scalar_lea.smem %s0, 25
  %s51 = sld [smem:[%s50]]
  %s52 = scalar_lea.smem %s0, 26
  %s53 = sld [smem:[%s52]]
  %s54 = scalar_lea.smem %s0, 27
  %s55 = sld [smem:[%s54]]
  %s56 = scalar_lea.smem %s0, 28
  %s57 = sld [smem:[%s56]]
  %s58 = scalar_lea.smem %s0, 29
  %s59 = sld [smem:[%s58]]
  %s60 = scalar_lea.smem %s0, 30
  %s61 = sld [smem:[%s60]]
  %s62 = scalar_lea.smem %s0, 31
  %s63 = sld [smem:[%s62]]
  %s64 = scalar_lea.smem %s0, 32
  %s65 = sld [smem:[%s64]]
  %s66 = scalar_lea.smem %s0, 33
  %s67 = sld [smem:[%s66]]
  %s68 = scalar_lea.smem %s0, 34
  %s69 = sld [smem:[%s68]]
  %s70 = scalar_lea.smem %s0, 35
  %s71 = sld [smem:[%s70]]
  %s72 = scalar_lea.smem %s0, 36
  %s73 = sld [smem:[%s72]]
  %s74 = scalar_lea.smem %s0, 37
  %s75 = sld [smem:[%s74]]
  %s76 = scalar_lea.smem %s0, 38
  %s77 = sld [smem:[%s76]]
  %s78 = scalar_lea.smem %s0, 39
  %s79 = sld [smem:[%s78]]
  %80 = xla_tuple %s77, %s79
  %s81 = sld [smem:[#allocation0]]
  $region277: #{_forward_impl.3} parent=0
    _
  %s83 = ssub.s32 1, %s81
  %s84 = scalar_select 0, %s83, %s81
  $region1: #{_forward_impl.3} parent=0
    #allocation2 [shape = 'u8[1024]{0}', space=smem, size = 0x400, scoped, tag = 'input window, operand 3, single buffered']
    #allocation3 [shape = 's32[2]{0}', space=sflag, size = 0x8, scoped, tag = 'scoped memory for _forward_impl.3']
    #allocation4 [shape = 's32[2]{0}', space=sflag, size = 0x8, scoped, tag = 'scoped memory for _forward_impl.3']
    #allocation5 [shape = 's32[2]{0}', space=sflag, size = 0x8, scoped, tag = 'scoped memory for _forward_impl.3']
    #allocation6 [shape = 'u8[32768]{0}', space=vmem, size = 0x8000, scoped, tag = 'input window, operand 10, single buffered']
    #allocation7 [shape = 'u8[512]{0}', space=vmem, size = 0x400, scoped, tag = 'input window, operand 11, single buffered']
    #allocation8 [shape = 's32[1]{0}', space=sflag, size = 0x4, scoped, tag = 'scoped memory for _forward_impl.3']
    #allocation9 [shape = 'u8[512]{0}', space=vmem, size = 0x400, scoped, tag = 'input window, operand 13, single buffered']
    #allocation10 [shape = 'u8[512]{0}', space=vmem, size = 0x400, scoped, tag = 'input window, operand 15, single buffered']
    #allocation11 [shape = 's32[1]{0}', space=sflag, size = 0x4, scoped, tag = 'scoped memory for _forward_impl.3']
    #allocation12 [shape = 'u8[512]{0}', space=vmem, size = 0x400, scoped, tag = 'input window, operand 16, single buffered']
    #allocation13 [shape = 'u8[512]{0}', space=vmem, size = 0x400, scoped, tag = 'input window, operand 17, single buffered']
    #allocation14 [shape = 's32[1]{0}', space=sflag, size = 0x4, scoped, tag = 'scoped memory for _forward_impl.3']
    #allocation15 [shape = 'u8[32768]{0}', space=vmem, size = 0x8000, scoped, tag = 'input window, operand 18, single buffered']
    #allocation16 [shape = 'u8[512]{0}', space=vmem, size = 0x400, scoped, tag = 'input window, operand 19, single buffered']
    #allocation17 [shape = 's32[1]{0}', space=sflag, size = 0x4, scoped, tag = 'scoped memory for _forward_impl.3']
    #allocation18 [shape = 'u8[32768]{0}', space=vmem, size = 0x8000, scoped, tag = 'input window, operand 22, single buffered']
    #allocation19 [shape = 'u8[512]{0}', space=vmem, size = 0x400, scoped, tag = 'input window, operand 23, single buffered']
    #allocation20 [shape = 's32[1]{0}', space=sflag, size = 0x4, scoped, tag = 'scoped memory for _forward_impl.3']
    #allocation21 [shape = 'u8[512]{0}', space=vmem, size = 0x400, scoped, tag = 'input window, operand 24, single buffered']
    #allocation22 [shape = 'u8[512]{0}', space=vmem, size = 0x400, scoped, tag = 'input window, operand 25, single buffered']
    #allocation23 [shape = 's32[1]{0}', space=sflag, size = 0x4, scoped, tag = 'scoped memory for _forward_impl.3']
    #allocation24 [shape = 'u8[65536]{0}', space=vmem, size = 0x10000, scoped, tag = 'input window, operand 26, single buffered']
    #allocation25 [shape = 'u8[65536]{0}', space=vmem, size = 0x10000, scoped, tag = 'input window, operand 28, single buffered']
    #allocation26 [shape = 's32[1]{0}', space=sflag, size = 0x4, scoped, tag = 'scoped memory for _forward_impl.3']
    #allocation27 [shape = 'u8[512]{0}', space=vmem, size = 0x400, scoped, tag = 'input window, operand 29, single buffered']
    #allocation28 [shape = 'u8[512]{0}', space=vmem, size = 0x400, scoped, tag = 'input window, operand 31, single buffered']
    #allocation29 [shape = 's32[1]{0}', space=sflag, size = 0x4, scoped, tag = 'scoped memory for _forward_impl.3']
    #allocation30 [shape = 'u8[512]{0}', space=vmem, size = 0x400, scoped, tag = 'input window, operand 33, single buffered']
    #allocation31 [shape = 'u8[512]{0}', space=vmem, size = 0x400, scoped, tag = 'input window, operand 34, single buffered']
    #allocation32 [shape = 's32[1]{0}', space=sflag, size = 0x4, scoped, tag = 'scoped memory for _forward_impl.3']
    #allocation33 [shape = 'u8[512]{0}', space=vmem, size = 0x400, scoped, tag = 'input window, operand 35, single buffered']
    #allocation34 [shape = 'u8[65536]{0}', space=vmem, size = 0x10000, scoped, tag = 'input window, operand 36, single buffered']
    #allocation35 [shape = 's32[1]{0}', space=sflag, size = 0x4, scoped, tag = 'scoped memory for _forward_impl.3']
    #allocation36 [shape = 'u8[16384]{0}', space=vmem, size = 0x4000, scoped, tag = 'output window, operand 0']
    %85 = vsyncpa [#allocation5], 0
    %86 = vsyncpa [#allocation3], 0
    %87 = vsyncpa [#allocation8], 0
    %88 = vsyncpa [#allocation11], 0
    %89 = vsyncpa [#allocation14], 0
    %90 = vsyncpa [#allocation17], 0
    %91 = vsyncpa [#allocation20], 0
    %92 = vsyncpa [#allocation23], 0
    %93 = vsyncpa [#allocation26], 0
    %94 = vsyncpa [#allocation29], 0
    %95 = vsyncpa [#allocation32], 0
    %96 = vsyncpa [#allocation35], 0
    %97 = vsyncpa [#allocation4], 0
    %s98 = scalar_lea.sflag [#allocation4], 1
    %99 = vsyncpa %s98, 0
    loop: start=0, step=1, limit=4
    $region2: #{_forward_impl.3} parent=1 // loop_pre_header
      _
    $region3: #{_forward_impl.3} parent=1 // loop_header
      %s101 = sphi 0, %s105
      %p102 = scmp.ge.s32.totalorder %s101, 4
      %s111 = sphi 0, %s113
      %s114 = sphi 0, %s111
      %s115 = sphi 0, %s114
      %s131 = sphi 0, %s115
      %s137 = sphi 0, %s139
      %s140 = sphi 0, %s137
      %s141 = sphi 0, %s140
      %s157 = sphi 0, %s141
      %s163 = sphi 0, %s165
      %s166 = sphi 0, %s163
      %s167 = sphi 0, %s166
      %s183 = sphi 0, %s167
      %s187 = sphi 0, %s187
      %s189 = sphi 0, %s187
      %s190 = sphi 0, %s189
      %s204 = sphi 0, %s190
      %s208 = sphi 0, %s208
      %s210 = sphi 0, %s208
      %s211 = sphi 0, %s210
      %s225 = sphi 0, %s211
      %s229 = sphi 0, %s229
      %s231 = sphi 0, %s229
      %s232 = sphi 0, %s231
      %s246 = sphi 0, %s232
      %s250 = sphi 0, %s250
      %s252 = sphi 0, %s250
      %s253 = sphi 0, %s252
      %s267 = sphi 0, %s253
      %s271 = sphi 0, %s271
      %s273 = sphi 0, %s271
      %s274 = sphi 0, %s273
      %s288 = sphi 0, %s274
      %s292 = sphi 0, %s292
      %s294 = sphi 0, %s292
      %s295 = sphi 0, %s294
      %s309 = sphi 0, %s295
      %s313 = sphi 0, %s313
      %s315 = sphi 0, %s313
      %s316 = sphi 0, %s315
      %s330 = sphi 0, %s316
      %s334 = sphi 0, %s334
      %s336 = sphi 0, %s334
      %s337 = sphi 0, %s336
      %s351 = sphi 0, %s337
      %s355 = sphi 0, %s355
      %s357 = sphi 0, %s355
      %s358 = sphi 0, %s357
      %s372 = sphi 0, %s358
      %s376 = sphi 0, %s376
      %s378 = sphi 0, %s376
      %s379 = sphi 0, %s378
      %s393 = sphi 0, %s379
      %s397 = sphi 0, %s397
      %s399 = sphi 0, %s397
      %s400 = sphi 0, %s399
      %s414 = sphi 0, %s400
      %s418 = sphi 0, %s418
      %s420 = sphi 0, %s418
      %s421 = sphi 0, %s420
      %s435 = sphi 0, %s421
      %s439 = sphi 0, %s439
      %s441 = sphi 0, %s439
      %s442 = sphi 0, %s441
      %s456 = sphi 0, %s442
      %s460 = sphi 0, %s460
      %s462 = sphi 0, %s460
      %s463 = sphi 0, %s462
      %s477 = sphi 0, %s463
      %s481 = sphi 0, %s481
      %s483 = sphi 0, %s481
      %s484 = sphi 0, %s483
      %s498 = sphi 0, %s484
      %s502 = sphi 0, %s502
      %s504 = sphi 0, %s502
      %s505 = sphi 0, %s504
      %s519 = sphi 0, %s505
      %s523 = sphi 0, %s523
      %s525 = sphi 0, %s523
      %s526 = sphi 0, %s525
      %s540 = sphi 0, %s526
      %s544 = sphi 0, %s544
      %s546 = sphi 0, %s544
      %s547 = sphi 0, %s546
      %s561 = sphi 0, %s547
      %s565 = sphi 0, %s565
      %s567 = sphi 0, %s565
      %s568 = sphi 0, %s567
      %s582 = sphi 0, %s568
      %s586 = sphi 0, %s586
      %s588 = sphi 0, %s586
      %s589 = sphi 0, %s588
      %s603 = sphi 0, %s589
      %s607 = sphi 0, %s607
      %s609 = sphi 0, %s607
      %s610 = sphi 0, %s609
      %s624 = sphi 0, %s610
      %s628 = sphi 0, %s628
      %s630 = sphi 0, %s628
      %s631 = sphi 0, %s630
      %s645 = sphi 0, %s631
      %s649 = sphi 0, %s649
      %s651 = sphi 0, %s649
      %s652 = sphi 0, %s651
      %s666 = sphi 0, %s652
      %s670 = sphi 0, %s670
      %s672 = sphi 0, %s670
      %s673 = sphi 0, %s672
      %s687 = sphi 0, %s673
      %s691 = sphi 0, %s691
      %s693 = sphi 0, %s691
      %s694 = sphi 0, %s693
      %s708 = sphi 0, %s694
      %s712 = sphi 0, %s712
      %s714 = sphi 0, %s712
      %s715 = sphi 0, %s714
      %s729 = sphi 0, %s715
      %s733 = sphi 0, %s733
      %s735 = sphi 0, %s733
      %s736 = sphi 0, %s735
      %s750 = sphi 0, %s736
      %s754 = sphi 0, %s754
      %s756 = sphi 0, %s754
      %s757 = sphi 0, %s756
      %s771 = sphi 0, %s757
      %s775 = sphi 0, %s775
      %s777 = sphi 0, %s775
      %s778 = sphi 0, %s777
      %s792 = sphi 0, %s778
      %s796 = sphi 0, %s796
      %s798 = sphi 0, %s796
      %s799 = sphi 0, %s798
      %s813 = sphi 0, %s799
      %s817 = sphi 0, %s817
      %s819 = sphi 0, %s817
      %s820 = sphi 0, %s819
      %s834 = sphi 0, %s820
      %s838 = sphi 0, %s838
      %s840 = sphi 0, %s838
      %s841 = sphi 0, %s840
      %s855 = sphi 0, %s841
      %s859 = sphi 0, %s859
      %s861 = sphi 0, %s859
      %s862 = sphi 0, %s861
      %s876 = sphi 0, %s862
      %s880 = sphi 0, %s880
      %s882 = sphi 0, %s880
      %s883 = sphi 0, %s882
      %s897 = sphi 0, %s883
      %s901 = sphi 0, %s901
      %s903 = sphi 0, %s901
      %s904 = sphi 0, %s903
      %s918 = sphi 0, %s904
      %s924 = sphi 0, %s926
      %s927 = sphi 0, %s924
      %s928 = sphi 0, %s927
      %s944 = sphi 0, %s928
      %s950 = sphi 0, %s952
      %s953 = sphi 0, %s950
      %s954 = sphi 0, %s953
      %s970 = sphi 0, %s954
    $region4: #{_forward_impl.3} parent=1 // loop_header_branch
      %104 = sbr.rel (%p102) target = $region8
    $region5: #{_forward_impl.3} parent=1 // loop_body
      %s106 = ssub.s32 %s101, 1
      %s107 = ssub.s32 %s101, 2
      %s108 = sadd.s32 %s101, 1
      %s109 = ssub.s32 %s101, %s108
      %p110 = scmp.eq.s32.totalorder %s109, 0
      %s112 = sadd.s32 %s111, 1
      %s113 = scalar_select %p110, %s111, %s112
      %p116 = pneg %p110
      %p117 = scmp.eq.s32.totalorder %s101, 1
      %p118 = por %p116, %p117
      %p119 = scmp.ne.s32.totalorder %s111, %s114
      %p120 = scmp.eq.s32.totalorder %s101, 0
      %p121 = por %p119, %p120
      %p122 = scmp.ne.s32.totalorder %s111, %s114
      %p123 = scmp.eq.s32.totalorder %s106, 1
      %p124 = por %p122, %p123
      %p125 = scmp.ne.s32.totalorder %s114, %s115
      %p126 = scmp.eq.s32.totalorder %s106, 0
      %p127 = por %p125, %p126
      %p128 = scmp.ne.s32.totalorder %s114, %s115
      %p129 = scmp.eq.s32.totalorder %s107, 1
      %p130 = por %p128, %p129
      %p132 = scmp.ne.s32.totalorder %s115, %s131
      %p133 = scmp.eq.s32.totalorder %s107, 0
      %p134 = por %p132, %p133
      %s135 = ssub.s32 %s101, %s108
      %p136 = scmp.eq.s32.totalorder %s135, 0
      %s138 = sadd.s32 %s137, 1
      %s139 = scalar_select %p136, %s137, %s138
      %p142 = pneg %p136
      %p143 = scmp.eq.s32.totalorder %s101, 1
      %p144 = por %p142, %p143
      %p145 = scmp.ne.s32.totalorder %s137, %s140
      %p146 = scmp.eq.s32.totalorder %s101, 0
      %p147 = por %p145, %p146
      %p148 = scmp.ne.s32.totalorder %s137, %s140
      %p149 = scmp.eq.s32.totalorder %s106, 1
      %p150 = por %p148, %p149
      %p151 = scmp.ne.s32.totalorder %s140, %s141
      %p152 = scmp.eq.s32.totalorder %s106, 0
      %p153 = por %p151, %p152
      %p154 = scmp.ne.s32.totalorder %s140, %s141
      %p155 = scmp.eq.s32.totalorder %s107, 1
      %p156 = por %p154, %p155
      %p158 = scmp.ne.s32.totalorder %s141, %s157
      %p159 = scmp.eq.s32.totalorder %s107, 0
      %p160 = por %p158, %p159
      %s161 = ssub.s32 %s101, %s108
      %p162 = scmp.eq.s32.totalorder %s161, 0
      %s164 = sadd.s32 %s163, 1
      %s165 = scalar_select %p162, %s163, %s164
      %p168 = pneg %p162
      %p169 = scmp.eq.s32.totalorder %s101, 1
      %p170 = por %p168, %p169
      %p171 = scmp.ne.s32.totalorder %s163, %s166
      %p172 = scmp.eq.s32.totalorder %s101, 0
      %p173 = por %p171, %p172
      %p174 = scmp.ne.s32.totalorder %s163, %s166
      %p175 = scmp.eq.s32.totalorder %s106, 1
      %p176 = por %p174, %p175
      %p177 = scmp.ne.s32.totalorder %s166, %s167
      %p178 = scmp.eq.s32.totalorder %s106, 0
      %p179 = por %p177, %p178
      %p180 = scmp.ne.s32.totalorder %s166, %s167
      %p181 = scmp.eq.s32.totalorder %s107, 1
      %p182 = por %p180, %p181
      %p184 = scmp.ne.s32.totalorder %s167, %s183
      %p185 = scmp.eq.s32.totalorder %s107, 0
      %p186 = por %p184, %p185
      %s188 = sadd.s32 %s187, 1
      %p191 = scmp.eq.s32.totalorder %s101, 1
      %p192 = scmp.ne.s32.totalorder %s187, %s189
      %p193 = scmp.eq.s32.totalorder %s101, 0
      %p194 = por %p192, %p193
      %p195 = scmp.ne.s32.totalorder %s187, %s189
      %p196 = scmp.eq.s32.totalorder %s106, 1
      %p197 = por %p195, %p196
      %p198 = scmp.ne.s32.totalorder %s189, %s190
      %p199 = scmp.eq.s32.totalorder %s106, 0
      %p200 = por %p198, %p199
      %p201 = scmp.ne.s32.totalorder %s189, %s190
      %p202 = scmp.eq.s32.totalorder %s107, 1
      %p203 = por %p201, %p202
      %p205 = scmp.ne.s32.totalorder %s190, %s204
      %p206 = scmp.eq.s32.totalorder %s107, 0
      %p207 = por %p205, %p206
      %s209 = sadd.s32 %s208, 1
      %p212 = scmp.eq.s32.totalorder %s101, 1
      %p213 = scmp.ne.s32.totalorder %s208, %s210
      %p214 = scmp.eq.s32.totalorder %s101, 0
      %p215 = por %p213, %p214
      %p216 = scmp.ne.s32.totalorder %s208, %s210
      %p217 = scmp.eq.s32.totalorder %s106, 1
      %p218 = por %p216, %p217
      %p219 = scmp.ne.s32.totalorder %s210, %s211
      %p220 = scmp.eq.s32.totalorder %s106, 0
      %p221 = por %p219, %p220
      %p222 = scmp.ne.s32.totalorder %s210, %s211
      %p223 = scmp.eq.s32.totalorder %s107, 1
      %p224 = por %p222, %p223
      %p226 = scmp.ne.s32.totalorder %s211, %s225
      %p227 = scmp.eq.s32.totalorder %s107, 0
      %p228 = por %p226, %p227
      %s230 = sadd.s32 %s229, 1
      %p233 = scmp.eq.s32.totalorder %s101, 1
      %p234 = scmp.ne.s32.totalorder %s229, %s231
      %p235 = scmp.eq.s32.totalorder %s101, 0
      %p236 = por %p234, %p235
      %p237 = scmp.ne.s32.totalorder %s229, %s231
      %p238 = scmp.eq.s32.totalorder %s106, 1
      %p239 = por %p237, %p238
      %p240 = scmp.ne.s32.totalorder %s231, %s232
      %p241 = scmp.eq.s32.totalorder %s106, 0
      %p242 = por %p240, %p241
      %p243 = scmp.ne.s32.totalorder %s231, %s232
      %p244 = scmp.eq.s32.totalorder %s107, 1
      %p245 = por %p243, %p244
      %p247 = scmp.ne.s32.totalorder %s232, %s246
      %p248 = scmp.eq.s32.totalorder %s107, 0
      %p249 = por %p247, %p248
      %s251 = sadd.s32 %s250, 1
      %p254 = scmp.eq.s32.totalorder %s101, 1
      %p255 = scmp.ne.s32.totalorder %s250, %s252
      %p256 = scmp.eq.s32.totalorder %s101, 0
      %p257 = por %p255, %p256
      %p258 = scmp.ne.s32.totalorder %s250, %s252
      %p259 = scmp.eq.s32.totalorder %s106, 1
      %p260 = por %p258, %p259
      %p261 = scmp.ne.s32.totalorder %s252, %s253
      %p262 = scmp.eq.s32.totalorder %s106, 0
      %p263 = por %p261, %p262
      %p264 = scmp.ne.s32.totalorder %s252, %s253
      %p265 = scmp.eq.s32.totalorder %s107, 1
      %p266 = por %p264, %p265
      %p268 = scmp.ne.s32.totalorder %s253, %s267
      %p269 = scmp.eq.s32.totalorder %s107, 0
      %p270 = por %p268, %p269
      %s272 = sadd.s32 %s271, 1
      %p275 = scmp.eq.s32.totalorder %s101, 1
      %p276 = scmp.ne.s32.totalorder %s271, %s273
      %p277 = scmp.eq.s32.totalorder %s101, 0
      %p278 = por %p276, %p277
      %p279 = scmp.ne.s32.totalorder %s271, %s273
      %p280 = scmp.eq.s32.totalorder %s106, 1
      %p281 = por %p279, %p280
      %p282 = scmp.ne.s32.totalorder %s273, %s274
      %p283 = scmp.eq.s32.totalorder %s106, 0
      %p284 = por %p282, %p283
      %p285 = scmp.ne.s32.totalorder %s273, %s274
      %p286 = scmp.eq.s32.totalorder %s107, 1
      %p287 = por %p285, %p286
      %p289 = scmp.ne.s32.totalorder %s274, %s288
      %p290 = scmp.eq.s32.totalorder %s107, 0
      %p291 = por %p289, %p290
      %s293 = sadd.s32 %s292, 1
      %p296 = scmp.eq.s32.totalorder %s101, 1
      %p297 = scmp.ne.s32.totalorder %s292, %s294
      %p298 = scmp.eq.s32.totalorder %s101, 0
      %p299 = por %p297, %p298
      %p300 = scmp.ne.s32.totalorder %s292, %s294
      %p301 = scmp.eq.s32.totalorder %s106, 1
      %p302 = por %p300, %p301
      %p303 = scmp.ne.s32.totalorder %s294, %s295
      %p304 = scmp.eq.s32.totalorder %s106, 0
      %p305 = por %p303, %p304
      %p306 = scmp.ne.s32.totalorder %s294, %s295
      %p307 = scmp.eq.s32.totalorder %s107, 1
      %p308 = por %p306, %p307
      %p310 = scmp.ne.s32.totalorder %s295, %s309
      %p311 = scmp.eq.s32.totalorder %s107, 0
      %p312 = por %p310, %p311
      %s314 = sadd.s32 %s313, 1
      %p317 = scmp.eq.s32.totalorder %s101, 1
      %p318 = scmp.ne.s32.totalorder %s313, %s315
      %p319 = scmp.eq.s32.totalorder %s101, 0
      %p320 = por %p318, %p319
      %p321 = scmp.ne.s32.totalorder %s313, %s315
      %p322 = scmp.eq.s32.totalorder %s106, 1
      %p323 = por %p321, %p322
      %p324 = scmp.ne.s32.totalorder %s315, %s316
      %p325 = scmp.eq.s32.totalorder %s106, 0
      %p326 = por %p324, %p325
      %p327 = scmp.ne.s32.totalorder %s315, %s316
      %p328 = scmp.eq.s32.totalorder %s107, 1
      %p329 = por %p327, %p328
      %p331 = scmp.ne.s32.totalorder %s316, %s330
      %p332 = scmp.eq.s32.totalorder %s107, 0
      %p333 = por %p331, %p332
      %s335 = sadd.s32 %s334, 1
      %p338 = scmp.eq.s32.totalorder %s101, 1
      %p339 = scmp.ne.s32.totalorder %s334, %s336
      %p340 = scmp.eq.s32.totalorder %s101, 0
      %p341 = por %p339, %p340
      %p342 = scmp.ne.s32.totalorder %s334, %s336
      %p343 = scmp.eq.s32.totalorder %s106, 1
      %p344 = por %p342, %p343
      %p345 = scmp.ne.s32.totalorder %s336, %s337
      %p346 = scmp.eq.s32.totalorder %s106, 0
      %p347 = por %p345, %p346
      %p348 = scmp.ne.s32.totalorder %s336, %s337
      %p349 = scmp.eq.s32.totalorder %s107, 1
      %p350 = por %p348, %p349
      %p352 = scmp.ne.s32.totalorder %s337, %s351
      %p353 = scmp.eq.s32.totalorder %s107, 0
      %p354 = por %p352, %p353
      %s356 = sadd.s32 %s355, 1
      %p359 = scmp.eq.s32.totalorder %s101, 1
      %p360 = scmp.ne.s32.totalorder %s355, %s357
      %p361 = scmp.eq.s32.totalorder %s101, 0
      %p362 = por %p360, %p361
      %p363 = scmp.ne.s32.totalorder %s355, %s357
      %p364 = scmp.eq.s32.totalorder %s106, 1
      %p365 = por %p363, %p364
      %p366 = scmp.ne.s32.totalorder %s357, %s358
      %p367 = scmp.eq.s32.totalorder %s106, 0
      %p368 = por %p366, %p367
      %p369 = scmp.ne.s32.totalorder %s357, %s358
      %p370 = scmp.eq.s32.totalorder %s107, 1
      %p371 = por %p369, %p370
      %p373 = scmp.ne.s32.totalorder %s358, %s372
      %p374 = scmp.eq.s32.totalorder %s107, 0
      %p375 = por %p373, %p374
      %s377 = sadd.s32 %s376, 1
      %p380 = scmp.eq.s32.totalorder %s101, 1
      %p381 = scmp.ne.s32.totalorder %s376, %s378
      %p382 = scmp.eq.s32.totalorder %s101, 0
      %p383 = por %p381, %p382
      %p384 = scmp.ne.s32.totalorder %s376, %s378
      %p385 = scmp.eq.s32.totalorder %s106, 1
      %p386 = por %p384, %p385
      %p387 = scmp.ne.s32.totalorder %s378, %s379
      %p388 = scmp.eq.s32.totalorder %s106, 0
      %p389 = por %p387, %p388
      %p390 = scmp.ne.s32.totalorder %s378, %s379
      %p391 = scmp.eq.s32.totalorder %s107, 1
      %p392 = por %p390, %p391
      %p394 = scmp.ne.s32.totalorder %s379, %s393
      %p395 = scmp.eq.s32.totalorder %s107, 0
      %p396 = por %p394, %p395
      %s398 = sadd.s32 %s397, 1
      %p401 = scmp.eq.s32.totalorder %s101, 1
      %p402 = scmp.ne.s32.totalorder %s397, %s399
      %p403 = scmp.eq.s32.totalorder %s101, 0
      %p404 = por %p402, %p403
      %p405 = scmp.ne.s32.totalorder %s397, %s399
      %p406 = scmp.eq.s32.totalorder %s106, 1
      %p407 = por %p405, %p406
      %p408 = scmp.ne.s32.totalorder %s399, %s400
      %p409 = scmp.eq.s32.totalorder %s106, 0
      %p410 = por %p408, %p409
      %p411 = scmp.ne.s32.totalorder %s399, %s400
      %p412 = scmp.eq.s32.totalorder %s107, 1
      %p413 = por %p411, %p412
      %p415 = scmp.ne.s32.totalorder %s400, %s414
      %p416 = scmp.eq.s32.totalorder %s107, 0
      %p417 = por %p415, %p416
      %s419 = sadd.s32 %s418, 1
      %p422 = scmp.eq.s32.totalorder %s101, 1
      %p423 = scmp.ne.s32.totalorder %s418, %s420
      %p424 = scmp.eq.s32.totalorder %s101, 0
      %p425 = por %p423, %p424
      %p426 = scmp.ne.s32.totalorder %s418, %s420
      %p427 = scmp.eq.s32.totalorder %s106, 1
      %p428 = por %p426, %p427
      %p429 = scmp.ne.s32.totalorder %s420, %s421
      %p430 = scmp.eq.s32.totalorder %s106, 0
      %p431 = por %p429, %p430
      %p432 = scmp.ne.s32.totalorder %s420, %s421
      %p433 = scmp.eq.s32.totalorder %s107, 1
      %p434 = por %p432, %p433
      %p436 = scmp.ne.s32.totalorder %s421, %s435
      %p437 = scmp.eq.s32.totalorder %s107, 0
      %p438 = por %p436, %p437
      %s440 = sadd.s32 %s439, 1
      %p443 = scmp.eq.s32.totalorder %s101, 1
      %p444 = scmp.ne.s32.totalorder %s439, %s441
      %p445 = scmp.eq.s32.totalorder %s101, 0
      %p446 = por %p444, %p445
      %p447 = scmp.ne.s32.totalorder %s439, %s441
      %p448 = scmp.eq.s32.totalorder %s106, 1
      %p449 = por %p447, %p448
      %p450 = scmp.ne.s32.totalorder %s441, %s442
      %p451 = scmp.eq.s32.totalorder %s106, 0
      %p452 = por %p450, %p451
      %p453 = scmp.ne.s32.totalorder %s441, %s442
      %p454 = scmp.eq.s32.totalorder %s107, 1
      %p455 = por %p453, %p454
      %p457 = scmp.ne.s32.totalorder %s442, %s456
      %p458 = scmp.eq.s32.totalorder %s107, 0
      %p459 = por %p457, %p458
      %s461 = sadd.s32 %s460, 1
      %p464 = scmp.eq.s32.totalorder %s101, 1
      %p465 = scmp.ne.s32.totalorder %s460, %s462
      %p466 = scmp.eq.s32.totalorder %s101, 0
      %p467 = por %p465, %p466
      %p468 = scmp.ne.s32.totalorder %s460, %s462
      %p469 = scmp.eq.s32.totalorder %s106, 1
      %p470 = por %p468, %p469
      %p471 = scmp.ne.s32.totalorder %s462, %s463
      %p472 = scmp.eq.s32.totalorder %s106, 0
      %p473 = por %p471, %p472
      %p474 = scmp.ne.s32.totalorder %s462, %s463
      %p475 = scmp.eq.s32.totalorder %s107, 1
      %p476 = por %p474, %p475
      %p478 = scmp.ne.s32.totalorder %s463, %s477
      %p479 = scmp.eq.s32.totalorder %s107, 0
      %p480 = por %p478, %p479
      %s482 = sadd.s32 %s481, 1
      %p485 = scmp.eq.s32.totalorder %s101, 1
      %p486 = scmp.ne.s32.totalorder %s481, %s483
      %p487 = scmp.eq.s32.totalorder %s101, 0
      %p488 = por %p486, %p487
      %p489 = scmp.ne.s32.totalorder %s481, %s483
      %p490 = scmp.eq.s32.totalorder %s106, 1
      %p491 = por %p489, %p490
      %p492 = scmp.ne.s32.totalorder %s483, %s484
      %p493 = scmp.eq.s32.totalorder %s106, 0
      %p494 = por %p492, %p493
      %p495 = scmp.ne.s32.totalorder %s483, %s484
      %p496 = scmp.eq.s32.totalorder %s107, 1
      %p497 = por %p495, %p496
      %p499 = scmp.ne.s32.totalorder %s484, %s498
      %p500 = scmp.eq.s32.totalorder %s107, 0
      %p501 = por %p499, %p500
      %s503 = sadd.s32 %s502, 1
      %p506 = scmp.eq.s32.totalorder %s101, 1
      %p507 = scmp.ne.s32.totalorder %s502, %s504
      %p508 = scmp.eq.s32.totalorder %s101, 0
      %p509 = por %p507, %p508
      %p510 = scmp.ne.s32.totalorder %s502, %s504
      %p511 = scmp.eq.s32.totalorder %s106, 1
      %p512 = por %p510, %p511
      %p513 = scmp.ne.s32.totalorder %s504, %s505
      %p514 = scmp.eq.s32.totalorder %s106, 0
      %p515 = por %p513, %p514
      %p516 = scmp.ne.s32.totalorder %s504, %s505
      %p517 = scmp.eq.s32.totalorder %s107, 1
      %p518 = por %p516, %p517
      %p520 = scmp.ne.s32.totalorder %s505, %s519
      %p521 = scmp.eq.s32.totalorder %s107, 0
      %p522 = por %p520, %p521
      %s524 = sadd.s32 %s523, 1
      %p527 = scmp.eq.s32.totalorder %s101, 1
      %p528 = scmp.ne.s32.totalorder %s523, %s525
      %p529 = scmp.eq.s32.totalorder %s101, 0
      %p530 = por %p528, %p529
      %p531 = scmp.ne.s32.totalorder %s523, %s525
      %p532 = scmp.eq.s32.totalorder %s106, 1
      %p533 = por %p531, %p532
      %p534 = scmp.ne.s32.totalorder %s525, %s526
      %p535 = scmp.eq.s32.totalorder %s106, 0
      %p536 = por %p534, %p535
      %p537 = scmp.ne.s32.totalorder %s525, %s526
      %p538 = scmp.eq.s32.totalorder %s107, 1
      %p539 = por %p537, %p538
      %p541 = scmp.ne.s32.totalorder %s526, %s540
      %p542 = scmp.eq.s32.totalorder %s107, 0
      %p543 = por %p541, %p542
      %s545 = sadd.s32 %s544, 1
      %p548 = scmp.eq.s32.totalorder %s101, 1
      %p549 = scmp.ne.s32.totalorder %s544, %s546
      %p550 = scmp.eq.s32.totalorder %s101, 0
      %p551 = por %p549, %p550
      %p552 = scmp.ne.s32.totalorder %s544, %s546
      %p553 = scmp.eq.s32.totalorder %s106, 1
      %p554 = por %p552, %p553
      %p555 = scmp.ne.s32.totalorder %s546, %s547
      %p556 = scmp.eq.s32.totalorder %s106, 0
      %p557 = por %p555, %p556
      %p558 = scmp.ne.s32.totalorder %s546, %s547
      %p559 = scmp.eq.s32.totalorder %s107, 1
      %p560 = por %p558, %p559
      %p562 = scmp.ne.s32.totalorder %s547, %s561
      %p563 = scmp.eq.s32.totalorder %s107, 0
      %p564 = por %p562, %p563
      %s566 = sadd.s32 %s565, 1
      %p569 = scmp.eq.s32.totalorder %s101, 1
      %p570 = scmp.ne.s32.totalorder %s565, %s567
      %p571 = scmp.eq.s32.totalorder %s101, 0
      %p572 = por %p570, %p571
      %p573 = scmp.ne.s32.totalorder %s565, %s567
      %p574 = scmp.eq.s32.totalorder %s106, 1
      %p575 = por %p573, %p574
      %p576 = scmp.ne.s32.totalorder %s567, %s568
      %p577 = scmp.eq.s32.totalorder %s106, 0
      %p578 = por %p576, %p577
      %p579 = scmp.ne.s32.totalorder %s567, %s568
      %p580 = scmp.eq.s32.totalorder %s107, 1
      %p581 = por %p579, %p580
      %p583 = scmp.ne.s32.totalorder %s568, %s582
      %p584 = scmp.eq.s32.totalorder %s107, 0
      %p585 = por %p583, %p584
      %s587 = sadd.s32 %s586, 1
      %p590 = scmp.eq.s32.totalorder %s101, 1
      %p591 = scmp.ne.s32.totalorder %s586, %s588
      %p592 = scmp.eq.s32.totalorder %s101, 0
      %p593 = por %p591, %p592
      %p594 = scmp.ne.s32.totalorder %s586, %s588
      %p595 = scmp.eq.s32.totalorder %s106, 1
      %p596 = por %p594, %p595
      %p597 = scmp.ne.s32.totalorder %s588, %s589
      %p598 = scmp.eq.s32.totalorder %s106, 0
      %p599 = por %p597, %p598
      %p600 = scmp.ne.s32.totalorder %s588, %s589
      %p601 = scmp.eq.s32.totalorder %s107, 1
      %p602 = por %p600, %p601
      %p604 = scmp.ne.s32.totalorder %s589, %s603
      %p605 = scmp.eq.s32.totalorder %s107, 0
      %p606 = por %p604, %p605
      %s608 = sadd.s32 %s607, 1
      %p611 = scmp.eq.s32.totalorder %s101, 1
      %p612 = scmp.ne.s32.totalorder %s607, %s609
      %p613 = scmp.eq.s32.totalorder %s101, 0
      %p614 = por %p612, %p613
      %p615 = scmp.ne.s32.totalorder %s607, %s609
      %p616 = scmp.eq.s32.totalorder %s106, 1
      %p617 = por %p615, %p616
      %p618 = scmp.ne.s32.totalorder %s609, %s610
      %p619 = scmp.eq.s32.totalorder %s106, 0
      %p620 = por %p618, %p619
      %p621 = scmp.ne.s32.totalorder %s609, %s610
      %p622 = scmp.eq.s32.totalorder %s107, 1
      %p623 = por %p621, %p622
      %p625 = scmp.ne.s32.totalorder %s610, %s624
      %p626 = scmp.eq.s32.totalorder %s107, 0
      %p627 = por %p625, %p626
      %s629 = sadd.s32 %s628, 1
      %p632 = scmp.eq.s32.totalorder %s101, 1
      %p633 = scmp.ne.s32.totalorder %s628, %s630
      %p634 = scmp.eq.s32.totalorder %s101, 0
      %p635 = por %p633, %p634
      %p636 = scmp.ne.s32.totalorder %s628, %s630
      %p637 = scmp.eq.s32.totalorder %s106, 1
      %p638 = por %p636, %p637
      %p639 = scmp.ne.s32.totalorder %s630, %s631
      %p640 = scmp.eq.s32.totalorder %s106, 0
      %p641 = por %p639, %p640
      %p642 = scmp.ne.s32.totalorder %s630, %s631
      %p643 = scmp.eq.s32.totalorder %s107, 1
      %p644 = por %p642, %p643
      %p646 = scmp.ne.s32.totalorder %s631, %s645
      %p647 = scmp.eq.s32.totalorder %s107, 0
      %p648 = por %p646, %p647
      %s650 = sadd.s32 %s649, 1
      %p653 = scmp.eq.s32.totalorder %s101, 1
      %p654 = scmp.ne.s32.totalorder %s649, %s651
      %p655 = scmp.eq.s32.totalorder %s101, 0
      %p656 = por %p654, %p655
      %p657 = scmp.ne.s32.totalorder %s649, %s651
      %p658 = scmp.eq.s32.totalorder %s106, 1
      %p659 = por %p657, %p658
      %p660 = scmp.ne.s32.totalorder %s651, %s652
      %p661 = scmp.eq.s32.totalorder %s106, 0
      %p662 = por %p660, %p661
      %p663 = scmp.ne.s32.totalorder %s651, %s652
      %p664 = scmp.eq.s32.totalorder %s107, 1
      %p665 = por %p663, %p664
      %p667 = scmp.ne.s32.totalorder %s652, %s666
      %p668 = scmp.eq.s32.totalorder %s107, 0
      %p669 = por %p667, %p668
      %s671 = sadd.s32 %s670, 1
      %p674 = scmp.eq.s32.totalorder %s101, 1
      %p675 = scmp.ne.s32.totalorder %s670, %s672
      %p676 = scmp.eq.s32.totalorder %s101, 0
      %p677 = por %p675, %p676
      %p678 = scmp.ne.s32.totalorder %s670, %s672
      %p679 = scmp.eq.s32.totalorder %s106, 1
      %p680 = por %p678, %p679
      %p681 = scmp.ne.s32.totalorder %s672, %s673
      %p682 = scmp.eq.s32.totalorder %s106, 0
      %p683 = por %p681, %p682
      %p684 = scmp.ne.s32.totalorder %s672, %s673
      %p685 = scmp.eq.s32.totalorder %s107, 1
      %p686 = por %p684, %p685
      %p688 = scmp.ne.s32.totalorder %s673, %s687
      %p689 = scmp.eq.s32.totalorder %s107, 0
      %p690 = por %p688, %p689
      %s692 = sadd.s32 %s691, 1
      %p695 = scmp.eq.s32.totalorder %s101, 1
      %p696 = scmp.ne.s32.totalorder %s691, %s693
      %p697 = scmp.eq.s32.totalorder %s101, 0
      %p698 = por %p696, %p697
      %p699 = scmp.ne.s32.totalorder %s691, %s693
      %p700 = scmp.eq.s32.totalorder %s106, 1
      %p701 = por %p699, %p700
      %p702 = scmp.ne.s32.totalorder %s693, %s694
      %p703 = scmp.eq.s32.totalorder %s106, 0
      %p704 = por %p702, %p703
      %p705 = scmp.ne.s32.totalorder %s693, %s694
      %p706 = scmp.eq.s32.totalorder %s107, 1
      %p707 = por %p705, %p706
      %p709 = scmp.ne.s32.totalorder %s694, %s708
      %p710 = scmp.eq.s32.totalorder %s107, 0
      %p711 = por %p709, %p710
      %s713 = sadd.s32 %s712, 1
      %p716 = scmp.eq.s32.totalorder %s101, 1
      %p717 = scmp.ne.s32.totalorder %s712, %s714
      %p718 = scmp.eq.s32.totalorder %s101, 0
      %p719 = por %p717, %p718
      %p720 = scmp.ne.s32.totalorder %s712, %s714
      %p721 = scmp.eq.s32.totalorder %s106, 1
      %p722 = por %p720, %p721
      %p723 = scmp.ne.s32.totalorder %s714, %s715
      %p724 = scmp.eq.s32.totalorder %s106, 0
      %p725 = por %p723, %p724
      %p726 = scmp.ne.s32.totalorder %s714, %s715
      %p727 = scmp.eq.s32.totalorder %s107, 1
      %p728 = por %p726, %p727
      %p730 = scmp.ne.s32.totalorder %s715, %s729
      %p731 = scmp.eq.s32.totalorder %s107, 0
      %p732 = por %p730, %p731
      %s734 = sadd.s32 %s733, 1
      %p737 = scmp.eq.s32.totalorder %s101, 1
      %p738 = scmp.ne.s32.totalorder %s733, %s735
      %p739 = scmp.eq.s32.totalorder %s101, 0
      %p740 = por %p738, %p739
      %p741 = scmp.ne.s32.totalorder %s733, %s735
      %p742 = scmp.eq.s32.totalorder %s106, 1
      %p743 = por %p741, %p742
      %p744 = scmp.ne.s32.totalorder %s735, %s736
      %p745 = scmp.eq.s32.totalorder %s106, 0
      %p746 = por %p744, %p745
      %p747 = scmp.ne.s32.totalorder %s735, %s736
      %p748 = scmp.eq.s32.totalorder %s107, 1
      %p749 = por %p747, %p748
      %p751 = scmp.ne.s32.totalorder %s736, %s750
      %p752 = scmp.eq.s32.totalorder %s107, 0
      %p753 = por %p751, %p752
      %s755 = sadd.s32 %s754, 1
      %p758 = scmp.eq.s32.totalorder %s101, 1
      %p759 = scmp.ne.s32.totalorder %s754, %s756
      %p760 = scmp.eq.s32.totalorder %s101, 0
      %p761 = por %p759, %p760
      %p762 = scmp.ne.s32.totalorder %s754, %s756
      %p763 = scmp.eq.s32.totalorder %s106, 1
      %p764 = por %p762, %p763
      %p765 = scmp.ne.s32.totalorder %s756, %s757
      %p766 = scmp.eq.s32.totalorder %s106, 0
      %p767 = por %p765, %p766
      %p768 = scmp.ne.s32.totalorder %s756, %s757
      %p769 = scmp.eq.s32.totalorder %s107, 1
      %p770 = por %p768, %p769
      %p772 = scmp.ne.s32.totalorder %s757, %s771
      %p773 = scmp.eq.s32.totalorder %s107, 0
      %p774 = por %p772, %p773
      %s776 = sadd.s32 %s775, 1
      %p779 = scmp.eq.s32.totalorder %s101, 1
      %p780 = scmp.ne.s32.totalorder %s775, %s777
      %p781 = scmp.eq.s32.totalorder %s101, 0
      %p782 = por %p780, %p781
      %p783 = scmp.ne.s32.totalorder %s775, %s777
      %p784 = scmp.eq.s32.totalorder %s106, 1
      %p785 = por %p783, %p784
      %p786 = scmp.ne.s32.totalorder %s777, %s778
      %p787 = scmp.eq.s32.totalorder %s106, 0
      %p788 = por %p786, %p787
      %p789 = scmp.ne.s32.totalorder %s777, %s778
      %p790 = scmp.eq.s32.totalorder %s107, 1
      %p791 = por %p789, %p790
      %p793 = scmp.ne.s32.totalorder %s778, %s792
      %p794 = scmp.eq.s32.totalorder %s107, 0
      %p795 = por %p793, %p794
      %s797 = sadd.s32 %s796, 1
      %p800 = scmp.eq.s32.totalorder %s101, 1
      %p801 = scmp.ne.s32.totalorder %s796, %s798
      %p802 = scmp.eq.s32.totalorder %s101, 0
      %p803 = por %p801, %p802
      %p804 = scmp.ne.s32.totalorder %s796, %s798
      %p805 = scmp.eq.s32.totalorder %s106, 1
      %p806 = por %p804, %p805
      %p807 = scmp.ne.s32.totalorder %s798, %s799
      %p808 = scmp.eq.s32.totalorder %s106, 0
      %p809 = por %p807, %p808
      %p810 = scmp.ne.s32.totalorder %s798, %s799
      %p811 = scmp.eq.s32.totalorder %s107, 1
      %p812 = por %p810, %p811
      %p814 = scmp.ne.s32.totalorder %s799, %s813
      %p815 = scmp.eq.s32.totalorder %s107, 0
      %p816 = por %p814, %p815
      %s818 = sadd.s32 %s817, 1
      %p821 = scmp.eq.s32.totalorder %s101, 1
      %p822 = scmp.ne.s32.totalorder %s817, %s819
      %p823 = scmp.eq.s32.totalorder %s101, 0
      %p824 = por %p822, %p823
      %p825 = scmp.ne.s32.totalorder %s817, %s819
      %p826 = scmp.eq.s32.totalorder %s106, 1
      %p827 = por %p825, %p826
      %p828 = scmp.ne.s32.totalorder %s819, %s820
      %p829 = scmp.eq.s32.totalorder %s106, 0
      %p830 = por %p828, %p829
      %p831 = scmp.ne.s32.totalorder %s819, %s820
      %p832 = scmp.eq.s32.totalorder %s107, 1
      %p833 = por %p831, %p832
      %p835 = scmp.ne.s32.totalorder %s820, %s834
      %p836 = scmp.eq.s32.totalorder %s107, 0
      %p837 = por %p835, %p836
      %s839 = sadd.s32 %s838, 1
      %p842 = scmp.eq.s32.totalorder %s101, 1
      %p843 = scmp.ne.s32.totalorder %s838, %s840
      %p844 = scmp.eq.s32.totalorder %s101, 0
      %p845 = por %p843, %p844
      %p846 = scmp.ne.s32.totalorder %s838, %s840
      %p847 = scmp.eq.s32.totalorder %s106, 1
      %p848 = por %p846, %p847
      %p849 = scmp.ne.s32.totalorder %s840, %s841
      %p850 = scmp.eq.s32.totalorder %s106, 0
      %p851 = por %p849, %p850
      %p852 = scmp.ne.s32.totalorder %s840, %s841
      %p853 = scmp.eq.s32.totalorder %s107, 1
      %p854 = por %p852, %p853
      %p856 = scmp.ne.s32.totalorder %s841, %s855
      %p857 = scmp.eq.s32.totalorder %s107, 0
      %p858 = por %p856, %p857
      %s860 = sadd.s32 %s859, 1
      %p863 = scmp.eq.s32.totalorder %s101, 1
      %p864 = scmp.ne.s32.totalorder %s859, %s861
      %p865 = scmp.eq.s32.totalorder %s101, 0
      %p866 = por %p864, %p865
      %p867 = scmp.ne.s32.totalorder %s859, %s861
      %p868 = scmp.eq.s32.totalorder %s106, 1
      %p869 = por %p867, %p868
      %p870 = scmp.ne.s32.totalorder %s861, %s862
      %p871 = scmp.eq.s32.totalorder %s106, 0
      %p872 = por %p870, %p871
      %p873 = scmp.ne.s32.totalorder %s861, %s862
      %p874 = scmp.eq.s32.totalorder %s107, 1
      %p875 = por %p873, %p874
      %p877 = scmp.ne.s32.totalorder %s862, %s876
      %p878 = scmp.eq.s32.totalorder %s107, 0
      %p879 = por %p877, %p878
      %s881 = sadd.s32 %s880, 1
      %p884 = scmp.eq.s32.totalorder %s101, 1
      %p885 = scmp.ne.s32.totalorder %s880, %s882
      %p886 = scmp.eq.s32.totalorder %s101, 0
      %p887 = por %p885, %p886
      %p888 = scmp.ne.s32.totalorder %s880, %s882
      %p889 = scmp.eq.s32.totalorder %s106, 1
      %p890 = por %p888, %p889
      %p891 = scmp.ne.s32.totalorder %s882, %s883
      %p892 = scmp.eq.s32.totalorder %s106, 0
      %p893 = por %p891, %p892
      %p894 = scmp.ne.s32.totalorder %s882, %s883
      %p895 = scmp.eq.s32.totalorder %s107, 1
      %p896 = por %p894, %p895
      %p898 = scmp.ne.s32.totalorder %s883, %s897
      %p899 = scmp.eq.s32.totalorder %s107, 0
      %p900 = por %p898, %p899
      %s902 = sadd.s32 %s901, 1
      %p905 = scmp.eq.s32.totalorder %s101, 1
      %p906 = scmp.ne.s32.totalorder %s901, %s903
      %p907 = scmp.eq.s32.totalorder %s101, 0
      %p908 = por %p906, %p907
      %p909 = scmp.ne.s32.totalorder %s901, %s903
      %p910 = scmp.eq.s32.totalorder %s106, 1
      %p911 = por %p909, %p910
      %p912 = scmp.ne.s32.totalorder %s903, %s904
      %p913 = scmp.eq.s32.totalorder %s106, 0
      %p914 = por %p912, %p913
      %p915 = scmp.ne.s32.totalorder %s903, %s904
      %p916 = scmp.eq.s32.totalorder %s107, 1
      %p917 = por %p915, %p916
      %p919 = scmp.ne.s32.totalorder %s904, %s918
      %p920 = scmp.eq.s32.totalorder %s107, 0
      %p921 = por %p919, %p920
      %s922 = ssub.s32 %s101, %s108
      %p923 = scmp.eq.s32.totalorder %s922, 0
      %s925 = sadd.s32 %s924, 1
      %s926 = scalar_select %p923, %s924, %s925
      %p929 = pneg %p923
      %p930 = scmp.eq.s32.totalorder %s101, 1
      %p931 = por %p929, %p930
      %p932 = scmp.ne.s32.totalorder %s924, %s927
      %p933 = scmp.eq.s32.totalorder %s101, 0
      %p934 = por %p932, %p933
      %p935 = scmp.ne.s32.totalorder %s924, %s927
      %p936 = scmp.eq.s32.totalorder %s106, 1
      %p937 = por %p935, %p936
      %p938 = scmp.ne.s32.totalorder %s927, %s928
      %p939 = scmp.eq.s32.totalorder %s106, 0
      %p940 = por %p938, %p939
      %p941 = scmp.ne.s32.totalorder %s927, %s928
      %p942 = scmp.eq.s32.totalorder %s107, 1
      %p943 = por %p941, %p942
      %p945 = scmp.ne.s32.totalorder %s928, %s944
      %p946 = scmp.eq.s32.totalorder %s107, 0
      %p947 = por %p945, %p946
      %s948 = ssub.s32 %s101, %s108
      %p949 = scmp.eq.s32.totalorder %s948, 0
      %s951 = sadd.s32 %s950, 1
      %s952 = scalar_select %p949, %s950, %s951
      %p955 = pneg %p949
      %p956 = scmp.eq.s32.totalorder %s101, 1
      %p957 = por %p955, %p956
      %p958 = scmp.ne.s32.totalorder %s950, %s953
      %p959 = scmp.eq.s32.totalorder %s101, 0
      %p960 = por %p958, %p959
      %p961 = scmp.ne.s32.totalorder %s950, %s953
      %p962 = scmp.eq.s32.totalorder %s106, 1
      %p963 = por %p961, %p962
      %p964 = scmp.ne.s32.totalorder %s953, %s954
      %p965 = scmp.eq.s32.totalorder %s106, 0
      %p966 = por %p964, %p965
      %p967 = scmp.ne.s32.totalorder %s953, %s954
      %p968 = scmp.eq.s32.totalorder %s107, 1
      %p969 = por %p967, %p968
      %p971 = scmp.ne.s32.totalorder %s954, %s970
      %p972 = scmp.eq.s32.totalorder %s107, 0
      %p973 = por %p971, %p972
      %p974 = scmp.le.s32.totalorder 1, %s101
      %p975 = scmp.lt.s32.totalorder %s101, 3
      %p976 = pnand %p974, %p975
      %p977 = pneg %p976
      // Predicated region
      $region9: #{_forward_impl.3} parent=5 // pred_check
        _
      $region10: #{_forward_impl.3} parent=5 // pred_check_branch
        %979 = sbr.rel (%p976) target = $region12
      $region11: #{_forward_impl.3} parent=5 // pred_region
        %s980 = ssub.s32 %s101, 1
        // Predicated region
        $region13: #{_forward_impl.3} parent=11 // pred_check
          %p981 = pneg %p200
        $region14: #{_forward_impl.3} parent=11 // pred_check_branch
          %983 = sbr.rel (%p981) target = $region16
        $region15: #{_forward_impl.3} parent=11 // pred_region
          %985 = vsyncadd [#allocation5], 0
          %s987 = sshll.u32 %s7, 4
          %s988 = int_to_ptr.vmem [resolvable:$true] %s987
          %990 = dma.vmem_to_smem %s988, 32, [#allocation2], [#allocation5]
        $region16: #{_forward_impl.3} parent=11 // pred_fallthru
          _
        // Predicated region
        $region17: #{_forward_impl.3} parent=11 // pred_check
          %p991 = pneg %p221
        $region18: #{_forward_impl.3} parent=11 // pred_check_branch
          %993 = sbr.rel (%p991) target = $region20
        $region19: #{_forward_impl.3} parent=11 // pred_region
          _
        $region20: #{_forward_impl.3} parent=11 // pred_fallthru
          _
        // Predicated region
        $region21: #{_forward_impl.3} parent=11 // pred_check
          %p994 = pneg %p242
        $region22: #{_forward_impl.3} parent=11 // pred_check_branch
          %996 = sbr.rel (%p994) target = $region24
        $region23: #{_forward_impl.3} parent=11 // pred_region
          _
        $region24: #{_forward_impl.3} parent=11 // pred_fallthru
          _
        // Predicated region
        $region25: #{_forward_impl.3} parent=11 // pred_check
          %p997 = pneg %p263
        $region26: #{_forward_impl.3} parent=11 // pred_check_branch
          %999 = sbr.rel (%p997) target = $region28
        $region27: #{_forward_impl.3} parent=11 // pred_region
          _
        $region28: #{_forward_impl.3} parent=11 // pred_fallthru
          _
        // Predicated region
        $region29: #{_forward_impl.3} parent=11 // pred_check
          %p1000 = pneg %p284
        $region30: #{_forward_impl.3} parent=11 // pred_check_branch
          %1002 = sbr.rel (%p1000) target = $region32
        $region31: #{_forward_impl.3} parent=11 // pred_region
          _
        $region32: #{_forward_impl.3} parent=11 // pred_fallthru
          _
        // Predicated region
        $region33: #{_forward_impl.3} parent=11 // pred_check
          %p1003 = pneg %p305
        $region34: #{_forward_impl.3} parent=11 // pred_check_branch
          %1005 = sbr.rel (%p1003) target = $region36
        $region35: #{_forward_impl.3} parent=11 // pred_region
          _
        $region36: #{_forward_impl.3} parent=11 // pred_fallthru
          _
        // Predicated region
        $region37: #{_forward_impl.3} parent=11 // pred_check
          %p1006 = pneg %p326
        $region38: #{_forward_impl.3} parent=11 // pred_check_branch
          %1008 = sbr.rel (%p1006) target = $region40
        $region39: #{_forward_impl.3} parent=11 // pred_region
          _
        $region40: #{_forward_impl.3} parent=11 // pred_fallthru
          _
        // Predicated region
        $region41: #{_forward_impl.3} parent=11 // pred_check
          %p1009 = pneg %p347
        $region42: #{_forward_impl.3} parent=11 // pred_check_branch
          %1011 = sbr.rel (%p1009) target = $region44
        $region43: #{_forward_impl.3} parent=11 // pred_region
          %1013 = vsyncadd [#allocation3], 0
          %s1014 = sshll.u32 %s21, 4
          %s1015 = int_to_ptr.hbm [resolvable:$true] %s1014
          %s1016 = sshll.u32 [#allocation6], 4
          %s1017 = int_to_ptr.vmem [resolvable:$true] %s1016
          %1022 = dma.hbm_to_vmem [thread:$0]  %s1015, 1024, %s1017, [#allocation3], 64, 64, 4
        $region44: #{_forward_impl.3} parent=11 // pred_fallthru
          _
        // Predicated region
        $region45: #{_forward_impl.3} parent=11 // pred_check
          %p1023 = pneg %p368
        $region46: #{_forward_impl.3} parent=11 // pred_check_branch
          %1025 = sbr.rel (%p1023) target = $region48
        $region47: #{_forward_impl.3} parent=11 // pred_region
          %1027 = vsyncadd [#allocation8], 0
          %s1029 = sshll.u32 %s23, 4
          %s1030 = int_to_ptr.hbm [resolvable:$true] %s1029
          %s1031 = sshll.u32 [#allocation7], 4
          %s1032 = int_to_ptr.vmem [resolvable:$true] %s1031
          %1034 = dma.hbm_to_vmem [thread:$0]  %s1030, 16, %s1032, [#allocation8]
        $region48: #{_forward_impl.3} parent=11 // pred_fallthru
          _
        // Predicated region
        $region49: #{_forward_impl.3} parent=11 // pred_check
          %p1035 = pneg %p389
        $region50: #{_forward_impl.3} parent=11 // pred_check_branch
          %1037 = sbr.rel (%p1035) target = $region52
        $region51: #{_forward_impl.3} parent=11 // pred_region
          _
        $region52: #{_forward_impl.3} parent=11 // pred_fallthru
          _
        // Predicated region
        $region53: #{_forward_impl.3} parent=11 // pred_check
          %p1038 = pneg %p410
        $region54: #{_forward_impl.3} parent=11 // pred_check_branch
          %1040 = sbr.rel (%p1038) target = $region56
        $region55: #{_forward_impl.3} parent=11 // pred_region
          %1042 = vsyncadd [#allocation8], 0
          %s1044 = sshll.u32 %s27, 4
          %s1045 = int_to_ptr.hbm [resolvable:$true] %s1044
          %s1046 = sshll.u32 [#allocation9], 4
          %s1047 = int_to_ptr.vmem [resolvable:$true] %s1046
          %1049 = dma.hbm_to_vmem [thread:$0]  %s1045, 16, %s1047, [#allocation8]
        $region56: #{_forward_impl.3} parent=11 // pred_fallthru
          _
        // Predicated region
        $region57: #{_forward_impl.3} parent=11 // pred_check
          %p1050 = pneg %p431
        $region58: #{_forward_impl.3} parent=11 // pred_check_branch
          %1052 = sbr.rel (%p1050) target = $region60
        $region59: #{_forward_impl.3} parent=11 // pred_region
          _
        $region60: #{_forward_impl.3} parent=11 // pred_fallthru
          _
        // Predicated region
        $region61: #{_forward_impl.3} parent=11 // pred_check
          %p1053 = pneg %p452
        $region62: #{_forward_impl.3} parent=11 // pred_check_branch
          %1055 = sbr.rel (%p1053) target = $region64
        $region63: #{_forward_impl.3} parent=11 // pred_region
          %1057 = vsyncadd [#allocation11], 0
          %s1059 = sshll.u32 %s31, 4
          %s1060 = int_to_ptr.hbm [resolvable:$true] %s1059
          %s1061 = sshll.u32 [#allocation10], 4
          %s1062 = int_to_ptr.vmem [resolvable:$true] %s1061
          %1064 = dma.hbm_to_vmem [thread:$0]  %s1060, 16, %s1062, [#allocation11]
        $region64: #{_forward_impl.3} parent=11 // pred_fallthru
          _
        // Predicated region
        $region65: #{_forward_impl.3} parent=11 // pred_check
          %p1065 = pneg %p473
        $region66: #{_forward_impl.3} parent=11 // pred_check_branch
          %1067 = sbr.rel (%p1065) target = $region68
        $region67: #{_forward_impl.3} parent=11 // pred_region
          %1069 = vsyncadd [#allocation11], 0
          %s1071 = sshll.u32 %s33, 4
          %s1072 = int_to_ptr.hbm [resolvable:$true] %s1071
          %s1073 = sshll.u32 [#allocation12], 4
          %s1074 = int_to_ptr.vmem [resolvable:$true] %s1073
          %1076 = dma.hbm_to_vmem [thread:$0]  %s1072, 16, %s1074, [#allocation11]
        $region68: #{_forward_impl.3} parent=11 // pred_fallthru
          _
        // Predicated region
        $region69: #{_forward_impl.3} parent=11 // pred_check
          %p1077 = pneg %p494
        $region70: #{_forward_impl.3} parent=11 // pred_check_branch
          %1079 = sbr.rel (%p1077) target = $region72
        $region71: #{_forward_impl.3} parent=11 // pred_region
          %1081 = vsyncadd [#allocation14], 0
          %s1083 = sshll.u32 %s35, 4
          %s1084 = int_to_ptr.hbm [resolvable:$true] %s1083
          %s1085 = sshll.u32 [#allocation13], 4
          %s1086 = int_to_ptr.vmem [resolvable:$true] %s1085
          %1088 = dma.hbm_to_vmem [thread:$0]  %s1084, 16, %s1086, [#allocation14]
        $region72: #{_forward_impl.3} parent=11 // pred_fallthru
          _
        // Predicated region
        $region73: #{_forward_impl.3} parent=11 // pred_check
          %p1089 = pneg %p515
        $region74: #{_forward_impl.3} parent=11 // pred_check_branch
          %1091 = sbr.rel (%p1089) target = $region76
        $region75: #{_forward_impl.3} parent=11 // pred_region
          %1093 = vsyncadd [#allocation14], 0
          %s1094 = sshll.u32 %s37, 4
          %s1095 = int_to_ptr.hbm [resolvable:$true] %s1094
          %s1096 = sshll.u32 [#allocation15], 4
          %s1097 = int_to_ptr.vmem [resolvable:$true] %s1096
          %1102 = dma.hbm_to_vmem [thread:$0]  %s1095, 1024, %s1097, [#allocation14], 64, 64, 4
        $region76: #{_forward_impl.3} parent=11 // pred_fallthru
          _
        // Predicated region
        $region77: #{_forward_impl.3} parent=11 // pred_check
          %p1103 = pneg %p536
        $region78: #{_forward_impl.3} parent=11 // pred_check_branch
          %1105 = sbr.rel (%p1103) target = $region80
        $region79: #{_forward_impl.3} parent=11 // pred_region
          %1107 = vsyncadd [#allocation17], 0
          %s1109 = sshll.u32 %s39, 4
          %s1110 = int_to_ptr.hbm [resolvable:$true] %s1109
          %s1111 = sshll.u32 [#allocation16], 4
          %s1112 = int_to_ptr.vmem [resolvable:$true] %s1111
          %1114 = dma.hbm_to_vmem [thread:$0]  %s1110, 16, %s1112, [#allocation17]
        $region80: #{_forward_impl.3} parent=11 // pred_fallthru
          _
        // Predicated region
        $region81: #{_forward_impl.3} parent=11 // pred_check
          %p1115 = pneg %p557
        $region82: #{_forward_impl.3} parent=11 // pred_check_branch
          %1117 = sbr.rel (%p1115) target = $region84
        $region83: #{_forward_impl.3} parent=11 // pred_region
          _
        $region84: #{_forward_impl.3} parent=11 // pred_fallthru
          _
        // Predicated region
        $region85: #{_forward_impl.3} parent=11 // pred_check
          %p1118 = pneg %p578
        $region86: #{_forward_impl.3} parent=11 // pred_check_branch
          %1120 = sbr.rel (%p1118) target = $region88
        $region87: #{_forward_impl.3} parent=11 // pred_region
          _
        $region88: #{_forward_impl.3} parent=11 // pred_fallthru
          _
        // Predicated region
        $region89: #{_forward_impl.3} parent=11 // pred_check
          %p1121 = pneg %p599
        $region90: #{_forward_impl.3} parent=11 // pred_check_branch
          %1123 = sbr.rel (%p1121) target = $region92
        $region91: #{_forward_impl.3} parent=11 // pred_region
          %1125 = vsyncadd [#allocation17], 0
          %s1126 = sshll.u32 %s45, 4
          %s1127 = int_to_ptr.hbm [resolvable:$true] %s1126
          %s1128 = sshll.u32 [#allocation18], 4
          %s1129 = int_to_ptr.vmem [resolvable:$true] %s1128
          %1134 = dma.hbm_to_vmem [thread:$0]  %s1127, 1024, %s1129, [#allocation17], 64, 64, 4
        $region92: #{_forward_impl.3} parent=11 // pred_fallthru
          _
        // Predicated region
        $region93: #{_forward_impl.3} parent=11 // pred_check
          %p1135 = pneg %p620
        $region94: #{_forward_impl.3} parent=11 // pred_check_branch
          %1137 = sbr.rel (%p1135) target = $region96
        $region95: #{_forward_impl.3} parent=11 // pred_region
          %1139 = vsyncadd [#allocation20], 0
          %s1141 = sshll.u32 %s47, 4
          %s1142 = int_to_ptr.hbm [resolvable:$true] %s1141
          %s1143 = sshll.u32 [#allocation19], 4
          %s1144 = int_to_ptr.vmem [resolvable:$true] %s1143
          %1146 = dma.hbm_to_vmem [thread:$0]  %s1142, 16, %s1144, [#allocation20]
        $region96: #{_forward_impl.3} parent=11 // pred_fallthru
          _
        // Predicated region
        $region97: #{_forward_impl.3} parent=11 // pred_check
          %p1147 = pneg %p641
        $region98: #{_forward_impl.3} parent=11 // pred_check_branch
          %1149 = sbr.rel (%p1147) target = $region100
        $region99: #{_forward_impl.3} parent=11 // pred_region
          %1151 = vsyncadd [#allocation20], 0
          %s1153 = sshll.u32 %s49, 4
          %s1154 = int_to_ptr.hbm [resolvable:$true] %s1153
          %s1155 = sshll.u32 [#allocation21], 4
          %s1156 = int_to_ptr.vmem [resolvable:$true] %s1155
          %1158 = dma.hbm_to_vmem [thread:$0]  %s1154, 16, %s1156, [#allocation20]
        $region100: #{_forward_impl.3} parent=11 // pred_fallthru
          _
        // Predicated region
        $region101: #{_forward_impl.3} parent=11 // pred_check
          %p1159 = pneg %p662
        $region102: #{_forward_impl.3} parent=11 // pred_check_branch
          %1161 = sbr.rel (%p1159) target = $region104
        $region103: #{_forward_impl.3} parent=11 // pred_region
          %1163 = vsyncadd [#allocation23], 0
          %s1165 = sshll.u32 %s51, 4
          %s1166 = int_to_ptr.hbm [resolvable:$true] %s1165
          %s1167 = sshll.u32 [#allocation22], 4
          %s1168 = int_to_ptr.vmem [resolvable:$true] %s1167
          %1170 = dma.hbm_to_vmem [thread:$0]  %s1166, 16, %s1168, [#allocation23]
        $region104: #{_forward_impl.3} parent=11 // pred_fallthru
          _
        // Predicated region
        $region105: #{_forward_impl.3} parent=11 // pred_check
          %p1171 = pneg %p683
        $region106: #{_forward_impl.3} parent=11 // pred_check_branch
          %1173 = sbr.rel (%p1171) target = $region108
        $region107: #{_forward_impl.3} parent=11 // pred_region
          %1175 = vsyncadd [#allocation23], 0
          %s1176 = sshll.u32 %s53, 4
          %s1177 = int_to_ptr.hbm [resolvable:$true] %s1176
          %s1178 = sshll.u32 [#allocation24], 4
          %s1179 = int_to_ptr.vmem [resolvable:$true] %s1178
          %1184 = dma.hbm_to_vmem [thread:$0]  %s1177, 2048, %s1179, [#allocation23], 128, 128, 8
        $region108: #{_forward_impl.3} parent=11 // pred_fallthru
          _
        // Predicated region
        $region109: #{_forward_impl.3} parent=11 // pred_check
          %p1185 = pneg %p704
        $region110: #{_forward_impl.3} parent=11 // pred_check_branch
          %1187 = sbr.rel (%p1185) target = $region112
        $region111: #{_forward_impl.3} parent=11 // pred_region
          _
        $region112: #{_forward_impl.3} parent=11 // pred_fallthru
          _
        // Predicated region
        $region113: #{_forward_impl.3} parent=11 // pred_check
          %p1188 = pneg %p725
        $region114: #{_forward_impl.3} parent=11 // pred_check_branch
          %1190 = sbr.rel (%p1188) target = $region116
        $region115: #{_forward_impl.3} parent=11 // pred_region
          %1192 = vsyncadd [#allocation26], 0
          %s1193 = sshll.u32 %s57, 4
          %s1194 = int_to_ptr.hbm [resolvable:$true] %s1193
          %s1195 = sshll.u32 [#allocation25], 4
          %s1196 = int_to_ptr.vmem [resolvable:$true] %s1195
          %1201 = dma.hbm_to_vmem [thread:$0]  %s1194, 2048, %s1196, [#allocation26], 64, 64, 4
        $region116: #{_forward_impl.3} parent=11 // pred_fallthru
          _
        // Predicated region
        $region117: #{_forward_impl.3} parent=11 // pred_check
          %p1202 = pneg %p746
        $region118: #{_forward_impl.3} parent=11 // pred_check_branch
          %1204 = sbr.rel (%p1202) target = $region120
        $region119: #{_forward_impl.3} parent=11 // pred_region
          %1206 = vsyncadd [#allocation26], 0
          %s1208 = sshll.u32 %s59, 4
          %s1209 = int_to_ptr.hbm [resolvable:$true] %s1208
          %s1210 = sshll.u32 [#allocation27], 4
          %s1211 = int_to_ptr.vmem [resolvable:$true] %s1210
          %1213 = dma.hbm_to_vmem [thread:$0]  %s1209, 16, %s1211, [#allocation26]
        $region120: #{_forward_impl.3} parent=11 // pred_fallthru
          _
        // Predicated region
        $region121: #{_forward_impl.3} parent=11 // pred_check
          %p1214 = pneg %p767
        $region122: #{_forward_impl.3} parent=11 // pred_check_branch
          %1216 = sbr.rel (%p1214) target = $region124
        $region123: #{_forward_impl.3} parent=11 // pred_region
          _
        $region124: #{_forward_impl.3} parent=11 // pred_fallthru
          _
        // Predicated region
        $region125: #{_forward_impl.3} parent=11 // pred_check
          %p1217 = pneg %p788
        $region126: #{_forward_impl.3} parent=11 // pred_check_branch
          %1219 = sbr.rel (%p1217) target = $region128
        $region127: #{_forward_impl.3} parent=11 // pred_region
          %1221 = vsyncadd [#allocation29], 0
          %s1223 = sshll.u32 %s63, 4
          %s1224 = int_to_ptr.hbm [resolvable:$true] %s1223
          %s1225 = sshll.u32 [#allocation28], 4
          %s1226 = int_to_ptr.vmem [resolvable:$true] %s1225
          %1228 = dma.hbm_to_vmem [thread:$0]  %s1224, 16, %s1226, [#allocation29]
        $region128: #{_forward_impl.3} parent=11 // pred_fallthru
          _
        // Predicated region
        $region129: #{_forward_impl.3} parent=11 // pred_check
          %p1229 = pneg %p809
        $region130: #{_forward_impl.3} parent=11 // pred_check_branch
          %1231 = sbr.rel (%p1229) target = $region132
        $region131: #{_forward_impl.3} parent=11 // pred_region
          _
        $region132: #{_forward_impl.3} parent=11 // pred_fallthru
          _
        // Predicated region
        $region133: #{_forward_impl.3} parent=11 // pred_check
          %p1232 = pneg %p830
        $region134: #{_forward_impl.3} parent=11 // pred_check_branch
          %1234 = sbr.rel (%p1232) target = $region136
        $region135: #{_forward_impl.3} parent=11 // pred_region
          %1236 = vsyncadd [#allocation29], 0
          %s1238 = sshll.u32 %s67, 4
          %s1239 = int_to_ptr.hbm [resolvable:$true] %s1238
          %s1240 = sshll.u32 [#allocation30], 4
          %s1241 = int_to_ptr.vmem [resolvable:$true] %s1240
          %1243 = dma.hbm_to_vmem [thread:$0]  %s1239, 16, %s1241, [#allocation29]
        $region136: #{_forward_impl.3} parent=11 // pred_fallthru
          _
        // Predicated region
        $region137: #{_forward_impl.3} parent=11 // pred_check
          %p1244 = pneg %p851
        $region138: #{_forward_impl.3} parent=11 // pred_check_branch
          %1246 = sbr.rel (%p1244) target = $region140
        $region139: #{_forward_impl.3} parent=11 // pred_region
          %1248 = vsyncadd [#allocation32], 0
          %s1250 = sshll.u32 %s69, 4
          %s1251 = int_to_ptr.hbm [resolvable:$true] %s1250
          %s1252 = sshll.u32 [#allocation31], 4
          %s1253 = int_to_ptr.vmem [resolvable:$true] %s1252
          %1255 = dma.hbm_to_vmem [thread:$0]  %s1251, 16, %s1253, [#allocation32]
        $region140: #{_forward_impl.3} parent=11 // pred_fallthru
          _
        // Predicated region
        $region141: #{_forward_impl.3} parent=11 // pred_check
          %p1256 = pneg %p872
        $region142: #{_forward_impl.3} parent=11 // pred_check_branch
          %1258 = sbr.rel (%p1256) target = $region144
        $region143: #{_forward_impl.3} parent=11 // pred_region
          %1260 = vsyncadd [#allocation32], 0
          %s1262 = sshll.u32 %s71, 4
          %s1263 = int_to_ptr.hbm [resolvable:$true] %s1262
          %s1264 = sshll.u32 [#allocation33], 4
          %s1265 = int_to_ptr.vmem [resolvable:$true] %s1264
          %1267 = dma.hbm_to_vmem [thread:$0]  %s1263, 16, %s1265, [#allocation32]
        $region144: #{_forward_impl.3} parent=11 // pred_fallthru
          _
        // Predicated region
        $region145: #{_forward_impl.3} parent=11 // pred_check
          %p1268 = pneg %p893
        $region146: #{_forward_impl.3} parent=11 // pred_check_branch
          %1270 = sbr.rel (%p1268) target = $region148
        $region147: #{_forward_impl.3} parent=11 // pred_region
          %1272 = vsyncadd [#allocation35], 0
          %s1273 = sshll.u32 %s73, 4
          %s1274 = int_to_ptr.hbm [resolvable:$true] %s1273
          %s1275 = sshll.u32 [#allocation34], 4
          %s1276 = int_to_ptr.vmem [resolvable:$true] %s1275
          %1281 = dma.hbm_to_vmem [thread:$0]  %s1274, 2048, %s1276, [#allocation35], 128, 128, 8
        $region148: #{_forward_impl.3} parent=11 // pred_fallthru
          _
        // Predicated region
        $region149: #{_forward_impl.3} parent=11 // pred_check
          %p1282 = pneg %p914
        $region150: #{_forward_impl.3} parent=11 // pred_check_branch
          %1284 = sbr.rel (%p1282) target = $region152
        $region151: #{_forward_impl.3} parent=11 // pred_region
          _
        $region152: #{_forward_impl.3} parent=11 // pred_fallthru
          _
      $region12: #{_forward_impl.3} parent=5 // pred_fallthru
        _
      %p1285 = scmp.lt.s32.totalorder %s101, 2
      // Predicated region
      $region153: #{_forward_impl.3} parent=5 // pred_check
        %p1286 = pneg %p1285
      $region154: #{_forward_impl.3} parent=5 // pred_check_branch
        %1288 = sbr.rel (%p1286) target = $region156
      $region155: #{_forward_impl.3} parent=5 // pred_region
        // Predicated region
        $region157: #{_forward_impl.3} parent=155 // pred_check
          %p1289 = pneg %p121
        $region158: #{_forward_impl.3} parent=155 // pred_check_branch
          %1291 = sbr.rel (%p1289) target = $region160
        $region159: #{_forward_impl.3} parent=155 // pred_region
          %p1292 = scmp.lt.s32.totalorder %s101, 1
          %s1293 = scalar_select %p1292, %s101, 1
          %s1294 = smul.addr %s1293, 8
          %s1295 = scalar_lea.vmem %s1, %s1294
        $region160: #{_forward_impl.3} parent=155 // pred_fallthru
          _
        // Predicated region
        $region161: #{_forward_impl.3} parent=155 // pred_check
          %p1296 = pneg %p147
        $region162: #{_forward_impl.3} parent=155 // pred_check_branch
          %1298 = sbr.rel (%p1296) target = $region164
        $region163: #{_forward_impl.3} parent=155 // pred_region
          %p1299 = scmp.lt.s32.totalorder %s101, 1
          %s1300 = scalar_select %p1299, %s101, 1
          %s1301 = smul.addr %s1300, 8
          %s1302 = scalar_lea.vmem %s3, %s1301
        $region164: #{_forward_impl.3} parent=155 // pred_fallthru
          _
        // Predicated region
        $region165: #{_forward_impl.3} parent=155 // pred_check
          %p1303 = pneg %p173
        $region166: #{_forward_impl.3} parent=155 // pred_check_branch
          %1305 = sbr.rel (%p1303) target = $region168
        $region167: #{_forward_impl.3} parent=155 // pred_region
          %p1306 = scmp.lt.s32.totalorder %s101, 1
          %s1307 = scalar_select %p1306, %s101, 1
          %s1308 = scalar_lea.vmem %s5, %s1307
        $region168: #{_forward_impl.3} parent=155 // pred_fallthru
          _
      $region156: #{_forward_impl.3} parent=5 // pred_fallthru
        _
      %p1309 = scmp.le.s32.totalorder 1, %s101
      %p1310 = scmp.lt.s32.totalorder %s101, 3
      %p1311 = pnand %p1309, %p1310
      %p1312 = pneg %p1311
      // Predicated region
      $region169: #{_forward_impl.3} parent=5 // pred_check
        _
      $region170: #{_forward_impl.3} parent=5 // pred_check_branch
        %1314 = sbr.rel (%p1311) target = $region172
      $region171: #{_forward_impl.3} parent=5 // pred_region
        %s1315 = ssub.s32 %s101, 1
        // Predicated region
        $region173: #{_forward_impl.3} parent=171 // pred_check
          %p1316 = pneg %p200
        $region174: #{_forward_impl.3} parent=171 // pred_check_branch
          %1318 = sbr.rel (%p1316) target = $region176
        $region175: #{_forward_impl.3} parent=171 // pred_region
          %1320 = dma.done [#allocation5], 32
        $region176: #{_forward_impl.3} parent=171 // pred_fallthru
          _
        // Predicated region
        $region177: #{_forward_impl.3} parent=171 // pred_check
          %p1321 = pneg %p347
        $region178: #{_forward_impl.3} parent=171 // pred_check_branch
          %1323 = sbr.rel (%p1321) target = $region180
        $region179: #{_forward_impl.3} parent=171 // pred_region
          %1325 = dma.done [#allocation3], 1024
        $region180: #{_forward_impl.3} parent=171 // pred_fallthru
          _
        // Predicated region
        $region181: #{_forward_impl.3} parent=171 // pred_check
          %p1326 = pneg %p368
        $region182: #{_forward_impl.3} parent=171 // pred_check_branch
          %1328 = sbr.rel (%p1326) target = $region184
        $region183: #{_forward_impl.3} parent=171 // pred_region
          %1330 = dma.done [#allocation8], 16
        $region184: #{_forward_impl.3} parent=171 // pred_fallthru
          _
        // Predicated region
        $region185: #{_forward_impl.3} parent=171 // pred_check
          %p1331 = pneg %p410
        $region186: #{_forward_impl.3} parent=171 // pred_check_branch
          %1333 = sbr.rel (%p1331) target = $region188
        $region187: #{_forward_impl.3} parent=171 // pred_region
          %1335 = dma.done [#allocation8], 16
        $region188: #{_forward_impl.3} parent=171 // pred_fallthru
          _
        // Predicated region
        $region189: #{_forward_impl.3} parent=171 // pred_check
          %p1336 = pneg %p452
        $region190: #{_forward_impl.3} parent=171 // pred_check_branch
          %1338 = sbr.rel (%p1336) target = $region192
        $region191: #{_forward_impl.3} parent=171 // pred_region
          %1340 = dma.done [#allocation11], 16
        $region192: #{_forward_impl.3} parent=171 // pred_fallthru
          _
        // Predicated region
        $region193: #{_forward_impl.3} parent=171 // pred_check
          %p1341 = pneg %p473
        $region194: #{_forward_impl.3} parent=171 // pred_check_branch
          %1343 = sbr.rel (%p1341) target = $region196
        $region195: #{_forward_impl.3} parent=171 // pred_region
          %1345 = dma.done [#allocation11], 16
        $region196: #{_forward_impl.3} parent=171 // pred_fallthru
          _
        // Predicated region
        $region197: #{_forward_impl.3} parent=171 // pred_check
          %p1346 = pneg %p494
        $region198: #{_forward_impl.3} parent=171 // pred_check_branch
          %1348 = sbr.rel (%p1346) target = $region200
        $region199: #{_forward_impl.3} parent=171 // pred_region
          %1350 = dma.done [#allocation14], 16
        $region200: #{_forward_impl.3} parent=171 // pred_fallthru
          _
        // Predicated region
        $region201: #{_forward_impl.3} parent=171 // pred_check
          %p1351 = pneg %p515
        $region202: #{_forward_impl.3} parent=171 // pred_check_branch
          %1353 = sbr.rel (%p1351) target = $region204
        $region203: #{_forward_impl.3} parent=171 // pred_region
          %1355 = dma.done [#allocation14], 1024
        $region204: #{_forward_impl.3} parent=171 // pred_fallthru
          _
        // Predicated region
        $region205: #{_forward_impl.3} parent=171 // pred_check
          %p1356 = pneg %p536
        $region206: #{_forward_impl.3} parent=171 // pred_check_branch
          %1358 = sbr.rel (%p1356) target = $region208
        $region207: #{_forward_impl.3} parent=171 // pred_region
          %1360 = dma.done [#allocation17], 16
        $region208: #{_forward_impl.3} parent=171 // pred_fallthru
          _
        // Predicated region
        $region209: #{_forward_impl.3} parent=171 // pred_check
          %p1361 = pneg %p599
        $region210: #{_forward_impl.3} parent=171 // pred_check_branch
          %1363 = sbr.rel (%p1361) target = $region212
        $region211: #{_forward_impl.3} parent=171 // pred_region
          %1365 = dma.done [#allocation17], 1024
        $region212: #{_forward_impl.3} parent=171 // pred_fallthru
          _
        // Predicated region
        $region213: #{_forward_impl.3} parent=171 // pred_check
          %p1366 = pneg %p620
        $region214: #{_forward_impl.3} parent=171 // pred_check_branch
          %1368 = sbr.rel (%p1366) target = $region216
        $region215: #{_forward_impl.3} parent=171 // pred_region
          %1370 = dma.done [#allocation20], 16
        $region216: #{_forward_impl.3} parent=171 // pred_fallthru
          _
        // Predicated region
        $region217: #{_forward_impl.3} parent=171 // pred_check
          %p1371 = pneg %p641
        $region218: #{_forward_impl.3} parent=171 // pred_check_branch
          %1373 = sbr.rel (%p1371) target = $region220
        $region219: #{_forward_impl.3} parent=171 // pred_region
          %1375 = dma.done [#allocation20], 16
        $region220: #{_forward_impl.3} parent=171 // pred_fallthru
          _
        // Predicated region
        $region221: #{_forward_impl.3} parent=171 // pred_check
          %p1376 = pneg %p662
        $region222: #{_forward_impl.3} parent=171 // pred_check_branch
          %1378 = sbr.rel (%p1376) target = $region224
        $region223: #{_forward_impl.3} parent=171 // pred_region
          %1380 = dma.done [#allocation23], 16
        $region224: #{_forward_impl.3} parent=171 // pred_fallthru
          _
        // Predicated region
        $region225: #{_forward_impl.3} parent=171 // pred_check
          %p1381 = pneg %p683
        $region226: #{_forward_impl.3} parent=171 // pred_check_branch
          %1383 = sbr.rel (%p1381) target = $region228
        $region227: #{_forward_impl.3} parent=171 // pred_region
          %1385 = dma.done [#allocation23], 2048
        $region228: #{_forward_impl.3} parent=171 // pred_fallthru
          _
        // Predicated region
        $region229: #{_forward_impl.3} parent=171 // pred_check
          %p1386 = pneg %p725
        $region230: #{_forward_impl.3} parent=171 // pred_check_branch
          %1388 = sbr.rel (%p1386) target = $region232
        $region231: #{_forward_impl.3} parent=171 // pred_region
          %1390 = dma.done [#allocation26], 2048
        $region232: #{_forward_impl.3} parent=171 // pred_fallthru
          _
        // Predicated region
        $region233: #{_forward_impl.3} parent=171 // pred_check
          %p1391 = pneg %p746
        $region234: #{_forward_impl.3} parent=171 // pred_check_branch
          %1393 = sbr.rel (%p1391) target = $region236
        $region235: #{_forward_impl.3} parent=171 // pred_region
          %1395 = dma.done [#allocation26], 16
        $region236: #{_forward_impl.3} parent=171 // pred_fallthru
          _
        // Predicated region
        $region237: #{_forward_impl.3} parent=171 // pred_check
          %p1396 = pneg %p788
        $region238: #{_forward_impl.3} parent=171 // pred_check_branch
          %1398 = sbr.rel (%p1396) target = $region240
        $region239: #{_forward_impl.3} parent=171 // pred_region
          %1400 = dma.done [#allocation29], 16
        $region240: #{_forward_impl.3} parent=171 // pred_fallthru
          _
        // Predicated region
        $region241: #{_forward_impl.3} parent=171 // pred_check
          %p1401 = pneg %p830
        $region242: #{_forward_impl.3} parent=171 // pred_check_branch
          %1403 = sbr.rel (%p1401) target = $region244
        $region243: #{_forward_impl.3} parent=171 // pred_region
          %1405 = dma.done [#allocation29], 16
        $region244: #{_forward_impl.3} parent=171 // pred_fallthru
          _
        // Predicated region
        $region245: #{_forward_impl.3} parent=171 // pred_check
          %p1406 = pneg %p851
        $region246: #{_forward_impl.3} parent=171 // pred_check_branch
          %1408 = sbr.rel (%p1406) target = $region248
        $region247: #{_forward_impl.3} parent=171 // pred_region
          %1410 = dma.done [#allocation32], 16
        $region248: #{_forward_impl.3} parent=171 // pred_fallthru
          _
        // Predicated region
        $region249: #{_forward_impl.3} parent=171 // pred_check
          %p1411 = pneg %p872
        $region250: #{_forward_impl.3} parent=171 // pred_check_branch
          %1413 = sbr.rel (%p1411) target = $region252
        $region251: #{_forward_impl.3} parent=171 // pred_region
          %1415 = dma.done [#allocation32], 16
        $region252: #{_forward_impl.3} parent=171 // pred_fallthru
          _
        // Predicated region
        $region253: #{_forward_impl.3} parent=171 // pred_check
          %p1416 = pneg %p893
        $region254: #{_forward_impl.3} parent=171 // pred_check_branch
          %1418 = sbr.rel (%p1416) target = $region256
        $region255: #{_forward_impl.3} parent=171 // pred_region
          %1420 = dma.done [#allocation35], 2048
        $region256: #{_forward_impl.3} parent=171 // pred_fallthru
          _
        %1421 = sfence
        %p1422 = scmp.lt.s32.totalorder %s106, 1
        %s1423 = scalar_select %p1422, %s106, 1
        %s1424 = smul.addr %s1423, 8
        %s1425 = scalar_lea.vmem %s1, %s1424
        %p1426 = pneg %p127
        %p1427 = pneg %p124
        %p1428 = scmp.lt.s32.totalorder %s106, 1
        %s1429 = scalar_select %p1428, %s106, 1
        %s1430 = smul.addr %s1429, 8
        %s1431 = scalar_lea.vmem %s3, %s1430
        %p1432 = pneg %p153
        %p1433 = pneg %p150
        %p1434 = scmp.lt.s32.totalorder %s106, 1
        %s1435 = scalar_select %p1434, %s106, 1
        %s1436 = scalar_lea.vmem %s5, %s1435
        %p1437 = pneg %p179
        %p1438 = pneg %p176
        %p1439 = pneg %p200
        %p1440 = pneg %p197
        %p1441 = pneg %p221
        %p1442 = pneg %p218
        %p1443 = pneg %p242
        %p1444 = pneg %p239
        %p1445 = pneg %p263
        %p1446 = pneg %p260
        %p1447 = pneg %p284
        %p1448 = pneg %p281
        %p1449 = pneg %p305
        %p1450 = pneg %p302
        %p1451 = pneg %p326
        %p1452 = pneg %p323
        %p1453 = pneg %p347
        %p1454 = pneg %p344
        %p1455 = pneg %p368
        %p1456 = pneg %p365
        %p1457 = pneg %p389
        %p1458 = pneg %p386
        %p1459 = pneg %p410
        %p1460 = pneg %p407
        %p1461 = pneg %p431
        %p1462 = pneg %p428
        %p1463 = pneg %p452
        %p1464 = pneg %p449
        %p1465 = pneg %p473
        %p1466 = pneg %p470
        %p1467 = pneg %p494
        %p1468 = pneg %p491
        %p1469 = pneg %p515
        %p1470 = pneg %p512
        %p1471 = pneg %p536
        %p1472 = pneg %p533
        %p1473 = pneg %p557
        %p1474 = pneg %p554
        %p1475 = pneg %p578
        %p1476 = pneg %p575
        %p1477 = pneg %p599
        %p1478 = pneg %p596
        %p1479 = pneg %p620
        %p1480 = pneg %p617
        %p1481 = pneg %p641
        %p1482 = pneg %p638
        %p1483 = pneg %p662
        %p1484 = pneg %p659
        %p1485 = pneg %p683
        %p1486 = pneg %p680
        %p1487 = pneg %p704
        %p1488 = pneg %p701
        %p1489 = pneg %p725
        %p1490 = pneg %p722
        %p1491 = pneg %p746
        %p1492 = pneg %p743
        %p1493 = pneg %p767
        %p1494 = pneg %p764
        %p1495 = pneg %p788
        %p1496 = pneg %p785
        %p1497 = pneg %p809
        %p1498 = pneg %p806
        %p1499 = pneg %p830
        %p1500 = pneg %p827
        %p1501 = pneg %p851
        %p1502 = pneg %p848
        %p1503 = pneg %p872
        %p1504 = pneg %p869
        %p1505 = pneg %p893
        %p1506 = pneg %p890
        %p1507 = pneg %p914
        %p1508 = pneg %p911
        %p1509 = pneg %p940
        %p1510 = pneg %p937
        %s1511 = sand.u32 %s927, 1
        %s1512 = scalar_lea.sflag [#allocation4], %s1511
        %s1513 = sand.u32 %s927, 1
        %s1514 = smul.addr %s1513, 16
        %s1515 = scalar_lea.vmem [#allocation36], %s1514
        %p1516 = pneg %p966
        %p1517 = pneg %p963
        %p1518 = scmp.lt.s32.totalorder %s106, 1
        %s1519 = scalar_select %p1518, %s106, 1
        %s1520 = smul.addr %s1519, 8
        %s1521 = scalar_lea.vmem %s79, %s1520
        %p1522 = scmp.lt.s32.totalorder %s106, 1
        %s1523 = scalar_select %p1522, %s106, 1
        %s1524 = smul.addr %s1523, 8
        %s1525 = scalar_lea.vmem %s1, %s1524
        %p1526 = scmp.lt.s32.totalorder %s106, 1
        %s1527 = scalar_select %p1526, %s106, 1
        %s1528 = smul.addr %s1527, 8
        %s1529 = scalar_lea.vmem %s3, %s1528
        %p1530 = scmp.lt.s32.totalorder %s106, 1
        %s1531 = scalar_select %p1530, %s106, 1
        %s1532 = scalar_lea.vmem %s5, %s1531
        %p1533 = scmp.lt.s32.totalorder %s106, 1
        %s1534 = scalar_select %p1533, %s106, 1
        %s1535 = smul.addr %s1534, 8
        %s1536 = scalar_lea.vmem %s79, %s1535
        %v1538 = vld [vmem:[%s1532] sm:$0x1]
        %v1539 = vsub.f32 %v1538, 1.0
        %v1540 = vmul.f32 %v1539, 1e+09
        %v1541 = vlaneseq
        %v1542 = vshrl.u32 %v1541, 7
        %v1543 = vlaneseq
        %v1544 = vand.u32 %v1543, 127
        %vm1545 = vcmp.ge.s32.totalorder %v1542, %v1544
        %v1546 = vsel %vm1545, 0.0, -1e+09
        %v1547 = vld [vmem:[%s1529] sm:$0xff]
        %v1548 = vld [vmem:[%s1525] sm:$0xff]
        %v1549 = vld [vmem:[%s9] sm:$0x1]
        %v1550 = vld [vmem:[%s11] sm:$0x1]
        %1551 = vadd.xlane.f32.xlu0 %v1548
        %v1552 = vpop.xlane.xlu0 %1551
        %v1553 = vrcp.pop 128.0
        %v1554 = vmul.f32 128.0, %v1553
        %v1555 = vsub.f32 1.0, %v1554
        %v1556 = vmul.f32 %v1553, %v1555
        %v1557 = vadd.f32 %v1553, %v1556
        %vm1558 = vweird.f32 %v1553
        %v1559 = vsel %vm1558, %v1553, %v1557
        %v1560 = vmul.f32 %v1552, %v1559
        %v1561 = vsub.f32 %v1548, %v1560
        %v1562 = vmul.f32 %v1561, %v1561
        %1563 = vadd.xlane.f32.xlu0 %v1562
        %v1564 = vpop.xlane.xlu0 %1563
        %v1565 = vmul.f32 %v1564, %v1559
        %v1566 = vadd.f32 %v1565, 1e-05
        %v1567 = vrsqrt.pop %v1566
        %v1568 = vmul.f32 %v1567, %v1566
        %v1569 = vmul.f32 %v1568, %v1567
        %v1570 = vmul.f32 0.5, %v1569
        %v1571 = vsub.f32 1.5, %v1570
        %v1572 = vmul.f32 %v1567, %v1571
        %vm1573 = vweird.f32 %v1566
        %vm1574 = vweird.f32 %v1567
        %vm1575 = vmor %vm1573, %vm1574
        %v1576 = vsel %vm1575, %v1567, %v1572
        %v1577 = vmul.f32 %v1561, %v1576
        %v1579 = vperm.slane %v1549, 0
        %v1581 = vmul.f32 %v1577, %v1579
        %v1583 = vperm.slane %v1550, 0
        %v1585 = vadd.f32 %v1581, %v1583
        %v1586 = vld [vmem:[%s13] sm:$0x1]
        %v1587 = vld [vmem:[%s15] sm:$0x1]
        %1588 = vadd.xlane.f32.xlu0 %v1585
        %v1589 = vpop.xlane.xlu0 %1588
        %v1590 = vmul.f32 %v1589, %v1559
        %v1591 = vsub.f32 %v1585, %v1590
        %v1592 = vmul.f32 %v1591, %v1591
        %1593 = vadd.xlane.f32.xlu0 %v1592
        %v1594 = vpop.xlane.xlu0 %1593
        %v1595 = vmul.f32 %v1594, %v1559
        %v1596 = vadd.f32 %v1595, 1e-05
        %v1597 = vrsqrt.pop %v1596
        %v1598 = vmul.f32 %v1597, %v1596
        %v1599 = vmul.f32 %v1598, %v1597
        %v1600 = vmul.f32 0.5, %v1599
        %v1601 = vsub.f32 1.5, %v1600
        %v1602 = vmul.f32 %v1597, %v1601
        %vm1603 = vweird.f32 %v1596
        %vm1604 = vweird.f32 %v1597
        %vm1605 = vmor %vm1603, %vm1604
        %v1606 = vsel %vm1605, %v1597, %v1602
        %v1607 = vmul.f32 %v1591, %v1606
        %v1609 = vperm.slane %v1586, 0
        %v1611 = vmul.f32 %v1607, %v1609
        %v1613 = vperm.slane %v1587, 0
        %v1615 = vadd.f32 %v1611, %v1613
        %v1616 = vld [vmem:[%s17] sm:$0xff]
        %v1617 = vld [vmem:[%s17 + $0x8] sm:$0xf]
        %v1618 = vld [vmem:[%s17 + $0xc] sm:$0xff]
        %v1619 = vld [vmem:[%s17 + $0x14] sm:$0xf]
        %v1620 = vld [vmem:[%s17 + $0x18] sm:$0xff]
        %v1621 = vld [vmem:[%s17 + $0x20] sm:$0xf]
        %v1622 = vld [vmem:[%s17 + $0x24] sm:$0xff]
        %v1623 = vld [vmem:[%s17 + $0x2c] sm:$0xf]
        %v1624 = vld [vmem:[%s17 + $0x30] sm:$0xff]
        %v1625 = vld [vmem:[%s17 + $0x38] sm:$0xf]
        %v1626 = vld [vmem:[%s17 + $0x3c] sm:$0xff]
        %v1627 = vld [vmem:[%s17 + $0x44] sm:$0xf]
        %v1628 = vld [vmem:[%s17 + $0x48] sm:$0xff]
        %v1629 = vld [vmem:[%s17 + $0x50] sm:$0xf]
        %v1630 = vld [vmem:[%s17 + $0x54] sm:$0xff]
        %v1631 = vld [vmem:[%s17 + $0x5c] sm:$0xf]
        %v1632 = vld [vmem:[%s17 + $0x60] sm:$0xff]
        %v1633 = vld [vmem:[%s17 + $0x68] sm:$0xf]
        %v1634 = vld [vmem:[%s17 + $0x6c] sm:$0xff]
        %v1635 = vld [vmem:[%s17 + $0x74] sm:$0xf]
        %v1636 = vld [vmem:[%s17 + $0x78] sm:$0xff]
        %v1637 = vld [vmem:[%s17 + $0x80] sm:$0xf]
        %v1638 = vld [vmem:[%s17 + $0x84] sm:$0xff]
        %v1639 = vld [vmem:[%s17 + $0x8c] sm:$0xf]
        %v1640 = vld [vmem:[%s17 + $0x90] sm:$0xff]
        %v1641 = vld [vmem:[%s17 + $0x98] sm:$0xf]
        %v1642 = vld [vmem:[%s17 + $0x9c] sm:$0xff]
        %v1643 = vld [vmem:[%s17 + $0xa4] sm:$0xf]
        %v1644 = vld [vmem:[%s17 + $0xa8] sm:$0xff]
        %v1645 = vld [vmem:[%s17 + $0xb0] sm:$0xf]
        %v1646 = vld [vmem:[%s17 + $0xb4] sm:$0xff]
        %v1647 = vld [vmem:[%s17 + $0xbc] sm:$0xf]
        %v1648 = vpack.c.bf16 %v1615, %v1615
        %v1649 = vld [vmem:[%s19] sm:$0x7]
        %v1651 = vperm.slane %v1649, 0
        %v1652 = vperm.slane %v1649, 1
        %v1653 = vperm.slane %v1649, 2
        %v1689 = vunpack.c.l.b16 %v1616
        %v1690 = vunpack.c.h.b16 %v1616
        %v1691 = vunpack.c.l.b16 %v1617
        %v1692 = vunpack.c.l.b16 %v1618
        %v1693 = vunpack.c.h.b16 %v1618
        %v1694 = vunpack.c.l.b16 %v1619
        %v1695 = vunpack.c.l.b16 %v1620
        %v1696 = vunpack.c.h.b16 %v1620
        %v1697 = vunpack.c.l.b16 %v1621
        %v1698 = vunpack.c.l.b16 %v1622
        %v1699 = vunpack.c.h.b16 %v1622
        %v1700 = vunpack.c.l.b16 %v1623
        %v1701 = vunpack.c.l.b16 %v1624
        %v1702 = vunpack.c.h.b16 %v1624
        %v1703 = vunpack.c.l.b16 %v1625
        %v1704 = vunpack.c.l.b16 %v1626
        %v1705 = vunpack.c.h.b16 %v1626
        %v1706 = vunpack.c.l.b16 %v1627
        %v1707 = vunpack.c.l.b16 %v1628
        %v1708 = vunpack.c.h.b16 %v1628
        %v1709 = vunpack.c.l.b16 %v1629
        %v1710 = vunpack.c.l.b16 %v1630
        %v1711 = vunpack.c.h.b16 %v1630
        %v1712 = vunpack.c.l.b16 %v1631
        %v1713 = vunpack.c.l.b16 %v1632
        %v1714 = vunpack.c.h.b16 %v1632
        %v1715 = vunpack.c.l.b16 %v1633
        %v1716 = vunpack.c.l.b16 %v1634
        %v1717 = vunpack.c.h.b16 %v1634
        %v1718 = vunpack.c.l.b16 %v1635
        %v1719 = vunpack.c.l.b16 %v1636
        %v1720 = vunpack.c.h.b16 %v1636
        %v1721 = vunpack.c.l.b16 %v1637
        %v1722 = vunpack.c.l.b16 %v1638
        %v1723 = vunpack.c.h.b16 %v1638
        %v1724 = vunpack.c.l.b16 %v1639
        %v1725 = vunpack.c.l.b16 %v1640
        %v1726 = vunpack.c.h.b16 %v1640
        %v1727 = vunpack.c.l.b16 %v1641
        %v1728 = vunpack.c.l.b16 %v1642
        %v1729 = vunpack.c.h.b16 %v1642
        %v1730 = vunpack.c.l.b16 %v1643
        %v1731 = vunpack.c.l.b16 %v1644
        %v1732 = vunpack.c.h.b16 %v1644
        %v1733 = vunpack.c.l.b16 %v1645
        %v1734 = vunpack.c.l.b16 %v1646
        %v1735 = vunpack.c.h.b16 %v1646
        %v1736 = vunpack.c.l.b16 %v1647
        %v1737 = vpack.c.b16 %v1692, %v1689
        %v1738 = vpack.c.b16 %v1693, %v1690
        %v1739 = vpack.c.b16 %v1694, %v1691
        %v1740 = vpack.c.b16 %v1698, %v1695
        %v1741 = vpack.c.b16 %v1699, %v1696
        %v1742 = vpack.c.b16 %v1700, %v1697
        %v1743 = vpack.c.b16 %v1704, %v1701
        %v1744 = vpack.c.b16 %v1705, %v1702
        %v1745 = vpack.c.b16 %v1706, %v1703
        %v1746 = vpack.c.b16 %v1710, %v1707
        %v1747 = vpack.c.b16 %v1711, %v1708
        %v1748 = vpack.c.b16 %v1712, %v1709
        %v1749 = vpack.c.b16 %v1716, %v1713
        %v1750 = vpack.c.b16 %v1717, %v1714
        %v1751 = vpack.c.b16 %v1718, %v1715
        %v1752 = vpack.c.b16 %v1722, %v1719
        %v1753 = vpack.c.b16 %v1723, %v1720
        %v1754 = vpack.c.b16 %v1724, %v1721
        %v1755 = vpack.c.b16 %v1728, %v1725
        %v1756 = vpack.c.b16 %v1729, %v1726
        %v1757 = vpack.c.b16 %v1730, %v1727
        %v1758 = vpack.c.b16 %v1734, %v1731
        %v1759 = vpack.c.b16 %v1735, %v1732
        %v1760 = vpack.c.b16 %v1736, %v1733
        %1785 = vmatpush.bf16.msra.mxu0 %v1758
        %1786 = vmatpush.bf16.msra.mxu0 %v1755
        %1787 = vmatpush.bf16.msra.mxu0 %v1752
        %1788 = vmatpush.bf16.msra.mxu0 %v1749
        %1789 = vmatpush.bf16.msra.mxu0 %v1746
        %1790 = vmatpush.bf16.msra.mxu0 %v1743
        %1791 = vmatpush.bf16.msra.mxu0 %v1740
        %1792 = vmatpush.bf16.msra.mxu0 %v1737
        %1793 = vmatmul.bf16.gmra.mxu0 %v1648
        %v1794 = vpop.f32.mrf.mxu0
        %v1795 = vadd.f32 %v1651, %v1794
        %v1796 = vpop.f32.mrf.mxu0
        %1797 = vdwg.mxu0
        %1798 = vmatpush.bf16.msra.mxu0 %v1759
        %1799 = vmatpush.bf16.msra.mxu0 %v1756
        %1800 = vmatpush.bf16.msra.mxu0 %v1753
        %1801 = vmatpush.bf16.msra.mxu0 %v1750
        %1802 = vmatpush.bf16.msra.mxu0 %v1747
        %1803 = vmatpush.bf16.msra.mxu0 %v1744
        %1804 = vmatpush.bf16.msra.mxu0 %v1741
        %1805 = vmatpush.bf16.msra.mxu0 %v1738
        %1806 = vmatmul.bf16.gmra.mxu0 %v1648
        %v1807 = vpop.f32.mrf.mxu0
        %v1808 = vadd.f32 %v1652, %v1807
        %v1809 = vpop.f32.mrf.mxu0
        %1810 = vdwg.mxu0
        %1811 = vmatpush.bf16.msra.mxu0 %v1760
        %1812 = vmatpush.bf16.msra.mxu0 %v1757
        %1813 = vmatpush.bf16.msra.mxu0 %v1754
        %1814 = vmatpush.bf16.msra.mxu0 %v1751
        %1815 = vmatpush.bf16.msra.mxu0 %v1748
        %1816 = vmatpush.bf16.msra.mxu0 %v1745
        %1817 = vmatpush.bf16.msra.mxu0 %v1742
        %1818 = vmatpush.bf16.msra.mxu0 %v1739
        %1819 = vmatmul.bf16.gmra.mxu0 %v1648
        %v1820 = vpop.f32.mrf.mxu0
        %v1821 = vadd.f32 %v1653, %v1820
        %v1822 = vpop.f32.mrf.mxu0
        %1823 = vdwg.mxu0
        %v1824 = vld [vmem:[#allocation6] sm:$0xf]
        %v1825 = vld [vmem:[#allocation6 + $0x4] sm:$0xf]
        %v1826 = vld [vmem:[#allocation6 + $0x8] sm:$0xf]
        %v1827 = vld [vmem:[#allocation6 + $0xc] sm:$0xf]
        %v1828 = vld [vmem:[#allocation6 + $0x10] sm:$0xf]
        %v1829 = vld [vmem:[#allocation6 + $0x14] sm:$0xf]
        %v1830 = vld [vmem:[#allocation6 + $0x18] sm:$0xf]
        %v1831 = vld [vmem:[#allocation6 + $0x1c] sm:$0xf]
        %v1832 = vld [vmem:[#allocation6 + $0x20] sm:$0xf]
        %v1833 = vld [vmem:[#allocation6 + $0x24] sm:$0xf]
        %v1834 = vld [vmem:[#allocation6 + $0x28] sm:$0xf]
        %v1835 = vld [vmem:[#allocation6 + $0x2c] sm:$0xf]
        %v1836 = vld [vmem:[#allocation6 + $0x30] sm:$0xf]
        %v1837 = vld [vmem:[#allocation6 + $0x34] sm:$0xf]
        %v1838 = vld [vmem:[#allocation6 + $0x38] sm:$0xf]
        %v1839 = vld [vmem:[#allocation6 + $0x3c] sm:$0xf]
        %v1840 = vld [vmem:[#allocation7] sm:$0x1]
        %v1841 = vpack.c.bf16 %v1795, %v1795
        %v1842 = vpack.c.bf16 %v1808, %v1808
        %v1843 = vpack.c.bf16 %v1821, %v1821
        %vm1844 = vcmask 261120
        %v1846 = vsel %vm1844, %v1841, 0
        %v1849 = vsel %vm1844, %v1842, 0
        %1851 = vmatpush.bf16.xpose.msra.mxu0 0
        %1852 = vmatpush.bf16.xpose.msra.mxu0 0
        %1853 = vmatpush.bf16.xpose.msra.mxu0 0
        %1854 = vmatpush.bf16.xpose.msra.mxu0 0
        %1855 = vmatpush.bf16.xpose.msra.mxu0 0
        %1856 = vmatpush.bf16.xpose.msra.mxu0 0
        %1857 = vmatpush.bf16.xpose.msra.mxu0 0
        %1858 = vmatpush.bf16.xpose.msra.mxu0 %v1849
        %1859 = vmatmul.bf16.gmra.mxu0 %v1846
        %v1860 = vpop.f32.mrf.mxu0
        %v1861 = vadd.f32 0.0, %v1860
        %v1862 = vpop.f32.mrf.mxu0
        %1863 = vdwg.mxu0
        %v1864 = vmul.f32 %v1861, 0.17677669
        %v1865 = vadd.f32 %v1864, %v1546
        %vm1866 = vcmask 64512
        %v1867 = vsel %vm1866, %v1865, -inf
        %1868 = vmax.xlane.f32.xlu0 %v1867
        %v1869 = vpop.xlane.xlu0 %1868
        %v1870 = vsub.f32 %v1865, %v1869
        %v1871 = vmul.f32 %v1870, 1.442695
        %v1872 = vpow.pop %v1871
        %v1873 = vsel %vm1866, %v1872, 0.0
        %1874 = vadd.xlane.f32.xlu0 %v1873
        %v1875 = vpop.xlane.xlu0 %1874
        %v1876 = vrcp.pop %v1875
        %v1877 = vmul.f32 %v1872, %v1876
        %v1878 = vpack.c.bf16 %v1877, %v1877
        %v1880 = vsel %vm1866, %v1878, 0
        %vm1882 = vcmask 1043456
        %v1884 = vsel %vm1882, %v1843, 0
        %1886 = vmatpush.bf16.msra.mxu0 0
        %1887 = vmatpush.bf16.msra.mxu0 0
        %1888 = vmatpush.bf16.msra.mxu0 0
        %1889 = vmatpush.bf16.msra.mxu0 0
        %1890 = vmatpush.bf16.msra.mxu0 0
        %1891 = vmatpush.bf16.msra.mxu0 0
        %1892 = vmatpush.bf16.msra.mxu0 0
        %1893 = vmatpush.bf16.msra.mxu0 %v1884
        %1894 = vmatmul.bf16.gmra.mxu0 %v1880
        %v1895 = vpop.f32.mrf.mxu0
        %v1896 = vadd.f32 0.0, %v1895
        %v1897 = vpop.f32.mrf.mxu0
        %1898 = vdwg.mxu0
        %v1899 = vpack.c.bf16 %v1896, %v1896
        %1901 = vrot.lane.b32.xlu0 %v1841, 96
        %v1902 = vpop.permute.xlu0 %1901
        %1904 = vrot.lane.b32.xlu0 %v1842, 96
        %v1905 = vpop.permute.xlu0 %1904
        %v1907 = vsel %vm1844, %v1902, 0
        %v1910 = vsel %vm1844, %v1905, 0
        %1912 = vmatpush.bf16.xpose.msra.mxu0 0
        %1913 = vmatpush.bf16.xpose.msra.mxu0 0
        %1914 = vmatpush.bf16.xpose.msra.mxu0 0
        %1915 = vmatpush.bf16.xpose.msra.mxu0 0
        %1916 = vmatpush.bf16.xpose.msra.mxu0 0
        %1917 = vmatpush.bf16.xpose.msra.mxu0 0
        %1918 = vmatpush.bf16.xpose.msra.mxu0 0
        %1919 = vmatpush.bf16.xpose.msra.mxu0 %v1910
        %1920 = vmatmul.bf16.gmra.mxu0 %v1907
        %v1921 = vpop.f32.mrf.mxu0
        %v1922 = vadd.f32 0.0, %v1921
        %v1923 = vpop.f32.mrf.mxu0
        %1924 = vdwg.mxu0
        %v1925 = vmul.f32 %v1922, 0.17677669
        %v1926 = vadd.f32 %v1925, %v1546
        %v1927 = vsel %vm1866, %v1926, -inf
        %1928 = vmax.xlane.f32.xlu0 %v1927
        %v1929 = vpop.xlane.xlu0 %1928
        %v1930 = vsub.f32 %v1926, %v1929
        %v1931 = vmul.f32 %v1930, 1.442695
        %v1932 = vpow.pop %v1931
        %v1933 = vsel %vm1866, %v1932, 0.0
        %1934 = vadd.xlane.f32.xlu0 %v1933
        %v1935 = vpop.xlane.xlu0 %1934
        %v1936 = vrcp.pop %v1935
        %v1937 = vmul.f32 %v1932, %v1936
        %v1938 = vpack.c.bf16 %v1937, %v1937
        %1940 = vrot.lane.b32.xlu0 %v1843, 96
        %v1941 = vpop.permute.xlu0 %1940
        %v1943 = vsel %vm1866, %v1938, 0
        %v1946 = vsel %vm1882, %v1941, 0
        %1948 = vmatpush.bf16.msra.mxu0 0
        %1949 = vmatpush.bf16.msra.mxu0 0
        %1950 = vmatpush.bf16.msra.mxu0 0
        %1951 = vmatpush.bf16.msra.mxu0 0
        %1952 = vmatpush.bf16.msra.mxu0 0
        %1953 = vmatpush.bf16.msra.mxu0 0
        %1954 = vmatpush.bf16.msra.mxu0 0
        %1955 = vmatpush.bf16.msra.mxu0 %v1946
        %1956 = vmatmul.bf16.gmra.mxu0 %v1943
        %v1957 = vpop.f32.mrf.mxu0
        %v1958 = vadd.f32 0.0, %v1957
        %v1959 = vpop.f32.mrf.mxu0
        %1960 = vdwg.mxu0
        %v1961 = vpack.c.bf16 %v1958, %v1958
        %v1966 = vunpack.c.l.b16 %v1828
        %v1967 = vunpack.c.l.b16 %v1829
        %v1968 = vunpack.c.l.b16 %v1830
        %v1969 = vunpack.c.l.b16 %v1831
        %v1970 = vpack.c.b16 %v1967, %v1966
        %v1971 = vpack.c.b16 %v1969, %v1968
        %v1975 = vsel %vm1844, %v1961, 0
        %1977 = vmatpush.bf16.msra.mxu0 0
        %1978 = vmatpush.bf16.msra.mxu0 0
        %1979 = vmatpush.bf16.msra.mxu0 0
        %1980 = vmatpush.bf16.msra.mxu0 0
        %1981 = vmatpush.bf16.msra.mxu0 0
        %1982 = vmatpush.bf16.msra.mxu0 0
        %1983 = vmatpush.bf16.msra.mxu0 %v1971
        %1984 = vmatpush.bf16.msra.mxu0 %v1970
        %1985 = vmatmul.bf16.gmra.mxu0 %v1975
        %v1986 = vpop.f32.mrf.mxu0
        %v1987 = vadd.f32 0.0, %v1986
        %v1988 = vpop.f32.mrf.mxu0
        %1989 = vdwg.mxu0
        %v1994 = vunpack.c.l.b16 %v1824
        %v1995 = vunpack.c.l.b16 %v1825
        %v1996 = vunpack.c.l.b16 %v1826
        %v1997 = vunpack.c.l.b16 %v1827
        %v1998 = vpack.c.b16 %v1995, %v1994
        %v1999 = vpack.c.b16 %v1997, %v1996
        %v2003 = vsel %vm1844, %v1899, 0
        %2005 = vmatpush.bf16.msra.mxu0 0
        %2006 = vmatpush.bf16.msra.mxu0 0
        %2007 = vmatpush.bf16.msra.mxu0 0
        %2008 = vmatpush.bf16.msra.mxu0 0
        %2009 = vmatpush.bf16.msra.mxu0 0
        %2010 = vmatpush.bf16.msra.mxu0 0
        %2011 = vmatpush.bf16.msra.mxu0 %v1999
        %2012 = vmatpush.bf16.msra.mxu0 %v1998
        %2013 = vmatmul.bf16.gmra.mxu0 %v2003
        %v2014 = vpop.f32.mrf.mxu0
        %v2015 = vadd.f32 %v1987, %v2014
        %v2016 = vpop.f32.mrf.mxu0
        %2017 = vdwg.mxu0
        %2018 = vrot.lane.b32.xlu0 %v1841, 64
        %v2019 = vpop.permute.xlu0 %2018
        %2020 = vrot.lane.b32.xlu0 %v1842, 64
        %v2021 = vpop.permute.xlu0 %2020
        %v2023 = vsel %vm1844, %v2019, 0
        %v2026 = vsel %vm1844, %v2021, 0
        %2028 = vmatpush.bf16.xpose.msra.mxu0 0
        %2029 = vmatpush.bf16.xpose.msra.mxu0 0
        %2030 = vmatpush.bf16.xpose.msra.mxu0 0
        %2031 = vmatpush.bf16.xpose.msra.mxu0 0
        %2032 = vmatpush.bf16.xpose.msra.mxu0 0
        %2033 = vmatpush.bf16.xpose.msra.mxu0 0
        %2034 = vmatpush.bf16.xpose.msra.mxu0 0
        %2035 = vmatpush.bf16.xpose.msra.mxu0 %v2026
        %2036 = vmatmul.bf16.gmra.mxu0 %v2023
        %v2037 = vpop.f32.mrf.mxu0
        %v2038 = vadd.f32 0.0, %v2037
        %v2039 = vpop.f32.mrf.mxu0
        %2040 = vdwg.mxu0
        %v2041 = vmul.f32 %v2038, 0.17677669
        %v2042 = vadd.f32 %v2041, %v1546
        %v2043 = vsel %vm1866, %v2042, -inf
        %2044 = vmax.xlane.f32.xlu0 %v2043
        %v2045 = vpop.xlane.xlu0 %2044
        %v2046 = vsub.f32 %v2042, %v2045
        %v2047 = vmul.f32 %v2046, 1.442695
        %v2048 = vpow.pop %v2047
        %v2049 = vsel %vm1866, %v2048, 0.0
        %2050 = vadd.xlane.f32.xlu0 %v2049
        %v2051 = vpop.xlane.xlu0 %2050
        %v2052 = vrcp.pop %v2051
        %v2053 = vmul.f32 %v2048, %v2052
        %v2054 = vpack.c.bf16 %v2053, %v2053
        %2055 = vrot.lane.b32.xlu0 %v1843, 64
        %v2056 = vpop.permute.xlu0 %2055
        %v2058 = vsel %vm1866, %v2054, 0
        %v2061 = vsel %vm1882, %v2056, 0
        %2063 = vmatpush.bf16.msra.mxu0 0
        %2064 = vmatpush.bf16.msra.mxu0 0
        %2065 = vmatpush.bf16.msra.mxu0 0
        %2066 = vmatpush.bf16.msra.mxu0 0
        %2067 = vmatpush.bf16.msra.mxu0 0
        %2068 = vmatpush.bf16.msra.mxu0 0
        %2069 = vmatpush.bf16.msra.mxu0 0
        %2070 = vmatpush.bf16.msra.mxu0 %v2061
        %2071 = vmatmul.bf16.gmra.mxu0 %v2058
        %v2072 = vpop.f32.mrf.mxu0
        %v2073 = vadd.f32 0.0, %v2072
        %v2074 = vpop.f32.mrf.mxu0
        %2075 = vdwg.mxu0
        %v2076 = vpack.c.bf16 %v2073, %v2073
        %v2081 = vunpack.c.l.b16 %v1832
        %v2082 = vunpack.c.l.b16 %v1833
        %v2083 = vunpack.c.l.b16 %v1834
        %v2084 = vunpack.c.l.b16 %v1835
        %v2085 = vpack.c.b16 %v2082, %v2081
        %v2086 = vpack.c.b16 %v2084, %v2083
        %v2090 = vsel %vm1844, %v2076, 0
        %2092 = vmatpush.bf16.msra.mxu0 0
        %2093 = vmatpush.bf16.msra.mxu0 0
        %2094 = vmatpush.bf16.msra.mxu0 0
        %2095 = vmatpush.bf16.msra.mxu0 0
        %2096 = vmatpush.bf16.msra.mxu0 0
        %2097 = vmatpush.bf16.msra.mxu0 0
        %2098 = vmatpush.bf16.msra.mxu0 %v2086
        %2099 = vmatpush.bf16.msra.mxu0 %v2085
        %2100 = vmatmul.bf16.gmra.mxu0 %v2090
        %v2101 = vpop.f32.mrf.mxu0
        %v2102 = vadd.f32 0.0, %v2101
        %v2103 = vpop.f32.mrf.mxu0
        %2104 = vdwg.mxu0
        %v2105 = vadd.f32 %v2015, %v2102
        %2106 = vrot.lane.b32.xlu0 %v1841, 32
        %v2107 = vpop.permute.xlu0 %2106
        %2108 = vrot.lane.b32.xlu0 %v1842, 32
        %v2109 = vpop.permute.xlu0 %2108
        %v2111 = vsel %vm1844, %v2107, 0
        %v2114 = vsel %vm1844, %v2109, 0
        %2116 = vmatpush.bf16.xpose.msra.mxu0 0
        %2117 = vmatpush.bf16.xpose.msra.mxu0 0
        %2118 = vmatpush.bf16.xpose.msra.mxu0 0
        %2119 = vmatpush.bf16.xpose.msra.mxu0 0
        %2120 = vmatpush.bf16.xpose.msra.mxu0 0
        %2121 = vmatpush.bf16.xpose.msra.mxu0 0
        %2122 = vmatpush.bf16.xpose.msra.mxu0 0
        %2123 = vmatpush.bf16.xpose.msra.mxu0 %v2114
        %2124 = vmatmul.bf16.gmra.mxu0 %v2111
        %v2125 = vpop.f32.mrf.mxu0
        %v2126 = vadd.f32 0.0, %v2125
        %v2127 = vpop.f32.mrf.mxu0
        %2128 = vdwg.mxu0
        %v2129 = vmul.f32 %v2126, 0.17677669
        %v2130 = vadd.f32 %v2129, %v1546
        %v2131 = vsel %vm1866, %v2130, -inf
        %2132 = vmax.xlane.f32.xlu0 %v2131
        %v2133 = vpop.xlane.xlu0 %2132
        %v2134 = vsub.f32 %v2130, %v2133
        %v2135 = vmul.f32 %v2134, 1.442695
        %v2136 = vpow.pop %v2135
        %v2137 = vsel %vm1866, %v2136, 0.0
        %2138 = vadd.xlane.f32.xlu0 %v2137
        %v2139 = vpop.xlane.xlu0 %2138
        %v2140 = vrcp.pop %v2139
        %v2141 = vmul.f32 %v2136, %v2140
        %v2142 = vpack.c.bf16 %v2141, %v2141
        %2143 = vrot.lane.b32.xlu0 %v1843, 32
        %v2144 = vpop.permute.xlu0 %2143
        %v2146 = vsel %vm1866, %v2142, 0
        %v2149 = vsel %vm1882, %v2144, 0
        %2151 = vmatpush.bf16.msra.mxu0 0
        %2152 = vmatpush.bf16.msra.mxu0 0
        %2153 = vmatpush.bf16.msra.mxu0 0
        %2154 = vmatpush.bf16.msra.mxu0 0
        %2155 = vmatpush.bf16.msra.mxu0 0
        %2156 = vmatpush.bf16.msra.mxu0 0
        %2157 = vmatpush.bf16.msra.mxu0 0
        %2158 = vmatpush.bf16.msra.mxu0 %v2149
        %2159 = vmatmul.bf16.gmra.mxu0 %v2146
        %v2160 = vpop.f32.mrf.mxu0
        %v2161 = vadd.f32 0.0, %v2160
        %v2162 = vpop.f32.mrf.mxu0
        %2163 = vdwg.mxu0
        %v2164 = vpack.c.bf16 %v2161, %v2161
        %v2169 = vunpack.c.l.b16 %v1836
        %v2170 = vunpack.c.l.b16 %v1837
        %v2171 = vunpack.c.l.b16 %v1838
        %v2172 = vunpack.c.l.b16 %v1839
        %v2173 = vpack.c.b16 %v2170, %v2169
        %v2174 = vpack.c.b16 %v2172, %v2171
        %v2178 = vsel %vm1844, %v2164, 0
        %2180 = vmatpush.bf16.msra.mxu0 0
        %2181 = vmatpush.bf16.msra.mxu0 0
        %2182 = vmatpush.bf16.msra.mxu0 0
        %2183 = vmatpush.bf16.msra.mxu0 0
        %2184 = vmatpush.bf16.msra.mxu0 0
        %2185 = vmatpush.bf16.msra.mxu0 0
        %2186 = vmatpush.bf16.msra.mxu0 %v2174
        %2187 = vmatpush.bf16.msra.mxu0 %v2173
        %2188 = vmatmul.bf16.gmra.mxu0 %v2178
        %v2189 = vpop.f32.mrf.mxu0
        %v2190 = vadd.f32 0.0, %v2189
        %v2191 = vpop.f32.mrf.mxu0
        %2192 = vdwg.mxu0
        %v2193 = vadd.f32 %v2105, %v2190
        %v2195 = vperm.slane %v1840, 0
        %v2197 = vadd.f32 %v2193, %v2195
        %v2198 = vld [vmem:[%s25] sm:$0xf]
        %v2199 = vld [vmem:[%s25 + $0x4] sm:$0xf]
        %v2200 = vld [vmem:[%s25 + $0x8] sm:$0xf]
        %v2201 = vld [vmem:[%s25 + $0xc] sm:$0xf]
        %v2202 = vld [vmem:[%s25 + $0x10] sm:$0xf]
        %v2203 = vld [vmem:[%s25 + $0x14] sm:$0xf]
        %v2204 = vld [vmem:[%s25 + $0x18] sm:$0xf]
        %v2205 = vld [vmem:[%s25 + $0x1c] sm:$0xf]
        %v2206 = vld [vmem:[%s25 + $0x20] sm:$0xf]
        %v2207 = vld [vmem:[%s25 + $0x24] sm:$0xf]
        %v2208 = vld [vmem:[%s25 + $0x28] sm:$0xf]
        %v2209 = vld [vmem:[%s25 + $0x2c] sm:$0xf]
        %v2210 = vld [vmem:[%s25 + $0x30] sm:$0xf]
        %v2211 = vld [vmem:[%s25 + $0x34] sm:$0xf]
        %v2212 = vld [vmem:[%s25 + $0x38] sm:$0xf]
        %v2213 = vld [vmem:[%s25 + $0x3c] sm:$0xf]
        %v2214 = vld [vmem:[#allocation9] sm:$0x1]
        %v2215 = vld [vmem:[%s29] sm:$0xf]
        %v2216 = vld [vmem:[%s29 + $0x4] sm:$0xf]
        %v2217 = vld [vmem:[%s29 + $0x8] sm:$0xf]
        %v2218 = vld [vmem:[%s29 + $0xc] sm:$0xf]
        %v2219 = vld [vmem:[#allocation10] sm:$0x1]
        %v2220 = vpack.c.bf16 %v2197, %v2197
        %v2222 = vperm.slane %v2214, 0
        %v2240 = vunpack.c.l.b16 %v2198
        %v2241 = vunpack.c.l.b16 %v2199
        %v2242 = vunpack.c.l.b16 %v2200
        %v2243 = vunpack.c.l.b16 %v2201
        %v2244 = vunpack.c.l.b16 %v2202
        %v2245 = vunpack.c.l.b16 %v2203
        %v2246 = vunpack.c.l.b16 %v2204
        %v2247 = vunpack.c.l.b16 %v2205
        %v2248 = vunpack.c.l.b16 %v2206
        %v2249 = vunpack.c.l.b16 %v2207
        %v2250 = vunpack.c.l.b16 %v2208
        %v2251 = vunpack.c.l.b16 %v2209
        %v2252 = vunpack.c.l.b16 %v2210
        %v2253 = vunpack.c.l.b16 %v2211
        %v2254 = vunpack.c.l.b16 %v2212
        %v2255 = vunpack.c.l.b16 %v2213
        %v2256 = vpack.c.b16 %v2241, %v2240
        %v2257 = vpack.c.b16 %v2243, %v2242
        %v2258 = vpack.c.b16 %v2245, %v2244
        %v2259 = vpack.c.b16 %v2247, %v2246
        %v2260 = vpack.c.b16 %v2249, %v2248
        %v2261 = vpack.c.b16 %v2251, %v2250
        %v2262 = vpack.c.b16 %v2253, %v2252
        %v2263 = vpack.c.b16 %v2255, %v2254
        %2272 = vmatpush.bf16.msra.mxu0 %v2263
        %2273 = vmatpush.bf16.msra.mxu0 %v2262
        %2274 = vmatpush.bf16.msra.mxu0 %v2261
        %2275 = vmatpush.bf16.msra.mxu0 %v2260
        %2276 = vmatpush.bf16.msra.mxu0 %v2259
        %2277 = vmatpush.bf16.msra.mxu0 %v2258
        %2278 = vmatpush.bf16.msra.mxu0 %v2257
        %2279 = vmatpush.bf16.msra.mxu0 %v2256
        %2280 = vmatmul.bf16.gmra.mxu0 %v2220
        %v2281 = vpop.f32.mrf.mxu0
        %v2282 = vadd.f32 %v2222, %v2281
        %v2283 = vpop.f32.mrf.mxu0
        %2284 = vdwg.mxu0
        %v2285 = vmax.f32 %v2282, 0.0
        %v2286 = vpack.c.bf16 %v2285, %v2285
        %v2291 = vunpack.c.l.b16 %v2215
        %v2292 = vunpack.c.l.b16 %v2216
        %v2293 = vunpack.c.l.b16 %v2217
        %v2294 = vunpack.c.l.b16 %v2218
        %v2295 = vpack.c.b16 %v2292, %v2291
        %v2296 = vpack.c.b16 %v2294, %v2293
        %v2300 = vsel %vm1844, %v2286, 0
        %2302 = vmatpush.bf16.msra.mxu0 0
        %2303 = vmatpush.bf16.msra.mxu0 0
        %2304 = vmatpush.bf16.msra.mxu0 0
        %2305 = vmatpush.bf16.msra.mxu0 0
        %2306 = vmatpush.bf16.msra.mxu0 0
        %2307 = vmatpush.bf16.msra.mxu0 0
        %2308 = vmatpush.bf16.msra.mxu0 %v2296
        %2309 = vmatpush.bf16.msra.mxu0 %v2295
        %2310 = vmatmul.bf16.gmra.mxu0 %v2300
        %v2311 = vpop.f32.mrf.mxu0
        %v2312 = vadd.f32 0.0, %v2311
        %v2313 = vpop.f32.mrf.mxu0
        %2314 = vdwg.mxu0
        %v2315 = vadd.f32 %v2197, %v2312
        %v2317 = vperm.slane %v2219, 0
        %v2319 = vadd.f32 %v2315, %v2317
        %v2320 = vadd.f32 %v1585, %v2319
        %v2321 = vld [vmem:[#allocation12] sm:$0x1]
        %v2322 = vld [vmem:[#allocation13] sm:$0x1]
        %2323 = vadd.xlane.f32.xlu0 %v2320
        %v2324 = vpop.xlane.xlu0 %2323
        %v2325 = vmul.f32 %v2324, %v1559
        %v2326 = vsub.f32 %v2320, %v2325
        %v2327 = vmul.f32 %v2326, %v2326
        %2328 = vadd.xlane.f32.xlu0 %v2327
        %v2329 = vpop.xlane.xlu0 %2328
        %v2330 = vmul.f32 %v2329, %v1559
        %v2331 = vadd.f32 %v2330, 1e-05
        %v2332 = vrsqrt.pop %v2331
        %v2333 = vmul.f32 %v2332, %v2331
        %v2334 = vmul.f32 %v2333, %v2332
        %v2335 = vmul.f32 0.5, %v2334
        %v2336 = vsub.f32 1.5, %v2335
        %v2337 = vmul.f32 %v2332, %v2336
        %vm2338 = vweird.f32 %v2331
        %vm2339 = vweird.f32 %v2332
        %vm2340 = vmor %vm2338, %vm2339
        %v2341 = vsel %vm2340, %v2332, %v2337
        %v2342 = vmul.f32 %v2326, %v2341
        %v2344 = vperm.slane %v2321, 0
        %v2346 = vmul.f32 %v2342, %v2344
        %v2348 = vperm.slane %v2322, 0
        %v2350 = vadd.f32 %v2346, %v2348
        %v2351 = vld [vmem:[#allocation15] sm:$0xf]
        %v2352 = vld [vmem:[#allocation15 + $0x4] sm:$0xf]
        %v2353 = vld [vmem:[#allocation15 + $0x8] sm:$0xf]
        %v2354 = vld [vmem:[#allocation15 + $0xc] sm:$0xf]
        %v2355 = vld [vmem:[#allocation15 + $0x10] sm:$0xf]
        %v2356 = vld [vmem:[#allocation15 + $0x14] sm:$0xf]
        %v2357 = vld [vmem:[#allocation15 + $0x18] sm:$0xf]
        %v2358 = vld [vmem:[#allocation15 + $0x1c] sm:$0xf]
        %v2359 = vld [vmem:[#allocation15 + $0x20] sm:$0xf]
        %v2360 = vld [vmem:[#allocation15 + $0x24] sm:$0xf]
        %v2361 = vld [vmem:[#allocation15 + $0x28] sm:$0xf]
        %v2362 = vld [vmem:[#allocation15 + $0x2c] sm:$0xf]
        %v2363 = vld [vmem:[#allocation15 + $0x30] sm:$0xf]
        %v2364 = vld [vmem:[#allocation15 + $0x34] sm:$0xf]
        %v2365 = vld [vmem:[#allocation15 + $0x38] sm:$0xf]
        %v2366 = vld [vmem:[#allocation15 + $0x3c] sm:$0xf]
        %v2367 = vpack.c.bf16 %v2350, %v2350
        %v2368 = vld [vmem:[#allocation16] sm:$0x1]
        %v2370 = vperm.slane %v2368, 0
        %v2388 = vunpack.c.l.b16 %v2351
        %v2389 = vunpack.c.l.b16 %v2352
        %v2390 = vunpack.c.l.b16 %v2353
        %v2391 = vunpack.c.l.b16 %v2354
        %v2392 = vunpack.c.l.b16 %v2355
        %v2393 = vunpack.c.l.b16 %v2356
        %v2394 = vunpack.c.l.b16 %v2357
        %v2395 = vunpack.c.l.b16 %v2358
        %v2396 = vunpack.c.l.b16 %v2359
        %v2397 = vunpack.c.l.b16 %v2360
        %v2398 = vunpack.c.l.b16 %v2361
        %v2399 = vunpack.c.l.b16 %v2362
        %v2400 = vunpack.c.l.b16 %v2363
        %v2401 = vunpack.c.l.b16 %v2364
        %v2402 = vunpack.c.l.b16 %v2365
        %v2403 = vunpack.c.l.b16 %v2366
        %v2404 = vpack.c.b16 %v2389, %v2388
        %v2405 = vpack.c.b16 %v2391, %v2390
        %v2406 = vpack.c.b16 %v2393, %v2392
        %v2407 = vpack.c.b16 %v2395, %v2394
        %v2408 = vpack.c.b16 %v2397, %v2396
        %v2409 = vpack.c.b16 %v2399, %v2398
        %v2410 = vpack.c.b16 %v2401, %v2400
        %v2411 = vpack.c.b16 %v2403, %v2402
        %2420 = vmatpush.bf16.msra.mxu0 %v2411
        %2421 = vmatpush.bf16.msra.mxu0 %v2410
        %2422 = vmatpush.bf16.msra.mxu0 %v2409
        %2423 = vmatpush.bf16.msra.mxu0 %v2408
        %2424 = vmatpush.bf16.msra.mxu0 %v2407
        %2425 = vmatpush.bf16.msra.mxu0 %v2406
        %2426 = vmatpush.bf16.msra.mxu0 %v2405
        %2427 = vmatpush.bf16.msra.mxu0 %v2404
        %2428 = vmatmul.bf16.gmra.mxu0 %v2367
        %v2429 = vpop.f32.mrf.mxu0
        %v2430 = vadd.f32 %v2370, %v2429
        %v2431 = vpop.f32.mrf.mxu0
        %2432 = vdwg.mxu0
        %v2433 = vld [vmem:[%s41] sm:$0xff]
        %v2434 = vld [vmem:[%s41 + $0x8] sm:$0xff]
        %v2435 = vld [vmem:[%s41 + $0x10] sm:$0xff]
        %v2436 = vld [vmem:[%s41 + $0x18] sm:$0xff]
        %v2437 = vld [vmem:[%s41 + $0x20] sm:$0xff]
        %v2438 = vld [vmem:[%s41 + $0x28] sm:$0xff]
        %v2439 = vld [vmem:[%s41 + $0x30] sm:$0xff]
        %v2440 = vld [vmem:[%s41 + $0x38] sm:$0xff]
        %v2441 = vld [vmem:[%s41 + $0x40] sm:$0xff]
        %v2442 = vld [vmem:[%s41 + $0x48] sm:$0xff]
        %v2443 = vld [vmem:[%s41 + $0x50] sm:$0xff]
        %v2444 = vld [vmem:[%s41 + $0x58] sm:$0xff]
        %v2445 = vld [vmem:[%s41 + $0x60] sm:$0xff]
        %v2446 = vld [vmem:[%s41 + $0x68] sm:$0xff]
        %v2447 = vld [vmem:[%s41 + $0x70] sm:$0xff]
        %v2448 = vld [vmem:[%s41 + $0x78] sm:$0xff]
        %v2449 = vpack.c.bf16 %v1547, %v1547
        %v2450 = vld [vmem:[%s43] sm:$0x3]
        %v2452 = vperm.slane %v2450, 0
        %v2453 = vperm.slane %v2450, 1
        %v2472 = vunpack.c.l.b16 %v2433
        %v2473 = vunpack.c.h.b16 %v2433
        %v2474 = vunpack.c.l.b16 %v2434
        %v2475 = vunpack.c.h.b16 %v2434
        %v2476 = vunpack.c.l.b16 %v2435
        %v2477 = vunpack.c.h.b16 %v2435
        %v2478 = vunpack.c.l.b16 %v2436
        %v2479 = vunpack.c.h.b16 %v2436
        %v2480 = vunpack.c.l.b16 %v2437
        %v2481 = vunpack.c.h.b16 %v2437
        %v2482 = vunpack.c.l.b16 %v2438
        %v2483 = vunpack.c.h.b16 %v2438
        %v2484 = vunpack.c.l.b16 %v2439
        %v2485 = vunpack.c.h.b16 %v2439
        %v2486 = vunpack.c.l.b16 %v2440
        %v2487 = vunpack.c.h.b16 %v2440
        %v2488 = vunpack.c.l.b16 %v2441
        %v2489 = vunpack.c.h.b16 %v2441
        %v2490 = vunpack.c.l.b16 %v2442
        %v2491 = vunpack.c.h.b16 %v2442
        %v2492 = vunpack.c.l.b16 %v2443
        %v2493 = vunpack.c.h.b16 %v2443
        %v2494 = vunpack.c.l.b16 %v2444
        %v2495 = vunpack.c.h.b16 %v2444
        %v2496 = vunpack.c.l.b16 %v2445
        %v2497 = vunpack.c.h.b16 %v2445
        %v2498 = vunpack.c.l.b16 %v2446
        %v2499 = vunpack.c.h.b16 %v2446
        %v2500 = vunpack.c.l.b16 %v2447
        %v2501 = vunpack.c.h.b16 %v2447
        %v2502 = vunpack.c.l.b16 %v2448
        %v2503 = vunpack.c.h.b16 %v2448
        %v2504 = vpack.c.b16 %v2474, %v2472
        %v2505 = vpack.c.b16 %v2475, %v2473
        %v2506 = vpack.c.b16 %v2478, %v2476
        %v2507 = vpack.c.b16 %v2479, %v2477
        %v2508 = vpack.c.b16 %v2482, %v2480
        %v2509 = vpack.c.b16 %v2483, %v2481
        %v2510 = vpack.c.b16 %v2486, %v2484
        %v2511 = vpack.c.b16 %v2487, %v2485
        %v2512 = vpack.c.b16 %v2490, %v2488
        %v2513 = vpack.c.b16 %v2491, %v2489
        %v2514 = vpack.c.b16 %v2494, %v2492
        %v2515 = vpack.c.b16 %v2495, %v2493
        %v2516 = vpack.c.b16 %v2498, %v2496
        %v2517 = vpack.c.b16 %v2499, %v2497
        %v2518 = vpack.c.b16 %v2502, %v2500
        %v2519 = vpack.c.b16 %v2503, %v2501
        %2536 = vmatpush.bf16.msra.mxu0 %v2518
        %2537 = vmatpush.bf16.msra.mxu0 %v2516
        %2538 = vmatpush.bf16.msra.mxu0 %v2514
        %2539 = vmatpush.bf16.msra.mxu0 %v2512
        %2540 = vmatpush.bf16.msra.mxu0 %v2510
        %2541 = vmatpush.bf16.msra.mxu0 %v2508
        %2542 = vmatpush.bf16.msra.mxu0 %v2506
        %2543 = vmatpush.bf16.msra.mxu0 %v2504
        %2544 = vmatmul.bf16.gmra.mxu0 %v2449
        %v2545 = vpop.f32.mrf.mxu0
        %v2546 = vadd.f32 %v2452, %v2545
        %v2547 = vpop.f32.mrf.mxu0
        %2548 = vdwg.mxu0
        %2549 = vmatpush.bf16.msra.mxu0 %v2519
        %2550 = vmatpush.bf16.msra.mxu0 %v2517
        %2551 = vmatpush.bf16.msra.mxu0 %v2515
        %2552 = vmatpush.bf16.msra.mxu0 %v2513
        %2553 = vmatpush.bf16.msra.mxu0 %v2511
        %2554 = vmatpush.bf16.msra.mxu0 %v2509
        %2555 = vmatpush.bf16.msra.mxu0 %v2507
        %2556 = vmatpush.bf16.msra.mxu0 %v2505
        %2557 = vmatmul.bf16.gmra.mxu0 %v2449
        %v2558 = vpop.f32.mrf.mxu0
        %v2559 = vadd.f32 %v2453, %v2558
        %v2560 = vpop.f32.mrf.mxu0
        %2561 = vdwg.mxu0
        %v2562 = vld [vmem:[#allocation18] sm:$0xf]
        %v2563 = vld [vmem:[#allocation18 + $0x4] sm:$0xf]
        %v2564 = vld [vmem:[#allocation18 + $0x8] sm:$0xf]
        %v2565 = vld [vmem:[#allocation18 + $0xc] sm:$0xf]
        %v2566 = vld [vmem:[#allocation18 + $0x10] sm:$0xf]
        %v2567 = vld [vmem:[#allocation18 + $0x14] sm:$0xf]
        %v2568 = vld [vmem:[#allocation18 + $0x18] sm:$0xf]
        %v2569 = vld [vmem:[#allocation18 + $0x1c] sm:$0xf]
        %v2570 = vld [vmem:[#allocation18 + $0x20] sm:$0xf]
        %v2571 = vld [vmem:[#allocation18 + $0x24] sm:$0xf]
        %v2572 = vld [vmem:[#allocation18 + $0x28] sm:$0xf]
        %v2573 = vld [vmem:[#allocation18 + $0x2c] sm:$0xf]
        %v2574 = vld [vmem:[#allocation18 + $0x30] sm:$0xf]
        %v2575 = vld [vmem:[#allocation18 + $0x34] sm:$0xf]
        %v2576 = vld [vmem:[#allocation18 + $0x38] sm:$0xf]
        %v2577 = vld [vmem:[#allocation18 + $0x3c] sm:$0xf]
        %v2578 = vld [vmem:[#allocation19] sm:$0x1]
        %v2579 = vpack.c.bf16 %v2430, %v2430
        %v2580 = vpack.c.bf16 %v2546, %v2546
        %v2581 = vpack.c.bf16 %v2559, %v2559
        %v2583 = vsel %vm1844, %v2579, 0
        %v2586 = vsel %vm1844, %v2580, 0
        %2588 = vmatpush.bf16.xpose.msra.mxu0 0
        %2589 = vmatpush.bf16.xpose.msra.mxu0 0
        %2590 = vmatpush.bf16.xpose.msra.mxu0 0
        %2591 = vmatpush.bf16.xpose.msra.mxu0 0
        %2592 = vmatpush.bf16.xpose.msra.mxu0 0
        %2593 = vmatpush.bf16.xpose.msra.mxu0 0
        %2594 = vmatpush.bf16.xpose.msra.mxu0 0
        %2595 = vmatpush.bf16.xpose.msra.mxu0 %v2586
        %2596 = vmatmul.bf16.gmra.mxu0 %v2583
        %v2597 = vpop.f32.mrf.mxu0
        %v2598 = vadd.f32 0.0, %v2597
        %v2599 = vpop.f32.mrf.mxu0
        %2600 = vdwg.mxu0
        %v2601 = vmul.f32 %v2598, 0.17677669
        %v2603 = vperm.slane %v1540, 0
        %v2605 = vadd.f32 %v2601, %v2603
        %v2606 = vsel %vm1866, %v2605, -inf
        %2607 = vmax.xlane.f32.xlu0 %v2606
        %v2608 = vpop.xlane.xlu0 %2607
        %v2609 = vsub.f32 %v2605, %v2608
        %v2610 = vmul.f32 %v2609, 1.442695
        %v2611 = vpow.pop %v2610
        %v2612 = vsel %vm1866, %v2611, 0.0
        %2613 = vadd.xlane.f32.xlu0 %v2612
        %v2614 = vpop.xlane.xlu0 %2613
        %v2615 = vrcp.pop %v2614
        %v2616 = vmul.f32 %v2611, %v2615
        %v2617 = vpack.c.bf16 %v2616, %v2616
        %v2619 = vsel %vm1866, %v2617, 0
        %v2622 = vsel %vm1882, %v2581, 0
        %2624 = vmatpush.bf16.msra.mxu0 0
        %2625 = vmatpush.bf16.msra.mxu0 0
        %2626 = vmatpush.bf16.msra.mxu0 0
        %2627 = vmatpush.bf16.msra.mxu0 0
        %2628 = vmatpush.bf16.msra.mxu0 0
        %2629 = vmatpush.bf16.msra.mxu0 0
        %2630 = vmatpush.bf16.msra.mxu0 0
        %2631 = vmatpush.bf16.msra.mxu0 %v2622
        %2632 = vmatmul.bf16.gmra.mxu0 %v2619
        %v2633 = vpop.f32.mrf.mxu0
        %v2634 = vadd.f32 0.0, %v2633
        %v2635 = vpop.f32.mrf.mxu0
        %2636 = vdwg.mxu0
        %v2637 = vpack.c.bf16 %v2634, %v2634
        %2639 = vrot.lane.b32.xlu0 %v2579, 96
        %v2640 = vpop.permute.xlu0 %2639
        %2642 = vrot.lane.b32.xlu0 %v2580, 96
        %v2643 = vpop.permute.xlu0 %2642
        %v2645 = vsel %vm1844, %v2640, 0
        %v2648 = vsel %vm1844, %v2643, 0
        %2650 = vmatpush.bf16.xpose.msra.mxu0 0
        %2651 = vmatpush.bf16.xpose.msra.mxu0 0
        %2652 = vmatpush.bf16.xpose.msra.mxu0 0
        %2653 = vmatpush.bf16.xpose.msra.mxu0 0
        %2654 = vmatpush.bf16.xpose.msra.mxu0 0
        %2655 = vmatpush.bf16.xpose.msra.mxu0 0
        %2656 = vmatpush.bf16.xpose.msra.mxu0 0
        %2657 = vmatpush.bf16.xpose.msra.mxu0 %v2648
        %2658 = vmatmul.bf16.gmra.mxu0 %v2645
        %v2659 = vpop.f32.mrf.mxu0
        %v2660 = vadd.f32 0.0, %v2659
        %v2661 = vpop.f32.mrf.mxu0
        %2662 = vdwg.mxu0
        %v2663 = vmul.f32 %v2660, 0.17677669
        %v2664 = vadd.f32 %v2663, %v2603
        %v2665 = vsel %vm1866, %v2664, -inf
        %2666 = vmax.xlane.f32.xlu0 %v2665
        %v2667 = vpop.xlane.xlu0 %2666
        %v2668 = vsub.f32 %v2664, %v2667
        %v2669 = vmul.f32 %v2668, 1.442695
        %v2670 = vpow.pop %v2669
        %v2671 = vsel %vm1866, %v2670, 0.0
        %2672 = vadd.xlane.f32.xlu0 %v2671
        %v2673 = vpop.xlane.xlu0 %2672
        %v2674 = vrcp.pop %v2673
        %v2675 = vmul.f32 %v2670, %v2674
        %v2676 = vpack.c.bf16 %v2675, %v2675
        %2678 = vrot.lane.b32.xlu0 %v2581, 96
        %v2679 = vpop.permute.xlu0 %2678
        %v2681 = vsel %vm1866, %v2676, 0
        %v2684 = vsel %vm1882, %v2679, 0
        %2686 = vmatpush.bf16.msra.mxu0 0
        %2687 = vmatpush.bf16.msra.mxu0 0
        %2688 = vmatpush.bf16.msra.mxu0 0
        %2689 = vmatpush.bf16.msra.mxu0 0
        %2690 = vmatpush.bf16.msra.mxu0 0
        %2691 = vmatpush.bf16.msra.mxu0 0
        %2692 = vmatpush.bf16.msra.mxu0 0
        %2693 = vmatpush.bf16.msra.mxu0 %v2684
        %2694 = vmatmul.bf16.gmra.mxu0 %v2681
        %v2695 = vpop.f32.mrf.mxu0
        %v2696 = vadd.f32 0.0, %v2695
        %v2697 = vpop.f32.mrf.mxu0
        %2698 = vdwg.mxu0
        %v2699 = vpack.c.bf16 %v2696, %v2696
        %v2704 = vunpack.c.l.b16 %v2566
        %v2705 = vunpack.c.l.b16 %v2567
        %v2706 = vunpack.c.l.b16 %v2568
        %v2707 = vunpack.c.l.b16 %v2569
        %v2708 = vpack.c.b16 %v2705, %v2704
        %v2709 = vpack.c.b16 %v2707, %v2706
        %v2713 = vsel %vm1844, %v2699, 0
        %2715 = vmatpush.bf16.msra.mxu0 0
        %2716 = vmatpush.bf16.msra.mxu0 0
        %2717 = vmatpush.bf16.msra.mxu0 0
        %2718 = vmatpush.bf16.msra.mxu0 0
        %2719 = vmatpush.bf16.msra.mxu0 0
        %2720 = vmatpush.bf16.msra.mxu0 0
        %2721 = vmatpush.bf16.msra.mxu0 %v2709
        %2722 = vmatpush.bf16.msra.mxu0 %v2708
        %2723 = vmatmul.bf16.gmra.mxu0 %v2713
        %v2724 = vpop.f32.mrf.mxu0
        %v2725 = vadd.f32 0.0, %v2724
        %v2726 = vpop.f32.mrf.mxu0
        %2727 = vdwg.mxu0
        %v2732 = vunpack.c.l.b16 %v2562
        %v2733 = vunpack.c.l.b16 %v2563
        %v2734 = vunpack.c.l.b16 %v2564
        %v2735 = vunpack.c.l.b16 %v2565
        %v2736 = vpack.c.b16 %v2733, %v2732
        %v2737 = vpack.c.b16 %v2735, %v2734
        %v2741 = vsel %vm1844, %v2637, 0
        %2743 = vmatpush.bf16.msra.mxu0 0
        %2744 = vmatpush.bf16.msra.mxu0 0
        %2745 = vmatpush.bf16.msra.mxu0 0
        %2746 = vmatpush.bf16.msra.mxu0 0
        %2747 = vmatpush.bf16.msra.mxu0 0
        %2748 = vmatpush.bf16.msra.mxu0 0
        %2749 = vmatpush.bf16.msra.mxu0 %v2737
        %2750 = vmatpush.bf16.msra.mxu0 %v2736
        %2751 = vmatmul.bf16.gmra.mxu0 %v2741
        %v2752 = vpop.f32.mrf.mxu0
        %v2753 = vadd.f32 %v2725, %v2752
        %v2754 = vpop.f32.mrf.mxu0
        %2755 = vdwg.mxu0
        %2756 = vrot.lane.b32.xlu0 %v2579, 64
        %v2757 = vpop.permute.xlu0 %2756
        %2758 = vrot.lane.b32.xlu0 %v2580, 64
        %v2759 = vpop.permute.xlu0 %2758
        %v2761 = vsel %vm1844, %v2757, 0
        %v2764 = vsel %vm1844, %v2759, 0
        %2766 = vmatpush.bf16.xpose.msra.mxu0 0
        %2767 = vmatpush.bf16.xpose.msra.mxu0 0
        %2768 = vmatpush.bf16.xpose.msra.mxu0 0
        %2769 = vmatpush.bf16.xpose.msra.mxu0 0
        %2770 = vmatpush.bf16.xpose.msra.mxu0 0
        %2771 = vmatpush.bf16.xpose.msra.mxu0 0
        %2772 = vmatpush.bf16.xpose.msra.mxu0 0
        %2773 = vmatpush.bf16.xpose.msra.mxu0 %v2764
        %2774 = vmatmul.bf16.gmra.mxu0 %v2761
        %v2775 = vpop.f32.mrf.mxu0
        %v2776 = vadd.f32 0.0, %v2775
        %v2777 = vpop.f32.mrf.mxu0
        %2778 = vdwg.mxu0
        %v2779 = vmul.f32 %v2776, 0.17677669
        %v2780 = vadd.f32 %v2779, %v2603
        %v2781 = vsel %vm1866, %v2780, -inf
        %2782 = vmax.xlane.f32.xlu0 %v2781
        %v2783 = vpop.xlane.xlu0 %2782
        %v2784 = vsub.f32 %v2780, %v2783
        %v2785 = vmul.f32 %v2784, 1.442695
        %v2786 = vpow.pop %v2785
        %v2787 = vsel %vm1866, %v2786, 0.0
        %2788 = vadd.xlane.f32.xlu0 %v2787
        %v2789 = vpop.xlane.xlu0 %2788
        %v2790 = vrcp.pop %v2789
        %v2791 = vmul.f32 %v2786, %v2790
        %v2792 = vpack.c.bf16 %v2791, %v2791
        %2793 = vrot.lane.b32.xlu0 %v2581, 64
        %v2794 = vpop.permute.xlu0 %2793
        %v2796 = vsel %vm1866, %v2792, 0
        %v2799 = vsel %vm1882, %v2794, 0
        %2801 = vmatpush.bf16.msra.mxu0 0
        %2802 = vmatpush.bf16.msra.mxu0 0
        %2803 = vmatpush.bf16.msra.mxu0 0
        %2804 = vmatpush.bf16.msra.mxu0 0
        %2805 = vmatpush.bf16.msra.mxu0 0
        %2806 = vmatpush.bf16.msra.mxu0 0
        %2807 = vmatpush.bf16.msra.mxu0 0
        %2808 = vmatpush.bf16.msra.mxu0 %v2799
        %2809 = vmatmul.bf16.gmra.mxu0 %v2796
        %v2810 = vpop.f32.mrf.mxu0
        %v2811 = vadd.f32 0.0, %v2810
        %v2812 = vpop.f32.mrf.mxu0
        %2813 = vdwg.mxu0
        %v2814 = vpack.c.bf16 %v2811, %v2811
        %v2819 = vunpack.c.l.b16 %v2570
        %v2820 = vunpack.c.l.b16 %v2571
        %v2821 = vunpack.c.l.b16 %v2572
        %v2822 = vunpack.c.l.b16 %v2573
        %v2823 = vpack.c.b16 %v2820, %v2819
        %v2824 = vpack.c.b16 %v2822, %v2821
        %v2828 = vsel %vm1844, %v2814, 0
        %2830 = vmatpush.bf16.msra.mxu0 0
        %2831 = vmatpush.bf16.msra.mxu0 0
        %2832 = vmatpush.bf16.msra.mxu0 0
        %2833 = vmatpush.bf16.msra.mxu0 0
        %2834 = vmatpush.bf16.msra.mxu0 0
        %2835 = vmatpush.bf16.msra.mxu0 0
        %2836 = vmatpush.bf16.msra.mxu0 %v2824
        %2837 = vmatpush.bf16.msra.mxu0 %v2823
        %2838 = vmatmul.bf16.gmra.mxu0 %v2828
        %v2839 = vpop.f32.mrf.mxu0
        %v2840 = vadd.f32 0.0, %v2839
        %v2841 = vpop.f32.mrf.mxu0
        %2842 = vdwg.mxu0
        %v2843 = vadd.f32 %v2753, %v2840
        %2844 = vrot.lane.b32.xlu0 %v2579, 32
        %v2845 = vpop.permute.xlu0 %2844
        %2846 = vrot.lane.b32.xlu0 %v2580, 32
        %v2847 = vpop.permute.xlu0 %2846
        %v2849 = vsel %vm1844, %v2845, 0
        %v2852 = vsel %vm1844, %v2847, 0
        %2854 = vmatpush.bf16.xpose.msra.mxu0 0
        %2855 = vmatpush.bf16.xpose.msra.mxu0 0
        %2856 = vmatpush.bf16.xpose.msra.mxu0 0
        %2857 = vmatpush.bf16.xpose.msra.mxu0 0
        %2858 = vmatpush.bf16.xpose.msra.mxu0 0
        %2859 = vmatpush.bf16.xpose.msra.mxu0 0
        %2860 = vmatpush.bf16.xpose.msra.mxu0 0
        %2861 = vmatpush.bf16.xpose.msra.mxu0 %v2852
        %2862 = vmatmul.bf16.gmra.mxu0 %v2849
        %v2863 = vpop.f32.mrf.mxu0
        %v2864 = vadd.f32 0.0, %v2863
        %v2865 = vpop.f32.mrf.mxu0
        %2866 = vdwg.mxu0
        %v2867 = vmul.f32 %v2864, 0.17677669
        %v2868 = vadd.f32 %v2867, %v2603
        %v2869 = vsel %vm1866, %v2868, -inf
        %2870 = vmax.xlane.f32.xlu0 %v2869
        %v2871 = vpop.xlane.xlu0 %2870
        %v2872 = vsub.f32 %v2868, %v2871
        %v2873 = vmul.f32 %v2872, 1.442695
        %v2874 = vpow.pop %v2873
        %v2875 = vsel %vm1866, %v2874, 0.0
        %2876 = vadd.xlane.f32.xlu0 %v2875
        %v2877 = vpop.xlane.xlu0 %2876
        %v2878 = vrcp.pop %v2877
        %v2879 = vmul.f32 %v2874, %v2878
        %v2880 = vpack.c.bf16 %v2879, %v2879
        %2881 = vrot.lane.b32.xlu0 %v2581, 32
        %v2882 = vpop.permute.xlu0 %2881
        %v2884 = vsel %vm1866, %v2880, 0
        %v2887 = vsel %vm1882, %v2882, 0
        %2889 = vmatpush.bf16.msra.mxu0 0
        %2890 = vmatpush.bf16.msra.mxu0 0
        %2891 = vmatpush.bf16.msra.mxu0 0
        %2892 = vmatpush.bf16.msra.mxu0 0
        %2893 = vmatpush.bf16.msra.mxu0 0
        %2894 = vmatpush.bf16.msra.mxu0 0
        %2895 = vmatpush.bf16.msra.mxu0 0
        %2896 = vmatpush.bf16.msra.mxu0 %v2887
        %2897 = vmatmul.bf16.gmra.mxu0 %v2884
        %v2898 = vpop.f32.mrf.mxu0
        %v2899 = vadd.f32 0.0, %v2898
        %v2900 = vpop.f32.mrf.mxu0
        %2901 = vdwg.mxu0
        %v2902 = vpack.c.bf16 %v2899, %v2899
        %v2907 = vunpack.c.l.b16 %v2574
        %v2908 = vunpack.c.l.b16 %v2575
        %v2909 = vunpack.c.l.b16 %v2576
        %v2910 = vunpack.c.l.b16 %v2577
        %v2911 = vpack.c.b16 %v2908, %v2907
        %v2912 = vpack.c.b16 %v2910, %v2909
        %v2916 = vsel %vm1844, %v2902, 0
        %2918 = vmatpush.bf16.msra.mxu0 0
        %2919 = vmatpush.bf16.msra.mxu0 0
        %2920 = vmatpush.bf16.msra.mxu0 0
        %2921 = vmatpush.bf16.msra.mxu0 0
        %2922 = vmatpush.bf16.msra.mxu0 0
        %2923 = vmatpush.bf16.msra.mxu0 0
        %2924 = vmatpush.bf16.msra.mxu0 %v2912
        %2925 = vmatpush.bf16.msra.mxu0 %v2911
        %2926 = vmatmul.bf16.gmra.mxu0 %v2916
        %v2927 = vpop.f32.mrf.mxu0
        %v2928 = vadd.f32 0.0, %v2927
        %v2929 = vpop.f32.mrf.mxu0
        %2930 = vdwg.mxu0
        %v2931 = vadd.f32 %v2843, %v2928
        %v2933 = vperm.slane %v2578, 0
        %v2935 = vadd.f32 %v2931, %v2933
        %v2936 = vadd.f32 %v2320, %v2935
        %v2937 = vld [vmem:[#allocation21] sm:$0x1]
        %v2938 = vld [vmem:[#allocation22] sm:$0x1]
        %2939 = vadd.xlane.f32.xlu0 %v2936
        %v2940 = vpop.xlane.xlu0 %2939
        %v2941 = vmul.f32 %v2940, %v1559
        %v2942 = vsub.f32 %v2936, %v2941
        %v2943 = vmul.f32 %v2942, %v2942
        %2944 = vadd.xlane.f32.xlu0 %v2943
        %v2945 = vpop.xlane.xlu0 %2944
        %v2946 = vmul.f32 %v2945, %v1559
        %v2947 = vadd.f32 %v2946, 1e-05
        %v2948 = vrsqrt.pop %v2947
        %v2949 = vmul.f32 %v2948, %v2947
        %v2950 = vmul.f32 %v2949, %v2948
        %v2951 = vmul.f32 0.5, %v2950
        %v2952 = vsub.f32 1.5, %v2951
        %v2953 = vmul.f32 %v2948, %v2952
        %vm2954 = vweird.f32 %v2947
        %vm2955 = vweird.f32 %v2948
        %vm2956 = vmor %vm2954, %vm2955
        %v2957 = vsel %vm2956, %v2948, %v2953
        %v2958 = vmul.f32 %v2942, %v2957
        %v2960 = vperm.slane %v2937, 0
        %v2962 = vmul.f32 %v2958, %v2960
        %v2964 = vperm.slane %v2938, 0
        %v2966 = vadd.f32 %v2962, %v2964
        %v2967 = vld [vmem:[#allocation24] sm:$0xff]
        %v2968 = vld [vmem:[#allocation24 + $0x8] sm:$0xff]
        %v2969 = vld [vmem:[#allocation24 + $0x10] sm:$0xff]
        %v2970 = vld [vmem:[#allocation24 + $0x18] sm:$0xff]
        %v2971 = vld [vmem:[#allocation24 + $0x20] sm:$0xff]
        %v2972 = vld [vmem:[#allocation24 + $0x28] sm:$0xff]
        %v2973 = vld [vmem:[#allocation24 + $0x30] sm:$0xff]
        %v2974 = vld [vmem:[#allocation24 + $0x38] sm:$0xff]
        %v2975 = vld [vmem:[#allocation24 + $0x40] sm:$0xff]
        %v2976 = vld [vmem:[#allocation24 + $0x48] sm:$0xff]
        %v2977 = vld [vmem:[#allocation24 + $0x50] sm:$0xff]
        %v2978 = vld [vmem:[#allocation24 + $0x58] sm:$0xff]
        %v2979 = vld [vmem:[#allocation24 + $0x60] sm:$0xff]
        %v2980 = vld [vmem:[#allocation24 + $0x68] sm:$0xff]
        %v2981 = vld [vmem:[#allocation24 + $0x70] sm:$0xff]
        %v2982 = vld [vmem:[#allocation24 + $0x78] sm:$0xff]
        %v2983 = vld [vmem:[%s55] sm:$0x3]
        %v2984 = vld [vmem:[#allocation25] sm:$0xf]
        %v2985 = vld [vmem:[#allocation25 + $0x4] sm:$0xf]
        %v2986 = vld [vmem:[#allocation25 + $0x8] sm:$0xf]
        %v2987 = vld [vmem:[#allocation25 + $0xc] sm:$0xf]
        %v2988 = vld [vmem:[#allocation25 + $0x10] sm:$0xf]
        %v2989 = vld [vmem:[#allocation25 + $0x14] sm:$0xf]
        %v2990 = vld [vmem:[#allocation25 + $0x18] sm:$0xf]
        %v2991 = vld [vmem:[#allocation25 + $0x1c] sm:$0xf]
        %v2992 = vld [vmem:[#allocation25 + $0x20] sm:$0xf]
        %v2993 = vld [vmem:[#allocation25 + $0x24] sm:$0xf]
        %v2994 = vld [vmem:[#allocation25 + $0x28] sm:$0xf]
        %v2995 = vld [vmem:[#allocation25 + $0x2c] sm:$0xf]
        %v2996 = vld [vmem:[#allocation25 + $0x30] sm:$0xf]
        %v2997 = vld [vmem:[#allocation25 + $0x34] sm:$0xf]
        %v2998 = vld [vmem:[#allocation25 + $0x38] sm:$0xf]
        %v2999 = vld [vmem:[#allocation25 + $0x3c] sm:$0xf]
        %v3000 = vld [vmem:[#allocation25 + $0x40] sm:$0xf]
        %v3001 = vld [vmem:[#allocation25 + $0x44] sm:$0xf]
        %v3002 = vld [vmem:[#allocation25 + $0x48] sm:$0xf]
        %v3003 = vld [vmem:[#allocation25 + $0x4c] sm:$0xf]
        %v3004 = vld [vmem:[#allocation25 + $0x50] sm:$0xf]
        %v3005 = vld [vmem:[#allocation25 + $0x54] sm:$0xf]
        %v3006 = vld [vmem:[#allocation25 + $0x58] sm:$0xf]
        %v3007 = vld [vmem:[#allocation25 + $0x5c] sm:$0xf]
        %v3008 = vld [vmem:[#allocation25 + $0x60] sm:$0xf]
        %v3009 = vld [vmem:[#allocation25 + $0x64] sm:$0xf]
        %v3010 = vld [vmem:[#allocation25 + $0x68] sm:$0xf]
        %v3011 = vld [vmem:[#allocation25 + $0x6c] sm:$0xf]
        %v3012 = vld [vmem:[#allocation25 + $0x70] sm:$0xf]
        %v3013 = vld [vmem:[#allocation25 + $0x74] sm:$0xf]
        %v3014 = vld [vmem:[#allocation25 + $0x78] sm:$0xf]
        %v3015 = vld [vmem:[#allocation25 + $0x7c] sm:$0xf]
        %v3016 = vld [vmem:[#allocation27] sm:$0x1]
        %v3017 = vpack.c.bf16 %v2966, %v2966
        %v3019 = vperm.slane %v2983, 0
        %v3020 = vperm.slane %v2983, 1
        %v3039 = vunpack.c.l.b16 %v2967
        %v3040 = vunpack.c.h.b16 %v2967
        %v3041 = vunpack.c.l.b16 %v2968
        %v3042 = vunpack.c.h.b16 %v2968
        %v3043 = vunpack.c.l.b16 %v2969
        %v3044 = vunpack.c.h.b16 %v2969
        %v3045 = vunpack.c.l.b16 %v2970
        %v3046 = vunpack.c.h.b16 %v2970
        %v3047 = vunpack.c.l.b16 %v2971
        %v3048 = vunpack.c.h.b16 %v2971
        %v3049 = vunpack.c.l.b16 %v2972
        %v3050 = vunpack.c.h.b16 %v2972
        %v3051 = vunpack.c.l.b16 %v2973
        %v3052 = vunpack.c.h.b16 %v2973
        %v3053 = vunpack.c.l.b16 %v2974
        %v3054 = vunpack.c.h.b16 %v2974
        %v3055 = vunpack.c.l.b16 %v2975
        %v3056 = vunpack.c.h.b16 %v2975
        %v3057 = vunpack.c.l.b16 %v2976
        %v3058 = vunpack.c.h.b16 %v2976
        %v3059 = vunpack.c.l.b16 %v2977
        %v3060 = vunpack.c.h.b16 %v2977
        %v3061 = vunpack.c.l.b16 %v2978
        %v3062 = vunpack.c.h.b16 %v2978
        %v3063 = vunpack.c.l.b16 %v2979
        %v3064 = vunpack.c.h.b16 %v2979
        %v3065 = vunpack.c.l.b16 %v2980
        %v3066 = vunpack.c.h.b16 %v2980
        %v3067 = vunpack.c.l.b16 %v2981
        %v3068 = vunpack.c.h.b16 %v2981
        %v3069 = vunpack.c.l.b16 %v2982
        %v3070 = vunpack.c.h.b16 %v2982
        %v3071 = vpack.c.b16 %v3041, %v3039
        %v3072 = vpack.c.b16 %v3042, %v3040
        %v3073 = vpack.c.b16 %v3045, %v3043
        %v3074 = vpack.c.b16 %v3046, %v3044
        %v3075 = vpack.c.b16 %v3049, %v3047
        %v3076 = vpack.c.b16 %v3050, %v3048
        %v3077 = vpack.c.b16 %v3053, %v3051
        %v3078 = vpack.c.b16 %v3054, %v3052
        %v3079 = vpack.c.b16 %v3057, %v3055
        %v3080 = vpack.c.b16 %v3058, %v3056
        %v3081 = vpack.c.b16 %v3061, %v3059
        %v3082 = vpack.c.b16 %v3062, %v3060
        %v3083 = vpack.c.b16 %v3065, %v3063
        %v3084 = vpack.c.b16 %v3066, %v3064
        %v3085 = vpack.c.b16 %v3069, %v3067
        %v3086 = vpack.c.b16 %v3070, %v3068
        %3103 = vmatpush.bf16.msra.mxu0 %v3085
        %3104 = vmatpush.bf16.msra.mxu0 %v3083
        %3105 = vmatpush.bf16.msra.mxu0 %v3081
        %3106 = vmatpush.bf16.msra.mxu0 %v3079
        %3107 = vmatpush.bf16.msra.mxu0 %v3077
        %3108 = vmatpush.bf16.msra.mxu0 %v3075
        %3109 = vmatpush.bf16.msra.mxu0 %v3073
        %3110 = vmatpush.bf16.msra.mxu0 %v3071
        %3111 = vmatmul.bf16.gmra.mxu0 %v3017
        %v3112 = vpop.f32.mrf.mxu0
        %v3113 = vadd.f32 %v3019, %v3112
        %v3114 = vpop.f32.mrf.mxu0
        %3115 = vdwg.mxu0
        %3116 = vmatpush.bf16.msra.mxu0 %v3086
        %3117 = vmatpush.bf16.msra.mxu0 %v3084
        %3118 = vmatpush.bf16.msra.mxu0 %v3082
        %3119 = vmatpush.bf16.msra.mxu0 %v3080
        %3120 = vmatpush.bf16.msra.mxu0 %v3078
        %3121 = vmatpush.bf16.msra.mxu0 %v3076
        %3122 = vmatpush.bf16.msra.mxu0 %v3074
        %3123 = vmatpush.bf16.msra.mxu0 %v3072
        %3124 = vmatmul.bf16.gmra.mxu0 %v3017
        %v3125 = vpop.f32.mrf.mxu0
        %v3126 = vadd.f32 %v3020, %v3125
        %v3127 = vpop.f32.mrf.mxu0
        %3128 = vdwg.mxu0
        %v3129 = vmul.f32 %v3113, %v3113
        %v3130 = vmul.f32 %v3126, %v3126
        %v3131 = vmul.f32 %v3113, %v3129
        %v3132 = vmul.f32 %v3126, %v3130
        %v3133 = vmul.f32 %v3131, 0.044715
        %v3134 = vmul.f32 %v3132, 0.044715
        %v3135 = vadd.f32 %v3113, %v3133
        %v3136 = vadd.f32 %v3126, %v3134
        %v3137 = vmul.f32 %v3135, 0.7978846
        %v3138 = vmul.f32 %v3136, 0.7978846
        %v3139 = vtanh.pop %v3137
        %v3140 = vtanh.pop %v3138
        %v3141 = vadd.f32 %v3139, 1.0
        %v3142 = vadd.f32 %v3140, 1.0
        %v3143 = vmul.f32 %v3141, 0.5
        %v3144 = vmul.f32 %v3142, 0.5
        %v3145 = vmul.f32 %v3113, %v3143
        %v3146 = vmul.f32 %v3126, %v3144
        %v3147 = vpack.c.bf16 %v3145, %v3145
        %v3148 = vpack.c.bf16 %v3146, %v3146
        %v3150 = vperm.slane %v3016, 0
        %v3184 = vunpack.c.l.b16 %v2984
        %v3185 = vunpack.c.l.b16 %v2985
        %v3186 = vunpack.c.l.b16 %v2986
        %v3187 = vunpack.c.l.b16 %v2987
        %v3188 = vunpack.c.l.b16 %v2988
        %v3189 = vunpack.c.l.b16 %v2989
        %v3190 = vunpack.c.l.b16 %v2990
        %v3191 = vunpack.c.l.b16 %v2991
        %v3192 = vunpack.c.l.b16 %v2992
        %v3193 = vunpack.c.l.b16 %v2993
        %v3194 = vunpack.c.l.b16 %v2994
        %v3195 = vunpack.c.l.b16 %v2995
        %v3196 = vunpack.c.l.b16 %v2996
        %v3197 = vunpack.c.l.b16 %v2997
        %v3198 = vunpack.c.l.b16 %v2998
        %v3199 = vunpack.c.l.b16 %v2999
        %v3200 = vunpack.c.l.b16 %v3000
        %v3201 = vunpack.c.l.b16 %v3001
        %v3202 = vunpack.c.l.b16 %v3002
        %v3203 = vunpack.c.l.b16 %v3003
        %v3204 = vunpack.c.l.b16 %v3004
        %v3205 = vunpack.c.l.b16 %v3005
        %v3206 = vunpack.c.l.b16 %v3006
        %v3207 = vunpack.c.l.b16 %v3007
        %v3208 = vunpack.c.l.b16 %v3008
        %v3209 = vunpack.c.l.b16 %v3009
        %v3210 = vunpack.c.l.b16 %v3010
        %v3211 = vunpack.c.l.b16 %v3011
        %v3212 = vunpack.c.l.b16 %v3012
        %v3213 = vunpack.c.l.b16 %v3013
        %v3214 = vunpack.c.l.b16 %v3014
        %v3215 = vunpack.c.l.b16 %v3015
        %v3216 = vpack.c.b16 %v3185, %v3184
        %v3217 = vpack.c.b16 %v3187, %v3186
        %v3218 = vpack.c.b16 %v3189, %v3188
        %v3219 = vpack.c.b16 %v3191, %v3190
        %v3220 = vpack.c.b16 %v3193, %v3192
        %v3221 = vpack.c.b16 %v3195, %v3194
        %v3222 = vpack.c.b16 %v3197, %v3196
        %v3223 = vpack.c.b16 %v3199, %v3198
        %v3224 = vpack.c.b16 %v3201, %v3200
        %v3225 = vpack.c.b16 %v3203, %v3202
        %v3226 = vpack.c.b16 %v3205, %v3204
        %v3227 = vpack.c.b16 %v3207, %v3206
        %v3228 = vpack.c.b16 %v3209, %v3208
        %v3229 = vpack.c.b16 %v3211, %v3210
        %v3230 = vpack.c.b16 %v3213, %v3212
        %v3231 = vpack.c.b16 %v3215, %v3214
        %3248 = vmatpush.bf16.msra.mxu0 %v3223
        %3249 = vmatpush.bf16.msra.mxu0 %v3222
        %3250 = vmatpush.bf16.msra.mxu0 %v3221
        %3251 = vmatpush.bf16.msra.mxu0 %v3220
        %3252 = vmatpush.bf16.msra.mxu0 %v3219
        %3253 = vmatpush.bf16.msra.mxu0 %v3218
        %3254 = vmatpush.bf16.msra.mxu0 %v3217
        %3255 = vmatpush.bf16.msra.mxu0 %v3216
        %3256 = vmatmul.bf16.gmra.mxu0 %v3147
        %v3257 = vpop.f32.mrf.mxu0
        %v3258 = vadd.f32 %v3150, %v3257
        %v3259 = vpop.f32.mrf.mxu0
        %3260 = vdwg.mxu0
        %3261 = vmatpush.bf16.msra.mxu0 %v3231
        %3262 = vmatpush.bf16.msra.mxu0 %v3230
        %3263 = vmatpush.bf16.msra.mxu0 %v3229
        %3264 = vmatpush.bf16.msra.mxu0 %v3228
        %3265 = vmatpush.bf16.msra.mxu0 %v3227
        %3266 = vmatpush.bf16.msra.mxu0 %v3226
        %3267 = vmatpush.bf16.msra.mxu0 %v3225
        %3268 = vmatpush.bf16.msra.mxu0 %v3224
        %3269 = vmatmul.bf16.gmra.mxu0 %v3148
        %v3270 = vpop.f32.mrf.mxu0
        %v3271 = vadd.f32 %v3258, %v3270
        %v3272 = vpop.f32.mrf.mxu0
        %3273 = vdwg.mxu0
        %v3274 = vld [vmem:[%s61] sm:$0xf]
        %v3275 = vld [vmem:[%s61 + $0x4] sm:$0xf]
        %v3276 = vld [vmem:[%s61 + $0x8] sm:$0xf]
        %v3277 = vld [vmem:[%s61 + $0xc] sm:$0xf]
        %v3278 = vld [vmem:[%s61 + $0x10] sm:$0xf]
        %v3279 = vld [vmem:[%s61 + $0x14] sm:$0xf]
        %v3280 = vld [vmem:[%s61 + $0x18] sm:$0xf]
        %v3281 = vld [vmem:[%s61 + $0x1c] sm:$0xf]
        %v3282 = vld [vmem:[%s61 + $0x20] sm:$0xf]
        %v3283 = vld [vmem:[%s61 + $0x24] sm:$0xf]
        %v3284 = vld [vmem:[%s61 + $0x28] sm:$0xf]
        %v3285 = vld [vmem:[%s61 + $0x2c] sm:$0xf]
        %v3286 = vld [vmem:[%s61 + $0x30] sm:$0xf]
        %v3287 = vld [vmem:[%s61 + $0x34] sm:$0xf]
        %v3288 = vld [vmem:[%s61 + $0x38] sm:$0xf]
        %v3289 = vld [vmem:[%s61 + $0x3c] sm:$0xf]
        %v3290 = vld [vmem:[#allocation28] sm:$0x1]
        %v3291 = vld [vmem:[%s65] sm:$0xf]
        %v3292 = vld [vmem:[%s65 + $0x4] sm:$0xf]
        %v3293 = vld [vmem:[%s65 + $0x8] sm:$0xf]
        %v3294 = vld [vmem:[%s65 + $0xc] sm:$0xf]
        %v3295 = vld [vmem:[#allocation30] sm:$0x1]
        %v3296 = vpack.c.bf16 %v3271, %v3271
        %v3298 = vperm.slane %v3290, 0
        %v3316 = vunpack.c.l.b16 %v3274
        %v3317 = vunpack.c.l.b16 %v3275
        %v3318 = vunpack.c.l.b16 %v3276
        %v3319 = vunpack.c.l.b16 %v3277
        %v3320 = vunpack.c.l.b16 %v3278
        %v3321 = vunpack.c.l.b16 %v3279
        %v3322 = vunpack.c.l.b16 %v3280
        %v3323 = vunpack.c.l.b16 %v3281
        %v3324 = vunpack.c.l.b16 %v3282
        %v3325 = vunpack.c.l.b16 %v3283
        %v3326 = vunpack.c.l.b16 %v3284
        %v3327 = vunpack.c.l.b16 %v3285
        %v3328 = vunpack.c.l.b16 %v3286
        %v3329 = vunpack.c.l.b16 %v3287
        %v3330 = vunpack.c.l.b16 %v3288
        %v3331 = vunpack.c.l.b16 %v3289
        %v3332 = vpack.c.b16 %v3317, %v3316
        %v3333 = vpack.c.b16 %v3319, %v3318
        %v3334 = vpack.c.b16 %v3321, %v3320
        %v3335 = vpack.c.b16 %v3323, %v3322
        %v3336 = vpack.c.b16 %v3325, %v3324
        %v3337 = vpack.c.b16 %v3327, %v3326
        %v3338 = vpack.c.b16 %v3329, %v3328
        %v3339 = vpack.c.b16 %v3331, %v3330
        %3348 = vmatpush.bf16.msra.mxu0 %v3339
        %3349 = vmatpush.bf16.msra.mxu0 %v3338
        %3350 = vmatpush.bf16.msra.mxu0 %v3337
        %3351 = vmatpush.bf16.msra.mxu0 %v3336
        %3352 = vmatpush.bf16.msra.mxu0 %v3335
        %3353 = vmatpush.bf16.msra.mxu0 %v3334
        %3354 = vmatpush.bf16.msra.mxu0 %v3333
        %3355 = vmatpush.bf16.msra.mxu0 %v3332
        %3356 = vmatmul.bf16.gmra.mxu0 %v3296
        %v3357 = vpop.f32.mrf.mxu0
        %v3358 = vadd.f32 %v3298, %v3357
        %v3359 = vpop.f32.mrf.mxu0
        %3360 = vdwg.mxu0
        %v3361 = vmax.f32 %v3358, 0.0
        %v3362 = vpack.c.bf16 %v3361, %v3361
        %v3367 = vunpack.c.l.b16 %v3291
        %v3368 = vunpack.c.l.b16 %v3292
        %v3369 = vunpack.c.l.b16 %v3293
        %v3370 = vunpack.c.l.b16 %v3294
        %v3371 = vpack.c.b16 %v3368, %v3367
        %v3372 = vpack.c.b16 %v3370, %v3369
        %v3376 = vsel %vm1844, %v3362, 0
        %3378 = vmatpush.bf16.msra.mxu0 0
        %3379 = vmatpush.bf16.msra.mxu0 0
        %3380 = vmatpush.bf16.msra.mxu0 0
        %3381 = vmatpush.bf16.msra.mxu0 0
        %3382 = vmatpush.bf16.msra.mxu0 0
        %3383 = vmatpush.bf16.msra.mxu0 0
        %3384 = vmatpush.bf16.msra.mxu0 %v3372
        %3385 = vmatpush.bf16.msra.mxu0 %v3371
        %3386 = vmatmul.bf16.gmra.mxu0 %v3376
        %v3387 = vpop.f32.mrf.mxu0
        %v3388 = vadd.f32 0.0, %v3387
        %v3389 = vpop.f32.mrf.mxu0
        %3390 = vdwg.mxu0
        %v3391 = vadd.f32 %v3271, %v3388
        %v3393 = vperm.slane %v3295, 0
        %v3395 = vadd.f32 %v3391, %v3393
        %v3396 = vadd.f32 %v2936, %v3395
        %v3397 = vld [vmem:[#allocation31] sm:$0x1]
        %v3398 = vld [vmem:[#allocation33] sm:$0x1]
        %3399 = vadd.xlane.f32.xlu0 %v3396
        %v3400 = vpop.xlane.xlu0 %3399
        %v3401 = vmul.f32 %v3400, %v1559
        %v3402 = vsub.f32 %v3396, %v3401
        %v3403 = vmul.f32 %v3402, %v3402
        %3404 = vadd.xlane.f32.xlu0 %v3403
        %v3405 = vpop.xlane.xlu0 %3404
        %v3406 = vmul.f32 %v3405, %v1559
        %v3407 = vadd.f32 %v3406, 1e-05
        %v3408 = vrsqrt.pop %v3407
        %v3409 = vmul.f32 %v3408, %v3407
        %v3410 = vmul.f32 %v3409, %v3408
        %v3411 = vmul.f32 0.5, %v3410
        %v3412 = vsub.f32 1.5, %v3411
        %v3413 = vmul.f32 %v3408, %v3412
        %vm3414 = vweird.f32 %v3407
        %vm3415 = vweird.f32 %v3408
        %vm3416 = vmor %vm3414, %vm3415
        %v3417 = vsel %vm3416, %v3408, %v3413
        %v3418 = vmul.f32 %v3402, %v3417
        %v3420 = vperm.slane %v3397, 0
        %v3422 = vmul.f32 %v3418, %v3420
        %v3424 = vperm.slane %v3398, 0
        %v3426 = vadd.f32 %v3422, %v3424
        %v3427 = vld [vmem:[#allocation34] sm:$0xff]
        %v3428 = vld [vmem:[#allocation34 + $0x8] sm:$0xff]
        %v3429 = vld [vmem:[#allocation34 + $0x10] sm:$0xff]
        %v3430 = vld [vmem:[#allocation34 + $0x18] sm:$0xff]
        %v3431 = vld [vmem:[#allocation34 + $0x20] sm:$0xff]
        %v3432 = vld [vmem:[#allocation34 + $0x28] sm:$0xff]
        %v3433 = vld [vmem:[#allocation34 + $0x30] sm:$0xff]
        %v3434 = vld [vmem:[#allocation34 + $0x38] sm:$0xff]
        %v3435 = vld [vmem:[#allocation34 + $0x40] sm:$0xff]
        %v3436 = vld [vmem:[#allocation34 + $0x48] sm:$0xff]
        %v3437 = vld [vmem:[#allocation34 + $0x50] sm:$0xff]
        %v3438 = vld [vmem:[#allocation34 + $0x58] sm:$0xff]
        %v3439 = vld [vmem:[#allocation34 + $0x60] sm:$0xff]
        %v3440 = vld [vmem:[#allocation34 + $0x68] sm:$0xff]
        %v3441 = vld [vmem:[#allocation34 + $0x70] sm:$0xff]
        %v3442 = vld [vmem:[#allocation34 + $0x78] sm:$0xff]
        %v3443 = vpack.c.bf16 %v3426, %v3426
        %v3444 = vld [vmem:[%s75] sm:$0x3]
        %v3446 = vperm.slane %v3444, 0
        %v3447 = vperm.slane %v3444, 1
        %v3466 = vunpack.c.l.b16 %v3427
        %v3467 = vunpack.c.h.b16 %v3427
        %v3468 = vunpack.c.l.b16 %v3428
        %v3469 = vunpack.c.h.b16 %v3428
        %v3470 = vunpack.c.l.b16 %v3429
        %v3471 = vunpack.c.h.b16 %v3429
        %v3472 = vunpack.c.l.b16 %v3430
        %v3473 = vunpack.c.h.b16 %v3430
        %v3474 = vunpack.c.l.b16 %v3431
        %v3475 = vunpack.c.h.b16 %v3431
        %v3476 = vunpack.c.l.b16 %v3432
        %v3477 = vunpack.c.h.b16 %v3432
        %v3478 = vunpack.c.l.b16 %v3433
        %v3479 = vunpack.c.h.b16 %v3433
        %v3480 = vunpack.c.l.b16 %v3434
        %v3481 = vunpack.c.h.b16 %v3434
        %v3482 = vunpack.c.l.b16 %v3435
        %v3483 = vunpack.c.h.b16 %v3435
        %v3484 = vunpack.c.l.b16 %v3436
        %v3485 = vunpack.c.h.b16 %v3436
        %v3486 = vunpack.c.l.b16 %v3437
        %v3487 = vunpack.c.h.b16 %v3437
        %v3488 = vunpack.c.l.b16 %v3438
        %v3489 = vunpack.c.h.b16 %v3438
        %v3490 = vunpack.c.l.b16 %v3439
        %v3491 = vunpack.c.h.b16 %v3439
        %v3492 = vunpack.c.l.b16 %v3440
        %v3493 = vunpack.c.h.b16 %v3440
        %v3494 = vunpack.c.l.b16 %v3441
        %v3495 = vunpack.c.h.b16 %v3441
        %v3496 = vunpack.c.l.b16 %v3442
        %v3497 = vunpack.c.h.b16 %v3442
        %v3498 = vpack.c.b16 %v3468, %v3466
        %v3499 = vpack.c.b16 %v3469, %v3467
        %v3500 = vpack.c.b16 %v3472, %v3470
        %v3501 = vpack.c.b16 %v3473, %v3471
        %v3502 = vpack.c.b16 %v3476, %v3474
        %v3503 = vpack.c.b16 %v3477, %v3475
        %v3504 = vpack.c.b16 %v3480, %v3478
        %v3505 = vpack.c.b16 %v3481, %v3479
        %v3506 = vpack.c.b16 %v3484, %v3482
        %v3507 = vpack.c.b16 %v3485, %v3483
        %v3508 = vpack.c.b16 %v3488, %v3486
        %v3509 = vpack.c.b16 %v3489, %v3487
        %v3510 = vpack.c.b16 %v3492, %v3490
        %v3511 = vpack.c.b16 %v3493, %v3491
        %v3512 = vpack.c.b16 %v3496, %v3494
        %v3513 = vpack.c.b16 %v3497, %v3495
        %3530 = vmatpush.bf16.msra.mxu0 %v3512
        %3531 = vmatpush.bf16.msra.mxu0 %v3510
        %3532 = vmatpush.bf16.msra.mxu0 %v3508
        %3533 = vmatpush.bf16.msra.mxu0 %v3506
        %3534 = vmatpush.bf16.msra.mxu0 %v3504
        %3535 = vmatpush.bf16.msra.mxu0 %v3502
        %3536 = vmatpush.bf16.msra.mxu0 %v3500
        %3537 = vmatpush.bf16.msra.mxu0 %v3498
        %3538 = vmatmul.bf16.gmra.mxu0 %v3443
        %v3539 = vpop.f32.mrf.mxu0
        %v3540 = vadd.f32 %v3446, %v3539
        %v3541 = vpop.f32.mrf.mxu0
        %3542 = vdwg.mxu0
        %3543 = vmatpush.bf16.msra.mxu0 %v3513
        %3544 = vmatpush.bf16.msra.mxu0 %v3511
        %3545 = vmatpush.bf16.msra.mxu0 %v3509
        %3546 = vmatpush.bf16.msra.mxu0 %v3507
        %3547 = vmatpush.bf16.msra.mxu0 %v3505
        %3548 = vmatpush.bf16.msra.mxu0 %v3503
        %3549 = vmatpush.bf16.msra.mxu0 %v3501
        %3550 = vmatpush.bf16.msra.mxu0 %v3499
        %3551 = vmatmul.bf16.gmra.mxu0 %v3443
        %v3552 = vpop.f32.mrf.mxu0
        %v3553 = vadd.f32 %v3447, %v3552
        %v3554 = vpop.f32.mrf.mxu0
        %3555 = vdwg.mxu0
        %3556 = vst [vmem:[%s1515] sm:$0xff] %v3540
        %3557 = vst [vmem:[%s1515 + $0x8] sm:$0xff] %v3553
        %v3558 = vmax.f32 %v3540, %v3553
        %3559 = vmax.xlane.f32.xlu0 %v3558
        %v3560 = vpop.xlane.xlu0 %3559
        %v3561 = vsub.f32 %v3540, %v3560
        %v3562 = vsub.f32 %v3553, %v3560
        %v3563 = vmul.f32 %v3561, 1.442695
        %v3564 = vpow.pop %v3563
        %v3565 = vmul.f32 %v3562, 1.442695
        %v3566 = vpow.pop %v3565
        %v3567 = vadd.f32 %v3564, %v3566
        %3568 = vadd.xlane.f32.xlu0 %v3567
        %v3569 = vpop.xlane.xlu0 %3568
        %v3570 = vlog2.pop %v3569
        %v3571 = vmul.f32 %v3570, 0.6931472
        %v3572 = vadd.f32 %v3560, %v3571
        %v3573 = vadd.s32 %v1544, 128
        %vm3574 = vcmp.eq.s32.totalorder %v1542, 0
        %s3575 = smul.u32 %s106, 128
        %s3576 = sld [smem:[#allocation2 + %s3575]]
        %v3577 = vstv %s3576
        %v3578 = vsel %vm3574, %v3577, 0
        %vm3579 = vcmp.eq.s32.totalorder %v1542, 1
        %s3580 = sadd.s32 %s3575, 1
        %s3581 = sld [smem:[#allocation2 + %s3580]]
        %v3582 = vstv %s3581
        %v3583 = vsel %vm3579, %v3582, %v3578
        %vm3584 = vcmp.eq.s32.totalorder %v1542, 2
        %s3585 = sadd.s32 %s3575, 2
        %s3586 = sld [smem:[#allocation2 + %s3585]]
        %v3587 = vstv %s3586
        %v3588 = vsel %vm3584, %v3587, %v3583
        %vm3589 = vcmp.eq.s32.totalorder %v1542, 3
        %s3590 = sadd.s32 %s3575, 3
        %s3591 = sld [smem:[#allocation2 + %s3590]]
        %v3592 = vstv %s3591
        %v3593 = vsel %vm3589, %v3592, %v3588
        %vm3594 = vcmp.eq.s32.totalorder %v1542, 4
        %s3595 = sadd.s32 %s3575, 4
        %s3596 = sld [smem:[#allocation2 + %s3595]]
        %v3597 = vstv %s3596
        %v3598 = vsel %vm3594, %v3597, %v3593
        %vm3599 = vcmp.eq.s32.totalorder %v1542, 5
        %s3600 = sadd.s32 %s3575, 5
        %s3601 = sld [smem:[#allocation2 + %s3600]]
        %v3602 = vstv %s3601
        %v3603 = vsel %vm3599, %v3602, %v3598
        %vm3604 = vcmp.eq.s32.totalorder %v1542, 6
        %s3605 = sadd.s32 %s3575, 6
        %s3606 = sld [smem:[#allocation2 + %s3605]]
        %v3607 = vstv %s3606
        %v3608 = vsel %vm3604, %v3607, %v3603
        %vm3609 = vcmp.eq.s32.totalorder %v1542, 7
        %s3610 = sadd.s32 %s3575, 7
        %s3611 = sld [smem:[#allocation2 + %s3610]]
        %v3612 = vstv %s3611
        %v3613 = vsel %vm3609, %v3612, %v3608
        %vm3614 = vcmp.eq.s32.totalorder %v1544, %v3613
        %vm3615 = vcmp.eq.s32.totalorder %v3573, %v3613
        %v3616 = vsel %vm3614, %v3540, 0.0
        %v3617 = vsel %vm3615, %v3553, 0.0
        %v3618 = vadd.f32 %v3616, %v3617
        %3619 = vadd.xlane.f32.xlu0 %v3618
        %v3620 = vpop.xlane.xlu0 %3619
        %v3621 = vsub.f32 %v3572, %v3620
        %3622 = vst [vmem:[%s1536] sm:$0xff] %v3621
        %s3623 = sand.u32 %s927, 1
        %s3624 = scalar_lea.sflag [#allocation4], %s3623
        %s3625 = sand.u32 %s927, 1
        %s3626 = smul.addr %s3625, 16
        %s3627 = scalar_lea.vmem [#allocation36], %s3626
        %p3628 = scmp.lt.s32.totalorder %s106, 1
        %s3629 = scalar_select %p3628, %s106, 1
        %s3630 = smul.addr %s3629, 8
        %s3631 = scalar_lea.vmem %s79, %s3630
        // Predicated region
        $region257: #{_forward_impl.3} parent=171 // pred_check
          %p3632 = pneg %p937
        $region258: #{_forward_impl.3} parent=171 // pred_check_branch
          %3634 = sbr.rel (%p3632) target = $region260
        $region259: #{_forward_impl.3} parent=171 // pred_region
          %3636 = vsyncadd %s3624, 0
          %s3637 = smul.addr %s106, 2
          %s3638 = smul.addr %s3637, 8
          %s3639 = scalar_lea.hbm %s77, %s3638
          %s3641 = sshll.u32 %s3627, 4
          %s3642 = int_to_ptr.vmem [resolvable:$true] %s3641
          %s3643 = sshll.u32 %s3639, 4
          %s3644 = int_to_ptr.hbm [resolvable:$true] %s3643
          %3646 = dma.vmem_to_hbm [thread:$0]  %s3642, 256, %s3644, %s3624
        $region260: #{_forward_impl.3} parent=171 // pred_fallthru
          _
        // Predicated region
        $region261: #{_forward_impl.3} parent=171 // pred_check
          %p3647 = pneg %p963
        $region262: #{_forward_impl.3} parent=171 // pred_check_branch
          %3649 = sbr.rel (%p3647) target = $region264
        $region263: #{_forward_impl.3} parent=171 // pred_region
          _
        $region264: #{_forward_impl.3} parent=171 // pred_fallthru
          _
      $region172: #{_forward_impl.3} parent=5 // pred_fallthru
        _
      %p3650 = scmp.le.s32.totalorder 2, %s101
      // Predicated region
      $region265: #{_forward_impl.3} parent=5 // pred_check
        %p3651 = pneg %p3650
      $region266: #{_forward_impl.3} parent=5 // pred_check_branch
        %3653 = sbr.rel (%p3651) target = $region268
      $region267: #{_forward_impl.3} parent=5 // pred_region
        %s3654 = ssub.s32 %s101, 2
        // Predicated region
        $region269: #{_forward_impl.3} parent=267 // pred_check
          %p3655 = pneg %p943
        $region270: #{_forward_impl.3} parent=267 // pred_check_branch
          %3657 = sbr.rel (%p3655) target = $region272
        $region271: #{_forward_impl.3} parent=267 // pred_region
          %s3658 = sand.u32 %s928, 1
          %s3659 = scalar_lea.sflag [#allocation4], %s3658
          %s3660 = sand.u32 %s928, 1
          %s3661 = smul.addr %s3660, 16
          %s3662 = scalar_lea.vmem [#allocation36], %s3661
          %3664 = dma.done %s3659, 256
        $region272: #{_forward_impl.3} parent=267 // pred_fallthru
          _
        // Predicated region
        $region273: #{_forward_impl.3} parent=267 // pred_check
          %p3665 = pneg %p969
        $region274: #{_forward_impl.3} parent=267 // pred_check_branch
          %3667 = sbr.rel (%p3665) target = $region276
        $region275: #{_forward_impl.3} parent=267 // pred_region
          %p3668 = scmp.lt.s32.totalorder %s107, 1
          %s3669 = scalar_select %p3668, %s107, 1
          %s3670 = smul.addr %s3669, 8
          %s3671 = scalar_lea.vmem %s79, %s3670
        $region276: #{_forward_impl.3} parent=267 // pred_fallthru
          _
      $region268: #{_forward_impl.3} parent=5 // pred_fallthru
        _
    $region6: #{_forward_impl.3} parent=1 // loop_footer
      %s105 = sadd.s32 1, %s101
    $region7: #{_forward_impl.3} parent=1 // loop_footer_branch
      %100 = sbr.rel target = $region3
    $region8: #{_forward_impl.3} parent=1 // loop_exit
      _
    %3672 = vsyncpa [#allocation3], 1
    %s3673 = scalar_lea.sflag [#allocation3], 1
    %3674 = vsyncpa %s3673, 1
    %3675 = vsyncpa [#allocation8], 1
    %3676 = vsyncpa [#allocation11], 1
    %3677 = vsyncpa [#allocation14], 1
    %3678 = vsyncpa [#allocation17], 1
    %3679 = vsyncpa [#allocation20], 1
    %3680 = vsyncpa [#allocation23], 1
    %3681 = vsyncpa [#allocation26], 1
    %3682 = vsyncpa [#allocation29], 1
    %3683 = vsyncpa [#allocation32], 1
    %3684 = vsyncpa [#allocation35], 1
    %3685 = vsyncpa [#allocation4], 1
    %s3686 = scalar_lea.sflag [#allocation4], 1
    %3687 = vsyncpa %s3686, 1
    %3688 = vsyncpa [#allocation5], 1
    %s3689 = scalar_lea.sflag [#allocation5], 1
    %3690 = vsyncpa %s3689, 1

</llo_original>
